<compile_context>
chip_gen: v7x
topology: tpu7x:2x2x1
jax: 0.10.0
libtpu: 0.0.40
codegen_flags: <defaults>
</compile_context>

<pallas_src>
import functools

import jax
import jax.numpy as jnp
import numpy as np
from jax.experimental import pallas as pl
from jax.experimental.pallas import tpu as pltpu


# -----------------------------------------------------------------------------
# Fused Pallas kernel: conv1 -> conv2 -> conv3 -> fc1 -> fc2 (all in VMEM)
# -----------------------------------------------------------------------------
def _fused_kernel(x_ref, w1_ref, b1_ref, w2_ref, b2_ref, w3_ref, b3_ref,
                  fc1w_ref, fc1b_ref, fc2w_ref, fc2b_ref, o_ref,
                  p1_ref, a1_ref, p2_ref, a3_ref,
                  *, bb, oh1, ow1, oh2, ow2):
    f32 = jnp.float32
    kc = x_ref.shape[-1]                 # 16 * Cin   (lanes per 4x4 input tile)
    c1 = w1_ref.shape[1]                 # conv1 out channels (32)
    c2 = w2_ref.shape[1]                 # conv2/conv3 out channels (64)
    m1 = bb * oh1 * ow1

    # ---- conv1: stage the 4 (di,dj) tap blocks ONCE into the K=256 im2col
    #      scratch, then a single (m1, 256) x (256, 32) GEMM.
    for t, (di, dj) in enumerate(((0, 0), (0, 1), (1, 0), (1, 1))):
        blk = x_ref[:, di:di + oh1, dj:dj + ow1, :]          # (bb, oh1, ow1, kc)
        p1_ref[:, t * kc:(t + 1) * kc] = blk.reshape(m1, kc)
    a1 = jnp.dot(p1_ref[...], w1_ref[...], preferred_element_type=f32)
    a1 = jnp.maximum(a1 + b1_ref[...], 0.0)                  # (m1, 32)

    # ---- repack conv1 activations into a (w, c)-merged lane layout so that
    #      conv2 strips (4 consecutive w positions x 32 ch = 128 lanes) are
    #      lane-contiguous.  8 slab stores, each (bb, oh1, 32).
    a1_4d = a1.reshape(bb, oh1, ow1, c1)
    for q in range(ow1):
        a1_ref[:, :, q * c1:(q + 1) * c1] = a1_4d[:, :, q, :]

    # ---- conv2: 36 lane-dense (bb, 128) strip copies (128-aligned stores)
    #      building the K=512 patch matrix, then ONE GEMM.
    for r2 in range(oh2):
        for kh in range(4):                                  # conv2 kernel rows
            row = a1_ref[:, 2 * r2 + kh, :]                  # (bb, ow1*c1)
            for q2 in range(ow2):
                pos = r2 * ow2 + q2
                p2_ref[pos * bb:(pos + 1) * bb,
                       kh * 4 * c1:(kh + 1) * 4 * c1] = (
                    row[:, 2 * q2 * c1:(2 * q2 + 4) * c1])
    a2 = jnp.dot(p2_ref[...], w2_ref[...], preferred_element_type=f32)
    a2 = jnp.maximum(a2 + b2_ref[...], 0.0)                  # (9*bb, 64)

    # ---- conv3 (3x3, stride 1, output 1x1): gather the conv2 result
    #      sample-major into (bb, 576) and do ONE K=576 GEMM.
    for pos in range(oh2 * ow2):
        a3_ref[:, pos * c2:(pos + 1) * c2] = a2[pos * bb:(pos + 1) * bb, :]
    h3 = jnp.dot(a3_ref[...], w3_ref[...], preferred_element_type=f32)
    h3 = jnp.maximum(h3 + b3_ref[...], 0.0)                  # (bb, 64)

    # ---- fully connected head (fc2 padded to 128 lanes -> dense output store)
    h4 = jnp.dot(h3, fc1w_ref[...], preferred_element_type=f32) + fc1b_ref[...]
    h4 = jnp.maximum(h4, 0.0)
    out = jnp.dot(h4, fc2w_ref[...], preferred_element_type=f32) + fc2b_ref[...]
    o_ref[0] = out.astype(o_ref.dtype)


# -----------------------------------------------------------------------------
# One-time weight re-layout (outside the hot path)
# -----------------------------------------------------------------------------
def prepare_params(params):
    w1 = params["conv1_w"]                   # (32, Cin, 8, 8)  torch OIHW
    cin, cout1 = w1.shape[1], w1.shape[0]
    # p1 column order: (tap t = di*2+dj, i, j, c)  -> rows of w1r must match.
    w1r = (jnp.transpose(w1, (2, 3, 1, 0))               # (kh, kw, c, o)
             .reshape(2, 4, 2, 4, cin, cout1)            # (di, i, dj, j, c, o)
             .transpose(0, 2, 1, 3, 4, 5)                # (di, dj, i, j, c, o)
             .reshape(4 * 16 * cin, cout1))              # (256, 32)

    w2 = params["conv2_w"]                   # (64, 32, 4, 4)
    w2r = jnp.transpose(w2, (2, 3, 1, 0)).reshape(16 * w2.shape[1], w2.shape[0])

    w3 = params["conv3_w"]                   # (64, 64, 3, 3)
    w3r = jnp.transpose(w3, (2, 3, 1, 0)).reshape(9 * w3.shape[1], w3.shape[0])

    fc2w_t = params["fc2_w"].T               # (hidden, n_actions)
    n_act = fc2w_t.shape[1]
    n_pad = max(128, ((n_act + 127) // 128) * 128)        # lane-dense output
    fc2w_pad = jnp.zeros((fc2w_t.shape[0], n_pad), fc2w_t.dtype)
    fc2w_pad = fc2w_pad.at[:, :n_act].set(fc2w_t)
    fc2b_pad = jnp.zeros((1, n_pad), params["fc2_b"].dtype)
    fc2b_pad = fc2b_pad.at[0, :n_act].set(params["fc2_b"])

    return {
        "w1r": w1r, "b1": params["conv1_b"].reshape(1, -1),
        "w2r": w2r, "b2": params["conv2_b"].reshape(1, -1),
        "w3r": w3r, "b3": params["conv3_b"].reshape(1, -1),
        "fc1w": params["fc1_w"].T, "fc1b": params["fc1_b"].reshape(1, -1),
        "fc2w": fc2w_pad, "fc2b": fc2b_pad,
    }


# -----------------------------------------------------------------------------
# Forward pass (AtariCNN.forward semantics)
# -----------------------------------------------------------------------------
def atari_cnn_forward(prep, x_nchw, *, n_actions, block_batch=None):
    B, C, H, W = x_nchw.shape
    assert H % 4 == 0 and W % 4 == 0
    th, tw = H // 4, W // 4
    oh1, ow1 = th - 1, tw - 1                          # conv1 output spatial
    oh2, ow2 = (oh1 - 4) // 2 + 1, (ow1 - 4) // 2 + 1  # conv2 output spatial
    assert oh2 == 3 and ow2 == 3, "kernel specialised to conv3 output 1x1"
    # Default: whole batch in one grid step (best for 1-TC v5e/v6e).  Pass an
    # explicit block_batch (multiple of 8) to split across v7x's 2 TCs.
    bb = B if block_batch is None else block_batch
    assert B % bb == 0
    nb = B // bb

    # NCHW -> NHWC -> non-overlapping 4x4xC tiles, lane order (i, j, c).
    x = jnp.transpose(x_nchw, (0, 2, 3, 1))
    x = (x.reshape(B, th, 4, tw, 4, C)
          .transpose(0, 1, 3, 2, 4, 5)
          .reshape(B, th, tw, 16 * C))

    c1 = prep["w1r"].shape[1]
    c2 = prep["w2r"].shape[1]
    n_pad = prep["fc2w"].shape[1]

    kernel = functools.partial(_fused_kernel, bb=bb, oh1=oh1, ow1=ow1,
                               oh2=oh2, ow2=ow2)
    zero = lambda rank: (lambda i: (0,) * rank)
    rup = lambda n, m: -(-n // m) * m

    # Explicit VMEM budget (v5e default scoped is only 16 MiB; v7x physical is
    # 64 MiB) -- estimate padded footprint and leave headroom, cap at 48 MiB.
    weight_bytes = 4 * sum(int(prep[k].size) for k in
                           ("w1r", "b1", "w2r", "b2", "w3r", "b3",
                            "fc1w", "fc1b", "fc2w", "fc2b"))
    vmem_est = 4 * (2 * bb * th * rup(tw, 8) * rup(16 * C, 128)      # x block x2
                    + bb * oh1 * ow1 * rup(4 * 16 * C, 128)          # p1 scratch
                    + bb * rup(oh1, 8) * rup(ow1 * c1, 128)          # a1 scratch
                    + oh2 * ow2 * bb * rup(16 * c1, 128)             # p2 scratch
                    + rup(bb, 8) * rup(oh2 * ow2 * c2, 128)          # a3 scratch
                    + 2 * bb * n_pad) + 2 * weight_bytes             # out x2
    vmem_limit = int(min(48 << 20, max(32 << 20, 2 * vmem_est)))

    out = pl.pallas_call(
        kernel,
        out_shape=jax.ShapeDtypeStruct((nb, bb, n_pad), jnp.float32),
        grid_spec=pltpu.PrefetchScalarGridSpec(
            num_scalar_prefetch=0,
            grid=(nb,),
            in_specs=[
                pl.BlockSpec((bb, th, tw, 16 * C), lambda i: (i, 0, 0, 0)),
                pl.BlockSpec(prep["w1r"].shape, zero(2)),
                pl.BlockSpec(prep["b1"].shape, zero(2)),
                pl.BlockSpec(prep["w2r"].shape, zero(2)),
                pl.BlockSpec(prep["b2"].shape, zero(2)),
                pl.BlockSpec(prep["w3r"].shape, zero(2)),
                pl.BlockSpec(prep["b3"].shape, zero(2)),
                pl.BlockSpec(prep["fc1w"].shape, zero(2)),
                pl.BlockSpec(prep["fc1b"].shape, zero(2)),
                pl.BlockSpec(prep["fc2w"].shape, zero(2)),
                pl.BlockSpec(prep["fc2b"].shape, zero(2)),
            ],
            out_specs=pl.BlockSpec((1, bb, n_pad), lambda i: (i, 0, 0)),
            scratch_shapes=[
                pltpu.VMEM((bb * oh1 * ow1, 4 * 16 * C), jnp.float32),  # conv1 im2col
                pltpu.VMEM((bb, oh1, ow1 * c1), jnp.float32),           # conv1 act (merged lanes)
                pltpu.VMEM((oh2 * ow2 * bb, 16 * c1), jnp.float32),     # conv2 patches
                pltpu.VMEM((bb, oh2 * ow2 * c2), jnp.float32),          # conv3 LHS
            ],
        ),
        compiler_params=pltpu.CompilerParams(
            dimension_semantics=("parallel",),
            vmem_limit_bytes=vmem_limit),
    )(x, prep["w1r"], prep["b1"], prep["w2r"], prep["b2"],
      prep["w3r"], prep["b3"], prep["fc1w"], prep["fc1b"],
      prep["fc2w"], prep["fc2b"])
    return out.reshape(B, n_pad)[:, :n_actions]


# -----------------------------------------------------------------------------
# Pure-JAX reference (correctness check only)
# -----------------------------------------------------------------------------
def reference_forward(params, x_nchw):
    def conv(x, w, b, stride):
        y = jax.lax.conv_general_dilated(
            x, w, (stride, stride), "VALID",
            dimension_numbers=("NCHW", "OIHW", "NCHW"))
        return jax.nn.relu(y + b[None, :, None, None])
    x = conv(x_nchw, params["conv1_w"], params["conv1_b"], 4)
    x = conv(x, params["conv2_w"], params["conv2_b"], 2)
    x = conv(x, params["conv3_w"], params["conv3_b"], 1)
    flat = x.reshape(x.shape[0], -1)
    h = jax.nn.relu(flat @ params["fc1_w"].T + params["fc1_b"])
    return h @ params["fc2_w"].T + params["fc2_b"]


# -----------------------------------------------------------------------------
# Deterministic synthetic parameter init (torch-shaped tensors)
# -----------------------------------------------------------------------------
def init_params(key, in_channels, n_actions, hidden_size, conv_out_size):
    keys = jax.random.split(key, 10)

    def u(k, shape, fan_in):
        bound = 1.0 / np.sqrt(fan_in)
        return jax.random.uniform(k, shape, jnp.float32, -bound, bound)

    return {
        "conv1_w": u(keys[0], (32, in_channels, 8, 8), in_channels * 8 * 8),
        "conv1_b": u(keys[1], (32,), in_channels * 8 * 8),
        "conv2_w": u(keys[2], (64, 32, 4, 4), 32 * 4 * 4),
        "conv2_b": u(keys[3], (64,), 32 * 4 * 4),
        "conv3_w": u(keys[4], (64, 64, 3, 3), 64 * 3 * 3),
        "conv3_b": u(keys[5], (64,), 64 * 3 * 3),
        "fc1_w": u(keys[6], (hidden_size, conv_out_size), conv_out_size),
        "fc1_b": u(keys[7], (hidden_size,), conv_out_size),
        "fc2_w": u(keys[8], (n_actions, hidden_size), hidden_size),
        "fc2_b": u(keys[9], (n_actions,), hidden_size),
    }


if __name__ == "__main__":
    # obs_shape=(4, 36, 36): conv chain 8x8 -> 3x3 -> 1x1, conv_out_size = 64.
    obs_shape = (4, 36, 36)
    n_actions = 3
    hidden_size = 256
    batch = 32
    block_batch = 16     # nb=2 "parallel" chunks (both v7x TCs); bb=16 >= 8.

    def _spatial(s):
        s = (s - 8) // 4 + 1
        s = (s - 4) // 2 + 1
        s = (s - 3) // 1 + 1
        return s

    conv_out_size = 64 * _spatial(obs_shape[1]) * _spatial(obs_shape[2])

    key = jax.random.PRNGKey(0)
    pkey, xkey = jax.random.split(key)
    params = init_params(pkey, obs_shape[0], n_actions, hidden_size,
                         conv_out_size)
    x = jax.random.normal(xkey, (batch,) + obs_shape, jnp.float32)

    prep = prepare_params(params)        # one-time weight re-layout
    fwd = jax.jit(functools.partial(atari_cnn_forward, n_actions=n_actions,
                                    block_batch=block_batch))

    out = jax.block_until_ready(fwd(prep, x))
    ref = jax.block_until_ready(reference_forward(params, x))

    assert out.shape == (batch, n_actions)
    np.testing.assert_allclose(np.asarray(out), np.asarray(ref),
                               rtol=1e-3, atol=1e-3)
    print("KERNEL_OK")
</pallas_src>

<mosaic_0001>
module attributes {stable_mosaic.version = 11 : i64} {
  func.func @_fused_kernel(%arg0: i32, %arg1: memref<16x9x9x64xf32, #tpu.memory_space<vmem>>, %arg2: memref<256x32xf32, #tpu.memory_space<vmem>>, %arg3: memref<1x32xf32, #tpu.memory_space<vmem>>, %arg4: memref<512x64xf32, #tpu.memory_space<vmem>>, %arg5: memref<1x64xf32, #tpu.memory_space<vmem>>, %arg6: memref<576x64xf32, #tpu.memory_space<vmem>>, %arg7: memref<1x64xf32, #tpu.memory_space<vmem>>, %arg8: memref<64x256xf32, #tpu.memory_space<vmem>>, %arg9: memref<1x256xf32, #tpu.memory_space<vmem>>, %arg10: memref<256x128xf32, #tpu.memory_space<vmem>>, %arg11: memref<1x128xf32, #tpu.memory_space<vmem>>, %arg12: memref<1x16x128xf32, #tpu.memory_space<vmem>>, %arg13: memref<1024x256xf32, #tpu.memory_space<vmem>>, %arg14: memref<16x8x256xf32, #tpu.memory_space<vmem>>, %arg15: memref<144x512xf32, #tpu.memory_space<vmem>>, %arg16: memref<16x576xf32, #tpu.memory_space<vmem>>) attributes {dimension_semantics = [#tpu.dimension_semantics<parallel>], iteration_bounds = array<i64: 2>, scalar_prefetch = 0 : i64, scratch_operands = 4 : i64, tpu.core_type = #tpu.core_type<tc>, window_params = [{transform_indices = @transform_0, window_bounds = array<i64: 16, 9, 9, 64>}, {pipeline_mode = #tpu.pipeline_mode<synchronous>, transform_indices = @transform_1, window_bounds = array<i64: 256, 32>}, {pipeline_mode = #tpu.pipeline_mode<synchronous>, transform_indices = @transform_2, window_bounds = array<i64: 1, 32>}, {pipeline_mode = #tpu.pipeline_mode<synchronous>, transform_indices = @transform_3, window_bounds = array<i64: 512, 64>}, {pipeline_mode = #tpu.pipeline_mode<synchronous>, transform_indices = @transform_4, window_bounds = array<i64: 1, 64>}, {pipeline_mode = #tpu.pipeline_mode<synchronous>, transform_indices = @transform_5, window_bounds = array<i64: 576, 64>}, {pipeline_mode = #tpu.pipeline_mode<synchronous>, transform_indices = @transform_6, window_bounds = array<i64: 1, 64>}, {pipeline_mode = #tpu.pipeline_mode<synchronous>, transform_indices = @transform_7, window_bounds = array<i64: 64, 256>}, {pipeline_mode = #tpu.pipeline_mode<synchronous>, transform_indices = @transform_8, window_bounds = array<i64: 1, 256>}, {pipeline_mode = #tpu.pipeline_mode<synchronous>, transform_indices = @transform_9, window_bounds = array<i64: 256, 128>}, {pipeline_mode = #tpu.pipeline_mode<synchronous>, transform_indices = @transform_10, window_bounds = array<i64: 1, 128>}, {transform_indices = @transform_11, window_bounds = array<i64: 1, 16, 128>}]} {
    %c0 = arith.constant 0 : index
    %c0_0 = arith.constant 0 : index
    %c0_1 = arith.constant 0 : index
    %c0_2 = arith.constant 0 : index
    %0 = vector.load %arg1[%c0, %c0_0, %c0_1, %c0_2] : memref<16x9x9x64xf32, #tpu.memory_space<vmem>>, vector<16x8x8x64xf32>
    %1 = vector.shape_cast %0 : vector<16x8x8x64xf32> to vector<1024x64xf32>
    %c0_3 = arith.constant 0 : index
    %c0_4 = arith.constant 0 : index
    %2 = vector.load %arg13[%c0_3, %c0_4] : memref<1024x256xf32, #tpu.memory_space<vmem>>, vector<1024x64xf32>
    tpu.vector_store %arg13[%c0_3, %c0_4], %1 {strides = array<i32>} : memref<1024x256xf32, #tpu.memory_space<vmem>>, vector<1024x64xf32>,
    %c0_5 = arith.constant 0 : index
    %c0_6 = arith.constant 0 : index
    %c1 = arith.constant 1 : index
    %c0_7 = arith.constant 0 : index
    %3 = vector.load %arg1[%c0_5, %c0_6, %c1, %c0_7] : memref<16x9x9x64xf32, #tpu.memory_space<vmem>>, vector<16x8x8x64xf32>
    %4 = vector.shape_cast %3 : vector<16x8x8x64xf32> to vector<1024x64xf32>
    %c0_8 = arith.constant 0 : index
    %c64 = arith.constant 64 : index
    %5 = vector.load %arg13[%c0_8, %c64] : memref<1024x256xf32, #tpu.memory_space<vmem>>, vector<1024x64xf32>
    tpu.vector_store %arg13[%c0_8, %c64], %4 {strides = array<i32>} : memref<1024x256xf32, #tpu.memory_space<vmem>>, vector<1024x64xf32>,
    %c0_9 = arith.constant 0 : index
    %c1_10 = arith.constant 1 : index
    %c0_11 = arith.constant 0 : index
    %c0_12 = arith.constant 0 : index
    %6 = vector.load %arg1[%c0_9, %c1_10, %c0_11, %c0_12] : memref<16x9x9x64xf32, #tpu.memory_space<vmem>>, vector<16x8x8x64xf32>
    %7 = vector.shape_cast %6 : vector<16x8x8x64xf32> to vector<1024x64xf32>
    %c0_13 = arith.constant 0 : index
    %c128 = arith.constant 128 : index
    %8 = vector.load %arg13[%c0_13, %c128] : memref<1024x256xf32, #tpu.memory_space<vmem>>, vector<1024x64xf32>
    tpu.vector_store %arg13[%c0_13, %c128], %7 {strides = array<i32>} : memref<1024x256xf32, #tpu.memory_space<vmem>>, vector<1024x64xf32>,
    %c0_14 = arith.constant 0 : index
    %c1_15 = arith.constant 1 : index
    %c1_16 = arith.constant 1 : index
    %c0_17 = arith.constant 0 : index
    %9 = vector.load %arg1[%c0_14, %c1_15, %c1_16, %c0_17] : memref<16x9x9x64xf32, #tpu.memory_space<vmem>>, vector<16x8x8x64xf32>
    %10 = vector.shape_cast %9 : vector<16x8x8x64xf32> to vector<1024x64xf32>
    %c0_18 = arith.constant 0 : index
    %c192 = arith.constant 192 : index
    %11 = vector.load %arg13[%c0_18, %c192] : memref<1024x256xf32, #tpu.memory_space<vmem>>, vector<1024x64xf32>
    tpu.vector_store %arg13[%c0_18, %c192], %10 {strides = array<i32>} : memref<1024x256xf32, #tpu.memory_space<vmem>>, vector<1024x64xf32>,
    %c0_19 = arith.constant 0 : index
    %c0_20 = arith.constant 0 : index
    %12 = vector.load %arg13[%c0_19, %c0_20] : memref<1024x256xf32, #tpu.memory_space<vmem>>, vector<1024x256xf32>
    %c0_21 = arith.constant 0 : index
    %c0_22 = arith.constant 0 : index
    %13 = vector.load %arg2[%c0_21, %c0_22] : memref<256x32xf32, #tpu.memory_space<vmem>>, vector<256x32xf32>
    %cst = arith.constant dense<0.000000e+00> : vector<1024x32xf32>
    %14 = tpu.matmul %12, %13, %cst {dimension_numbers = #tpu.dot_dimension_numbers<[1], [0], [0], [1], [0, 0, 1, 1], [], []>} : vector<1024x256xf32>, vector<256x32xf32>, vector<1024x32xf32> -> vector<1024x32xf32>
    %c0_23 = arith.constant 0 : index
    %c0_24 = arith.constant 0 : index
    %15 = vector.load %arg3[%c0_23, %c0_24] : memref<1x32xf32, #tpu.memory_space<vmem>>, vector<1x32xf32>
    %16 = vector.broadcast %15 : vector<1x32xf32> to vector<1024x32xf32>
    %17 = arith.addf %14, %16 : vector<1024x32xf32>
    %cst_25 = arith.constant 0.000000e+00 : f32
    %18 = vector.broadcast %cst_25 : f32 to vector<1024x32xf32>
    %19 = arith.maximumf %17, %18 : vector<1024x32xf32>
    %20 = vector.shape_cast %19 : vector<1024x32xf32> to vector<16x8x8x32xf32>
    %21 = vector.extract_strided_slice %20 {offsets = [0, 0, 0, 0], sizes = [16, 8, 1, 32], strides = [1, 1, 1, 1]} : vector<16x8x8x32xf32> to vector<16x8x1x32xf32>
    %22 = vector.shape_cast %21 : vector<16x8x1x32xf32> to vector<16x8x32xf32>
    %c0_26 = arith.constant 0 : index
    %c0_27 = arith.constant 0 : index
    %c0_28 = arith.constant 0 : index
    %23 = vector.load %arg14[%c0_26, %c0_27, %c0_28] : memref<16x8x256xf32, #tpu.memory_space<vmem>>, vector<16x8x32xf32>
    tpu.vector_store %arg14[%c0_26, %c0_27, %c0_28], %22 {strides = array<i32>} : memref<16x8x256xf32, #tpu.memory_space<vmem>>, vector<16x8x32xf32>,
    %24 = vector.extract_strided_slice %20 {offsets = [0, 0, 1, 0], sizes = [16, 8, 1, 32], strides = [1, 1, 1, 1]} : vector<16x8x8x32xf32> to vector<16x8x1x32xf32>
    %25 = vector.shape_cast %24 : vector<16x8x1x32xf32> to vector<16x8x32xf32>
    %c0_29 = arith.constant 0 : index
    %c0_30 = arith.constant 0 : index
    %c32 = arith.constant 32 : index
    %26 = vector.load %arg14[%c0_29, %c0_30, %c32] : memref<16x8x256xf32, #tpu.memory_space<vmem>>, vector<16x8x32xf32>
    tpu.vector_store %arg14[%c0_29, %c0_30, %c32], %25 {strides = array<i32>} : memref<16x8x256xf32, #tpu.memory_space<vmem>>, vector<16x8x32xf32>,
    %27 = vector.extract_strided_slice %20 {offsets = [0, 0, 2, 0], sizes = [16, 8, 1, 32], strides = [1, 1, 1, 1]} : vector<16x8x8x32xf32> to vector<16x8x1x32xf32>
    %28 = vector.shape_cast %27 : vector<16x8x1x32xf32> to vector<16x8x32xf32>
    %c0_31 = arith.constant 0 : index
    %c0_32 = arith.constant 0 : index
    %c64_33 = arith.constant 64 : index
    %29 = vector.load %arg14[%c0_31, %c0_32, %c64_33] : memref<16x8x256xf32, #tpu.memory_space<vmem>>, vector<16x8x32xf32>
    tpu.vector_store %arg14[%c0_31, %c0_32, %c64_33], %28 {strides = array<i32>} : memref<16x8x256xf32, #tpu.memory_space<vmem>>, vector<16x8x32xf32>,
    %30 = vector.extract_strided_slice %20 {offsets = [0, 0, 3, 0], sizes = [16, 8, 1, 32], strides = [1, 1, 1, 1]} : vector<16x8x8x32xf32> to vector<16x8x1x32xf32>
    %31 = vector.shape_cast %30 : vector<16x8x1x32xf32> to vector<16x8x32xf32>
    %c0_34 = arith.constant 0 : index
    %c0_35 = arith.constant 0 : index
    %c96 = arith.constant 96 : index
    %32 = vector.load %arg14[%c0_34, %c0_35, %c96] : memref<16x8x256xf32, #tpu.memory_space<vmem>>, vector<16x8x32xf32>
    tpu.vector_store %arg14[%c0_34, %c0_35, %c96], %31 {strides = array<i32>} : memref<16x8x256xf32, #tpu.memory_space<vmem>>, vector<16x8x32xf32>,
    %33 = vector.extract_strided_slice %20 {offsets = [0, 0, 4, 0], sizes = [16, 8, 1, 32], strides = [1, 1, 1, 1]} : vector<16x8x8x32xf32> to vector<16x8x1x32xf32>
    %34 = vector.shape_cast %33 : vector<16x8x1x32xf32> to vector<16x8x32xf32>
    %c0_36 = arith.constant 0 : index
    %c0_37 = arith.constant 0 : index
    %c128_38 = arith.constant 128 : index
    %35 = vector.load %arg14[%c0_36, %c0_37, %c128_38] : memref<16x8x256xf32, #tpu.memory_space<vmem>>, vector<16x8x32xf32>
    tpu.vector_store %arg14[%c0_36, %c0_37, %c128_38], %34 {strides = array<i32>} : memref<16x8x256xf32, #tpu.memory_space<vmem>>, vector<16x8x32xf32>,
    %36 = vector.extract_strided_slice %20 {offsets = [0, 0, 5, 0], sizes = [16, 8, 1, 32], strides = [1, 1, 1, 1]} : vector<16x8x8x32xf32> to vector<16x8x1x32xf32>
    %37 = vector.shape_cast %36 : vector<16x8x1x32xf32> to vector<16x8x32xf32>
    %c0_39 = arith.constant 0 : index
    %c0_40 = arith.constant 0 : index
    %c160 = arith.constant 160 : index
    %38 = vector.load %arg14[%c0_39, %c0_40, %c160] : memref<16x8x256xf32, #tpu.memory_space<vmem>>, vector<16x8x32xf32>
    tpu.vector_store %arg14[%c0_39, %c0_40, %c160], %37 {strides = array<i32>} : memref<16x8x256xf32, #tpu.memory_space<vmem>>, vector<16x8x32xf32>,
    %39 = vector.extract_strided_slice %20 {offsets = [0, 0, 6, 0], sizes = [16, 8, 1, 32], strides = [1, 1, 1, 1]} : vector<16x8x8x32xf32> to vector<16x8x1x32xf32>
    %40 = vector.shape_cast %39 : vector<16x8x1x32xf32> to vector<16x8x32xf32>
    %c0_41 = arith.constant 0 : index
    %c0_42 = arith.constant 0 : index
    %c192_43 = arith.constant 192 : index
    %41 = vector.load %arg14[%c0_41, %c0_42, %c192_43] : memref<16x8x256xf32, #tpu.memory_space<vmem>>, vector<16x8x32xf32>
    tpu.vector_store %arg14[%c0_41, %c0_42, %c192_43], %40 {strides = array<i32>} : memref<16x8x256xf32, #tpu.memory_space<vmem>>, vector<16x8x32xf32>,
    %42 = vector.extract_strided_slice %20 {offsets = [0, 0, 7, 0], sizes = [16, 8, 1, 32], strides = [1, 1, 1, 1]} : vector<16x8x8x32xf32> to vector<16x8x1x32xf32>
    %43 = vector.shape_cast %42 : vector<16x8x1x32xf32> to vector<16x8x32xf32>
    %c0_44 = arith.constant 0 : index
    %c0_45 = arith.constant 0 : index
    %c224 = arith.constant 224 : index
    %44 = vector.load %arg14[%c0_44, %c0_45, %c224] : memref<16x8x256xf32, #tpu.memory_space<vmem>>, vector<16x8x32xf32>
    tpu.vector_store %arg14[%c0_44, %c0_45, %c224], %43 {strides = array<i32>} : memref<16x8x256xf32, #tpu.memory_space<vmem>>, vector<16x8x32xf32>,
    %c0_46 = arith.constant 0 : index
    %c0_47 = arith.constant 0 : index
    %c0_48 = arith.constant 0 : index
    %45 = vector.load %arg14[%c0_46, %c0_47, %c0_48] : memref<16x8x256xf32, #tpu.memory_space<vmem>>, vector<16x1x256xf32>
    %46 = vector.shape_cast %45 : vector<16x1x256xf32> to vector<16x256xf32>
    %47 = vector.extract_strided_slice %46 {offsets = [0, 0], sizes = [16, 128], strides = [1, 1]} : vector<16x256xf32> to vector<16x128xf32>
    %c0_49 = arith.constant 0 : index
    %c0_50 = arith.constant 0 : index
    %48 = vector.load %arg15[%c0_49, %c0_50] : memref<144x512xf32, #tpu.memory_space<vmem>>, vector<16x128xf32>
    tpu.vector_store %arg15[%c0_49, %c0_50], %47 {strides = array<i32>} : memref<144x512xf32, #tpu.memory_space<vmem>>, vector<16x128xf32>,
    %49 = vector.extract_strided_slice %46 {offsets = [0, 64], sizes = [16, 128], strides = [1, 1]} : vector<16x256xf32> to vector<16x128xf32>
    %c16 = arith.constant 16 : index
    %c0_51 = arith.constant 0 : index
    %50 = vector.load %arg15[%c16, %c0_51] : memref<144x512xf32, #tpu.memory_space<vmem>>, vector<16x128xf32>
    tpu.vector_store %arg15[%c16, %c0_51], %49 {strides = array<i32>} : memref<144x512xf32, #tpu.memory_space<vmem>>, vector<16x128xf32>,
    %51 = vector.extract_strided_slice %46 {offsets = [0, 128], sizes = [16, 128], strides = [1, 1]} : vector<16x256xf32> to vector<16x128xf32>
    %c32_52 = arith.constant 32 : index
    %c0_53 = arith.constant 0 : index
    %52 = vector.load %arg15[%c32_52, %c0_53] : memref<144x512xf32, #tpu.memory_space<vmem>>, vector<16x128xf32>
    tpu.vector_store %arg15[%c32_52, %c0_53], %51 {strides = array<i32>} : memref<144x512xf32, #tpu.memory_space<vmem>>, vector<16x128xf32>,
    %c0_54 = arith.constant 0 : index
    %c1_55 = arith.constant 1 : index
    %c0_56 = arith.constant 0 : index
    %53 = vector.load %arg14[%c0_54, %c1_55, %c0_56] : memref<16x8x256xf32, #tpu.memory_space<vmem>>, vector<16x1x256xf32>
    %54 = vector.shape_cast %53 : vector<16x1x256xf32> to vector<16x256xf32>
    %55 = vector.extract_strided_slice %54 {offsets = [0, 0], sizes = [16, 128], strides = [1, 1]} : vector<16x256xf32> to vector<16x128xf32>
    %c0_57 = arith.constant 0 : index
    %c128_58 = arith.constant 128 : index
    %56 = vector.load %arg15[%c0_57, %c128_58] : memref<144x512xf32, #tpu.memory_space<vmem>>, vector<16x128xf32>
    tpu.vector_store %arg15[%c0_57, %c128_58], %55 {strides = array<i32>} : memref<144x512xf32, #tpu.memory_space<vmem>>, vector<16x128xf32>,
    %57 = vector.extract_strided_slice %54 {offsets = [0, 64], sizes = [16, 128], strides = [1, 1]} : vector<16x256xf32> to vector<16x128xf32>
    %c16_59 = arith.constant 16 : index
    %c128_60 = arith.constant 128 : index
    %58 = vector.load %arg15[%c16_59, %c128_60] : memref<144x512xf32, #tpu.memory_space<vmem>>, vector<16x128xf32>
    tpu.vector_store %arg15[%c16_59, %c128_60], %57 {strides = array<i32>} : memref<144x512xf32, #tpu.memory_space<vmem>>, vector<16x128xf32>,
    %59 = vector.extract_strided_slice %54 {offsets = [0, 128], sizes = [16, 128], strides = [1, 1]} : vector<16x256xf32> to vector<16x128xf32>
    %c32_61 = arith.constant 32 : index
    %c128_62 = arith.constant 128 : index
    %60 = vector.load %arg15[%c32_61, %c128_62] : memref<144x512xf32, #tpu.memory_space<vmem>>, vector<16x128xf32>
    tpu.vector_store %arg15[%c32_61, %c128_62], %59 {strides = array<i32>} : memref<144x512xf32, #tpu.memory_space<vmem>>, vector<16x128xf32>,
    %c0_63 = arith.constant 0 : index
    %c2 = arith.constant 2 : index
    %c0_64 = arith.constant 0 : index
    %61 = vector.load %arg14[%c0_63, %c2, %c0_64] : memref<16x8x256xf32, #tpu.memory_space<vmem>>, vector<16x1x256xf32>
    %62 = vector.shape_cast %61 : vector<16x1x256xf32> to vector<16x256xf32>
    %63 = vector.extract_strided_slice %62 {offsets = [0, 0], sizes = [16, 128], strides = [1, 1]} : vector<16x256xf32> to vector<16x128xf32>
    %c0_65 = arith.constant 0 : index
    %c256 = arith.constant 256 : index
    %64 = vector.load %arg15[%c0_65, %c256] : memref<144x512xf32, #tpu.memory_space<vmem>>, vector<16x128xf32>
    tpu.vector_store %arg15[%c0_65, %c256], %63 {strides = array<i32>} : memref<144x512xf32, #tpu.memory_space<vmem>>, vector<16x128xf32>,
    %65 = vector.extract_strided_slice %62 {offsets = [0, 64], sizes = [16, 128], strides = [1, 1]} : vector<16x256xf32> to vector<16x128xf32>
    %c16_66 = arith.constant 16 : index
    %c256_67 = arith.constant 256 : index
    %66 = vector.load %arg15[%c16_66, %c256_67] : memref<144x512xf32, #tpu.memory_space<vmem>>, vector<16x128xf32>
    tpu.vector_store %arg15[%c16_66, %c256_67], %65 {strides = array<i32>} : memref<144x512xf32, #tpu.memory_space<vmem>>, vector<16x128xf32>,
    %67 = vector.extract_strided_slice %62 {offsets = [0, 128], sizes = [16, 128], strides = [1, 1]} : vector<16x256xf32> to vector<16x128xf32>
    %c32_68 = arith.constant 32 : index
    %c256_69 = arith.constant 256 : index
    %68 = vector.load %arg15[%c32_68, %c256_69] : memref<144x512xf32, #tpu.memory_space<vmem>>, vector<16x128xf32>
    tpu.vector_store %arg15[%c32_68, %c256_69], %67 {strides = array<i32>} : memref<144x512xf32, #tpu.memory_space<vmem>>, vector<16x128xf32>,
    %c0_70 = arith.constant 0 : index
    %c3 = arith.constant 3 : index
    %c0_71 = arith.constant 0 : index
    %69 = vector.load %arg14[%c0_70, %c3, %c0_71] : memref<16x8x256xf32, #tpu.memory_space<vmem>>, vector<16x1x256xf32>
    %70 = vector.shape_cast %69 : vector<16x1x256xf32> to vector<16x256xf32>
    %71 = vector.extract_strided_slice %70 {offsets = [0, 0], sizes = [16, 128], strides = [1, 1]} : vector<16x256xf32> to vector<16x128xf32>
    %c0_72 = arith.constant 0 : index
    %c384 = arith.constant 384 : index
    %72 = vector.load %arg15[%c0_72, %c384] : memref<144x512xf32, #tpu.memory_space<vmem>>, vector<16x128xf32>
    tpu.vector_store %arg15[%c0_72, %c384], %71 {strides = array<i32>} : memref<144x512xf32, #tpu.memory_space<vmem>>, vector<16x128xf32>,
    %73 = vector.extract_strided_slice %70 {offsets = [0, 64], sizes = [16, 128], strides = [1, 1]} : vector<16x256xf32> to vector<16x128xf32>
    %c16_73 = arith.constant 16 : index
    %c384_74 = arith.constant 384 : index
    %74 = vector.load %arg15[%c16_73, %c384_74] : memref<144x512xf32, #tpu.memory_space<vmem>>, vector<16x128xf32>
    tpu.vector_store %arg15[%c16_73, %c384_74], %73 {strides = array<i32>} : memref<144x512xf32, #tpu.memory_space<vmem>>, vector<16x128xf32>,
    %75 = vector.extract_strided_slice %70 {offsets = [0, 128], sizes = [16, 128], strides = [1, 1]} : vector<16x256xf32> to vector<16x128xf32>
    %c32_75 = arith.constant 32 : index
    %c384_76 = arith.constant 384 : index
    %76 = vector.load %arg15[%c32_75, %c384_76] : memref<144x512xf32, #tpu.memory_space<vmem>>, vector<16x128xf32>
    tpu.vector_store %arg15[%c32_75, %c384_76], %75 {strides = array<i32>} : memref<144x512xf32, #tpu.memory_space<vmem>>, vector<16x128xf32>,
    %c0_77 = arith.constant 0 : index
    %c2_78 = arith.constant 2 : index
    %c0_79 = arith.constant 0 : index
    %77 = vector.load %arg14[%c0_77, %c2_78, %c0_79] : memref<16x8x256xf32, #tpu.memory_space<vmem>>, vector<16x1x256xf32>
    %78 = vector.shape_cast %77 : vector<16x1x256xf32> to vector<16x256xf32>
    %79 = vector.extract_strided_slice %78 {offsets = [0, 0], sizes = [16, 128], strides = [1, 1]} : vector<16x256xf32> to vector<16x128xf32>
    %c48 = arith.constant 48 : index
    %c0_80 = arith.constant 0 : index
    %80 = vector.load %arg15[%c48, %c0_80] : memref<144x512xf32, #tpu.memory_space<vmem>>, vector<16x128xf32>
    tpu.vector_store %arg15[%c48, %c0_80], %79 {strides = array<i32>} : memref<144x512xf32, #tpu.memory_space<vmem>>, vector<16x128xf32>,
    %81 = vector.extract_strided_slice %78 {offsets = [0, 64], sizes = [16, 128], strides = [1, 1]} : vector<16x256xf32> to vector<16x128xf32>
    %c64_81 = arith.constant 64 : index
    %c0_82 = arith.constant 0 : index
    %82 = vector.load %arg15[%c64_81, %c0_82] : memref<144x512xf32, #tpu.memory_space<vmem>>, vector<16x128xf32>
    tpu.vector_store %arg15[%c64_81, %c0_82], %81 {strides = array<i32>} : memref<144x512xf32, #tpu.memory_space<vmem>>, vector<16x128xf32>,
    %83 = vector.extract_strided_slice %78 {offsets = [0, 128], sizes = [16, 128], strides = [1, 1]} : vector<16x256xf32> to vector<16x128xf32>
    %c80 = arith.constant 80 : index
    %c0_83 = arith.constant 0 : index
    %84 = vector.load %arg15[%c80, %c0_83] : memref<144x512xf32, #tpu.memory_space<vmem>>, vector<16x128xf32>
    tpu.vector_store %arg15[%c80, %c0_83], %83 {strides = array<i32>} : memref<144x512xf32, #tpu.memory_space<vmem>>, vector<16x128xf32>,
    %c0_84 = arith.constant 0 : index
    %c3_85 = arith.constant 3 : index
    %c0_86 = arith.constant 0 : index
    %85 = vector.load %arg14[%c0_84, %c3_85, %c0_86] : memref<16x8x256xf32, #tpu.memory_space<vmem>>, vector<16x1x256xf32>
    %86 = vector.shape_cast %85 : vector<16x1x256xf32> to vector<16x256xf32>
    %87 = vector.extract_strided_slice %86 {offsets = [0, 0], sizes = [16, 128], strides = [1, 1]} : vector<16x256xf32> to vector<16x128xf32>
    %c48_87 = arith.constant 48 : index
    %c128_88 = arith.constant 128 : index
    %88 = vector.load %arg15[%c48_87, %c128_88] : memref<144x512xf32, #tpu.memory_space<vmem>>, vector<16x128xf32>
    tpu.vector_store %arg15[%c48_87, %c128_88], %87 {strides = array<i32>} : memref<144x512xf32, #tpu.memory_space<vmem>>, vector<16x128xf32>,
    %89 = vector.extract_strided_slice %86 {offsets = [0, 64], sizes = [16, 128], strides = [1, 1]} : vector<16x256xf32> to vector<16x128xf32>
    %c64_89 = arith.constant 64 : index
    %c128_90 = arith.constant 128 : index
    %90 = vector.load %arg15[%c64_89, %c128_90] : memref<144x512xf32, #tpu.memory_space<vmem>>, vector<16x128xf32>
    tpu.vector_store %arg15[%c64_89, %c128_90], %89 {strides = array<i32>} : memref<144x512xf32, #tpu.memory_space<vmem>>, vector<16x128xf32>,
    %91 = vector.extract_strided_slice %86 {offsets = [0, 128], sizes = [16, 128], strides = [1, 1]} : vector<16x256xf32> to vector<16x128xf32>
    %c80_91 = arith.constant 80 : index
    %c128_92 = arith.constant 128 : index
    %92 = vector.load %arg15[%c80_91, %c128_92] : memref<144x512xf32, #tpu.memory_space<vmem>>, vector<16x128xf32>
    tpu.vector_store %arg15[%c80_91, %c128_92], %91 {strides = array<i32>} : memref<144x512xf32, #tpu.memory_space<vmem>>, vector<16x128xf32>,
    %c0_93 = arith.constant 0 : index
    %c4 = arith.constant 4 : index
    %c0_94 = arith.constant 0 : index
    %93 = vector.load %arg14[%c0_93, %c4, %c0_94] : memref<16x8x256xf32, #tpu.memory_space<vmem>>, vector<16x1x256xf32>
    %94 = vector.shape_cast %93 : vector<16x1x256xf32> to vector<16x256xf32>
    %95 = vector.extract_strided_slice %94 {offsets = [0, 0], sizes = [16, 128], strides = [1, 1]} : vector<16x256xf32> to vector<16x128xf32>
    %c48_95 = arith.constant 48 : index
    %c256_96 = arith.constant 256 : index
    %96 = vector.load %arg15[%c48_95, %c256_96] : memref<144x512xf32, #tpu.memory_space<vmem>>, vector<16x128xf32>
    tpu.vector_store %arg15[%c48_95, %c256_96], %95 {strides = array<i32>} : memref<144x512xf32, #tpu.memory_space<vmem>>, vector<16x128xf32>,
    %97 = vector.extract_strided_slice %94 {offsets = [0, 64], sizes = [16, 128], strides = [1, 1]} : vector<16x256xf32> to vector<16x128xf32>
    %c64_97 = arith.constant 64 : index
    %c256_98 = arith.constant 256 : index
    %98 = vector.load %arg15[%c64_97, %c256_98] : memref<144x512xf32, #tpu.memory_space<vmem>>, vector<16x128xf32>
    tpu.vector_store %arg15[%c64_97, %c256_98], %97 {strides = array<i32>} : memref<144x512xf32, #tpu.memory_space<vmem>>, vector<16x128xf32>,
    %99 = vector.extract_strided_slice %94 {offsets = [0, 128], sizes = [16, 128], strides = [1, 1]} : vector<16x256xf32> to vector<16x128xf32>
    %c80_99 = arith.constant 80 : index
    %c256_100 = arith.constant 256 : index
    %100 = vector.load %arg15[%c80_99, %c256_100] : memref<144x512xf32, #tpu.memory_space<vmem>>, vector<16x128xf32>
    tpu.vector_store %arg15[%c80_99, %c256_100], %99 {strides = array<i32>} : memref<144x512xf32, #tpu.memory_space<vmem>>, vector<16x128xf32>,
    %c0_101 = arith.constant 0 : index
    %c5 = arith.constant 5 : index
    %c0_102 = arith.constant 0 : index
    %101 = vector.load %arg14[%c0_101, %c5, %c0_102] : memref<16x8x256xf32, #tpu.memory_space<vmem>>, vector<16x1x256xf32>
    %102 = vector.shape_cast %101 : vector<16x1x256xf32> to vector<16x256xf32>
    %103 = vector.extract_strided_slice %102 {offsets = [0, 0], sizes = [16, 128], strides = [1, 1]} : vector<16x256xf32> to vector<16x128xf32>
    %c48_103 = arith.constant 48 : index
    %c384_104 = arith.constant 384 : index
    %104 = vector.load %arg15[%c48_103, %c384_104] : memref<144x512xf32, #tpu.memory_space<vmem>>, vector<16x128xf32>
    tpu.vector_store %arg15[%c48_103, %c384_104], %103 {strides = array<i32>} : memref<144x512xf32, #tpu.memory_space<vmem>>, vector<16x128xf32>,
    %105 = vector.extract_strided_slice %102 {offsets = [0, 64], sizes = [16, 128], strides = [1, 1]} : vector<16x256xf32> to vector<16x128xf32>
    %c64_105 = arith.constant 64 : index
    %c384_106 = arith.constant 384 : index
    %106 = vector.load %arg15[%c64_105, %c384_106] : memref<144x512xf32, #tpu.memory_space<vmem>>, vector<16x128xf32>
    tpu.vector_store %arg15[%c64_105, %c384_106], %105 {strides = array<i32>} : memref<144x512xf32, #tpu.memory_space<vmem>>, vector<16x128xf32>,
    %107 = vector.extract_strided_slice %102 {offsets = [0, 128], sizes = [16, 128], strides = [1, 1]} : vector<16x256xf32> to vector<16x128xf32>
    %c80_107 = arith.constant 80 : index
    %c384_108 = arith.constant 384 : index
    %108 = vector.load %arg15[%c80_107, %c384_108] : memref<144x512xf32, #tpu.memory_space<vmem>>, vector<16x128xf32>
    tpu.vector_store %arg15[%c80_107, %c384_108], %107 {strides = array<i32>} : memref<144x512xf32, #tpu.memory_space<vmem>>, vector<16x128xf32>,
    %c0_109 = arith.constant 0 : index
    %c4_110 = arith.constant 4 : index
    %c0_111 = arith.constant 0 : index
    %109 = vector.load %arg14[%c0_109, %c4_110, %c0_111] : memref<16x8x256xf32, #tpu.memory_space<vmem>>, vector<16x1x256xf32>
    %110 = vector.shape_cast %109 : vector<16x1x256xf32> to vector<16x256xf32>
    %111 = vector.extract_strided_slice %110 {offsets = [0, 0], sizes = [16, 128], strides = [1, 1]} : vector<16x256xf32> to vector<16x128xf32>
    %c96_112 = arith.constant 96 : index
    %c0_113 = arith.constant 0 : index
    %112 = vector.load %arg15[%c96_112, %c0_113] : memref<144x512xf32, #tpu.memory_space<vmem>>, vector<16x128xf32>
    tpu.vector_store %arg15[%c96_112, %c0_113], %111 {strides = array<i32>} : memref<144x512xf32, #tpu.memory_space<vmem>>, vector<16x128xf32>,
    %113 = vector.extract_strided_slice %110 {offsets = [0, 64], sizes = [16, 128], strides = [1, 1]} : vector<16x256xf32> to vector<16x128xf32>
    %c112 = arith.constant 112 : index
    %c0_114 = arith.constant 0 : index
    %114 = vector.load %arg15[%c112, %c0_114] : memref<144x512xf32, #tpu.memory_space<vmem>>, vector<16x128xf32>
    tpu.vector_store %arg15[%c112, %c0_114], %113 {strides = array<i32>} : memref<144x512xf32, #tpu.memory_space<vmem>>, vector<16x128xf32>,
    %115 = vector.extract_strided_slice %110 {offsets = [0, 128], sizes = [16, 128], strides = [1, 1]} : vector<16x256xf32> to vector<16x128xf32>
    %c128_115 = arith.constant 128 : index
    %c0_116 = arith.constant 0 : index
    %116 = vector.load %arg15[%c128_115, %c0_116] : memref<144x512xf32, #tpu.memory_space<vmem>>, vector<16x128xf32>
    tpu.vector_store %arg15[%c128_115, %c0_116], %115 {strides = array<i32>} : memref<144x512xf32, #tpu.memory_space<vmem>>, vector<16x128xf32>,
    %c0_117 = arith.constant 0 : index
    %c5_118 = arith.constant 5 : index
    %c0_119 = arith.constant 0 : index
    %117 = vector.load %arg14[%c0_117, %c5_118, %c0_119] : memref<16x8x256xf32, #tpu.memory_space<vmem>>, vector<16x1x256xf32>
    %118 = vector.shape_cast %117 : vector<16x1x256xf32> to vector<16x256xf32>
    %119 = vector.extract_strided_slice %118 {offsets = [0, 0], sizes = [16, 128], strides = [1, 1]} : vector<16x256xf32> to vector<16x128xf32>
    %c96_120 = arith.constant 96 : index
    %c128_121 = arith.constant 128 : index
    %120 = vector.load %arg15[%c96_120, %c128_121] : memref<144x512xf32, #tpu.memory_space<vmem>>, vector<16x128xf32>
    tpu.vector_store %arg15[%c96_120, %c128_121], %119 {strides = array<i32>} : memref<144x512xf32, #tpu.memory_space<vmem>>, vector<16x128xf32>,
    %121 = vector.extract_strided_slice %118 {offsets = [0, 64], sizes = [16, 128], strides = [1, 1]} : vector<16x256xf32> to vector<16x128xf32>
    %c112_122 = arith.constant 112 : index
    %c128_123 = arith.constant 128 : index
    %122 = vector.load %arg15[%c112_122, %c128_123] : memref<144x512xf32, #tpu.memory_space<vmem>>, vector<16x128xf32>
    tpu.vector_store %arg15[%c112_122, %c128_123], %121 {strides = array<i32>} : memref<144x512xf32, #tpu.memory_space<vmem>>, vector<16x128xf32>,
    %123 = vector.extract_strided_slice %118 {offsets = [0, 128], sizes = [16, 128], strides = [1, 1]} : vector<16x256xf32> to vector<16x128xf32>
    %c128_124 = arith.constant 128 : index
    %c128_125 = arith.constant 128 : index
    %124 = vector.load %arg15[%c128_124, %c128_125] : memref<144x512xf32, #tpu.memory_space<vmem>>, vector<16x128xf32>
    tpu.vector_store %arg15[%c128_124, %c128_125], %123 {strides = array<i32>} : memref<144x512xf32, #tpu.memory_space<vmem>>, vector<16x128xf32>,
    %c0_126 = arith.constant 0 : index
    %c6 = arith.constant 6 : index
    %c0_127 = arith.constant 0 : index
    %125 = vector.load %arg14[%c0_126, %c6, %c0_127] : memref<16x8x256xf32, #tpu.memory_space<vmem>>, vector<16x1x256xf32>
    %126 = vector.shape_cast %125 : vector<16x1x256xf32> to vector<16x256xf32>
    %127 = vector.extract_strided_slice %126 {offsets = [0, 0], sizes = [16, 128], strides = [1, 1]} : vector<16x256xf32> to vector<16x128xf32>
    %c96_128 = arith.constant 96 : index
    %c256_129 = arith.constant 256 : index
    %128 = vector.load %arg15[%c96_128, %c256_129] : memref<144x512xf32, #tpu.memory_space<vmem>>, vector<16x128xf32>
    tpu.vector_store %arg15[%c96_128, %c256_129], %127 {strides = array<i32>} : memref<144x512xf32, #tpu.memory_space<vmem>>, vector<16x128xf32>,
    %129 = vector.extract_strided_slice %126 {offsets = [0, 64], sizes = [16, 128], strides = [1, 1]} : vector<16x256xf32> to vector<16x128xf32>
    %c112_130 = arith.constant 112 : index
    %c256_131 = arith.constant 256 : index
    %130 = vector.load %arg15[%c112_130, %c256_131] : memref<144x512xf32, #tpu.memory_space<vmem>>, vector<16x128xf32>
    tpu.vector_store %arg15[%c112_130, %c256_131], %129 {strides = array<i32>} : memref<144x512xf32, #tpu.memory_space<vmem>>, vector<16x128xf32>,
    %131 = vector.extract_strided_slice %126 {offsets = [0, 128], sizes = [16, 128], strides = [1, 1]} : vector<16x256xf32> to vector<16x128xf32>
    %c128_132 = arith.constant 128 : index
    %c256_133 = arith.constant 256 : index
    %132 = vector.load %arg15[%c128_132, %c256_133] : memref<144x512xf32, #tpu.memory_space<vmem>>, vector<16x128xf32>
    tpu.vector_store %arg15[%c128_132, %c256_133], %131 {strides = array<i32>} : memref<144x512xf32, #tpu.memory_space<vmem>>, vector<16x128xf32>,
    %c0_134 = arith.constant 0 : index
    %c7 = arith.constant 7 : index
    %c0_135 = arith.constant 0 : index
    %133 = vector.load %arg14[%c0_134, %c7, %c0_135] : memref<16x8x256xf32, #tpu.memory_space<vmem>>, vector<16x1x256xf32>
    %134 = vector.shape_cast %133 : vector<16x1x256xf32> to vector<16x256xf32>
    %135 = vector.extract_strided_slice %134 {offsets = [0, 0], sizes = [16, 128], strides = [1, 1]} : vector<16x256xf32> to vector<16x128xf32>
    %c96_136 = arith.constant 96 : index
    %c384_137 = arith.constant 384 : index
    %136 = vector.load %arg15[%c96_136, %c384_137] : memref<144x512xf32, #tpu.memory_space<vmem>>, vector<16x128xf32>
    tpu.vector_store %arg15[%c96_136, %c384_137], %135 {strides = array<i32>} : memref<144x512xf32, #tpu.memory_space<vmem>>, vector<16x128xf32>,
    %137 = vector.extract_strided_slice %134 {offsets = [0, 64], sizes = [16, 128], strides = [1, 1]} : vector<16x256xf32> to vector<16x128xf32>
    %c112_138 = arith.constant 112 : index
    %c384_139 = arith.constant 384 : index
    %138 = vector.load %arg15[%c112_138, %c384_139] : memref<144x512xf32, #tpu.memory_space<vmem>>, vector<16x128xf32>
    tpu.vector_store %arg15[%c112_138, %c384_139], %137 {strides = array<i32>} : memref<144x512xf32, #tpu.memory_space<vmem>>, vector<16x128xf32>,
    %139 = vector.extract_strided_slice %134 {offsets = [0, 128], sizes = [16, 128], strides = [1, 1]} : vector<16x256xf32> to vector<16x128xf32>
    %c128_140 = arith.constant 128 : index
    %c384_141 = arith.constant 384 : index
    %140 = vector.load %arg15[%c128_140, %c384_141] : memref<144x512xf32, #tpu.memory_space<vmem>>, vector<16x128xf32>
    tpu.vector_store %arg15[%c128_140, %c384_141], %139 {strides = array<i32>} : memref<144x512xf32, #tpu.memory_space<vmem>>, vector<16x128xf32>,
    %c0_142 = arith.constant 0 : index
    %c0_143 = arith.constant 0 : index
    %141 = vector.load %arg15[%c0_142, %c0_143] : memref<144x512xf32, #tpu.memory_space<vmem>>, vector<144x512xf32>
    %c0_144 = arith.constant 0 : index
    %c0_145 = arith.constant 0 : index
    %142 = vector.load %arg4[%c0_144, %c0_145] : memref<512x64xf32, #tpu.memory_space<vmem>>, vector<512x64xf32>
    %cst_146 = arith.constant dense<0.000000e+00> : vector<144x64xf32>
    %143 = tpu.matmul %141, %142, %cst_146 {dimension_numbers = #tpu.dot_dimension_numbers<[1], [0], [0], [1], [0, 0, 1, 1], [], []>} : vector<144x512xf32>, vector<512x64xf32>, vector<144x64xf32> -> vector<144x64xf32>
    %c0_147 = arith.constant 0 : index
    %c0_148 = arith.constant 0 : index
    %144 = vector.load %arg5[%c0_147, %c0_148] : memref<1x64xf32, #tpu.memory_space<vmem>>, vector<1x64xf32>
    %145 = vector.broadcast %144 : vector<1x64xf32> to vector<144x64xf32>
    %146 = arith.addf %143, %145 : vector<144x64xf32>
    %cst_149 = arith.constant 0.000000e+00 : f32
    %147 = vector.broadcast %cst_149 : f32 to vector<144x64xf32>
    %148 = arith.maximumf %146, %147 : vector<144x64xf32>
    %149 = vector.extract_strided_slice %148 {offsets = [0, 0], sizes = [16, 64], strides = [1, 1]} : vector<144x64xf32> to vector<16x64xf32>
    %c0_150 = arith.constant 0 : index
    %c0_151 = arith.constant 0 : index
    %150 = vector.load %arg16[%c0_150, %c0_151] : memref<16x576xf32, #tpu.memory_space<vmem>>, vector<16x64xf32>
    tpu.vector_store %arg16[%c0_150, %c0_151], %149 {strides = array<i32>} : memref<16x576xf32, #tpu.memory_space<vmem>>, vector<16x64xf32>,
    %151 = vector.extract_strided_slice %148 {offsets = [16, 0], sizes = [16, 64], strides = [1, 1]} : vector<144x64xf32> to vector<16x64xf32>
    %c0_152 = arith.constant 0 : index
    %c64_153 = arith.constant 64 : index
    %152 = vector.load %arg16[%c0_152, %c64_153] : memref<16x576xf32, #tpu.memory_space<vmem>>, vector<16x64xf32>
    tpu.vector_store %arg16[%c0_152, %c64_153], %151 {strides = array<i32>} : memref<16x576xf32, #tpu.memory_space<vmem>>, vector<16x64xf32>,
    %153 = vector.extract_strided_slice %148 {offsets = [32, 0], sizes = [16, 64], strides = [1, 1]} : vector<144x64xf32> to vector<16x64xf32>
    %c0_154 = arith.constant 0 : index
    %c128_155 = arith.constant 128 : index
    %154 = vector.load %arg16[%c0_154, %c128_155] : memref<16x576xf32, #tpu.memory_space<vmem>>, vector<16x64xf32>
    tpu.vector_store %arg16[%c0_154, %c128_155], %153 {strides = array<i32>} : memref<16x576xf32, #tpu.memory_space<vmem>>, vector<16x64xf32>,
    %155 = vector.extract_strided_slice %148 {offsets = [48, 0], sizes = [16, 64], strides = [1, 1]} : vector<144x64xf32> to vector<16x64xf32>
    %c0_156 = arith.constant 0 : index
    %c192_157 = arith.constant 192 : index
    %156 = vector.load %arg16[%c0_156, %c192_157] : memref<16x576xf32, #tpu.memory_space<vmem>>, vector<16x64xf32>
    tpu.vector_store %arg16[%c0_156, %c192_157], %155 {strides = array<i32>} : memref<16x576xf32, #tpu.memory_space<vmem>>, vector<16x64xf32>,
    %157 = vector.extract_strided_slice %148 {offsets = [64, 0], sizes = [16, 64], strides = [1, 1]} : vector<144x64xf32> to vector<16x64xf32>
    %c0_158 = arith.constant 0 : index
    %c256_159 = arith.constant 256 : index
    %158 = vector.load %arg16[%c0_158, %c256_159] : memref<16x576xf32, #tpu.memory_space<vmem>>, vector<16x64xf32>
    tpu.vector_store %arg16[%c0_158, %c256_159], %157 {strides = array<i32>} : memref<16x576xf32, #tpu.memory_space<vmem>>, vector<16x64xf32>,
    %159 = vector.extract_strided_slice %148 {offsets = [80, 0], sizes = [16, 64], strides = [1, 1]} : vector<144x64xf32> to vector<16x64xf32>
    %c0_160 = arith.constant 0 : index
    %c320 = arith.constant 320 : index
    %160 = vector.load %arg16[%c0_160, %c320] : memref<16x576xf32, #tpu.memory_space<vmem>>, vector<16x64xf32>
    tpu.vector_store %arg16[%c0_160, %c320], %159 {strides = array<i32>} : memref<16x576xf32, #tpu.memory_space<vmem>>, vector<16x64xf32>,
    %161 = vector.extract_strided_slice %148 {offsets = [96, 0], sizes = [16, 64], strides = [1, 1]} : vector<144x64xf32> to vector<16x64xf32>
    %c0_161 = arith.constant 0 : index
    %c384_162 = arith.constant 384 : index
    %162 = vector.load %arg16[%c0_161, %c384_162] : memref<16x576xf32, #tpu.memory_space<vmem>>, vector<16x64xf32>
    tpu.vector_store %arg16[%c0_161, %c384_162], %161 {strides = array<i32>} : memref<16x576xf32, #tpu.memory_space<vmem>>, vector<16x64xf32>,
    %163 = vector.extract_strided_slice %148 {offsets = [112, 0], sizes = [16, 64], strides = [1, 1]} : vector<144x64xf32> to vector<16x64xf32>
    %c0_163 = arith.constant 0 : index
    %c448 = arith.constant 448 : index
    %164 = vector.load %arg16[%c0_163, %c448] : memref<16x576xf32, #tpu.memory_space<vmem>>, vector<16x64xf32>
    tpu.vector_store %arg16[%c0_163, %c448], %163 {strides = array<i32>} : memref<16x576xf32, #tpu.memory_space<vmem>>, vector<16x64xf32>,
    %165 = vector.extract_strided_slice %148 {offsets = [128, 0], sizes = [16, 64], strides = [1, 1]} : vector<144x64xf32> to vector<16x64xf32>
    %c0_164 = arith.constant 0 : index
    %c512 = arith.constant 512 : index
    %166 = vector.load %arg16[%c0_164, %c512] : memref<16x576xf32, #tpu.memory_space<vmem>>, vector<16x64xf32>
    tpu.vector_store %arg16[%c0_164, %c512], %165 {strides = array<i32>} : memref<16x576xf32, #tpu.memory_space<vmem>>, vector<16x64xf32>,
    %c0_165 = arith.constant 0 : index
    %c0_166 = arith.constant 0 : index
    %167 = vector.load %arg16[%c0_165, %c0_166] : memref<16x576xf32, #tpu.memory_space<vmem>>, vector<16x576xf32>
    %c0_167 = arith.constant 0 : index
    %c0_168 = arith.constant 0 : index
    %168 = vector.load %arg6[%c0_167, %c0_168] : memref<576x64xf32, #tpu.memory_space<vmem>>, vector<576x64xf32>
    %cst_169 = arith.constant dense<0.000000e+00> : vector<16x64xf32>
    %169 = tpu.matmul %167, %168, %cst_169 {dimension_numbers = #tpu.dot_dimension_numbers<[1], [0], [0], [1], [0, 0, 1, 1], [], []>} : vector<16x576xf32>, vector<576x64xf32>, vector<16x64xf32> -> vector<16x64xf32>
    %c0_170 = arith.constant 0 : index
    %c0_171 = arith.constant 0 : index
    %170 = vector.load %arg7[%c0_170, %c0_171] : memref<1x64xf32, #tpu.memory_space<vmem>>, vector<1x64xf32>
    %171 = vector.broadcast %170 : vector<1x64xf32> to vector<16x64xf32>
    %172 = arith.addf %169, %171 : vector<16x64xf32>
    %cst_172 = arith.constant 0.000000e+00 : f32
    %173 = vector.broadcast %cst_172 : f32 to vector<16x64xf32>
    %174 = arith.maximumf %172, %173 : vector<16x64xf32>
    %c0_173 = arith.constant 0 : index
    %c0_174 = arith.constant 0 : index
    %175 = vector.load %arg8[%c0_173, %c0_174] : memref<64x256xf32, #tpu.memory_space<vmem>>, vector<64x256xf32>
    %cst_175 = arith.constant dense<0.000000e+00> : vector<16x256xf32>
    %176 = tpu.matmul %174, %175, %cst_175 {dimension_numbers = #tpu.dot_dimension_numbers<[1], [0], [0], [1], [0, 0, 1, 1], [], []>} : vector<16x64xf32>, vector<64x256xf32>, vector<16x256xf32> -> vector<16x256xf32>
    %c0_176 = arith.constant 0 : index
    %c0_177 = arith.constant 0 : index
    %177 = vector.load %arg9[%c0_176, %c0_177] : memref<1x256xf32, #tpu.memory_space<vmem>>, vector<1x256xf32>
    %178 = vector.broadcast %177 : vector<1x256xf32> to vector<16x256xf32>
    %179 = arith.addf %176, %178 : vector<16x256xf32>
    %cst_178 = arith.constant 0.000000e+00 : f32
    %180 = vector.broadcast %cst_178 : f32 to vector<16x256xf32>
    %181 = arith.maximumf %179, %180 : vector<16x256xf32>
    %c0_179 = arith.constant 0 : index
    %c0_180 = arith.constant 0 : index
    %182 = vector.load %arg10[%c0_179, %c0_180] : memref<256x128xf32, #tpu.memory_space<vmem>>, vector<256x128xf32>
    %cst_181 = arith.constant dense<0.000000e+00> : vector<16x128xf32>
    %183 = tpu.matmul %181, %182, %cst_181 {dimension_numbers = #tpu.dot_dimension_numbers<[1], [0], [0], [1], [0, 0, 1, 1], [], []>} : vector<16x256xf32>, vector<256x128xf32>, vector<16x128xf32> -> vector<16x128xf32>
    %c0_182 = arith.constant 0 : index
    %c0_183 = arith.constant 0 : index
    %184 = vector.load %arg11[%c0_182, %c0_183] : memref<1x128xf32, #tpu.memory_space<vmem>>, vector<1x128xf32>
    %185 = vector.broadcast %184 : vector<1x128xf32> to vector<16x128xf32>
    %186 = arith.addf %183, %185 : vector<16x128xf32>
    %c0_184 = arith.constant 0 : index
    %c0_185 = arith.constant 0 : index
    %c0_186 = arith.constant 0 : index
    %187 = vector.load %arg12[%c0_184, %c0_185, %c0_186] : memref<1x16x128xf32, #tpu.memory_space<vmem>>, vector<1x16x128xf32>
    %188 = vector.shape_cast %187 : vector<1x16x128xf32> to vector<16x128xf32>
    %189 = vector.shape_cast %186 : vector<16x128xf32> to vector<1x16x128xf32>
    tpu.vector_store %arg12[%c0_184, %c0_185, %c0_186], %189 {strides = array<i32>} : memref<1x16x128xf32, #tpu.memory_space<vmem>>, vector<1x16x128xf32>,
    return
  }
  func.func @transform_0(%arg0: i32) -> (i32, i32, i32, i32) {
    %c0_i32 = arith.constant 0 : i32
    %c0_i32_0 = arith.constant 0 : i32
    %c0_i32_1 = arith.constant 0 : i32
    %c0_i32_2 = arith.constant 0 : i32
    return %arg0, %c0_i32, %c0_i32_0, %c0_i32_1 : i32, i32, i32, i32
  }
  func.func @transform_1(%arg0: i32) -> (i32, i32) {
    %c0_i32 = arith.constant 0 : i32
    %c0_i32_0 = arith.constant 0 : i32
    %c0_i32_1 = arith.constant 0 : i32
    return %c0_i32, %c0_i32_0 : i32, i32
  }
  func.func @transform_2(%arg0: i32) -> (i32, i32) {
    %c0_i32 = arith.constant 0 : i32
    %c0_i32_0 = arith.constant 0 : i32
    %c0_i32_1 = arith.constant 0 : i32
    return %c0_i32, %c0_i32_0 : i32, i32
  }
  func.func @transform_3(%arg0: i32) -> (i32, i32) {
    %c0_i32 = arith.constant 0 : i32
    %c0_i32_0 = arith.constant 0 : i32
    %c0_i32_1 = arith.constant 0 : i32
    return %c0_i32, %c0_i32_0 : i32, i32
  }
  func.func @transform_4(%arg0: i32) -> (i32, i32) {
    %c0_i32 = arith.constant 0 : i32
    %c0_i32_0 = arith.constant 0 : i32
    %c0_i32_1 = arith.constant 0 : i32
    return %c0_i32, %c0_i32_0 : i32, i32
  }
  func.func @transform_5(%arg0: i32) -> (i32, i32) {
    %c0_i32 = arith.constant 0 : i32
    %c0_i32_0 = arith.constant 0 : i32
    %c0_i32_1 = arith.constant 0 : i32
    return %c0_i32, %c0_i32_0 : i32, i32
  }
  func.func @transform_6(%arg0: i32) -> (i32, i32) {
    %c0_i32 = arith.constant 0 : i32
    %c0_i32_0 = arith.constant 0 : i32
    %c0_i32_1 = arith.constant 0 : i32
    return %c0_i32, %c0_i32_0 : i32, i32
  }
  func.func @transform_7(%arg0: i32) -> (i32, i32) {
    %c0_i32 = arith.constant 0 : i32
    %c0_i32_0 = arith.constant 0 : i32
    %c0_i32_1 = arith.constant 0 : i32
    return %c0_i32, %c0_i32_0 : i32, i32
  }
  func.func @transform_8(%arg0: i32) -> (i32, i32) {
    %c0_i32 = arith.constant 0 : i32
    %c0_i32_0 = arith.constant 0 : i32
    %c0_i32_1 = arith.constant 0 : i32
    return %c0_i32, %c0_i32_0 : i32, i32
  }
  func.func @transform_9(%arg0: i32) -> (i32, i32) {
    %c0_i32 = arith.constant 0 : i32
    %c0_i32_0 = arith.constant 0 : i32
    %c0_i32_1 = arith.constant 0 : i32
    return %c0_i32, %c0_i32_0 : i32, i32
  }
  func.func @transform_10(%arg0: i32) -> (i32, i32) {
    %c0_i32 = arith.constant 0 : i32
    %c0_i32_0 = arith.constant 0 : i32
    %c0_i32_1 = arith.constant 0 : i32
    return %c0_i32, %c0_i32_0 : i32, i32
  }
  func.func @transform_11(%arg0: i32) -> (i32, i32, i32) {
    %c0_i32 = arith.constant 0 : i32
    %c0_i32_0 = arith.constant 0 : i32
    %c0_i32_1 = arith.constant 0 : i32
    return %arg0, %c0_i32, %c0_i32_0 : i32, i32, i32
  }
}

</mosaic_0001>

<llo_original>
// kernel: atari_cnn_forward.1
$region0: #{atari_cnn_forward.1}
  #allocation0 [shape = 'u32[]', space=smem, size = 0x4, offset = 0x4, fixed_abs, tag = 'smem constant byte address 0x4 - core index']
  #allocation1 [shape = 'u32[144,128]{1,0:T(1,128)}', space=vmem, size = 0x12000, scoped, tag = 'internal scratch']
  #allocation2 [shape = 'f32[1024,256]{1,0:T(8,128)}', space=vmem, size = 0x100000, scoped, tag = 'scratch operand']
  #allocation3 [shape = 'f32[16,8,256]{2,1,0:T(8,128)}', space=vmem, size = 0x20000, scoped, tag = 'scratch operand']
  #allocation4 [shape = 'f32[144,512]{1,0:T(8,128)}', space=vmem, size = 0x48000, scoped, tag = 'scratch operand']
  #allocation5 [shape = 'f32[16,576]{1,0:T(8,128)}', space=vmem, size = 0xa000, scoped, tag = 'scratch operand']
  %s0 = inlined_call_operand.vmem [shape: f32[32,9,9,64], index: 0, kind: input, shape index: {}]
  %s1 = inlined_call_operand.vmem [shape: f32[256,32], index: 1, kind: input, shape index: {}]
  %s2 = inlined_call_operand.vmem [shape: f32[1,32], index: 2, kind: input, shape index: {}]
  %s3 = inlined_call_operand.vmem [shape: f32[512,64], index: 3, kind: input, shape index: {}]
  %s4 = inlined_call_operand.vmem [shape: f32[1,64], index: 4, kind: input, shape index: {}]
  %s5 = inlined_call_operand.vmem [shape: f32[576,64], index: 5, kind: input, shape index: {}]
  %s6 = inlined_call_operand.vmem [shape: f32[1,64], index: 6, kind: input, shape index: {}]
  %s7 = inlined_call_operand.vmem [shape: f32[64,256], index: 7, kind: input, shape index: {}]
  %s8 = inlined_call_operand.vmem [shape: f32[1,256], index: 8, kind: input, shape index: {}]
  %s9 = inlined_call_operand.vmem [shape: f32[256,128], index: 9, kind: input, shape index: {}]
  %s10 = inlined_call_operand.vmem [shape: f32[1,128], index: 10, kind: input, shape index: {}]
  %s11 = inlined_call_operand.vmem [shape: f32[2,16,128], index: 11, kind: output, shape index: {}]
  %s12 = sld [smem:[#allocation0]]
  $region77: #{atari_cnn_forward.1} parent=0
    _
  %s14 = ssub.s32 1, %s12
  %s15 = scalar_select 0, %s14, %s12
  loop: start=0, step=1, limit=4
  $region2: #{atari_cnn_forward.1} parent=0 // loop_pre_header
    _
  $region3: #{atari_cnn_forward.1} parent=0 // loop_header
    %s17 = sphi 0, %s21
    %p18 = scmp.ge.s32.totalorder %s17, 4
    %s27 = sphi 0, %s29
    %s30 = sphi 0, %s27
    %s31 = sphi 0, %s30
    %s47 = sphi 0, %s31
    %s51 = sphi 0, %s51
    %s53 = sphi 0, %s51
    %s54 = sphi 0, %s53
    %s68 = sphi 0, %s54
    %s72 = sphi 0, %s72
    %s74 = sphi 0, %s72
    %s75 = sphi 0, %s74
    %s89 = sphi 0, %s75
    %s93 = sphi 0, %s93
    %s95 = sphi 0, %s93
    %s96 = sphi 0, %s95
    %s110 = sphi 0, %s96
    %s114 = sphi 0, %s114
    %s116 = sphi 0, %s114
    %s117 = sphi 0, %s116
    %s131 = sphi 0, %s117
    %s135 = sphi 0, %s135
    %s137 = sphi 0, %s135
    %s138 = sphi 0, %s137
    %s152 = sphi 0, %s138
    %s156 = sphi 0, %s156
    %s158 = sphi 0, %s156
    %s159 = sphi 0, %s158
    %s173 = sphi 0, %s159
    %s177 = sphi 0, %s177
    %s179 = sphi 0, %s177
    %s180 = sphi 0, %s179
    %s194 = sphi 0, %s180
    %s198 = sphi 0, %s198
    %s200 = sphi 0, %s198
    %s201 = sphi 0, %s200
    %s215 = sphi 0, %s201
    %s219 = sphi 0, %s219
    %s221 = sphi 0, %s219
    %s222 = sphi 0, %s221
    %s236 = sphi 0, %s222
    %s240 = sphi 0, %s240
    %s242 = sphi 0, %s240
    %s243 = sphi 0, %s242
    %s257 = sphi 0, %s243
    %s263 = sphi 0, %s265
    %s266 = sphi 0, %s263
    %s267 = sphi 0, %s266
    %s283 = sphi 0, %s267
  $region4: #{atari_cnn_forward.1} parent=0 // loop_header_branch
    %20 = sbr.rel (%p18) target = $region8
  $region5: #{atari_cnn_forward.1} parent=0 // loop_body
    %s22 = ssub.s32 %s17, 1
    %s23 = ssub.s32 %s17, 2
    %s24 = sadd.s32 %s17, 1
    %s25 = ssub.s32 %s17, %s24
    %p26 = scmp.eq.s32.totalorder %s25, 0
    %s28 = sadd.s32 %s27, 1
    %s29 = scalar_select %p26, %s27, %s28
    %p32 = pneg %p26
    %p33 = scmp.eq.s32.totalorder %s17, 1
    %p34 = por %p32, %p33
    %p35 = scmp.ne.s32.totalorder %s27, %s30
    %p36 = scmp.eq.s32.totalorder %s17, 0
    %p37 = por %p35, %p36
    %p38 = scmp.ne.s32.totalorder %s27, %s30
    %p39 = scmp.eq.s32.totalorder %s22, 1
    %p40 = por %p38, %p39
    %p41 = scmp.ne.s32.totalorder %s30, %s31
    %p42 = scmp.eq.s32.totalorder %s22, 0
    %p43 = por %p41, %p42
    %p44 = scmp.ne.s32.totalorder %s30, %s31
    %p45 = scmp.eq.s32.totalorder %s23, 1
    %p46 = por %p44, %p45
    %p48 = scmp.ne.s32.totalorder %s31, %s47
    %p49 = scmp.eq.s32.totalorder %s23, 0
    %p50 = por %p48, %p49
    %s52 = sadd.s32 %s51, 1
    %p55 = scmp.eq.s32.totalorder %s17, 1
    %p56 = scmp.ne.s32.totalorder %s51, %s53
    %p57 = scmp.eq.s32.totalorder %s17, 0
    %p58 = por %p56, %p57
    %p59 = scmp.ne.s32.totalorder %s51, %s53
    %p60 = scmp.eq.s32.totalorder %s22, 1
    %p61 = por %p59, %p60
    %p62 = scmp.ne.s32.totalorder %s53, %s54
    %p63 = scmp.eq.s32.totalorder %s22, 0
    %p64 = por %p62, %p63
    %p65 = scmp.ne.s32.totalorder %s53, %s54
    %p66 = scmp.eq.s32.totalorder %s23, 1
    %p67 = por %p65, %p66
    %p69 = scmp.ne.s32.totalorder %s54, %s68
    %p70 = scmp.eq.s32.totalorder %s23, 0
    %p71 = por %p69, %p70
    %s73 = sadd.s32 %s72, 1
    %p76 = scmp.eq.s32.totalorder %s17, 1
    %p77 = scmp.ne.s32.totalorder %s72, %s74
    %p78 = scmp.eq.s32.totalorder %s17, 0
    %p79 = por %p77, %p78
    %p80 = scmp.ne.s32.totalorder %s72, %s74
    %p81 = scmp.eq.s32.totalorder %s22, 1
    %p82 = por %p80, %p81
    %p83 = scmp.ne.s32.totalorder %s74, %s75
    %p84 = scmp.eq.s32.totalorder %s22, 0
    %p85 = por %p83, %p84
    %p86 = scmp.ne.s32.totalorder %s74, %s75
    %p87 = scmp.eq.s32.totalorder %s23, 1
    %p88 = por %p86, %p87
    %p90 = scmp.ne.s32.totalorder %s75, %s89
    %p91 = scmp.eq.s32.totalorder %s23, 0
    %p92 = por %p90, %p91
    %s94 = sadd.s32 %s93, 1
    %p97 = scmp.eq.s32.totalorder %s17, 1
    %p98 = scmp.ne.s32.totalorder %s93, %s95
    %p99 = scmp.eq.s32.totalorder %s17, 0
    %p100 = por %p98, %p99
    %p101 = scmp.ne.s32.totalorder %s93, %s95
    %p102 = scmp.eq.s32.totalorder %s22, 1
    %p103 = por %p101, %p102
    %p104 = scmp.ne.s32.totalorder %s95, %s96
    %p105 = scmp.eq.s32.totalorder %s22, 0
    %p106 = por %p104, %p105
    %p107 = scmp.ne.s32.totalorder %s95, %s96
    %p108 = scmp.eq.s32.totalorder %s23, 1
    %p109 = por %p107, %p108
    %p111 = scmp.ne.s32.totalorder %s96, %s110
    %p112 = scmp.eq.s32.totalorder %s23, 0
    %p113 = por %p111, %p112
    %s115 = sadd.s32 %s114, 1
    %p118 = scmp.eq.s32.totalorder %s17, 1
    %p119 = scmp.ne.s32.totalorder %s114, %s116
    %p120 = scmp.eq.s32.totalorder %s17, 0
    %p121 = por %p119, %p120
    %p122 = scmp.ne.s32.totalorder %s114, %s116
    %p123 = scmp.eq.s32.totalorder %s22, 1
    %p124 = por %p122, %p123
    %p125 = scmp.ne.s32.totalorder %s116, %s117
    %p126 = scmp.eq.s32.totalorder %s22, 0
    %p127 = por %p125, %p126
    %p128 = scmp.ne.s32.totalorder %s116, %s117
    %p129 = scmp.eq.s32.totalorder %s23, 1
    %p130 = por %p128, %p129
    %p132 = scmp.ne.s32.totalorder %s117, %s131
    %p133 = scmp.eq.s32.totalorder %s23, 0
    %p134 = por %p132, %p133
    %s136 = sadd.s32 %s135, 1
    %p139 = scmp.eq.s32.totalorder %s17, 1
    %p140 = scmp.ne.s32.totalorder %s135, %s137
    %p141 = scmp.eq.s32.totalorder %s17, 0
    %p142 = por %p140, %p141
    %p143 = scmp.ne.s32.totalorder %s135, %s137
    %p144 = scmp.eq.s32.totalorder %s22, 1
    %p145 = por %p143, %p144
    %p146 = scmp.ne.s32.totalorder %s137, %s138
    %p147 = scmp.eq.s32.totalorder %s22, 0
    %p148 = por %p146, %p147
    %p149 = scmp.ne.s32.totalorder %s137, %s138
    %p150 = scmp.eq.s32.totalorder %s23, 1
    %p151 = por %p149, %p150
    %p153 = scmp.ne.s32.totalorder %s138, %s152
    %p154 = scmp.eq.s32.totalorder %s23, 0
    %p155 = por %p153, %p154
    %s157 = sadd.s32 %s156, 1
    %p160 = scmp.eq.s32.totalorder %s17, 1
    %p161 = scmp.ne.s32.totalorder %s156, %s158
    %p162 = scmp.eq.s32.totalorder %s17, 0
    %p163 = por %p161, %p162
    %p164 = scmp.ne.s32.totalorder %s156, %s158
    %p165 = scmp.eq.s32.totalorder %s22, 1
    %p166 = por %p164, %p165
    %p167 = scmp.ne.s32.totalorder %s158, %s159
    %p168 = scmp.eq.s32.totalorder %s22, 0
    %p169 = por %p167, %p168
    %p170 = scmp.ne.s32.totalorder %s158, %s159
    %p171 = scmp.eq.s32.totalorder %s23, 1
    %p172 = por %p170, %p171
    %p174 = scmp.ne.s32.totalorder %s159, %s173
    %p175 = scmp.eq.s32.totalorder %s23, 0
    %p176 = por %p174, %p175
    %s178 = sadd.s32 %s177, 1
    %p181 = scmp.eq.s32.totalorder %s17, 1
    %p182 = scmp.ne.s32.totalorder %s177, %s179
    %p183 = scmp.eq.s32.totalorder %s17, 0
    %p184 = por %p182, %p183
    %p185 = scmp.ne.s32.totalorder %s177, %s179
    %p186 = scmp.eq.s32.totalorder %s22, 1
    %p187 = por %p185, %p186
    %p188 = scmp.ne.s32.totalorder %s179, %s180
    %p189 = scmp.eq.s32.totalorder %s22, 0
    %p190 = por %p188, %p189
    %p191 = scmp.ne.s32.totalorder %s179, %s180
    %p192 = scmp.eq.s32.totalorder %s23, 1
    %p193 = por %p191, %p192
    %p195 = scmp.ne.s32.totalorder %s180, %s194
    %p196 = scmp.eq.s32.totalorder %s23, 0
    %p197 = por %p195, %p196
    %s199 = sadd.s32 %s198, 1
    %p202 = scmp.eq.s32.totalorder %s17, 1
    %p203 = scmp.ne.s32.totalorder %s198, %s200
    %p204 = scmp.eq.s32.totalorder %s17, 0
    %p205 = por %p203, %p204
    %p206 = scmp.ne.s32.totalorder %s198, %s200
    %p207 = scmp.eq.s32.totalorder %s22, 1
    %p208 = por %p206, %p207
    %p209 = scmp.ne.s32.totalorder %s200, %s201
    %p210 = scmp.eq.s32.totalorder %s22, 0
    %p211 = por %p209, %p210
    %p212 = scmp.ne.s32.totalorder %s200, %s201
    %p213 = scmp.eq.s32.totalorder %s23, 1
    %p214 = por %p212, %p213
    %p216 = scmp.ne.s32.totalorder %s201, %s215
    %p217 = scmp.eq.s32.totalorder %s23, 0
    %p218 = por %p216, %p217
    %s220 = sadd.s32 %s219, 1
    %p223 = scmp.eq.s32.totalorder %s17, 1
    %p224 = scmp.ne.s32.totalorder %s219, %s221
    %p225 = scmp.eq.s32.totalorder %s17, 0
    %p226 = por %p224, %p225
    %p227 = scmp.ne.s32.totalorder %s219, %s221
    %p228 = scmp.eq.s32.totalorder %s22, 1
    %p229 = por %p227, %p228
    %p230 = scmp.ne.s32.totalorder %s221, %s222
    %p231 = scmp.eq.s32.totalorder %s22, 0
    %p232 = por %p230, %p231
    %p233 = scmp.ne.s32.totalorder %s221, %s222
    %p234 = scmp.eq.s32.totalorder %s23, 1
    %p235 = por %p233, %p234
    %p237 = scmp.ne.s32.totalorder %s222, %s236
    %p238 = scmp.eq.s32.totalorder %s23, 0
    %p239 = por %p237, %p238
    %s241 = sadd.s32 %s240, 1
    %p244 = scmp.eq.s32.totalorder %s17, 1
    %p245 = scmp.ne.s32.totalorder %s240, %s242
    %p246 = scmp.eq.s32.totalorder %s17, 0
    %p247 = por %p245, %p246
    %p248 = scmp.ne.s32.totalorder %s240, %s242
    %p249 = scmp.eq.s32.totalorder %s22, 1
    %p250 = por %p248, %p249
    %p251 = scmp.ne.s32.totalorder %s242, %s243
    %p252 = scmp.eq.s32.totalorder %s22, 0
    %p253 = por %p251, %p252
    %p254 = scmp.ne.s32.totalorder %s242, %s243
    %p255 = scmp.eq.s32.totalorder %s23, 1
    %p256 = por %p254, %p255
    %p258 = scmp.ne.s32.totalorder %s243, %s257
    %p259 = scmp.eq.s32.totalorder %s23, 0
    %p260 = por %p258, %p259
    %s261 = ssub.s32 %s17, %s24
    %p262 = scmp.eq.s32.totalorder %s261, 0
    %s264 = sadd.s32 %s263, 1
    %s265 = scalar_select %p262, %s263, %s264
    %p268 = pneg %p262
    %p269 = scmp.eq.s32.totalorder %s17, 1
    %p270 = por %p268, %p269
    %p271 = scmp.ne.s32.totalorder %s263, %s266
    %p272 = scmp.eq.s32.totalorder %s17, 0
    %p273 = por %p271, %p272
    %p274 = scmp.ne.s32.totalorder %s263, %s266
    %p275 = scmp.eq.s32.totalorder %s22, 1
    %p276 = por %p274, %p275
    %p277 = scmp.ne.s32.totalorder %s266, %s267
    %p278 = scmp.eq.s32.totalorder %s22, 0
    %p279 = por %p277, %p278
    %p280 = scmp.ne.s32.totalorder %s266, %s267
    %p281 = scmp.eq.s32.totalorder %s23, 1
    %p282 = por %p280, %p281
    %p284 = scmp.ne.s32.totalorder %s267, %s283
    %p285 = scmp.eq.s32.totalorder %s23, 0
    %p286 = por %p284, %p285
    %p287 = scmp.le.s32.totalorder 1, %s17
    %p288 = scmp.lt.s32.totalorder %s17, 3
    %p289 = pnand %p287, %p288
    %p290 = pneg %p289
    // Predicated region
    $region9: #{atari_cnn_forward.1} parent=5 // pred_check
      _
    $region10: #{atari_cnn_forward.1} parent=5 // pred_check_branch
      %292 = sbr.rel (%p289) target = $region12
    $region11: #{atari_cnn_forward.1} parent=5 // pred_region
      %s293 = ssub.s32 %s17, 1
      // Predicated region
      $region13: #{atari_cnn_forward.1} parent=11 // pred_check
        %p294 = pneg %p64
      $region14: #{atari_cnn_forward.1} parent=11 // pred_check_branch
        %296 = sbr.rel (%p294) target = $region16
      $region15: #{atari_cnn_forward.1} parent=11 // pred_region
        _
      $region16: #{atari_cnn_forward.1} parent=11 // pred_fallthru
        _
      // Predicated region
      $region17: #{atari_cnn_forward.1} parent=11 // pred_check
        %p297 = pneg %p85
      $region18: #{atari_cnn_forward.1} parent=11 // pred_check_branch
        %299 = sbr.rel (%p297) target = $region20
      $region19: #{atari_cnn_forward.1} parent=11 // pred_region
        _
      $region20: #{atari_cnn_forward.1} parent=11 // pred_fallthru
        _
      // Predicated region
      $region21: #{atari_cnn_forward.1} parent=11 // pred_check
        %p300 = pneg %p106
      $region22: #{atari_cnn_forward.1} parent=11 // pred_check_branch
        %302 = sbr.rel (%p300) target = $region24
      $region23: #{atari_cnn_forward.1} parent=11 // pred_region
        _
      $region24: #{atari_cnn_forward.1} parent=11 // pred_fallthru
        _
      // Predicated region
      $region25: #{atari_cnn_forward.1} parent=11 // pred_check
        %p303 = pneg %p127
      $region26: #{atari_cnn_forward.1} parent=11 // pred_check_branch
        %305 = sbr.rel (%p303) target = $region28
      $region27: #{atari_cnn_forward.1} parent=11 // pred_region
        _
      $region28: #{atari_cnn_forward.1} parent=11 // pred_fallthru
        _
      // Predicated region
      $region29: #{atari_cnn_forward.1} parent=11 // pred_check
        %p306 = pneg %p148
      $region30: #{atari_cnn_forward.1} parent=11 // pred_check_branch
        %308 = sbr.rel (%p306) target = $region32
      $region31: #{atari_cnn_forward.1} parent=11 // pred_region
        _
      $region32: #{atari_cnn_forward.1} parent=11 // pred_fallthru
        _
      // Predicated region
      $region33: #{atari_cnn_forward.1} parent=11 // pred_check
        %p309 = pneg %p169
      $region34: #{atari_cnn_forward.1} parent=11 // pred_check_branch
        %311 = sbr.rel (%p309) target = $region36
      $region35: #{atari_cnn_forward.1} parent=11 // pred_region
        _
      $region36: #{atari_cnn_forward.1} parent=11 // pred_fallthru
        _
      // Predicated region
      $region37: #{atari_cnn_forward.1} parent=11 // pred_check
        %p312 = pneg %p190
      $region38: #{atari_cnn_forward.1} parent=11 // pred_check_branch
        %314 = sbr.rel (%p312) target = $region40
      $region39: #{atari_cnn_forward.1} parent=11 // pred_region
        _
      $region40: #{atari_cnn_forward.1} parent=11 // pred_fallthru
        _
      // Predicated region
      $region41: #{atari_cnn_forward.1} parent=11 // pred_check
        %p315 = pneg %p211
      $region42: #{atari_cnn_forward.1} parent=11 // pred_check_branch
        %317 = sbr.rel (%p315) target = $region44
      $region43: #{atari_cnn_forward.1} parent=11 // pred_region
        _
      $region44: #{atari_cnn_forward.1} parent=11 // pred_fallthru
        _
      // Predicated region
      $region45: #{atari_cnn_forward.1} parent=11 // pred_check
        %p318 = pneg %p232
      $region46: #{atari_cnn_forward.1} parent=11 // pred_check_branch
        %320 = sbr.rel (%p318) target = $region48
      $region47: #{atari_cnn_forward.1} parent=11 // pred_region
        _
      $region48: #{atari_cnn_forward.1} parent=11 // pred_fallthru
        _
      // Predicated region
      $region49: #{atari_cnn_forward.1} parent=11 // pred_check
        %p321 = pneg %p253
      $region50: #{atari_cnn_forward.1} parent=11 // pred_check_branch
        %323 = sbr.rel (%p321) target = $region52
      $region51: #{atari_cnn_forward.1} parent=11 // pred_region
        _
      $region52: #{atari_cnn_forward.1} parent=11 // pred_fallthru
        _
    $region12: #{atari_cnn_forward.1} parent=5 // pred_fallthru
      _
    %p324 = scmp.lt.s32.totalorder %s17, 2
    // Predicated region
    $region53: #{atari_cnn_forward.1} parent=5 // pred_check
      %p325 = pneg %p324
    $region54: #{atari_cnn_forward.1} parent=5 // pred_check_branch
      %327 = sbr.rel (%p325) target = $region56
    $region55: #{atari_cnn_forward.1} parent=5 // pred_region
      // Predicated region
      $region57: #{atari_cnn_forward.1} parent=55 // pred_check
        %p328 = pneg %p37
      $region58: #{atari_cnn_forward.1} parent=55 // pred_check_branch
        %330 = sbr.rel (%p328) target = $region60
      $region59: #{atari_cnn_forward.1} parent=55 // pred_region
        %s331 = smul.u32 16, %s17
        %p332 = scmp.lt.s32.totalorder %s331, 31
        %s333 = scalar_select %p332, %s331, 31
        %s334 = smul.addr %s333, 18
        %s335 = smul.addr %s334, 8
        %s336 = scalar_lea.vmem %s0, %s335
        %s337 = smul.u32 16, %s17
      $region60: #{atari_cnn_forward.1} parent=55 // pred_fallthru
        _
    $region56: #{atari_cnn_forward.1} parent=5 // pred_fallthru
      _
    %p338 = scmp.le.s32.totalorder 1, %s17
    %p339 = scmp.lt.s32.totalorder %s17, 3
    %p340 = pnand %p338, %p339
    %p341 = pneg %p340
    // Predicated region
    $region61: #{atari_cnn_forward.1} parent=5 // pred_check
      _
    $region62: #{atari_cnn_forward.1} parent=5 // pred_check_branch
      %343 = sbr.rel (%p340) target = $region64
    $region63: #{atari_cnn_forward.1} parent=5 // pred_region
      %s344 = ssub.s32 %s17, 1
      %s345 = smul.u32 16, %s22
      %p346 = scmp.lt.s32.totalorder %s345, 31
      %s347 = scalar_select %p346, %s345, 31
      %s348 = smul.addr %s347, 18
      %s349 = smul.addr %s348, 8
      %s350 = scalar_lea.vmem %s0, %s349
      %p351 = pneg %p43
      %p352 = pneg %p40
      %p353 = pneg %p64
      %p354 = pneg %p61
      %p355 = pneg %p85
      %p356 = pneg %p82
      %p357 = pneg %p106
      %p358 = pneg %p103
      %p359 = pneg %p127
      %p360 = pneg %p124
      %p361 = pneg %p148
      %p362 = pneg %p145
      %p363 = pneg %p169
      %p364 = pneg %p166
      %p365 = pneg %p190
      %p366 = pneg %p187
      %p367 = pneg %p211
      %p368 = pneg %p208
      %p369 = pneg %p232
      %p370 = pneg %p229
      %p371 = pneg %p253
      %p372 = pneg %p250
      %p373 = pneg %p279
      %p374 = pneg %p276
      %p375 = scmp.lt.s32.totalorder %s22, 1
      %s376 = scalar_select %p375, %s22, 1
      %s377 = smul.addr %s376, 2
      %s378 = smul.addr %s377, 8
      %s379 = scalar_lea.vmem %s11, %s378
      %s380 = smul.u32 16, %s22
      %p381 = scmp.lt.s32.totalorder %s380, 31
      %s382 = scalar_select %p381, %s380, 31
      %s383 = smul.addr %s382, 18
      %s384 = smul.addr %s383, 8
      %s385 = scalar_lea.vmem %s0, %s384
      %s386 = smul.u32 16, %s22
      %p387 = scmp.lt.s32.totalorder %s22, 1
      %s388 = scalar_select %p387, %s22, 1
      %s389 = smul.addr %s388, 2
      %s390 = smul.addr %s389, 8
      %s391 = scalar_lea.vmem %s11, %s390
      %v392 = vld [vmem:[%s385] sm:$0xff]
      %v393 = vld [vmem:[%s385 + $0x10] sm:$0xff]
      %v394 = vld [vmem:[%s385 + $0x20] sm:$0xff]
      %v395 = vld [vmem:[%s385 + $0x30] sm:$0xff]
      %v396 = vld [vmem:[%s385 + $0x40] sm:$0xff]
      %v397 = vld [vmem:[%s385 + $0x50] sm:$0xff]
      %v398 = vld [vmem:[%s385 + $0x60] sm:$0xff]
      %v399 = vld [vmem:[%s385 + $0x70] sm:$0xff]
      %v400 = vld [vmem:[%s385 + $0x90] sm:$0xff]
      %v401 = vld [vmem:[%s385 + $0xa0] sm:$0xff]
      %v402 = vld [vmem:[%s385 + $0xb0] sm:$0xff]
      %v403 = vld [vmem:[%s385 + $0xc0] sm:$0xff]
      %v404 = vld [vmem:[%s385 + $0xd0] sm:$0xff]
      %v405 = vld [vmem:[%s385 + $0xe0] sm:$0xff]
      %v406 = vld [vmem:[%s385 + $0xf0] sm:$0xff]
      %v407 = vld [vmem:[%s385 + $0x100] sm:$0xff]
      %v408 = vld [vmem:[%s385 + $0x120] sm:$0xff]
      %v409 = vld [vmem:[%s385 + $0x130] sm:$0xff]
      %v410 = vld [vmem:[%s385 + $0x140] sm:$0xff]
      %v411 = vld [vmem:[%s385 + $0x150] sm:$0xff]
      %v412 = vld [vmem:[%s385 + $0x160] sm:$0xff]
      %v413 = vld [vmem:[%s385 + $0x170] sm:$0xff]
      %v414 = vld [vmem:[%s385 + $0x180] sm:$0xff]
      %v415 = vld [vmem:[%s385 + $0x190] sm:$0xff]
      %v416 = vld [vmem:[%s385 + $0x1b0] sm:$0xff]
      %v417 = vld [vmem:[%s385 + $0x1c0] sm:$0xff]
      %v418 = vld [vmem:[%s385 + $0x1d0] sm:$0xff]
      %v419 = vld [vmem:[%s385 + $0x1e0] sm:$0xff]
      %v420 = vld [vmem:[%s385 + $0x1f0] sm:$0xff]
      %v421 = vld [vmem:[%s385 + $0x200] sm:$0xff]
      %v422 = vld [vmem:[%s385 + $0x210] sm:$0xff]
      %v423 = vld [vmem:[%s385 + $0x220] sm:$0xff]
      %v424 = vld [vmem:[%s385 + $0x240] sm:$0xff]
      %v425 = vld [vmem:[%s385 + $0x250] sm:$0xff]
      %v426 = vld [vmem:[%s385 + $0x260] sm:$0xff]
      %v427 = vld [vmem:[%s385 + $0x270] sm:$0xff]
      %v428 = vld [vmem:[%s385 + $0x280] sm:$0xff]
      %v429 = vld [vmem:[%s385 + $0x290] sm:$0xff]
      %v430 = vld [vmem:[%s385 + $0x2a0] sm:$0xff]
      %v431 = vld [vmem:[%s385 + $0x2b0] sm:$0xff]
      %v432 = vld [vmem:[%s385 + $0x2d0] sm:$0xff]
      %v433 = vld [vmem:[%s385 + $0x2e0] sm:$0xff]
      %v434 = vld [vmem:[%s385 + $0x2f0] sm:$0xff]
      %v435 = vld [vmem:[%s385 + $0x300] sm:$0xff]
      %v436 = vld [vmem:[%s385 + $0x310] sm:$0xff]
      %v437 = vld [vmem:[%s385 + $0x320] sm:$0xff]
      %v438 = vld [vmem:[%s385 + $0x330] sm:$0xff]
      %v439 = vld [vmem:[%s385 + $0x340] sm:$0xff]
      %v440 = vld [vmem:[%s385 + $0x360] sm:$0xff]
      %v441 = vld [vmem:[%s385 + $0x370] sm:$0xff]
      %v442 = vld [vmem:[%s385 + $0x380] sm:$0xff]
      %v443 = vld [vmem:[%s385 + $0x390] sm:$0xff]
      %v444 = vld [vmem:[%s385 + $0x3a0] sm:$0xff]
      %v445 = vld [vmem:[%s385 + $0x3b0] sm:$0xff]
      %v446 = vld [vmem:[%s385 + $0x3c0] sm:$0xff]
      %v447 = vld [vmem:[%s385 + $0x3d0] sm:$0xff]
      %v448 = vld [vmem:[%s385 + $0x3f0] sm:$0xff]
      %v449 = vld [vmem:[%s385 + $0x400] sm:$0xff]
      %v450 = vld [vmem:[%s385 + $0x410] sm:$0xff]
      %v451 = vld [vmem:[%s385 + $0x420] sm:$0xff]
      %v452 = vld [vmem:[%s385 + $0x430] sm:$0xff]
      %v453 = vld [vmem:[%s385 + $0x440] sm:$0xff]
      %v454 = vld [vmem:[%s385 + $0x450] sm:$0xff]
      %v455 = vld [vmem:[%s385 + $0x460] sm:$0xff]
      %v456 = vld [vmem:[%s385 + $0x480] sm:$0xff]
      %v457 = vld [vmem:[%s385 + $0x490] sm:$0xff]
      %v458 = vld [vmem:[%s385 + $0x4a0] sm:$0xff]
      %v459 = vld [vmem:[%s385 + $0x4b0] sm:$0xff]
      %v460 = vld [vmem:[%s385 + $0x4c0] sm:$0xff]
      %v461 = vld [vmem:[%s385 + $0x4d0] sm:$0xff]
      %v462 = vld [vmem:[%s385 + $0x4e0] sm:$0xff]
      %v463 = vld [vmem:[%s385 + $0x4f0] sm:$0xff]
      %v464 = vld [vmem:[%s385 + $0x510] sm:$0xff]
      %v465 = vld [vmem:[%s385 + $0x520] sm:$0xff]
      %v466 = vld [vmem:[%s385 + $0x530] sm:$0xff]
      %v467 = vld [vmem:[%s385 + $0x540] sm:$0xff]
      %v468 = vld [vmem:[%s385 + $0x550] sm:$0xff]
      %v469 = vld [vmem:[%s385 + $0x560] sm:$0xff]
      %v470 = vld [vmem:[%s385 + $0x570] sm:$0xff]
      %v471 = vld [vmem:[%s385 + $0x580] sm:$0xff]
      %v472 = vld [vmem:[%s385 + $0x5a0] sm:$0xff]
      %v473 = vld [vmem:[%s385 + $0x5b0] sm:$0xff]
      %v474 = vld [vmem:[%s385 + $0x5c0] sm:$0xff]
      %v475 = vld [vmem:[%s385 + $0x5d0] sm:$0xff]
      %v476 = vld [vmem:[%s385 + $0x5e0] sm:$0xff]
      %v477 = vld [vmem:[%s385 + $0x5f0] sm:$0xff]
      %v478 = vld [vmem:[%s385 + $0x600] sm:$0xff]
      %v479 = vld [vmem:[%s385 + $0x610] sm:$0xff]
      %v480 = vld [vmem:[%s385 + $0x630] sm:$0xff]
      %v481 = vld [vmem:[%s385 + $0x640] sm:$0xff]
      %v482 = vld [vmem:[%s385 + $0x650] sm:$0xff]
      %v483 = vld [vmem:[%s385 + $0x660] sm:$0xff]
      %v484 = vld [vmem:[%s385 + $0x670] sm:$0xff]
      %v485 = vld [vmem:[%s385 + $0x680] sm:$0xff]
      %v486 = vld [vmem:[%s385 + $0x690] sm:$0xff]
      %v487 = vld [vmem:[%s385 + $0x6a0] sm:$0xff]
      %v488 = vld [vmem:[%s385 + $0x6c0] sm:$0xff]
      %v489 = vld [vmem:[%s385 + $0x6d0] sm:$0xff]
      %v490 = vld [vmem:[%s385 + $0x6e0] sm:$0xff]
      %v491 = vld [vmem:[%s385 + $0x6f0] sm:$0xff]
      %v492 = vld [vmem:[%s385 + $0x700] sm:$0xff]
      %v493 = vld [vmem:[%s385 + $0x710] sm:$0xff]
      %v494 = vld [vmem:[%s385 + $0x720] sm:$0xff]
      %v495 = vld [vmem:[%s385 + $0x730] sm:$0xff]
      %v496 = vld [vmem:[%s385 + $0x750] sm:$0xff]
      %v497 = vld [vmem:[%s385 + $0x760] sm:$0xff]
      %v498 = vld [vmem:[%s385 + $0x770] sm:$0xff]
      %v499 = vld [vmem:[%s385 + $0x780] sm:$0xff]
      %v500 = vld [vmem:[%s385 + $0x790] sm:$0xff]
      %v501 = vld [vmem:[%s385 + $0x7a0] sm:$0xff]
      %v502 = vld [vmem:[%s385 + $0x7b0] sm:$0xff]
      %v503 = vld [vmem:[%s385 + $0x7c0] sm:$0xff]
      %v504 = vld [vmem:[%s385 + $0x7e0] sm:$0xff]
      %v505 = vld [vmem:[%s385 + $0x7f0] sm:$0xff]
      %v506 = vld [vmem:[%s385 + $0x800] sm:$0xff]
      %v507 = vld [vmem:[%s385 + $0x810] sm:$0xff]
      %v508 = vld [vmem:[%s385 + $0x820] sm:$0xff]
      %v509 = vld [vmem:[%s385 + $0x830] sm:$0xff]
      %v510 = vld [vmem:[%s385 + $0x840] sm:$0xff]
      %v511 = vld [vmem:[%s385 + $0x850] sm:$0xff]
      %v512 = vld [vmem:[%s385 + $0x870] sm:$0xff]
      %v513 = vld [vmem:[%s385 + $0x880] sm:$0xff]
      %v514 = vld [vmem:[%s385 + $0x890] sm:$0xff]
      %v515 = vld [vmem:[%s385 + $0x8a0] sm:$0xff]
      %v516 = vld [vmem:[%s385 + $0x8b0] sm:$0xff]
      %v517 = vld [vmem:[%s385 + $0x8c0] sm:$0xff]
      %v518 = vld [vmem:[%s385 + $0x8d0] sm:$0xff]
      %v519 = vld [vmem:[%s385 + $0x8e0] sm:$0xff]
      %vm520 = vcmask 523264
      %521 = vst.msk [vmem:[#allocation2] sm:$0xff] %vm520, %v392
      %522 = vst.msk [vmem:[#allocation2 + $0x10] sm:$0xff] %vm520, %v393
      %523 = vst.msk [vmem:[#allocation2 + $0x20] sm:$0xff] %vm520, %v394
      %524 = vst.msk [vmem:[#allocation2 + $0x30] sm:$0xff] %vm520, %v395
      %525 = vst.msk [vmem:[#allocation2 + $0x40] sm:$0xff] %vm520, %v396
      %526 = vst.msk [vmem:[#allocation2 + $0x50] sm:$0xff] %vm520, %v397
      %527 = vst.msk [vmem:[#allocation2 + $0x60] sm:$0xff] %vm520, %v398
      %528 = vst.msk [vmem:[#allocation2 + $0x70] sm:$0xff] %vm520, %v399
      %529 = vst.msk [vmem:[#allocation2 + $0x80] sm:$0xff] %vm520, %v400
      %530 = vst.msk [vmem:[#allocation2 + $0x90] sm:$0xff] %vm520, %v401
      %531 = vst.msk [vmem:[#allocation2 + $0xa0] sm:$0xff] %vm520, %v402
      %532 = vst.msk [vmem:[#allocation2 + $0xb0] sm:$0xff] %vm520, %v403
      %533 = vst.msk [vmem:[#allocation2 + $0xc0] sm:$0xff] %vm520, %v404
      %534 = vst.msk [vmem:[#allocation2 + $0xd0] sm:$0xff] %vm520, %v405
      %535 = vst.msk [vmem:[#allocation2 + $0xe0] sm:$0xff] %vm520, %v406
      %536 = vst.msk [vmem:[#allocation2 + $0xf0] sm:$0xff] %vm520, %v407
      %537 = vst.msk [vmem:[#allocation2 + $0x100] sm:$0xff] %vm520, %v408
      %538 = vst.msk [vmem:[#allocation2 + $0x110] sm:$0xff] %vm520, %v409
      %539 = vst.msk [vmem:[#allocation2 + $0x120] sm:$0xff] %vm520, %v410
      %540 = vst.msk [vmem:[#allocation2 + $0x130] sm:$0xff] %vm520, %v411
      %541 = vst.msk [vmem:[#allocation2 + $0x140] sm:$0xff] %vm520, %v412
      %542 = vst.msk [vmem:[#allocation2 + $0x150] sm:$0xff] %vm520, %v413
      %543 = vst.msk [vmem:[#allocation2 + $0x160] sm:$0xff] %vm520, %v414
      %544 = vst.msk [vmem:[#allocation2 + $0x170] sm:$0xff] %vm520, %v415
      %545 = vst.msk [vmem:[#allocation2 + $0x180] sm:$0xff] %vm520, %v416
      %546 = vst.msk [vmem:[#allocation2 + $0x190] sm:$0xff] %vm520, %v417
      %547 = vst.msk [vmem:[#allocation2 + $0x1a0] sm:$0xff] %vm520, %v418
      %548 = vst.msk [vmem:[#allocation2 + $0x1b0] sm:$0xff] %vm520, %v419
      %549 = vst.msk [vmem:[#allocation2 + $0x1c0] sm:$0xff] %vm520, %v420
      %550 = vst.msk [vmem:[#allocation2 + $0x1d0] sm:$0xff] %vm520, %v421
      %551 = vst.msk [vmem:[#allocation2 + $0x1e0] sm:$0xff] %vm520, %v422
      %552 = vst.msk [vmem:[#allocation2 + $0x1f0] sm:$0xff] %vm520, %v423
      %553 = vst.msk [vmem:[#allocation2 + $0x200] sm:$0xff] %vm520, %v424
      %554 = vst.msk [vmem:[#allocation2 + $0x210] sm:$0xff] %vm520, %v425
      %555 = vst.msk [vmem:[#allocation2 + $0x220] sm:$0xff] %vm520, %v426
      %556 = vst.msk [vmem:[#allocation2 + $0x230] sm:$0xff] %vm520, %v427
      %557 = vst.msk [vmem:[#allocation2 + $0x240] sm:$0xff] %vm520, %v428
      %558 = vst.msk [vmem:[#allocation2 + $0x250] sm:$0xff] %vm520, %v429
      %559 = vst.msk [vmem:[#allocation2 + $0x260] sm:$0xff] %vm520, %v430
      %560 = vst.msk [vmem:[#allocation2 + $0x270] sm:$0xff] %vm520, %v431
      %561 = vst.msk [vmem:[#allocation2 + $0x280] sm:$0xff] %vm520, %v432
      %562 = vst.msk [vmem:[#allocation2 + $0x290] sm:$0xff] %vm520, %v433
      %563 = vst.msk [vmem:[#allocation2 + $0x2a0] sm:$0xff] %vm520, %v434
      %564 = vst.msk [vmem:[#allocation2 + $0x2b0] sm:$0xff] %vm520, %v435
      %565 = vst.msk [vmem:[#allocation2 + $0x2c0] sm:$0xff] %vm520, %v436
      %566 = vst.msk [vmem:[#allocation2 + $0x2d0] sm:$0xff] %vm520, %v437
      %567 = vst.msk [vmem:[#allocation2 + $0x2e0] sm:$0xff] %vm520, %v438
      %568 = vst.msk [vmem:[#allocation2 + $0x2f0] sm:$0xff] %vm520, %v439
      %569 = vst.msk [vmem:[#allocation2 + $0x300] sm:$0xff] %vm520, %v440
      %570 = vst.msk [vmem:[#allocation2 + $0x310] sm:$0xff] %vm520, %v441
      %571 = vst.msk [vmem:[#allocation2 + $0x320] sm:$0xff] %vm520, %v442
      %572 = vst.msk [vmem:[#allocation2 + $0x330] sm:$0xff] %vm520, %v443
      %573 = vst.msk [vmem:[#allocation2 + $0x340] sm:$0xff] %vm520, %v444
      %574 = vst.msk [vmem:[#allocation2 + $0x350] sm:$0xff] %vm520, %v445
      %575 = vst.msk [vmem:[#allocation2 + $0x360] sm:$0xff] %vm520, %v446
      %576 = vst.msk [vmem:[#allocation2 + $0x370] sm:$0xff] %vm520, %v447
      %577 = vst.msk [vmem:[#allocation2 + $0x380] sm:$0xff] %vm520, %v448
      %578 = vst.msk [vmem:[#allocation2 + $0x390] sm:$0xff] %vm520, %v449
      %579 = vst.msk [vmem:[#allocation2 + $0x3a0] sm:$0xff] %vm520, %v450
      %580 = vst.msk [vmem:[#allocation2 + $0x3b0] sm:$0xff] %vm520, %v451
      %581 = vst.msk [vmem:[#allocation2 + $0x3c0] sm:$0xff] %vm520, %v452
      %582 = vst.msk [vmem:[#allocation2 + $0x3d0] sm:$0xff] %vm520, %v453
      %583 = vst.msk [vmem:[#allocation2 + $0x3e0] sm:$0xff] %vm520, %v454
      %584 = vst.msk [vmem:[#allocation2 + $0x3f0] sm:$0xff] %vm520, %v455
      %585 = vst.msk [vmem:[#allocation2 + $0x400] sm:$0xff] %vm520, %v456
      %586 = vst.msk [vmem:[#allocation2 + $0x410] sm:$0xff] %vm520, %v457
      %587 = vst.msk [vmem:[#allocation2 + $0x420] sm:$0xff] %vm520, %v458
      %588 = vst.msk [vmem:[#allocation2 + $0x430] sm:$0xff] %vm520, %v459
      %589 = vst.msk [vmem:[#allocation2 + $0x440] sm:$0xff] %vm520, %v460
      %590 = vst.msk [vmem:[#allocation2 + $0x450] sm:$0xff] %vm520, %v461
      %591 = vst.msk [vmem:[#allocation2 + $0x460] sm:$0xff] %vm520, %v462
      %592 = vst.msk [vmem:[#allocation2 + $0x470] sm:$0xff] %vm520, %v463
      %593 = vst.msk [vmem:[#allocation2 + $0x480] sm:$0xff] %vm520, %v464
      %594 = vst.msk [vmem:[#allocation2 + $0x490] sm:$0xff] %vm520, %v465
      %595 = vst.msk [vmem:[#allocation2 + $0x4a0] sm:$0xff] %vm520, %v466
      %596 = vst.msk [vmem:[#allocation2 + $0x4b0] sm:$0xff] %vm520, %v467
      %597 = vst.msk [vmem:[#allocation2 + $0x4c0] sm:$0xff] %vm520, %v468
      %598 = vst.msk [vmem:[#allocation2 + $0x4d0] sm:$0xff] %vm520, %v469
      %599 = vst.msk [vmem:[#allocation2 + $0x4e0] sm:$0xff] %vm520, %v470
      %600 = vst.msk [vmem:[#allocation2 + $0x4f0] sm:$0xff] %vm520, %v471
      %601 = vst.msk [vmem:[#allocation2 + $0x500] sm:$0xff] %vm520, %v472
      %602 = vst.msk [vmem:[#allocation2 + $0x510] sm:$0xff] %vm520, %v473
      %603 = vst.msk [vmem:[#allocation2 + $0x520] sm:$0xff] %vm520, %v474
      %604 = vst.msk [vmem:[#allocation2 + $0x530] sm:$0xff] %vm520, %v475
      %605 = vst.msk [vmem:[#allocation2 + $0x540] sm:$0xff] %vm520, %v476
      %606 = vst.msk [vmem:[#allocation2 + $0x550] sm:$0xff] %vm520, %v477
      %607 = vst.msk [vmem:[#allocation2 + $0x560] sm:$0xff] %vm520, %v478
      %608 = vst.msk [vmem:[#allocation2 + $0x570] sm:$0xff] %vm520, %v479
      %609 = vst.msk [vmem:[#allocation2 + $0x580] sm:$0xff] %vm520, %v480
      %610 = vst.msk [vmem:[#allocation2 + $0x590] sm:$0xff] %vm520, %v481
      %611 = vst.msk [vmem:[#allocation2 + $0x5a0] sm:$0xff] %vm520, %v482
      %612 = vst.msk [vmem:[#allocation2 + $0x5b0] sm:$0xff] %vm520, %v483
      %613 = vst.msk [vmem:[#allocation2 + $0x5c0] sm:$0xff] %vm520, %v484
      %614 = vst.msk [vmem:[#allocation2 + $0x5d0] sm:$0xff] %vm520, %v485
      %615 = vst.msk [vmem:[#allocation2 + $0x5e0] sm:$0xff] %vm520, %v486
      %616 = vst.msk [vmem:[#allocation2 + $0x5f0] sm:$0xff] %vm520, %v487
      %617 = vst.msk [vmem:[#allocation2 + $0x600] sm:$0xff] %vm520, %v488
      %618 = vst.msk [vmem:[#allocation2 + $0x610] sm:$0xff] %vm520, %v489
      %619 = vst.msk [vmem:[#allocation2 + $0x620] sm:$0xff] %vm520, %v490
      %620 = vst.msk [vmem:[#allocation2 + $0x630] sm:$0xff] %vm520, %v491
      %621 = vst.msk [vmem:[#allocation2 + $0x640] sm:$0xff] %vm520, %v492
      %622 = vst.msk [vmem:[#allocation2 + $0x650] sm:$0xff] %vm520, %v493
      %623 = vst.msk [vmem:[#allocation2 + $0x660] sm:$0xff] %vm520, %v494
      %624 = vst.msk [vmem:[#allocation2 + $0x670] sm:$0xff] %vm520, %v495
      %625 = vst.msk [vmem:[#allocation2 + $0x680] sm:$0xff] %vm520, %v496
      %626 = vst.msk [vmem:[#allocation2 + $0x690] sm:$0xff] %vm520, %v497
      %627 = vst.msk [vmem:[#allocation2 + $0x6a0] sm:$0xff] %vm520, %v498
      %628 = vst.msk [vmem:[#allocation2 + $0x6b0] sm:$0xff] %vm520, %v499
      %629 = vst.msk [vmem:[#allocation2 + $0x6c0] sm:$0xff] %vm520, %v500
      %630 = vst.msk [vmem:[#allocation2 + $0x6d0] sm:$0xff] %vm520, %v501
      %631 = vst.msk [vmem:[#allocation2 + $0x6e0] sm:$0xff] %vm520, %v502
      %632 = vst.msk [vmem:[#allocation2 + $0x6f0] sm:$0xff] %vm520, %v503
      %633 = vst.msk [vmem:[#allocation2 + $0x700] sm:$0xff] %vm520, %v504
      %634 = vst.msk [vmem:[#allocation2 + $0x710] sm:$0xff] %vm520, %v505
      %635 = vst.msk [vmem:[#allocation2 + $0x720] sm:$0xff] %vm520, %v506
      %636 = vst.msk [vmem:[#allocation2 + $0x730] sm:$0xff] %vm520, %v507
      %637 = vst.msk [vmem:[#allocation2 + $0x740] sm:$0xff] %vm520, %v508
      %638 = vst.msk [vmem:[#allocation2 + $0x750] sm:$0xff] %vm520, %v509
      %639 = vst.msk [vmem:[#allocation2 + $0x760] sm:$0xff] %vm520, %v510
      %640 = vst.msk [vmem:[#allocation2 + $0x770] sm:$0xff] %vm520, %v511
      %641 = vst.msk [vmem:[#allocation2 + $0x780] sm:$0xff] %vm520, %v512
      %642 = vst.msk [vmem:[#allocation2 + $0x790] sm:$0xff] %vm520, %v513
      %643 = vst.msk [vmem:[#allocation2 + $0x7a0] sm:$0xff] %vm520, %v514
      %644 = vst.msk [vmem:[#allocation2 + $0x7b0] sm:$0xff] %vm520, %v515
      %645 = vst.msk [vmem:[#allocation2 + $0x7c0] sm:$0xff] %vm520, %v516
      %646 = vst.msk [vmem:[#allocation2 + $0x7d0] sm:$0xff] %vm520, %v517
      %647 = vst.msk [vmem:[#allocation2 + $0x7e0] sm:$0xff] %vm520, %v518
      %648 = vst.msk [vmem:[#allocation2 + $0x7f0] sm:$0xff] %vm520, %v519
      %v649 = vld [vmem:[%s385 + $0x1] sm:$0xff]
      %v650 = vld [vmem:[%s385 + $0x11] sm:$0xff]
      %v651 = vld [vmem:[%s385 + $0x21] sm:$0xff]
      %v652 = vld [vmem:[%s385 + $0x31] sm:$0xff]
      %v653 = vld [vmem:[%s385 + $0x41] sm:$0xff]
      %v654 = vld [vmem:[%s385 + $0x51] sm:$0xff]
      %v655 = vld [vmem:[%s385 + $0x61] sm:$0xff]
      %v656 = vld [vmem:[%s385 + $0x71] sm:$0xff]
      %v657 = vld [vmem:[%s385 + $0x91] sm:$0xff]
      %v658 = vld [vmem:[%s385 + $0xa1] sm:$0xff]
      %v659 = vld [vmem:[%s385 + $0xb1] sm:$0xff]
      %v660 = vld [vmem:[%s385 + $0xc1] sm:$0xff]
      %v661 = vld [vmem:[%s385 + $0xd1] sm:$0xff]
      %v662 = vld [vmem:[%s385 + $0xe1] sm:$0xff]
      %v663 = vld [vmem:[%s385 + $0xf1] sm:$0xff]
      %v664 = vld [vmem:[%s385 + $0x101] sm:$0xff]
      %v665 = vld [vmem:[%s385 + $0x121] sm:$0xff]
      %v666 = vld [vmem:[%s385 + $0x131] sm:$0xff]
      %v667 = vld [vmem:[%s385 + $0x141] sm:$0xff]
      %v668 = vld [vmem:[%s385 + $0x151] sm:$0xff]
      %v669 = vld [vmem:[%s385 + $0x161] sm:$0xff]
      %v670 = vld [vmem:[%s385 + $0x171] sm:$0xff]
      %v671 = vld [vmem:[%s385 + $0x181] sm:$0xff]
      %v672 = vld [vmem:[%s385 + $0x191] sm:$0xff]
      %v673 = vld [vmem:[%s385 + $0x1b1] sm:$0xff]
      %v674 = vld [vmem:[%s385 + $0x1c1] sm:$0xff]
      %v675 = vld [vmem:[%s385 + $0x1d1] sm:$0xff]
      %v676 = vld [vmem:[%s385 + $0x1e1] sm:$0xff]
      %v677 = vld [vmem:[%s385 + $0x1f1] sm:$0xff]
      %v678 = vld [vmem:[%s385 + $0x201] sm:$0xff]
      %v679 = vld [vmem:[%s385 + $0x211] sm:$0xff]
      %v680 = vld [vmem:[%s385 + $0x221] sm:$0xff]
      %v681 = vld [vmem:[%s385 + $0x241] sm:$0xff]
      %v682 = vld [vmem:[%s385 + $0x251] sm:$0xff]
      %v683 = vld [vmem:[%s385 + $0x261] sm:$0xff]
      %v684 = vld [vmem:[%s385 + $0x271] sm:$0xff]
      %v685 = vld [vmem:[%s385 + $0x281] sm:$0xff]
      %v686 = vld [vmem:[%s385 + $0x291] sm:$0xff]
      %v687 = vld [vmem:[%s385 + $0x2a1] sm:$0xff]
      %v688 = vld [vmem:[%s385 + $0x2b1] sm:$0xff]
      %v689 = vld [vmem:[%s385 + $0x2d1] sm:$0xff]
      %v690 = vld [vmem:[%s385 + $0x2e1] sm:$0xff]
      %v691 = vld [vmem:[%s385 + $0x2f1] sm:$0xff]
      %v692 = vld [vmem:[%s385 + $0x301] sm:$0xff]
      %v693 = vld [vmem:[%s385 + $0x311] sm:$0xff]
      %v694 = vld [vmem:[%s385 + $0x321] sm:$0xff]
      %v695 = vld [vmem:[%s385 + $0x331] sm:$0xff]
      %v696 = vld [vmem:[%s385 + $0x341] sm:$0xff]
      %v697 = vld [vmem:[%s385 + $0x361] sm:$0xff]
      %v698 = vld [vmem:[%s385 + $0x371] sm:$0xff]
      %v699 = vld [vmem:[%s385 + $0x381] sm:$0xff]
      %v700 = vld [vmem:[%s385 + $0x391] sm:$0xff]
      %v701 = vld [vmem:[%s385 + $0x3a1] sm:$0xff]
      %v702 = vld [vmem:[%s385 + $0x3b1] sm:$0xff]
      %v703 = vld [vmem:[%s385 + $0x3c1] sm:$0xff]
      %v704 = vld [vmem:[%s385 + $0x3d1] sm:$0xff]
      %v705 = vld [vmem:[%s385 + $0x3f1] sm:$0xff]
      %v706 = vld [vmem:[%s385 + $0x401] sm:$0xff]
      %v707 = vld [vmem:[%s385 + $0x411] sm:$0xff]
      %v708 = vld [vmem:[%s385 + $0x421] sm:$0xff]
      %v709 = vld [vmem:[%s385 + $0x431] sm:$0xff]
      %v710 = vld [vmem:[%s385 + $0x441] sm:$0xff]
      %v711 = vld [vmem:[%s385 + $0x451] sm:$0xff]
      %v712 = vld [vmem:[%s385 + $0x461] sm:$0xff]
      %v713 = vld [vmem:[%s385 + $0x481] sm:$0xff]
      %v714 = vld [vmem:[%s385 + $0x491] sm:$0xff]
      %v715 = vld [vmem:[%s385 + $0x4a1] sm:$0xff]
      %v716 = vld [vmem:[%s385 + $0x4b1] sm:$0xff]
      %v717 = vld [vmem:[%s385 + $0x4c1] sm:$0xff]
      %v718 = vld [vmem:[%s385 + $0x4d1] sm:$0xff]
      %v719 = vld [vmem:[%s385 + $0x4e1] sm:$0xff]
      %v720 = vld [vmem:[%s385 + $0x4f1] sm:$0xff]
      %v721 = vld [vmem:[%s385 + $0x511] sm:$0xff]
      %v722 = vld [vmem:[%s385 + $0x521] sm:$0xff]
      %v723 = vld [vmem:[%s385 + $0x531] sm:$0xff]
      %v724 = vld [vmem:[%s385 + $0x541] sm:$0xff]
      %v725 = vld [vmem:[%s385 + $0x551] sm:$0xff]
      %v726 = vld [vmem:[%s385 + $0x561] sm:$0xff]
      %v727 = vld [vmem:[%s385 + $0x571] sm:$0xff]
      %v728 = vld [vmem:[%s385 + $0x581] sm:$0xff]
      %v729 = vld [vmem:[%s385 + $0x5a1] sm:$0xff]
      %v730 = vld [vmem:[%s385 + $0x5b1] sm:$0xff]
      %v731 = vld [vmem:[%s385 + $0x5c1] sm:$0xff]
      %v732 = vld [vmem:[%s385 + $0x5d1] sm:$0xff]
      %v733 = vld [vmem:[%s385 + $0x5e1] sm:$0xff]
      %v734 = vld [vmem:[%s385 + $0x5f1] sm:$0xff]
      %v735 = vld [vmem:[%s385 + $0x601] sm:$0xff]
      %v736 = vld [vmem:[%s385 + $0x611] sm:$0xff]
      %v737 = vld [vmem:[%s385 + $0x631] sm:$0xff]
      %v738 = vld [vmem:[%s385 + $0x641] sm:$0xff]
      %v739 = vld [vmem:[%s385 + $0x651] sm:$0xff]
      %v740 = vld [vmem:[%s385 + $0x661] sm:$0xff]
      %v741 = vld [vmem:[%s385 + $0x671] sm:$0xff]
      %v742 = vld [vmem:[%s385 + $0x681] sm:$0xff]
      %v743 = vld [vmem:[%s385 + $0x691] sm:$0xff]
      %v744 = vld [vmem:[%s385 + $0x6a1] sm:$0xff]
      %v745 = vld [vmem:[%s385 + $0x6c1] sm:$0xff]
      %v746 = vld [vmem:[%s385 + $0x6d1] sm:$0xff]
      %v747 = vld [vmem:[%s385 + $0x6e1] sm:$0xff]
      %v748 = vld [vmem:[%s385 + $0x6f1] sm:$0xff]
      %v749 = vld [vmem:[%s385 + $0x701] sm:$0xff]
      %v750 = vld [vmem:[%s385 + $0x711] sm:$0xff]
      %v751 = vld [vmem:[%s385 + $0x721] sm:$0xff]
      %v752 = vld [vmem:[%s385 + $0x731] sm:$0xff]
      %v753 = vld [vmem:[%s385 + $0x751] sm:$0xff]
      %v754 = vld [vmem:[%s385 + $0x761] sm:$0xff]
      %v755 = vld [vmem:[%s385 + $0x771] sm:$0xff]
      %v756 = vld [vmem:[%s385 + $0x781] sm:$0xff]
      %v757 = vld [vmem:[%s385 + $0x791] sm:$0xff]
      %v758 = vld [vmem:[%s385 + $0x7a1] sm:$0xff]
      %v759 = vld [vmem:[%s385 + $0x7b1] sm:$0xff]
      %v760 = vld [vmem:[%s385 + $0x7c1] sm:$0xff]
      %v761 = vld [vmem:[%s385 + $0x7e1] sm:$0xff]
      %v762 = vld [vmem:[%s385 + $0x7f1] sm:$0xff]
      %v763 = vld [vmem:[%s385 + $0x801] sm:$0xff]
      %v764 = vld [vmem:[%s385 + $0x811] sm:$0xff]
      %v765 = vld [vmem:[%s385 + $0x821] sm:$0xff]
      %v766 = vld [vmem:[%s385 + $0x831] sm:$0xff]
      %v767 = vld [vmem:[%s385 + $0x841] sm:$0xff]
      %v768 = vld [vmem:[%s385 + $0x851] sm:$0xff]
      %v769 = vld [vmem:[%s385 + $0x871] sm:$0xff]
      %v770 = vld [vmem:[%s385 + $0x881] sm:$0xff]
      %v771 = vld [vmem:[%s385 + $0x891] sm:$0xff]
      %v772 = vld [vmem:[%s385 + $0x8a1] sm:$0xff]
      %v773 = vld [vmem:[%s385 + $0x8b1] sm:$0xff]
      %v774 = vld [vmem:[%s385 + $0x8c1] sm:$0xff]
      %v775 = vld [vmem:[%s385 + $0x8d1] sm:$0xff]
      %v776 = vld [vmem:[%s385 + $0x8e1] sm:$0xff]
      %905 = vrot.lane.b32.xlu0 %v649, 64
      %v906 = vpop.permute.xlu0 %905
      %907 = vrot.lane.b32.xlu0 %v650, 64
      %v908 = vpop.permute.xlu0 %907
      %909 = vrot.lane.b32.xlu0 %v651, 64
      %v910 = vpop.permute.xlu0 %909
      %911 = vrot.lane.b32.xlu0 %v652, 64
      %v912 = vpop.permute.xlu0 %911
      %913 = vrot.lane.b32.xlu0 %v653, 64
      %v914 = vpop.permute.xlu0 %913
      %915 = vrot.lane.b32.xlu0 %v654, 64
      %v916 = vpop.permute.xlu0 %915
      %917 = vrot.lane.b32.xlu0 %v655, 64
      %v918 = vpop.permute.xlu0 %917
      %919 = vrot.lane.b32.xlu0 %v656, 64
      %v920 = vpop.permute.xlu0 %919
      %921 = vrot.lane.b32.xlu0 %v657, 64
      %v922 = vpop.permute.xlu0 %921
      %923 = vrot.lane.b32.xlu0 %v658, 64
      %v924 = vpop.permute.xlu0 %923
      %925 = vrot.lane.b32.xlu0 %v659, 64
      %v926 = vpop.permute.xlu0 %925
      %927 = vrot.lane.b32.xlu0 %v660, 64
      %v928 = vpop.permute.xlu0 %927
      %929 = vrot.lane.b32.xlu0 %v661, 64
      %v930 = vpop.permute.xlu0 %929
      %931 = vrot.lane.b32.xlu0 %v662, 64
      %v932 = vpop.permute.xlu0 %931
      %933 = vrot.lane.b32.xlu0 %v663, 64
      %v934 = vpop.permute.xlu0 %933
      %935 = vrot.lane.b32.xlu0 %v664, 64
      %v936 = vpop.permute.xlu0 %935
      %937 = vrot.lane.b32.xlu0 %v665, 64
      %v938 = vpop.permute.xlu0 %937
      %939 = vrot.lane.b32.xlu0 %v666, 64
      %v940 = vpop.permute.xlu0 %939
      %941 = vrot.lane.b32.xlu0 %v667, 64
      %v942 = vpop.permute.xlu0 %941
      %943 = vrot.lane.b32.xlu0 %v668, 64
      %v944 = vpop.permute.xlu0 %943
      %945 = vrot.lane.b32.xlu0 %v669, 64
      %v946 = vpop.permute.xlu0 %945
      %947 = vrot.lane.b32.xlu0 %v670, 64
      %v948 = vpop.permute.xlu0 %947
      %949 = vrot.lane.b32.xlu0 %v671, 64
      %v950 = vpop.permute.xlu0 %949
      %951 = vrot.lane.b32.xlu0 %v672, 64
      %v952 = vpop.permute.xlu0 %951
      %953 = vrot.lane.b32.xlu0 %v673, 64
      %v954 = vpop.permute.xlu0 %953
      %955 = vrot.lane.b32.xlu0 %v674, 64
      %v956 = vpop.permute.xlu0 %955
      %957 = vrot.lane.b32.xlu0 %v675, 64
      %v958 = vpop.permute.xlu0 %957
      %959 = vrot.lane.b32.xlu0 %v676, 64
      %v960 = vpop.permute.xlu0 %959
      %961 = vrot.lane.b32.xlu0 %v677, 64
      %v962 = vpop.permute.xlu0 %961
      %963 = vrot.lane.b32.xlu0 %v678, 64
      %v964 = vpop.permute.xlu0 %963
      %965 = vrot.lane.b32.xlu0 %v679, 64
      %v966 = vpop.permute.xlu0 %965
      %967 = vrot.lane.b32.xlu0 %v680, 64
      %v968 = vpop.permute.xlu0 %967
      %969 = vrot.lane.b32.xlu0 %v681, 64
      %v970 = vpop.permute.xlu0 %969
      %971 = vrot.lane.b32.xlu0 %v682, 64
      %v972 = vpop.permute.xlu0 %971
      %973 = vrot.lane.b32.xlu0 %v683, 64
      %v974 = vpop.permute.xlu0 %973
      %975 = vrot.lane.b32.xlu0 %v684, 64
      %v976 = vpop.permute.xlu0 %975
      %977 = vrot.lane.b32.xlu0 %v685, 64
      %v978 = vpop.permute.xlu0 %977
      %979 = vrot.lane.b32.xlu0 %v686, 64
      %v980 = vpop.permute.xlu0 %979
      %981 = vrot.lane.b32.xlu0 %v687, 64
      %v982 = vpop.permute.xlu0 %981
      %983 = vrot.lane.b32.xlu0 %v688, 64
      %v984 = vpop.permute.xlu0 %983
      %985 = vrot.lane.b32.xlu0 %v689, 64
      %v986 = vpop.permute.xlu0 %985
      %987 = vrot.lane.b32.xlu0 %v690, 64
      %v988 = vpop.permute.xlu0 %987
      %989 = vrot.lane.b32.xlu0 %v691, 64
      %v990 = vpop.permute.xlu0 %989
      %991 = vrot.lane.b32.xlu0 %v692, 64
      %v992 = vpop.permute.xlu0 %991
      %993 = vrot.lane.b32.xlu0 %v693, 64
      %v994 = vpop.permute.xlu0 %993
      %995 = vrot.lane.b32.xlu0 %v694, 64
      %v996 = vpop.permute.xlu0 %995
      %997 = vrot.lane.b32.xlu0 %v695, 64
      %v998 = vpop.permute.xlu0 %997
      %999 = vrot.lane.b32.xlu0 %v696, 64
      %v1000 = vpop.permute.xlu0 %999
      %1001 = vrot.lane.b32.xlu0 %v697, 64
      %v1002 = vpop.permute.xlu0 %1001
      %1003 = vrot.lane.b32.xlu0 %v698, 64
      %v1004 = vpop.permute.xlu0 %1003
      %1005 = vrot.lane.b32.xlu0 %v699, 64
      %v1006 = vpop.permute.xlu0 %1005
      %1007 = vrot.lane.b32.xlu0 %v700, 64
      %v1008 = vpop.permute.xlu0 %1007
      %1009 = vrot.lane.b32.xlu0 %v701, 64
      %v1010 = vpop.permute.xlu0 %1009
      %1011 = vrot.lane.b32.xlu0 %v702, 64
      %v1012 = vpop.permute.xlu0 %1011
      %1013 = vrot.lane.b32.xlu0 %v703, 64
      %v1014 = vpop.permute.xlu0 %1013
      %1015 = vrot.lane.b32.xlu0 %v704, 64
      %v1016 = vpop.permute.xlu0 %1015
      %1017 = vrot.lane.b32.xlu0 %v705, 64
      %v1018 = vpop.permute.xlu0 %1017
      %1019 = vrot.lane.b32.xlu0 %v706, 64
      %v1020 = vpop.permute.xlu0 %1019
      %1021 = vrot.lane.b32.xlu0 %v707, 64
      %v1022 = vpop.permute.xlu0 %1021
      %1023 = vrot.lane.b32.xlu0 %v708, 64
      %v1024 = vpop.permute.xlu0 %1023
      %1025 = vrot.lane.b32.xlu0 %v709, 64
      %v1026 = vpop.permute.xlu0 %1025
      %1027 = vrot.lane.b32.xlu0 %v710, 64
      %v1028 = vpop.permute.xlu0 %1027
      %1029 = vrot.lane.b32.xlu0 %v711, 64
      %v1030 = vpop.permute.xlu0 %1029
      %1031 = vrot.lane.b32.xlu0 %v712, 64
      %v1032 = vpop.permute.xlu0 %1031
      %1033 = vrot.lane.b32.xlu0 %v713, 64
      %v1034 = vpop.permute.xlu0 %1033
      %1035 = vrot.lane.b32.xlu0 %v714, 64
      %v1036 = vpop.permute.xlu0 %1035
      %1037 = vrot.lane.b32.xlu0 %v715, 64
      %v1038 = vpop.permute.xlu0 %1037
      %1039 = vrot.lane.b32.xlu0 %v716, 64
      %v1040 = vpop.permute.xlu0 %1039
      %1041 = vrot.lane.b32.xlu0 %v717, 64
      %v1042 = vpop.permute.xlu0 %1041
      %1043 = vrot.lane.b32.xlu0 %v718, 64
      %v1044 = vpop.permute.xlu0 %1043
      %1045 = vrot.lane.b32.xlu0 %v719, 64
      %v1046 = vpop.permute.xlu0 %1045
      %1047 = vrot.lane.b32.xlu0 %v720, 64
      %v1048 = vpop.permute.xlu0 %1047
      %1049 = vrot.lane.b32.xlu0 %v721, 64
      %v1050 = vpop.permute.xlu0 %1049
      %1051 = vrot.lane.b32.xlu0 %v722, 64
      %v1052 = vpop.permute.xlu0 %1051
      %1053 = vrot.lane.b32.xlu0 %v723, 64
      %v1054 = vpop.permute.xlu0 %1053
      %1055 = vrot.lane.b32.xlu0 %v724, 64
      %v1056 = vpop.permute.xlu0 %1055
      %1057 = vrot.lane.b32.xlu0 %v725, 64
      %v1058 = vpop.permute.xlu0 %1057
      %1059 = vrot.lane.b32.xlu0 %v726, 64
      %v1060 = vpop.permute.xlu0 %1059
      %1061 = vrot.lane.b32.xlu0 %v727, 64
      %v1062 = vpop.permute.xlu0 %1061
      %1063 = vrot.lane.b32.xlu0 %v728, 64
      %v1064 = vpop.permute.xlu0 %1063
      %1065 = vrot.lane.b32.xlu0 %v729, 64
      %v1066 = vpop.permute.xlu0 %1065
      %1067 = vrot.lane.b32.xlu0 %v730, 64
      %v1068 = vpop.permute.xlu0 %1067
      %1069 = vrot.lane.b32.xlu0 %v731, 64
      %v1070 = vpop.permute.xlu0 %1069
      %1071 = vrot.lane.b32.xlu0 %v732, 64
      %v1072 = vpop.permute.xlu0 %1071
      %1073 = vrot.lane.b32.xlu0 %v733, 64
      %v1074 = vpop.permute.xlu0 %1073
      %1075 = vrot.lane.b32.xlu0 %v734, 64
      %v1076 = vpop.permute.xlu0 %1075
      %1077 = vrot.lane.b32.xlu0 %v735, 64
      %v1078 = vpop.permute.xlu0 %1077
      %1079 = vrot.lane.b32.xlu0 %v736, 64
      %v1080 = vpop.permute.xlu0 %1079
      %1081 = vrot.lane.b32.xlu0 %v737, 64
      %v1082 = vpop.permute.xlu0 %1081
      %1083 = vrot.lane.b32.xlu0 %v738, 64
      %v1084 = vpop.permute.xlu0 %1083
      %1085 = vrot.lane.b32.xlu0 %v739, 64
      %v1086 = vpop.permute.xlu0 %1085
      %1087 = vrot.lane.b32.xlu0 %v740, 64
      %v1088 = vpop.permute.xlu0 %1087
      %1089 = vrot.lane.b32.xlu0 %v741, 64
      %v1090 = vpop.permute.xlu0 %1089
      %1091 = vrot.lane.b32.xlu0 %v742, 64
      %v1092 = vpop.permute.xlu0 %1091
      %1093 = vrot.lane.b32.xlu0 %v743, 64
      %v1094 = vpop.permute.xlu0 %1093
      %1095 = vrot.lane.b32.xlu0 %v744, 64
      %v1096 = vpop.permute.xlu0 %1095
      %1097 = vrot.lane.b32.xlu0 %v745, 64
      %v1098 = vpop.permute.xlu0 %1097
      %1099 = vrot.lane.b32.xlu0 %v746, 64
      %v1100 = vpop.permute.xlu0 %1099
      %1101 = vrot.lane.b32.xlu0 %v747, 64
      %v1102 = vpop.permute.xlu0 %1101
      %1103 = vrot.lane.b32.xlu0 %v748, 64
      %v1104 = vpop.permute.xlu0 %1103
      %1105 = vrot.lane.b32.xlu0 %v749, 64
      %v1106 = vpop.permute.xlu0 %1105
      %1107 = vrot.lane.b32.xlu0 %v750, 64
      %v1108 = vpop.permute.xlu0 %1107
      %1109 = vrot.lane.b32.xlu0 %v751, 64
      %v1110 = vpop.permute.xlu0 %1109
      %1111 = vrot.lane.b32.xlu0 %v752, 64
      %v1112 = vpop.permute.xlu0 %1111
      %1113 = vrot.lane.b32.xlu0 %v753, 64
      %v1114 = vpop.permute.xlu0 %1113
      %1115 = vrot.lane.b32.xlu0 %v754, 64
      %v1116 = vpop.permute.xlu0 %1115
      %1117 = vrot.lane.b32.xlu0 %v755, 64
      %v1118 = vpop.permute.xlu0 %1117
      %1119 = vrot.lane.b32.xlu0 %v756, 64
      %v1120 = vpop.permute.xlu0 %1119
      %1121 = vrot.lane.b32.xlu0 %v757, 64
      %v1122 = vpop.permute.xlu0 %1121
      %1123 = vrot.lane.b32.xlu0 %v758, 64
      %v1124 = vpop.permute.xlu0 %1123
      %1125 = vrot.lane.b32.xlu0 %v759, 64
      %v1126 = vpop.permute.xlu0 %1125
      %1127 = vrot.lane.b32.xlu0 %v760, 64
      %v1128 = vpop.permute.xlu0 %1127
      %1129 = vrot.lane.b32.xlu0 %v761, 64
      %v1130 = vpop.permute.xlu0 %1129
      %1131 = vrot.lane.b32.xlu0 %v762, 64
      %v1132 = vpop.permute.xlu0 %1131
      %1133 = vrot.lane.b32.xlu0 %v763, 64
      %v1134 = vpop.permute.xlu0 %1133
      %1135 = vrot.lane.b32.xlu0 %v764, 64
      %v1136 = vpop.permute.xlu0 %1135
      %1137 = vrot.lane.b32.xlu0 %v765, 64
      %v1138 = vpop.permute.xlu0 %1137
      %1139 = vrot.lane.b32.xlu0 %v766, 64
      %v1140 = vpop.permute.xlu0 %1139
      %1141 = vrot.lane.b32.xlu0 %v767, 64
      %v1142 = vpop.permute.xlu0 %1141
      %1143 = vrot.lane.b32.xlu0 %v768, 64
      %v1144 = vpop.permute.xlu0 %1143
      %1145 = vrot.lane.b32.xlu0 %v769, 64
      %v1146 = vpop.permute.xlu0 %1145
      %1147 = vrot.lane.b32.xlu0 %v770, 64
      %v1148 = vpop.permute.xlu0 %1147
      %1149 = vrot.lane.b32.xlu0 %v771, 64
      %v1150 = vpop.permute.xlu0 %1149
      %1151 = vrot.lane.b32.xlu0 %v772, 64
      %v1152 = vpop.permute.xlu0 %1151
      %1153 = vrot.lane.b32.xlu0 %v773, 64
      %v1154 = vpop.permute.xlu0 %1153
      %1155 = vrot.lane.b32.xlu0 %v774, 64
      %v1156 = vpop.permute.xlu0 %1155
      %1157 = vrot.lane.b32.xlu0 %v775, 64
      %v1158 = vpop.permute.xlu0 %1157
      %1159 = vrot.lane.b32.xlu0 %v776, 64
      %v1160 = vpop.permute.xlu0 %1159
      %vm1289 = vcmask 1048064
      %1290 = vst.msk [vmem:[#allocation2] sm:$0xff] %vm1289, %v906
      %1291 = vst.msk [vmem:[#allocation2 + $0x10] sm:$0xff] %vm1289, %v908
      %1292 = vst.msk [vmem:[#allocation2 + $0x20] sm:$0xff] %vm1289, %v910
      %1293 = vst.msk [vmem:[#allocation2 + $0x30] sm:$0xff] %vm1289, %v912
      %1294 = vst.msk [vmem:[#allocation2 + $0x40] sm:$0xff] %vm1289, %v914
      %1295 = vst.msk [vmem:[#allocation2 + $0x50] sm:$0xff] %vm1289, %v916
      %1296 = vst.msk [vmem:[#allocation2 + $0x60] sm:$0xff] %vm1289, %v918
      %1297 = vst.msk [vmem:[#allocation2 + $0x70] sm:$0xff] %vm1289, %v920
      %1298 = vst.msk [vmem:[#allocation2 + $0x80] sm:$0xff] %vm1289, %v922
      %1299 = vst.msk [vmem:[#allocation2 + $0x90] sm:$0xff] %vm1289, %v924
      %1300 = vst.msk [vmem:[#allocation2 + $0xa0] sm:$0xff] %vm1289, %v926
      %1301 = vst.msk [vmem:[#allocation2 + $0xb0] sm:$0xff] %vm1289, %v928
      %1302 = vst.msk [vmem:[#allocation2 + $0xc0] sm:$0xff] %vm1289, %v930
      %1303 = vst.msk [vmem:[#allocation2 + $0xd0] sm:$0xff] %vm1289, %v932
      %1304 = vst.msk [vmem:[#allocation2 + $0xe0] sm:$0xff] %vm1289, %v934
      %1305 = vst.msk [vmem:[#allocation2 + $0xf0] sm:$0xff] %vm1289, %v936
      %1306 = vst.msk [vmem:[#allocation2 + $0x100] sm:$0xff] %vm1289, %v938
      %1307 = vst.msk [vmem:[#allocation2 + $0x110] sm:$0xff] %vm1289, %v940
      %1308 = vst.msk [vmem:[#allocation2 + $0x120] sm:$0xff] %vm1289, %v942
      %1309 = vst.msk [vmem:[#allocation2 + $0x130] sm:$0xff] %vm1289, %v944
      %1310 = vst.msk [vmem:[#allocation2 + $0x140] sm:$0xff] %vm1289, %v946
      %1311 = vst.msk [vmem:[#allocation2 + $0x150] sm:$0xff] %vm1289, %v948
      %1312 = vst.msk [vmem:[#allocation2 + $0x160] sm:$0xff] %vm1289, %v950
      %1313 = vst.msk [vmem:[#allocation2 + $0x170] sm:$0xff] %vm1289, %v952
      %1314 = vst.msk [vmem:[#allocation2 + $0x180] sm:$0xff] %vm1289, %v954
      %1315 = vst.msk [vmem:[#allocation2 + $0x190] sm:$0xff] %vm1289, %v956
      %1316 = vst.msk [vmem:[#allocation2 + $0x1a0] sm:$0xff] %vm1289, %v958
      %1317 = vst.msk [vmem:[#allocation2 + $0x1b0] sm:$0xff] %vm1289, %v960
      %1318 = vst.msk [vmem:[#allocation2 + $0x1c0] sm:$0xff] %vm1289, %v962
      %1319 = vst.msk [vmem:[#allocation2 + $0x1d0] sm:$0xff] %vm1289, %v964
      %1320 = vst.msk [vmem:[#allocation2 + $0x1e0] sm:$0xff] %vm1289, %v966
      %1321 = vst.msk [vmem:[#allocation2 + $0x1f0] sm:$0xff] %vm1289, %v968
      %1322 = vst.msk [vmem:[#allocation2 + $0x200] sm:$0xff] %vm1289, %v970
      %1323 = vst.msk [vmem:[#allocation2 + $0x210] sm:$0xff] %vm1289, %v972
      %1324 = vst.msk [vmem:[#allocation2 + $0x220] sm:$0xff] %vm1289, %v974
      %1325 = vst.msk [vmem:[#allocation2 + $0x230] sm:$0xff] %vm1289, %v976
      %1326 = vst.msk [vmem:[#allocation2 + $0x240] sm:$0xff] %vm1289, %v978
      %1327 = vst.msk [vmem:[#allocation2 + $0x250] sm:$0xff] %vm1289, %v980
      %1328 = vst.msk [vmem:[#allocation2 + $0x260] sm:$0xff] %vm1289, %v982
      %1329 = vst.msk [vmem:[#allocation2 + $0x270] sm:$0xff] %vm1289, %v984
      %1330 = vst.msk [vmem:[#allocation2 + $0x280] sm:$0xff] %vm1289, %v986
      %1331 = vst.msk [vmem:[#allocation2 + $0x290] sm:$0xff] %vm1289, %v988
      %1332 = vst.msk [vmem:[#allocation2 + $0x2a0] sm:$0xff] %vm1289, %v990
      %1333 = vst.msk [vmem:[#allocation2 + $0x2b0] sm:$0xff] %vm1289, %v992
      %1334 = vst.msk [vmem:[#allocation2 + $0x2c0] sm:$0xff] %vm1289, %v994
      %1335 = vst.msk [vmem:[#allocation2 + $0x2d0] sm:$0xff] %vm1289, %v996
      %1336 = vst.msk [vmem:[#allocation2 + $0x2e0] sm:$0xff] %vm1289, %v998
      %1337 = vst.msk [vmem:[#allocation2 + $0x2f0] sm:$0xff] %vm1289, %v1000
      %1338 = vst.msk [vmem:[#allocation2 + $0x300] sm:$0xff] %vm1289, %v1002
      %1339 = vst.msk [vmem:[#allocation2 + $0x310] sm:$0xff] %vm1289, %v1004
      %1340 = vst.msk [vmem:[#allocation2 + $0x320] sm:$0xff] %vm1289, %v1006
      %1341 = vst.msk [vmem:[#allocation2 + $0x330] sm:$0xff] %vm1289, %v1008
      %1342 = vst.msk [vmem:[#allocation2 + $0x340] sm:$0xff] %vm1289, %v1010
      %1343 = vst.msk [vmem:[#allocation2 + $0x350] sm:$0xff] %vm1289, %v1012
      %1344 = vst.msk [vmem:[#allocation2 + $0x360] sm:$0xff] %vm1289, %v1014
      %1345 = vst.msk [vmem:[#allocation2 + $0x370] sm:$0xff] %vm1289, %v1016
      %1346 = vst.msk [vmem:[#allocation2 + $0x380] sm:$0xff] %vm1289, %v1018
      %1347 = vst.msk [vmem:[#allocation2 + $0x390] sm:$0xff] %vm1289, %v1020
      %1348 = vst.msk [vmem:[#allocation2 + $0x3a0] sm:$0xff] %vm1289, %v1022
      %1349 = vst.msk [vmem:[#allocation2 + $0x3b0] sm:$0xff] %vm1289, %v1024
      %1350 = vst.msk [vmem:[#allocation2 + $0x3c0] sm:$0xff] %vm1289, %v1026
      %1351 = vst.msk [vmem:[#allocation2 + $0x3d0] sm:$0xff] %vm1289, %v1028
      %1352 = vst.msk [vmem:[#allocation2 + $0x3e0] sm:$0xff] %vm1289, %v1030
      %1353 = vst.msk [vmem:[#allocation2 + $0x3f0] sm:$0xff] %vm1289, %v1032
      %1354 = vst.msk [vmem:[#allocation2 + $0x400] sm:$0xff] %vm1289, %v1034
      %1355 = vst.msk [vmem:[#allocation2 + $0x410] sm:$0xff] %vm1289, %v1036
      %1356 = vst.msk [vmem:[#allocation2 + $0x420] sm:$0xff] %vm1289, %v1038
      %1357 = vst.msk [vmem:[#allocation2 + $0x430] sm:$0xff] %vm1289, %v1040
      %1358 = vst.msk [vmem:[#allocation2 + $0x440] sm:$0xff] %vm1289, %v1042
      %1359 = vst.msk [vmem:[#allocation2 + $0x450] sm:$0xff] %vm1289, %v1044
      %1360 = vst.msk [vmem:[#allocation2 + $0x460] sm:$0xff] %vm1289, %v1046
      %1361 = vst.msk [vmem:[#allocation2 + $0x470] sm:$0xff] %vm1289, %v1048
      %1362 = vst.msk [vmem:[#allocation2 + $0x480] sm:$0xff] %vm1289, %v1050
      %1363 = vst.msk [vmem:[#allocation2 + $0x490] sm:$0xff] %vm1289, %v1052
      %1364 = vst.msk [vmem:[#allocation2 + $0x4a0] sm:$0xff] %vm1289, %v1054
      %1365 = vst.msk [vmem:[#allocation2 + $0x4b0] sm:$0xff] %vm1289, %v1056
      %1366 = vst.msk [vmem:[#allocation2 + $0x4c0] sm:$0xff] %vm1289, %v1058
      %1367 = vst.msk [vmem:[#allocation2 + $0x4d0] sm:$0xff] %vm1289, %v1060
      %1368 = vst.msk [vmem:[#allocation2 + $0x4e0] sm:$0xff] %vm1289, %v1062
      %1369 = vst.msk [vmem:[#allocation2 + $0x4f0] sm:$0xff] %vm1289, %v1064
      %1370 = vst.msk [vmem:[#allocation2 + $0x500] sm:$0xff] %vm1289, %v1066
      %1371 = vst.msk [vmem:[#allocation2 + $0x510] sm:$0xff] %vm1289, %v1068
      %1372 = vst.msk [vmem:[#allocation2 + $0x520] sm:$0xff] %vm1289, %v1070
      %1373 = vst.msk [vmem:[#allocation2 + $0x530] sm:$0xff] %vm1289, %v1072
      %1374 = vst.msk [vmem:[#allocation2 + $0x540] sm:$0xff] %vm1289, %v1074
      %1375 = vst.msk [vmem:[#allocation2 + $0x550] sm:$0xff] %vm1289, %v1076
      %1376 = vst.msk [vmem:[#allocation2 + $0x560] sm:$0xff] %vm1289, %v1078
      %1377 = vst.msk [vmem:[#allocation2 + $0x570] sm:$0xff] %vm1289, %v1080
      %1378 = vst.msk [vmem:[#allocation2 + $0x580] sm:$0xff] %vm1289, %v1082
      %1379 = vst.msk [vmem:[#allocation2 + $0x590] sm:$0xff] %vm1289, %v1084
      %1380 = vst.msk [vmem:[#allocation2 + $0x5a0] sm:$0xff] %vm1289, %v1086
      %1381 = vst.msk [vmem:[#allocation2 + $0x5b0] sm:$0xff] %vm1289, %v1088
      %1382 = vst.msk [vmem:[#allocation2 + $0x5c0] sm:$0xff] %vm1289, %v1090
      %1383 = vst.msk [vmem:[#allocation2 + $0x5d0] sm:$0xff] %vm1289, %v1092
      %1384 = vst.msk [vmem:[#allocation2 + $0x5e0] sm:$0xff] %vm1289, %v1094
      %1385 = vst.msk [vmem:[#allocation2 + $0x5f0] sm:$0xff] %vm1289, %v1096
      %1386 = vst.msk [vmem:[#allocation2 + $0x600] sm:$0xff] %vm1289, %v1098
      %1387 = vst.msk [vmem:[#allocation2 + $0x610] sm:$0xff] %vm1289, %v1100
      %1388 = vst.msk [vmem:[#allocation2 + $0x620] sm:$0xff] %vm1289, %v1102
      %1389 = vst.msk [vmem:[#allocation2 + $0x630] sm:$0xff] %vm1289, %v1104
      %1390 = vst.msk [vmem:[#allocation2 + $0x640] sm:$0xff] %vm1289, %v1106
      %1391 = vst.msk [vmem:[#allocation2 + $0x650] sm:$0xff] %vm1289, %v1108
      %1392 = vst.msk [vmem:[#allocation2 + $0x660] sm:$0xff] %vm1289, %v1110
      %1393 = vst.msk [vmem:[#allocation2 + $0x670] sm:$0xff] %vm1289, %v1112
      %1394 = vst.msk [vmem:[#allocation2 + $0x680] sm:$0xff] %vm1289, %v1114
      %1395 = vst.msk [vmem:[#allocation2 + $0x690] sm:$0xff] %vm1289, %v1116
      %1396 = vst.msk [vmem:[#allocation2 + $0x6a0] sm:$0xff] %vm1289, %v1118
      %1397 = vst.msk [vmem:[#allocation2 + $0x6b0] sm:$0xff] %vm1289, %v1120
      %1398 = vst.msk [vmem:[#allocation2 + $0x6c0] sm:$0xff] %vm1289, %v1122
      %1399 = vst.msk [vmem:[#allocation2 + $0x6d0] sm:$0xff] %vm1289, %v1124
      %1400 = vst.msk [vmem:[#allocation2 + $0x6e0] sm:$0xff] %vm1289, %v1126
      %1401 = vst.msk [vmem:[#allocation2 + $0x6f0] sm:$0xff] %vm1289, %v1128
      %1402 = vst.msk [vmem:[#allocation2 + $0x700] sm:$0xff] %vm1289, %v1130
      %1403 = vst.msk [vmem:[#allocation2 + $0x710] sm:$0xff] %vm1289, %v1132
      %1404 = vst.msk [vmem:[#allocation2 + $0x720] sm:$0xff] %vm1289, %v1134
      %1405 = vst.msk [vmem:[#allocation2 + $0x730] sm:$0xff] %vm1289, %v1136
      %1406 = vst.msk [vmem:[#allocation2 + $0x740] sm:$0xff] %vm1289, %v1138
      %1407 = vst.msk [vmem:[#allocation2 + $0x750] sm:$0xff] %vm1289, %v1140
      %1408 = vst.msk [vmem:[#allocation2 + $0x760] sm:$0xff] %vm1289, %v1142
      %1409 = vst.msk [vmem:[#allocation2 + $0x770] sm:$0xff] %vm1289, %v1144
      %1410 = vst.msk [vmem:[#allocation2 + $0x780] sm:$0xff] %vm1289, %v1146
      %1411 = vst.msk [vmem:[#allocation2 + $0x790] sm:$0xff] %vm1289, %v1148
      %1412 = vst.msk [vmem:[#allocation2 + $0x7a0] sm:$0xff] %vm1289, %v1150
      %1413 = vst.msk [vmem:[#allocation2 + $0x7b0] sm:$0xff] %vm1289, %v1152
      %1414 = vst.msk [vmem:[#allocation2 + $0x7c0] sm:$0xff] %vm1289, %v1154
      %1415 = vst.msk [vmem:[#allocation2 + $0x7d0] sm:$0xff] %vm1289, %v1156
      %1416 = vst.msk [vmem:[#allocation2 + $0x7e0] sm:$0xff] %vm1289, %v1158
      %1417 = vst.msk [vmem:[#allocation2 + $0x7f0] sm:$0xff] %vm1289, %v1160
      %s1418 = scalar_lea.vmem %s385, 16
      %v1419 = vld [vmem:[%s1418] sm:$0xff]
      %v1420 = vld [vmem:[%s1418 + $0x10] sm:$0xff]
      %v1421 = vld [vmem:[%s1418 + $0x20] sm:$0xff]
      %v1422 = vld [vmem:[%s1418 + $0x30] sm:$0xff]
      %v1423 = vld [vmem:[%s1418 + $0x40] sm:$0xff]
      %v1424 = vld [vmem:[%s1418 + $0x50] sm:$0xff]
      %v1425 = vld [vmem:[%s1418 + $0x60] sm:$0xff]
      %v1426 = vld [vmem:[%s1418 + $0x70] sm:$0xff]
      %v1427 = vld [vmem:[%s1418 + $0x90] sm:$0xff]
      %v1428 = vld [vmem:[%s1418 + $0xa0] sm:$0xff]
      %v1429 = vld [vmem:[%s1418 + $0xb0] sm:$0xff]
      %v1430 = vld [vmem:[%s1418 + $0xc0] sm:$0xff]
      %v1431 = vld [vmem:[%s1418 + $0xd0] sm:$0xff]
      %v1432 = vld [vmem:[%s1418 + $0xe0] sm:$0xff]
      %v1433 = vld [vmem:[%s1418 + $0xf0] sm:$0xff]
      %v1434 = vld [vmem:[%s1418 + $0x100] sm:$0xff]
      %v1435 = vld [vmem:[%s1418 + $0x120] sm:$0xff]
      %v1436 = vld [vmem:[%s1418 + $0x130] sm:$0xff]
      %v1437 = vld [vmem:[%s1418 + $0x140] sm:$0xff]
      %v1438 = vld [vmem:[%s1418 + $0x150] sm:$0xff]
      %v1439 = vld [vmem:[%s1418 + $0x160] sm:$0xff]
      %v1440 = vld [vmem:[%s1418 + $0x170] sm:$0xff]
      %v1441 = vld [vmem:[%s1418 + $0x180] sm:$0xff]
      %v1442 = vld [vmem:[%s1418 + $0x190] sm:$0xff]
      %v1443 = vld [vmem:[%s1418 + $0x1b0] sm:$0xff]
      %v1444 = vld [vmem:[%s1418 + $0x1c0] sm:$0xff]
      %v1445 = vld [vmem:[%s1418 + $0x1d0] sm:$0xff]
      %v1446 = vld [vmem:[%s1418 + $0x1e0] sm:$0xff]
      %v1447 = vld [vmem:[%s1418 + $0x1f0] sm:$0xff]
      %v1448 = vld [vmem:[%s1418 + $0x200] sm:$0xff]
      %v1449 = vld [vmem:[%s1418 + $0x210] sm:$0xff]
      %v1450 = vld [vmem:[%s1418 + $0x220] sm:$0xff]
      %v1451 = vld [vmem:[%s1418 + $0x240] sm:$0xff]
      %v1452 = vld [vmem:[%s1418 + $0x250] sm:$0xff]
      %v1453 = vld [vmem:[%s1418 + $0x260] sm:$0xff]
      %v1454 = vld [vmem:[%s1418 + $0x270] sm:$0xff]
      %v1455 = vld [vmem:[%s1418 + $0x280] sm:$0xff]
      %v1456 = vld [vmem:[%s1418 + $0x290] sm:$0xff]
      %v1457 = vld [vmem:[%s1418 + $0x2a0] sm:$0xff]
      %v1458 = vld [vmem:[%s1418 + $0x2b0] sm:$0xff]
      %v1459 = vld [vmem:[%s1418 + $0x2d0] sm:$0xff]
      %v1460 = vld [vmem:[%s1418 + $0x2e0] sm:$0xff]
      %v1461 = vld [vmem:[%s1418 + $0x2f0] sm:$0xff]
      %v1462 = vld [vmem:[%s1418 + $0x300] sm:$0xff]
      %v1463 = vld [vmem:[%s1418 + $0x310] sm:$0xff]
      %v1464 = vld [vmem:[%s1418 + $0x320] sm:$0xff]
      %v1465 = vld [vmem:[%s1418 + $0x330] sm:$0xff]
      %v1466 = vld [vmem:[%s1418 + $0x340] sm:$0xff]
      %v1467 = vld [vmem:[%s1418 + $0x360] sm:$0xff]
      %v1468 = vld [vmem:[%s1418 + $0x370] sm:$0xff]
      %v1469 = vld [vmem:[%s1418 + $0x380] sm:$0xff]
      %v1470 = vld [vmem:[%s1418 + $0x390] sm:$0xff]
      %v1471 = vld [vmem:[%s1418 + $0x3a0] sm:$0xff]
      %v1472 = vld [vmem:[%s1418 + $0x3b0] sm:$0xff]
      %v1473 = vld [vmem:[%s1418 + $0x3c0] sm:$0xff]
      %v1474 = vld [vmem:[%s1418 + $0x3d0] sm:$0xff]
      %v1475 = vld [vmem:[%s1418 + $0x3f0] sm:$0xff]
      %v1476 = vld [vmem:[%s1418 + $0x400] sm:$0xff]
      %v1477 = vld [vmem:[%s1418 + $0x410] sm:$0xff]
      %v1478 = vld [vmem:[%s1418 + $0x420] sm:$0xff]
      %v1479 = vld [vmem:[%s1418 + $0x430] sm:$0xff]
      %v1480 = vld [vmem:[%s1418 + $0x440] sm:$0xff]
      %v1481 = vld [vmem:[%s1418 + $0x450] sm:$0xff]
      %v1482 = vld [vmem:[%s1418 + $0x460] sm:$0xff]
      %v1483 = vld [vmem:[%s1418 + $0x480] sm:$0xff]
      %v1484 = vld [vmem:[%s1418 + $0x490] sm:$0xff]
      %v1485 = vld [vmem:[%s1418 + $0x4a0] sm:$0xff]
      %v1486 = vld [vmem:[%s1418 + $0x4b0] sm:$0xff]
      %v1487 = vld [vmem:[%s1418 + $0x4c0] sm:$0xff]
      %v1488 = vld [vmem:[%s1418 + $0x4d0] sm:$0xff]
      %v1489 = vld [vmem:[%s1418 + $0x4e0] sm:$0xff]
      %v1490 = vld [vmem:[%s1418 + $0x4f0] sm:$0xff]
      %v1491 = vld [vmem:[%s1418 + $0x510] sm:$0xff]
      %v1492 = vld [vmem:[%s1418 + $0x520] sm:$0xff]
      %v1493 = vld [vmem:[%s1418 + $0x530] sm:$0xff]
      %v1494 = vld [vmem:[%s1418 + $0x540] sm:$0xff]
      %v1495 = vld [vmem:[%s1418 + $0x550] sm:$0xff]
      %v1496 = vld [vmem:[%s1418 + $0x560] sm:$0xff]
      %v1497 = vld [vmem:[%s1418 + $0x570] sm:$0xff]
      %v1498 = vld [vmem:[%s1418 + $0x580] sm:$0xff]
      %v1499 = vld [vmem:[%s1418 + $0x5a0] sm:$0xff]
      %v1500 = vld [vmem:[%s1418 + $0x5b0] sm:$0xff]
      %v1501 = vld [vmem:[%s1418 + $0x5c0] sm:$0xff]
      %v1502 = vld [vmem:[%s1418 + $0x5d0] sm:$0xff]
      %v1503 = vld [vmem:[%s1418 + $0x5e0] sm:$0xff]
      %v1504 = vld [vmem:[%s1418 + $0x5f0] sm:$0xff]
      %v1505 = vld [vmem:[%s1418 + $0x600] sm:$0xff]
      %v1506 = vld [vmem:[%s1418 + $0x610] sm:$0xff]
      %v1507 = vld [vmem:[%s1418 + $0x630] sm:$0xff]
      %v1508 = vld [vmem:[%s1418 + $0x640] sm:$0xff]
      %v1509 = vld [vmem:[%s1418 + $0x650] sm:$0xff]
      %v1510 = vld [vmem:[%s1418 + $0x660] sm:$0xff]
      %v1511 = vld [vmem:[%s1418 + $0x670] sm:$0xff]
      %v1512 = vld [vmem:[%s1418 + $0x680] sm:$0xff]
      %v1513 = vld [vmem:[%s1418 + $0x690] sm:$0xff]
      %v1514 = vld [vmem:[%s1418 + $0x6a0] sm:$0xff]
      %v1515 = vld [vmem:[%s1418 + $0x6c0] sm:$0xff]
      %v1516 = vld [vmem:[%s1418 + $0x6d0] sm:$0xff]
      %v1517 = vld [vmem:[%s1418 + $0x6e0] sm:$0xff]
      %v1518 = vld [vmem:[%s1418 + $0x6f0] sm:$0xff]
      %v1519 = vld [vmem:[%s1418 + $0x700] sm:$0xff]
      %v1520 = vld [vmem:[%s1418 + $0x710] sm:$0xff]
      %v1521 = vld [vmem:[%s1418 + $0x720] sm:$0xff]
      %v1522 = vld [vmem:[%s1418 + $0x730] sm:$0xff]
      %v1523 = vld [vmem:[%s1418 + $0x750] sm:$0xff]
      %v1524 = vld [vmem:[%s1418 + $0x760] sm:$0xff]
      %v1525 = vld [vmem:[%s1418 + $0x770] sm:$0xff]
      %v1526 = vld [vmem:[%s1418 + $0x780] sm:$0xff]
      %v1527 = vld [vmem:[%s1418 + $0x790] sm:$0xff]
      %v1528 = vld [vmem:[%s1418 + $0x7a0] sm:$0xff]
      %v1529 = vld [vmem:[%s1418 + $0x7b0] sm:$0xff]
      %v1530 = vld [vmem:[%s1418 + $0x7c0] sm:$0xff]
      %v1531 = vld [vmem:[%s1418 + $0x7e0] sm:$0xff]
      %v1532 = vld [vmem:[%s1418 + $0x7f0] sm:$0xff]
      %v1533 = vld [vmem:[%s1418 + $0x800] sm:$0xff]
      %v1534 = vld [vmem:[%s1418 + $0x810] sm:$0xff]
      %v1535 = vld [vmem:[%s1418 + $0x820] sm:$0xff]
      %v1536 = vld [vmem:[%s1418 + $0x830] sm:$0xff]
      %v1537 = vld [vmem:[%s1418 + $0x840] sm:$0xff]
      %v1538 = vld [vmem:[%s1418 + $0x850] sm:$0xff]
      %v1539 = vld [vmem:[%s1418 + $0x870] sm:$0xff]
      %v1540 = vld [vmem:[%s1418 + $0x880] sm:$0xff]
      %v1541 = vld [vmem:[%s1418 + $0x890] sm:$0xff]
      %v1542 = vld [vmem:[%s1418 + $0x8a0] sm:$0xff]
      %v1543 = vld [vmem:[%s1418 + $0x8b0] sm:$0xff]
      %v1544 = vld [vmem:[%s1418 + $0x8c0] sm:$0xff]
      %v1545 = vld [vmem:[%s1418 + $0x8d0] sm:$0xff]
      %v1546 = vld [vmem:[%s1418 + $0x8e0] sm:$0xff]
      %1547 = vst.msk [vmem:[#allocation2 + $0x8] sm:$0xff] %vm520, %v1419
      %1548 = vst.msk [vmem:[#allocation2 + $0x18] sm:$0xff] %vm520, %v1420
      %1549 = vst.msk [vmem:[#allocation2 + $0x28] sm:$0xff] %vm520, %v1421
      %1550 = vst.msk [vmem:[#allocation2 + $0x38] sm:$0xff] %vm520, %v1422
      %1551 = vst.msk [vmem:[#allocation2 + $0x48] sm:$0xff] %vm520, %v1423
      %1552 = vst.msk [vmem:[#allocation2 + $0x58] sm:$0xff] %vm520, %v1424
      %1553 = vst.msk [vmem:[#allocation2 + $0x68] sm:$0xff] %vm520, %v1425
      %1554 = vst.msk [vmem:[#allocation2 + $0x78] sm:$0xff] %vm520, %v1426
      %1555 = vst.msk [vmem:[#allocation2 + $0x88] sm:$0xff] %vm520, %v1427
      %1556 = vst.msk [vmem:[#allocation2 + $0x98] sm:$0xff] %vm520, %v1428
      %1557 = vst.msk [vmem:[#allocation2 + $0xa8] sm:$0xff] %vm520, %v1429
      %1558 = vst.msk [vmem:[#allocation2 + $0xb8] sm:$0xff] %vm520, %v1430
      %1559 = vst.msk [vmem:[#allocation2 + $0xc8] sm:$0xff] %vm520, %v1431
      %1560 = vst.msk [vmem:[#allocation2 + $0xd8] sm:$0xff] %vm520, %v1432
      %1561 = vst.msk [vmem:[#allocation2 + $0xe8] sm:$0xff] %vm520, %v1433
      %1562 = vst.msk [vmem:[#allocation2 + $0xf8] sm:$0xff] %vm520, %v1434
      %1563 = vst.msk [vmem:[#allocation2 + $0x108] sm:$0xff] %vm520, %v1435
      %1564 = vst.msk [vmem:[#allocation2 + $0x118] sm:$0xff] %vm520, %v1436
      %1565 = vst.msk [vmem:[#allocation2 + $0x128] sm:$0xff] %vm520, %v1437
      %1566 = vst.msk [vmem:[#allocation2 + $0x138] sm:$0xff] %vm520, %v1438
      %1567 = vst.msk [vmem:[#allocation2 + $0x148] sm:$0xff] %vm520, %v1439
      %1568 = vst.msk [vmem:[#allocation2 + $0x158] sm:$0xff] %vm520, %v1440
      %1569 = vst.msk [vmem:[#allocation2 + $0x168] sm:$0xff] %vm520, %v1441
      %1570 = vst.msk [vmem:[#allocation2 + $0x178] sm:$0xff] %vm520, %v1442
      %1571 = vst.msk [vmem:[#allocation2 + $0x188] sm:$0xff] %vm520, %v1443
      %1572 = vst.msk [vmem:[#allocation2 + $0x198] sm:$0xff] %vm520, %v1444
      %1573 = vst.msk [vmem:[#allocation2 + $0x1a8] sm:$0xff] %vm520, %v1445
      %1574 = vst.msk [vmem:[#allocation2 + $0x1b8] sm:$0xff] %vm520, %v1446
      %1575 = vst.msk [vmem:[#allocation2 + $0x1c8] sm:$0xff] %vm520, %v1447
      %1576 = vst.msk [vmem:[#allocation2 + $0x1d8] sm:$0xff] %vm520, %v1448
      %1577 = vst.msk [vmem:[#allocation2 + $0x1e8] sm:$0xff] %vm520, %v1449
      %1578 = vst.msk [vmem:[#allocation2 + $0x1f8] sm:$0xff] %vm520, %v1450
      %1579 = vst.msk [vmem:[#allocation2 + $0x208] sm:$0xff] %vm520, %v1451
      %1580 = vst.msk [vmem:[#allocation2 + $0x218] sm:$0xff] %vm520, %v1452
      %1581 = vst.msk [vmem:[#allocation2 + $0x228] sm:$0xff] %vm520, %v1453
      %1582 = vst.msk [vmem:[#allocation2 + $0x238] sm:$0xff] %vm520, %v1454
      %1583 = vst.msk [vmem:[#allocation2 + $0x248] sm:$0xff] %vm520, %v1455
      %1584 = vst.msk [vmem:[#allocation2 + $0x258] sm:$0xff] %vm520, %v1456
      %1585 = vst.msk [vmem:[#allocation2 + $0x268] sm:$0xff] %vm520, %v1457
      %1586 = vst.msk [vmem:[#allocation2 + $0x278] sm:$0xff] %vm520, %v1458
      %1587 = vst.msk [vmem:[#allocation2 + $0x288] sm:$0xff] %vm520, %v1459
      %1588 = vst.msk [vmem:[#allocation2 + $0x298] sm:$0xff] %vm520, %v1460
      %1589 = vst.msk [vmem:[#allocation2 + $0x2a8] sm:$0xff] %vm520, %v1461
      %1590 = vst.msk [vmem:[#allocation2 + $0x2b8] sm:$0xff] %vm520, %v1462
      %1591 = vst.msk [vmem:[#allocation2 + $0x2c8] sm:$0xff] %vm520, %v1463
      %1592 = vst.msk [vmem:[#allocation2 + $0x2d8] sm:$0xff] %vm520, %v1464
      %1593 = vst.msk [vmem:[#allocation2 + $0x2e8] sm:$0xff] %vm520, %v1465
      %1594 = vst.msk [vmem:[#allocation2 + $0x2f8] sm:$0xff] %vm520, %v1466
      %1595 = vst.msk [vmem:[#allocation2 + $0x308] sm:$0xff] %vm520, %v1467
      %1596 = vst.msk [vmem:[#allocation2 + $0x318] sm:$0xff] %vm520, %v1468
      %1597 = vst.msk [vmem:[#allocation2 + $0x328] sm:$0xff] %vm520, %v1469
      %1598 = vst.msk [vmem:[#allocation2 + $0x338] sm:$0xff] %vm520, %v1470
      %1599 = vst.msk [vmem:[#allocation2 + $0x348] sm:$0xff] %vm520, %v1471
      %1600 = vst.msk [vmem:[#allocation2 + $0x358] sm:$0xff] %vm520, %v1472
      %1601 = vst.msk [vmem:[#allocation2 + $0x368] sm:$0xff] %vm520, %v1473
      %1602 = vst.msk [vmem:[#allocation2 + $0x378] sm:$0xff] %vm520, %v1474
      %1603 = vst.msk [vmem:[#allocation2 + $0x388] sm:$0xff] %vm520, %v1475
      %1604 = vst.msk [vmem:[#allocation2 + $0x398] sm:$0xff] %vm520, %v1476
      %1605 = vst.msk [vmem:[#allocation2 + $0x3a8] sm:$0xff] %vm520, %v1477
      %1606 = vst.msk [vmem:[#allocation2 + $0x3b8] sm:$0xff] %vm520, %v1478
      %1607 = vst.msk [vmem:[#allocation2 + $0x3c8] sm:$0xff] %vm520, %v1479
      %1608 = vst.msk [vmem:[#allocation2 + $0x3d8] sm:$0xff] %vm520, %v1480
      %1609 = vst.msk [vmem:[#allocation2 + $0x3e8] sm:$0xff] %vm520, %v1481
      %1610 = vst.msk [vmem:[#allocation2 + $0x3f8] sm:$0xff] %vm520, %v1482
      %1611 = vst.msk [vmem:[#allocation2 + $0x408] sm:$0xff] %vm520, %v1483
      %1612 = vst.msk [vmem:[#allocation2 + $0x418] sm:$0xff] %vm520, %v1484
      %1613 = vst.msk [vmem:[#allocation2 + $0x428] sm:$0xff] %vm520, %v1485
      %1614 = vst.msk [vmem:[#allocation2 + $0x438] sm:$0xff] %vm520, %v1486
      %1615 = vst.msk [vmem:[#allocation2 + $0x448] sm:$0xff] %vm520, %v1487
      %1616 = vst.msk [vmem:[#allocation2 + $0x458] sm:$0xff] %vm520, %v1488
      %1617 = vst.msk [vmem:[#allocation2 + $0x468] sm:$0xff] %vm520, %v1489
      %1618 = vst.msk [vmem:[#allocation2 + $0x478] sm:$0xff] %vm520, %v1490
      %1619 = vst.msk [vmem:[#allocation2 + $0x488] sm:$0xff] %vm520, %v1491
      %1620 = vst.msk [vmem:[#allocation2 + $0x498] sm:$0xff] %vm520, %v1492
      %1621 = vst.msk [vmem:[#allocation2 + $0x4a8] sm:$0xff] %vm520, %v1493
      %1622 = vst.msk [vmem:[#allocation2 + $0x4b8] sm:$0xff] %vm520, %v1494
      %1623 = vst.msk [vmem:[#allocation2 + $0x4c8] sm:$0xff] %vm520, %v1495
      %1624 = vst.msk [vmem:[#allocation2 + $0x4d8] sm:$0xff] %vm520, %v1496
      %1625 = vst.msk [vmem:[#allocation2 + $0x4e8] sm:$0xff] %vm520, %v1497
      %1626 = vst.msk [vmem:[#allocation2 + $0x4f8] sm:$0xff] %vm520, %v1498
      %1627 = vst.msk [vmem:[#allocation2 + $0x508] sm:$0xff] %vm520, %v1499
      %1628 = vst.msk [vmem:[#allocation2 + $0x518] sm:$0xff] %vm520, %v1500
      %1629 = vst.msk [vmem:[#allocation2 + $0x528] sm:$0xff] %vm520, %v1501
      %1630 = vst.msk [vmem:[#allocation2 + $0x538] sm:$0xff] %vm520, %v1502
      %1631 = vst.msk [vmem:[#allocation2 + $0x548] sm:$0xff] %vm520, %v1503
      %1632 = vst.msk [vmem:[#allocation2 + $0x558] sm:$0xff] %vm520, %v1504
      %1633 = vst.msk [vmem:[#allocation2 + $0x568] sm:$0xff] %vm520, %v1505
      %1634 = vst.msk [vmem:[#allocation2 + $0x578] sm:$0xff] %vm520, %v1506
      %1635 = vst.msk [vmem:[#allocation2 + $0x588] sm:$0xff] %vm520, %v1507
      %1636 = vst.msk [vmem:[#allocation2 + $0x598] sm:$0xff] %vm520, %v1508
      %1637 = vst.msk [vmem:[#allocation2 + $0x5a8] sm:$0xff] %vm520, %v1509
      %1638 = vst.msk [vmem:[#allocation2 + $0x5b8] sm:$0xff] %vm520, %v1510
      %1639 = vst.msk [vmem:[#allocation2 + $0x5c8] sm:$0xff] %vm520, %v1511
      %1640 = vst.msk [vmem:[#allocation2 + $0x5d8] sm:$0xff] %vm520, %v1512
      %1641 = vst.msk [vmem:[#allocation2 + $0x5e8] sm:$0xff] %vm520, %v1513
      %1642 = vst.msk [vmem:[#allocation2 + $0x5f8] sm:$0xff] %vm520, %v1514
      %1643 = vst.msk [vmem:[#allocation2 + $0x608] sm:$0xff] %vm520, %v1515
      %1644 = vst.msk [vmem:[#allocation2 + $0x618] sm:$0xff] %vm520, %v1516
      %1645 = vst.msk [vmem:[#allocation2 + $0x628] sm:$0xff] %vm520, %v1517
      %1646 = vst.msk [vmem:[#allocation2 + $0x638] sm:$0xff] %vm520, %v1518
      %1647 = vst.msk [vmem:[#allocation2 + $0x648] sm:$0xff] %vm520, %v1519
      %1648 = vst.msk [vmem:[#allocation2 + $0x658] sm:$0xff] %vm520, %v1520
      %1649 = vst.msk [vmem:[#allocation2 + $0x668] sm:$0xff] %vm520, %v1521
      %1650 = vst.msk [vmem:[#allocation2 + $0x678] sm:$0xff] %vm520, %v1522
      %1651 = vst.msk [vmem:[#allocation2 + $0x688] sm:$0xff] %vm520, %v1523
      %1652 = vst.msk [vmem:[#allocation2 + $0x698] sm:$0xff] %vm520, %v1524
      %1653 = vst.msk [vmem:[#allocation2 + $0x6a8] sm:$0xff] %vm520, %v1525
      %1654 = vst.msk [vmem:[#allocation2 + $0x6b8] sm:$0xff] %vm520, %v1526
      %1655 = vst.msk [vmem:[#allocation2 + $0x6c8] sm:$0xff] %vm520, %v1527
      %1656 = vst.msk [vmem:[#allocation2 + $0x6d8] sm:$0xff] %vm520, %v1528
      %1657 = vst.msk [vmem:[#allocation2 + $0x6e8] sm:$0xff] %vm520, %v1529
      %1658 = vst.msk [vmem:[#allocation2 + $0x6f8] sm:$0xff] %vm520, %v1530
      %1659 = vst.msk [vmem:[#allocation2 + $0x708] sm:$0xff] %vm520, %v1531
      %1660 = vst.msk [vmem:[#allocation2 + $0x718] sm:$0xff] %vm520, %v1532
      %1661 = vst.msk [vmem:[#allocation2 + $0x728] sm:$0xff] %vm520, %v1533
      %1662 = vst.msk [vmem:[#allocation2 + $0x738] sm:$0xff] %vm520, %v1534
      %1663 = vst.msk [vmem:[#allocation2 + $0x748] sm:$0xff] %vm520, %v1535
      %1664 = vst.msk [vmem:[#allocation2 + $0x758] sm:$0xff] %vm520, %v1536
      %1665 = vst.msk [vmem:[#allocation2 + $0x768] sm:$0xff] %vm520, %v1537
      %1666 = vst.msk [vmem:[#allocation2 + $0x778] sm:$0xff] %vm520, %v1538
      %1667 = vst.msk [vmem:[#allocation2 + $0x788] sm:$0xff] %vm520, %v1539
      %1668 = vst.msk [vmem:[#allocation2 + $0x798] sm:$0xff] %vm520, %v1540
      %1669 = vst.msk [vmem:[#allocation2 + $0x7a8] sm:$0xff] %vm520, %v1541
      %1670 = vst.msk [vmem:[#allocation2 + $0x7b8] sm:$0xff] %vm520, %v1542
      %1671 = vst.msk [vmem:[#allocation2 + $0x7c8] sm:$0xff] %vm520, %v1543
      %1672 = vst.msk [vmem:[#allocation2 + $0x7d8] sm:$0xff] %vm520, %v1544
      %1673 = vst.msk [vmem:[#allocation2 + $0x7e8] sm:$0xff] %vm520, %v1545
      %1674 = vst.msk [vmem:[#allocation2 + $0x7f8] sm:$0xff] %vm520, %v1546
      %v1675 = vld [vmem:[%s1418 + $0x1] sm:$0xff]
      %v1676 = vld [vmem:[%s1418 + $0x11] sm:$0xff]
      %v1677 = vld [vmem:[%s1418 + $0x21] sm:$0xff]
      %v1678 = vld [vmem:[%s1418 + $0x31] sm:$0xff]
      %v1679 = vld [vmem:[%s1418 + $0x41] sm:$0xff]
      %v1680 = vld [vmem:[%s1418 + $0x51] sm:$0xff]
      %v1681 = vld [vmem:[%s1418 + $0x61] sm:$0xff]
      %v1682 = vld [vmem:[%s1418 + $0x71] sm:$0xff]
      %v1683 = vld [vmem:[%s1418 + $0x91] sm:$0xff]
      %v1684 = vld [vmem:[%s1418 + $0xa1] sm:$0xff]
      %v1685 = vld [vmem:[%s1418 + $0xb1] sm:$0xff]
      %v1686 = vld [vmem:[%s1418 + $0xc1] sm:$0xff]
      %v1687 = vld [vmem:[%s1418 + $0xd1] sm:$0xff]
      %v1688 = vld [vmem:[%s1418 + $0xe1] sm:$0xff]
      %v1689 = vld [vmem:[%s1418 + $0xf1] sm:$0xff]
      %v1690 = vld [vmem:[%s1418 + $0x101] sm:$0xff]
      %v1691 = vld [vmem:[%s1418 + $0x121] sm:$0xff]
      %v1692 = vld [vmem:[%s1418 + $0x131] sm:$0xff]
      %v1693 = vld [vmem:[%s1418 + $0x141] sm:$0xff]
      %v1694 = vld [vmem:[%s1418 + $0x151] sm:$0xff]
      %v1695 = vld [vmem:[%s1418 + $0x161] sm:$0xff]
      %v1696 = vld [vmem:[%s1418 + $0x171] sm:$0xff]
      %v1697 = vld [vmem:[%s1418 + $0x181] sm:$0xff]
      %v1698 = vld [vmem:[%s1418 + $0x191] sm:$0xff]
      %v1699 = vld [vmem:[%s1418 + $0x1b1] sm:$0xff]
      %v1700 = vld [vmem:[%s1418 + $0x1c1] sm:$0xff]
      %v1701 = vld [vmem:[%s1418 + $0x1d1] sm:$0xff]
      %v1702 = vld [vmem:[%s1418 + $0x1e1] sm:$0xff]
      %v1703 = vld [vmem:[%s1418 + $0x1f1] sm:$0xff]
      %v1704 = vld [vmem:[%s1418 + $0x201] sm:$0xff]
      %v1705 = vld [vmem:[%s1418 + $0x211] sm:$0xff]
      %v1706 = vld [vmem:[%s1418 + $0x221] sm:$0xff]
      %v1707 = vld [vmem:[%s1418 + $0x241] sm:$0xff]
      %v1708 = vld [vmem:[%s1418 + $0x251] sm:$0xff]
      %v1709 = vld [vmem:[%s1418 + $0x261] sm:$0xff]
      %v1710 = vld [vmem:[%s1418 + $0x271] sm:$0xff]
      %v1711 = vld [vmem:[%s1418 + $0x281] sm:$0xff]
      %v1712 = vld [vmem:[%s1418 + $0x291] sm:$0xff]
      %v1713 = vld [vmem:[%s1418 + $0x2a1] sm:$0xff]
      %v1714 = vld [vmem:[%s1418 + $0x2b1] sm:$0xff]
      %v1715 = vld [vmem:[%s1418 + $0x2d1] sm:$0xff]
      %v1716 = vld [vmem:[%s1418 + $0x2e1] sm:$0xff]
      %v1717 = vld [vmem:[%s1418 + $0x2f1] sm:$0xff]
      %v1718 = vld [vmem:[%s1418 + $0x301] sm:$0xff]
      %v1719 = vld [vmem:[%s1418 + $0x311] sm:$0xff]
      %v1720 = vld [vmem:[%s1418 + $0x321] sm:$0xff]
      %v1721 = vld [vmem:[%s1418 + $0x331] sm:$0xff]
      %v1722 = vld [vmem:[%s1418 + $0x341] sm:$0xff]
      %v1723 = vld [vmem:[%s1418 + $0x361] sm:$0xff]
      %v1724 = vld [vmem:[%s1418 + $0x371] sm:$0xff]
      %v1725 = vld [vmem:[%s1418 + $0x381] sm:$0xff]
      %v1726 = vld [vmem:[%s1418 + $0x391] sm:$0xff]
      %v1727 = vld [vmem:[%s1418 + $0x3a1] sm:$0xff]
      %v1728 = vld [vmem:[%s1418 + $0x3b1] sm:$0xff]
      %v1729 = vld [vmem:[%s1418 + $0x3c1] sm:$0xff]
      %v1730 = vld [vmem:[%s1418 + $0x3d1] sm:$0xff]
      %v1731 = vld [vmem:[%s1418 + $0x3f1] sm:$0xff]
      %v1732 = vld [vmem:[%s1418 + $0x401] sm:$0xff]
      %v1733 = vld [vmem:[%s1418 + $0x411] sm:$0xff]
      %v1734 = vld [vmem:[%s1418 + $0x421] sm:$0xff]
      %v1735 = vld [vmem:[%s1418 + $0x431] sm:$0xff]
      %v1736 = vld [vmem:[%s1418 + $0x441] sm:$0xff]
      %v1737 = vld [vmem:[%s1418 + $0x451] sm:$0xff]
      %v1738 = vld [vmem:[%s1418 + $0x461] sm:$0xff]
      %v1739 = vld [vmem:[%s1418 + $0x481] sm:$0xff]
      %v1740 = vld [vmem:[%s1418 + $0x491] sm:$0xff]
      %v1741 = vld [vmem:[%s1418 + $0x4a1] sm:$0xff]
      %v1742 = vld [vmem:[%s1418 + $0x4b1] sm:$0xff]
      %v1743 = vld [vmem:[%s1418 + $0x4c1] sm:$0xff]
      %v1744 = vld [vmem:[%s1418 + $0x4d1] sm:$0xff]
      %v1745 = vld [vmem:[%s1418 + $0x4e1] sm:$0xff]
      %v1746 = vld [vmem:[%s1418 + $0x4f1] sm:$0xff]
      %v1747 = vld [vmem:[%s1418 + $0x511] sm:$0xff]
      %v1748 = vld [vmem:[%s1418 + $0x521] sm:$0xff]
      %v1749 = vld [vmem:[%s1418 + $0x531] sm:$0xff]
      %v1750 = vld [vmem:[%s1418 + $0x541] sm:$0xff]
      %v1751 = vld [vmem:[%s1418 + $0x551] sm:$0xff]
      %v1752 = vld [vmem:[%s1418 + $0x561] sm:$0xff]
      %v1753 = vld [vmem:[%s1418 + $0x571] sm:$0xff]
      %v1754 = vld [vmem:[%s1418 + $0x581] sm:$0xff]
      %v1755 = vld [vmem:[%s1418 + $0x5a1] sm:$0xff]
      %v1756 = vld [vmem:[%s1418 + $0x5b1] sm:$0xff]
      %v1757 = vld [vmem:[%s1418 + $0x5c1] sm:$0xff]
      %v1758 = vld [vmem:[%s1418 + $0x5d1] sm:$0xff]
      %v1759 = vld [vmem:[%s1418 + $0x5e1] sm:$0xff]
      %v1760 = vld [vmem:[%s1418 + $0x5f1] sm:$0xff]
      %v1761 = vld [vmem:[%s1418 + $0x601] sm:$0xff]
      %v1762 = vld [vmem:[%s1418 + $0x611] sm:$0xff]
      %v1763 = vld [vmem:[%s1418 + $0x631] sm:$0xff]
      %v1764 = vld [vmem:[%s1418 + $0x641] sm:$0xff]
      %v1765 = vld [vmem:[%s1418 + $0x651] sm:$0xff]
      %v1766 = vld [vmem:[%s1418 + $0x661] sm:$0xff]
      %v1767 = vld [vmem:[%s1418 + $0x671] sm:$0xff]
      %v1768 = vld [vmem:[%s1418 + $0x681] sm:$0xff]
      %v1769 = vld [vmem:[%s1418 + $0x691] sm:$0xff]
      %v1770 = vld [vmem:[%s1418 + $0x6a1] sm:$0xff]
      %v1771 = vld [vmem:[%s1418 + $0x6c1] sm:$0xff]
      %v1772 = vld [vmem:[%s1418 + $0x6d1] sm:$0xff]
      %v1773 = vld [vmem:[%s1418 + $0x6e1] sm:$0xff]
      %v1774 = vld [vmem:[%s1418 + $0x6f1] sm:$0xff]
      %v1775 = vld [vmem:[%s1418 + $0x701] sm:$0xff]
      %v1776 = vld [vmem:[%s1418 + $0x711] sm:$0xff]
      %v1777 = vld [vmem:[%s1418 + $0x721] sm:$0xff]
      %v1778 = vld [vmem:[%s1418 + $0x731] sm:$0xff]
      %v1779 = vld [vmem:[%s1418 + $0x751] sm:$0xff]
      %v1780 = vld [vmem:[%s1418 + $0x761] sm:$0xff]
      %v1781 = vld [vmem:[%s1418 + $0x771] sm:$0xff]
      %v1782 = vld [vmem:[%s1418 + $0x781] sm:$0xff]
      %v1783 = vld [vmem:[%s1418 + $0x791] sm:$0xff]
      %v1784 = vld [vmem:[%s1418 + $0x7a1] sm:$0xff]
      %v1785 = vld [vmem:[%s1418 + $0x7b1] sm:$0xff]
      %v1786 = vld [vmem:[%s1418 + $0x7c1] sm:$0xff]
      %v1787 = vld [vmem:[%s1418 + $0x7e1] sm:$0xff]
      %v1788 = vld [vmem:[%s1418 + $0x7f1] sm:$0xff]
      %v1789 = vld [vmem:[%s1418 + $0x801] sm:$0xff]
      %v1790 = vld [vmem:[%s1418 + $0x811] sm:$0xff]
      %v1791 = vld [vmem:[%s1418 + $0x821] sm:$0xff]
      %v1792 = vld [vmem:[%s1418 + $0x831] sm:$0xff]
      %v1793 = vld [vmem:[%s1418 + $0x841] sm:$0xff]
      %v1794 = vld [vmem:[%s1418 + $0x851] sm:$0xff]
      %v1795 = vld [vmem:[%s1418 + $0x871] sm:$0xff]
      %v1796 = vld [vmem:[%s1418 + $0x881] sm:$0xff]
      %v1797 = vld [vmem:[%s1418 + $0x891] sm:$0xff]
      %v1798 = vld [vmem:[%s1418 + $0x8a1] sm:$0xff]
      %v1799 = vld [vmem:[%s1418 + $0x8b1] sm:$0xff]
      %v1800 = vld [vmem:[%s1418 + $0x8c1] sm:$0xff]
      %v1801 = vld [vmem:[%s1418 + $0x8d1] sm:$0xff]
      %v1802 = vld [vmem:[%s1418 + $0x8e1] sm:$0xff]
      %1931 = vrot.lane.b32.xlu0 %v1675, 64
      %v1932 = vpop.permute.xlu0 %1931
      %1933 = vrot.lane.b32.xlu0 %v1676, 64
      %v1934 = vpop.permute.xlu0 %1933
      %1935 = vrot.lane.b32.xlu0 %v1677, 64
      %v1936 = vpop.permute.xlu0 %1935
      %1937 = vrot.lane.b32.xlu0 %v1678, 64
      %v1938 = vpop.permute.xlu0 %1937
      %1939 = vrot.lane.b32.xlu0 %v1679, 64
      %v1940 = vpop.permute.xlu0 %1939
      %1941 = vrot.lane.b32.xlu0 %v1680, 64
      %v1942 = vpop.permute.xlu0 %1941
      %1943 = vrot.lane.b32.xlu0 %v1681, 64
      %v1944 = vpop.permute.xlu0 %1943
      %1945 = vrot.lane.b32.xlu0 %v1682, 64
      %v1946 = vpop.permute.xlu0 %1945
      %1947 = vrot.lane.b32.xlu0 %v1683, 64
      %v1948 = vpop.permute.xlu0 %1947
      %1949 = vrot.lane.b32.xlu0 %v1684, 64
      %v1950 = vpop.permute.xlu0 %1949
      %1951 = vrot.lane.b32.xlu0 %v1685, 64
      %v1952 = vpop.permute.xlu0 %1951
      %1953 = vrot.lane.b32.xlu0 %v1686, 64
      %v1954 = vpop.permute.xlu0 %1953
      %1955 = vrot.lane.b32.xlu0 %v1687, 64
      %v1956 = vpop.permute.xlu0 %1955
      %1957 = vrot.lane.b32.xlu0 %v1688, 64
      %v1958 = vpop.permute.xlu0 %1957
      %1959 = vrot.lane.b32.xlu0 %v1689, 64
      %v1960 = vpop.permute.xlu0 %1959
      %1961 = vrot.lane.b32.xlu0 %v1690, 64
      %v1962 = vpop.permute.xlu0 %1961
      %1963 = vrot.lane.b32.xlu0 %v1691, 64
      %v1964 = vpop.permute.xlu0 %1963
      %1965 = vrot.lane.b32.xlu0 %v1692, 64
      %v1966 = vpop.permute.xlu0 %1965
      %1967 = vrot.lane.b32.xlu0 %v1693, 64
      %v1968 = vpop.permute.xlu0 %1967
      %1969 = vrot.lane.b32.xlu0 %v1694, 64
      %v1970 = vpop.permute.xlu0 %1969
      %1971 = vrot.lane.b32.xlu0 %v1695, 64
      %v1972 = vpop.permute.xlu0 %1971
      %1973 = vrot.lane.b32.xlu0 %v1696, 64
      %v1974 = vpop.permute.xlu0 %1973
      %1975 = vrot.lane.b32.xlu0 %v1697, 64
      %v1976 = vpop.permute.xlu0 %1975
      %1977 = vrot.lane.b32.xlu0 %v1698, 64
      %v1978 = vpop.permute.xlu0 %1977
      %1979 = vrot.lane.b32.xlu0 %v1699, 64
      %v1980 = vpop.permute.xlu0 %1979
      %1981 = vrot.lane.b32.xlu0 %v1700, 64
      %v1982 = vpop.permute.xlu0 %1981
      %1983 = vrot.lane.b32.xlu0 %v1701, 64
      %v1984 = vpop.permute.xlu0 %1983
      %1985 = vrot.lane.b32.xlu0 %v1702, 64
      %v1986 = vpop.permute.xlu0 %1985
      %1987 = vrot.lane.b32.xlu0 %v1703, 64
      %v1988 = vpop.permute.xlu0 %1987
      %1989 = vrot.lane.b32.xlu0 %v1704, 64
      %v1990 = vpop.permute.xlu0 %1989
      %1991 = vrot.lane.b32.xlu0 %v1705, 64
      %v1992 = vpop.permute.xlu0 %1991
      %1993 = vrot.lane.b32.xlu0 %v1706, 64
      %v1994 = vpop.permute.xlu0 %1993
      %1995 = vrot.lane.b32.xlu0 %v1707, 64
      %v1996 = vpop.permute.xlu0 %1995
      %1997 = vrot.lane.b32.xlu0 %v1708, 64
      %v1998 = vpop.permute.xlu0 %1997
      %1999 = vrot.lane.b32.xlu0 %v1709, 64
      %v2000 = vpop.permute.xlu0 %1999
      %2001 = vrot.lane.b32.xlu0 %v1710, 64
      %v2002 = vpop.permute.xlu0 %2001
      %2003 = vrot.lane.b32.xlu0 %v1711, 64
      %v2004 = vpop.permute.xlu0 %2003
      %2005 = vrot.lane.b32.xlu0 %v1712, 64
      %v2006 = vpop.permute.xlu0 %2005
      %2007 = vrot.lane.b32.xlu0 %v1713, 64
      %v2008 = vpop.permute.xlu0 %2007
      %2009 = vrot.lane.b32.xlu0 %v1714, 64
      %v2010 = vpop.permute.xlu0 %2009
      %2011 = vrot.lane.b32.xlu0 %v1715, 64
      %v2012 = vpop.permute.xlu0 %2011
      %2013 = vrot.lane.b32.xlu0 %v1716, 64
      %v2014 = vpop.permute.xlu0 %2013
      %2015 = vrot.lane.b32.xlu0 %v1717, 64
      %v2016 = vpop.permute.xlu0 %2015
      %2017 = vrot.lane.b32.xlu0 %v1718, 64
      %v2018 = vpop.permute.xlu0 %2017
      %2019 = vrot.lane.b32.xlu0 %v1719, 64
      %v2020 = vpop.permute.xlu0 %2019
      %2021 = vrot.lane.b32.xlu0 %v1720, 64
      %v2022 = vpop.permute.xlu0 %2021
      %2023 = vrot.lane.b32.xlu0 %v1721, 64
      %v2024 = vpop.permute.xlu0 %2023
      %2025 = vrot.lane.b32.xlu0 %v1722, 64
      %v2026 = vpop.permute.xlu0 %2025
      %2027 = vrot.lane.b32.xlu0 %v1723, 64
      %v2028 = vpop.permute.xlu0 %2027
      %2029 = vrot.lane.b32.xlu0 %v1724, 64
      %v2030 = vpop.permute.xlu0 %2029
      %2031 = vrot.lane.b32.xlu0 %v1725, 64
      %v2032 = vpop.permute.xlu0 %2031
      %2033 = vrot.lane.b32.xlu0 %v1726, 64
      %v2034 = vpop.permute.xlu0 %2033
      %2035 = vrot.lane.b32.xlu0 %v1727, 64
      %v2036 = vpop.permute.xlu0 %2035
      %2037 = vrot.lane.b32.xlu0 %v1728, 64
      %v2038 = vpop.permute.xlu0 %2037
      %2039 = vrot.lane.b32.xlu0 %v1729, 64
      %v2040 = vpop.permute.xlu0 %2039
      %2041 = vrot.lane.b32.xlu0 %v1730, 64
      %v2042 = vpop.permute.xlu0 %2041
      %2043 = vrot.lane.b32.xlu0 %v1731, 64
      %v2044 = vpop.permute.xlu0 %2043
      %2045 = vrot.lane.b32.xlu0 %v1732, 64
      %v2046 = vpop.permute.xlu0 %2045
      %2047 = vrot.lane.b32.xlu0 %v1733, 64
      %v2048 = vpop.permute.xlu0 %2047
      %2049 = vrot.lane.b32.xlu0 %v1734, 64
      %v2050 = vpop.permute.xlu0 %2049
      %2051 = vrot.lane.b32.xlu0 %v1735, 64
      %v2052 = vpop.permute.xlu0 %2051
      %2053 = vrot.lane.b32.xlu0 %v1736, 64
      %v2054 = vpop.permute.xlu0 %2053
      %2055 = vrot.lane.b32.xlu0 %v1737, 64
      %v2056 = vpop.permute.xlu0 %2055
      %2057 = vrot.lane.b32.xlu0 %v1738, 64
      %v2058 = vpop.permute.xlu0 %2057
      %2059 = vrot.lane.b32.xlu0 %v1739, 64
      %v2060 = vpop.permute.xlu0 %2059
      %2061 = vrot.lane.b32.xlu0 %v1740, 64
      %v2062 = vpop.permute.xlu0 %2061
      %2063 = vrot.lane.b32.xlu0 %v1741, 64
      %v2064 = vpop.permute.xlu0 %2063
      %2065 = vrot.lane.b32.xlu0 %v1742, 64
      %v2066 = vpop.permute.xlu0 %2065
      %2067 = vrot.lane.b32.xlu0 %v1743, 64
      %v2068 = vpop.permute.xlu0 %2067
      %2069 = vrot.lane.b32.xlu0 %v1744, 64
      %v2070 = vpop.permute.xlu0 %2069
      %2071 = vrot.lane.b32.xlu0 %v1745, 64
      %v2072 = vpop.permute.xlu0 %2071
      %2073 = vrot.lane.b32.xlu0 %v1746, 64
      %v2074 = vpop.permute.xlu0 %2073
      %2075 = vrot.lane.b32.xlu0 %v1747, 64
      %v2076 = vpop.permute.xlu0 %2075
      %2077 = vrot.lane.b32.xlu0 %v1748, 64
      %v2078 = vpop.permute.xlu0 %2077
      %2079 = vrot.lane.b32.xlu0 %v1749, 64
      %v2080 = vpop.permute.xlu0 %2079
      %2081 = vrot.lane.b32.xlu0 %v1750, 64
      %v2082 = vpop.permute.xlu0 %2081
      %2083 = vrot.lane.b32.xlu0 %v1751, 64
      %v2084 = vpop.permute.xlu0 %2083
      %2085 = vrot.lane.b32.xlu0 %v1752, 64
      %v2086 = vpop.permute.xlu0 %2085
      %2087 = vrot.lane.b32.xlu0 %v1753, 64
      %v2088 = vpop.permute.xlu0 %2087
      %2089 = vrot.lane.b32.xlu0 %v1754, 64
      %v2090 = vpop.permute.xlu0 %2089
      %2091 = vrot.lane.b32.xlu0 %v1755, 64
      %v2092 = vpop.permute.xlu0 %2091
      %2093 = vrot.lane.b32.xlu0 %v1756, 64
      %v2094 = vpop.permute.xlu0 %2093
      %2095 = vrot.lane.b32.xlu0 %v1757, 64
      %v2096 = vpop.permute.xlu0 %2095
      %2097 = vrot.lane.b32.xlu0 %v1758, 64
      %v2098 = vpop.permute.xlu0 %2097
      %2099 = vrot.lane.b32.xlu0 %v1759, 64
      %v2100 = vpop.permute.xlu0 %2099
      %2101 = vrot.lane.b32.xlu0 %v1760, 64
      %v2102 = vpop.permute.xlu0 %2101
      %2103 = vrot.lane.b32.xlu0 %v1761, 64
      %v2104 = vpop.permute.xlu0 %2103
      %2105 = vrot.lane.b32.xlu0 %v1762, 64
      %v2106 = vpop.permute.xlu0 %2105
      %2107 = vrot.lane.b32.xlu0 %v1763, 64
      %v2108 = vpop.permute.xlu0 %2107
      %2109 = vrot.lane.b32.xlu0 %v1764, 64
      %v2110 = vpop.permute.xlu0 %2109
      %2111 = vrot.lane.b32.xlu0 %v1765, 64
      %v2112 = vpop.permute.xlu0 %2111
      %2113 = vrot.lane.b32.xlu0 %v1766, 64
      %v2114 = vpop.permute.xlu0 %2113
      %2115 = vrot.lane.b32.xlu0 %v1767, 64
      %v2116 = vpop.permute.xlu0 %2115
      %2117 = vrot.lane.b32.xlu0 %v1768, 64
      %v2118 = vpop.permute.xlu0 %2117
      %2119 = vrot.lane.b32.xlu0 %v1769, 64
      %v2120 = vpop.permute.xlu0 %2119
      %2121 = vrot.lane.b32.xlu0 %v1770, 64
      %v2122 = vpop.permute.xlu0 %2121
      %2123 = vrot.lane.b32.xlu0 %v1771, 64
      %v2124 = vpop.permute.xlu0 %2123
      %2125 = vrot.lane.b32.xlu0 %v1772, 64
      %v2126 = vpop.permute.xlu0 %2125
      %2127 = vrot.lane.b32.xlu0 %v1773, 64
      %v2128 = vpop.permute.xlu0 %2127
      %2129 = vrot.lane.b32.xlu0 %v1774, 64
      %v2130 = vpop.permute.xlu0 %2129
      %2131 = vrot.lane.b32.xlu0 %v1775, 64
      %v2132 = vpop.permute.xlu0 %2131
      %2133 = vrot.lane.b32.xlu0 %v1776, 64
      %v2134 = vpop.permute.xlu0 %2133
      %2135 = vrot.lane.b32.xlu0 %v1777, 64
      %v2136 = vpop.permute.xlu0 %2135
      %2137 = vrot.lane.b32.xlu0 %v1778, 64
      %v2138 = vpop.permute.xlu0 %2137
      %2139 = vrot.lane.b32.xlu0 %v1779, 64
      %v2140 = vpop.permute.xlu0 %2139
      %2141 = vrot.lane.b32.xlu0 %v1780, 64
      %v2142 = vpop.permute.xlu0 %2141
      %2143 = vrot.lane.b32.xlu0 %v1781, 64
      %v2144 = vpop.permute.xlu0 %2143
      %2145 = vrot.lane.b32.xlu0 %v1782, 64
      %v2146 = vpop.permute.xlu0 %2145
      %2147 = vrot.lane.b32.xlu0 %v1783, 64
      %v2148 = vpop.permute.xlu0 %2147
      %2149 = vrot.lane.b32.xlu0 %v1784, 64
      %v2150 = vpop.permute.xlu0 %2149
      %2151 = vrot.lane.b32.xlu0 %v1785, 64
      %v2152 = vpop.permute.xlu0 %2151
      %2153 = vrot.lane.b32.xlu0 %v1786, 64
      %v2154 = vpop.permute.xlu0 %2153
      %2155 = vrot.lane.b32.xlu0 %v1787, 64
      %v2156 = vpop.permute.xlu0 %2155
      %2157 = vrot.lane.b32.xlu0 %v1788, 64
      %v2158 = vpop.permute.xlu0 %2157
      %2159 = vrot.lane.b32.xlu0 %v1789, 64
      %v2160 = vpop.permute.xlu0 %2159
      %2161 = vrot.lane.b32.xlu0 %v1790, 64
      %v2162 = vpop.permute.xlu0 %2161
      %2163 = vrot.lane.b32.xlu0 %v1791, 64
      %v2164 = vpop.permute.xlu0 %2163
      %2165 = vrot.lane.b32.xlu0 %v1792, 64
      %v2166 = vpop.permute.xlu0 %2165
      %2167 = vrot.lane.b32.xlu0 %v1793, 64
      %v2168 = vpop.permute.xlu0 %2167
      %2169 = vrot.lane.b32.xlu0 %v1794, 64
      %v2170 = vpop.permute.xlu0 %2169
      %2171 = vrot.lane.b32.xlu0 %v1795, 64
      %v2172 = vpop.permute.xlu0 %2171
      %2173 = vrot.lane.b32.xlu0 %v1796, 64
      %v2174 = vpop.permute.xlu0 %2173
      %2175 = vrot.lane.b32.xlu0 %v1797, 64
      %v2176 = vpop.permute.xlu0 %2175
      %2177 = vrot.lane.b32.xlu0 %v1798, 64
      %v2178 = vpop.permute.xlu0 %2177
      %2179 = vrot.lane.b32.xlu0 %v1799, 64
      %v2180 = vpop.permute.xlu0 %2179
      %2181 = vrot.lane.b32.xlu0 %v1800, 64
      %v2182 = vpop.permute.xlu0 %2181
      %2183 = vrot.lane.b32.xlu0 %v1801, 64
      %v2184 = vpop.permute.xlu0 %2183
      %2185 = vrot.lane.b32.xlu0 %v1802, 64
      %v2186 = vpop.permute.xlu0 %2185
      %2315 = vst.msk [vmem:[#allocation2 + $0x8] sm:$0xff] %vm1289, %v1932
      %2316 = vst.msk [vmem:[#allocation2 + $0x18] sm:$0xff] %vm1289, %v1934
      %2317 = vst.msk [vmem:[#allocation2 + $0x28] sm:$0xff] %vm1289, %v1936
      %2318 = vst.msk [vmem:[#allocation2 + $0x38] sm:$0xff] %vm1289, %v1938
      %2319 = vst.msk [vmem:[#allocation2 + $0x48] sm:$0xff] %vm1289, %v1940
      %2320 = vst.msk [vmem:[#allocation2 + $0x58] sm:$0xff] %vm1289, %v1942
      %2321 = vst.msk [vmem:[#allocation2 + $0x68] sm:$0xff] %vm1289, %v1944
      %2322 = vst.msk [vmem:[#allocation2 + $0x78] sm:$0xff] %vm1289, %v1946
      %2323 = vst.msk [vmem:[#allocation2 + $0x88] sm:$0xff] %vm1289, %v1948
      %2324 = vst.msk [vmem:[#allocation2 + $0x98] sm:$0xff] %vm1289, %v1950
      %2325 = vst.msk [vmem:[#allocation2 + $0xa8] sm:$0xff] %vm1289, %v1952
      %2326 = vst.msk [vmem:[#allocation2 + $0xb8] sm:$0xff] %vm1289, %v1954
      %2327 = vst.msk [vmem:[#allocation2 + $0xc8] sm:$0xff] %vm1289, %v1956
      %2328 = vst.msk [vmem:[#allocation2 + $0xd8] sm:$0xff] %vm1289, %v1958
      %2329 = vst.msk [vmem:[#allocation2 + $0xe8] sm:$0xff] %vm1289, %v1960
      %2330 = vst.msk [vmem:[#allocation2 + $0xf8] sm:$0xff] %vm1289, %v1962
      %2331 = vst.msk [vmem:[#allocation2 + $0x108] sm:$0xff] %vm1289, %v1964
      %2332 = vst.msk [vmem:[#allocation2 + $0x118] sm:$0xff] %vm1289, %v1966
      %2333 = vst.msk [vmem:[#allocation2 + $0x128] sm:$0xff] %vm1289, %v1968
      %2334 = vst.msk [vmem:[#allocation2 + $0x138] sm:$0xff] %vm1289, %v1970
      %2335 = vst.msk [vmem:[#allocation2 + $0x148] sm:$0xff] %vm1289, %v1972
      %2336 = vst.msk [vmem:[#allocation2 + $0x158] sm:$0xff] %vm1289, %v1974
      %2337 = vst.msk [vmem:[#allocation2 + $0x168] sm:$0xff] %vm1289, %v1976
      %2338 = vst.msk [vmem:[#allocation2 + $0x178] sm:$0xff] %vm1289, %v1978
      %2339 = vst.msk [vmem:[#allocation2 + $0x188] sm:$0xff] %vm1289, %v1980
      %2340 = vst.msk [vmem:[#allocation2 + $0x198] sm:$0xff] %vm1289, %v1982
      %2341 = vst.msk [vmem:[#allocation2 + $0x1a8] sm:$0xff] %vm1289, %v1984
      %2342 = vst.msk [vmem:[#allocation2 + $0x1b8] sm:$0xff] %vm1289, %v1986
      %2343 = vst.msk [vmem:[#allocation2 + $0x1c8] sm:$0xff] %vm1289, %v1988
      %2344 = vst.msk [vmem:[#allocation2 + $0x1d8] sm:$0xff] %vm1289, %v1990
      %2345 = vst.msk [vmem:[#allocation2 + $0x1e8] sm:$0xff] %vm1289, %v1992
      %2346 = vst.msk [vmem:[#allocation2 + $0x1f8] sm:$0xff] %vm1289, %v1994
      %2347 = vst.msk [vmem:[#allocation2 + $0x208] sm:$0xff] %vm1289, %v1996
      %2348 = vst.msk [vmem:[#allocation2 + $0x218] sm:$0xff] %vm1289, %v1998
      %2349 = vst.msk [vmem:[#allocation2 + $0x228] sm:$0xff] %vm1289, %v2000
      %2350 = vst.msk [vmem:[#allocation2 + $0x238] sm:$0xff] %vm1289, %v2002
      %2351 = vst.msk [vmem:[#allocation2 + $0x248] sm:$0xff] %vm1289, %v2004
      %2352 = vst.msk [vmem:[#allocation2 + $0x258] sm:$0xff] %vm1289, %v2006
      %2353 = vst.msk [vmem:[#allocation2 + $0x268] sm:$0xff] %vm1289, %v2008
      %2354 = vst.msk [vmem:[#allocation2 + $0x278] sm:$0xff] %vm1289, %v2010
      %2355 = vst.msk [vmem:[#allocation2 + $0x288] sm:$0xff] %vm1289, %v2012
      %2356 = vst.msk [vmem:[#allocation2 + $0x298] sm:$0xff] %vm1289, %v2014
      %2357 = vst.msk [vmem:[#allocation2 + $0x2a8] sm:$0xff] %vm1289, %v2016
      %2358 = vst.msk [vmem:[#allocation2 + $0x2b8] sm:$0xff] %vm1289, %v2018
      %2359 = vst.msk [vmem:[#allocation2 + $0x2c8] sm:$0xff] %vm1289, %v2020
      %2360 = vst.msk [vmem:[#allocation2 + $0x2d8] sm:$0xff] %vm1289, %v2022
      %2361 = vst.msk [vmem:[#allocation2 + $0x2e8] sm:$0xff] %vm1289, %v2024
      %2362 = vst.msk [vmem:[#allocation2 + $0x2f8] sm:$0xff] %vm1289, %v2026
      %2363 = vst.msk [vmem:[#allocation2 + $0x308] sm:$0xff] %vm1289, %v2028
      %2364 = vst.msk [vmem:[#allocation2 + $0x318] sm:$0xff] %vm1289, %v2030
      %2365 = vst.msk [vmem:[#allocation2 + $0x328] sm:$0xff] %vm1289, %v2032
      %2366 = vst.msk [vmem:[#allocation2 + $0x338] sm:$0xff] %vm1289, %v2034
      %2367 = vst.msk [vmem:[#allocation2 + $0x348] sm:$0xff] %vm1289, %v2036
      %2368 = vst.msk [vmem:[#allocation2 + $0x358] sm:$0xff] %vm1289, %v2038
      %2369 = vst.msk [vmem:[#allocation2 + $0x368] sm:$0xff] %vm1289, %v2040
      %2370 = vst.msk [vmem:[#allocation2 + $0x378] sm:$0xff] %vm1289, %v2042
      %2371 = vst.msk [vmem:[#allocation2 + $0x388] sm:$0xff] %vm1289, %v2044
      %2372 = vst.msk [vmem:[#allocation2 + $0x398] sm:$0xff] %vm1289, %v2046
      %2373 = vst.msk [vmem:[#allocation2 + $0x3a8] sm:$0xff] %vm1289, %v2048
      %2374 = vst.msk [vmem:[#allocation2 + $0x3b8] sm:$0xff] %vm1289, %v2050
      %2375 = vst.msk [vmem:[#allocation2 + $0x3c8] sm:$0xff] %vm1289, %v2052
      %2376 = vst.msk [vmem:[#allocation2 + $0x3d8] sm:$0xff] %vm1289, %v2054
      %2377 = vst.msk [vmem:[#allocation2 + $0x3e8] sm:$0xff] %vm1289, %v2056
      %2378 = vst.msk [vmem:[#allocation2 + $0x3f8] sm:$0xff] %vm1289, %v2058
      %2379 = vst.msk [vmem:[#allocation2 + $0x408] sm:$0xff] %vm1289, %v2060
      %2380 = vst.msk [vmem:[#allocation2 + $0x418] sm:$0xff] %vm1289, %v2062
      %2381 = vst.msk [vmem:[#allocation2 + $0x428] sm:$0xff] %vm1289, %v2064
      %2382 = vst.msk [vmem:[#allocation2 + $0x438] sm:$0xff] %vm1289, %v2066
      %2383 = vst.msk [vmem:[#allocation2 + $0x448] sm:$0xff] %vm1289, %v2068
      %2384 = vst.msk [vmem:[#allocation2 + $0x458] sm:$0xff] %vm1289, %v2070
      %2385 = vst.msk [vmem:[#allocation2 + $0x468] sm:$0xff] %vm1289, %v2072
      %2386 = vst.msk [vmem:[#allocation2 + $0x478] sm:$0xff] %vm1289, %v2074
      %2387 = vst.msk [vmem:[#allocation2 + $0x488] sm:$0xff] %vm1289, %v2076
      %2388 = vst.msk [vmem:[#allocation2 + $0x498] sm:$0xff] %vm1289, %v2078
      %2389 = vst.msk [vmem:[#allocation2 + $0x4a8] sm:$0xff] %vm1289, %v2080
      %2390 = vst.msk [vmem:[#allocation2 + $0x4b8] sm:$0xff] %vm1289, %v2082
      %2391 = vst.msk [vmem:[#allocation2 + $0x4c8] sm:$0xff] %vm1289, %v2084
      %2392 = vst.msk [vmem:[#allocation2 + $0x4d8] sm:$0xff] %vm1289, %v2086
      %2393 = vst.msk [vmem:[#allocation2 + $0x4e8] sm:$0xff] %vm1289, %v2088
      %2394 = vst.msk [vmem:[#allocation2 + $0x4f8] sm:$0xff] %vm1289, %v2090
      %2395 = vst.msk [vmem:[#allocation2 + $0x508] sm:$0xff] %vm1289, %v2092
      %2396 = vst.msk [vmem:[#allocation2 + $0x518] sm:$0xff] %vm1289, %v2094
      %2397 = vst.msk [vmem:[#allocation2 + $0x528] sm:$0xff] %vm1289, %v2096
      %2398 = vst.msk [vmem:[#allocation2 + $0x538] sm:$0xff] %vm1289, %v2098
      %2399 = vst.msk [vmem:[#allocation2 + $0x548] sm:$0xff] %vm1289, %v2100
      %2400 = vst.msk [vmem:[#allocation2 + $0x558] sm:$0xff] %vm1289, %v2102
      %2401 = vst.msk [vmem:[#allocation2 + $0x568] sm:$0xff] %vm1289, %v2104
      %2402 = vst.msk [vmem:[#allocation2 + $0x578] sm:$0xff] %vm1289, %v2106
      %2403 = vst.msk [vmem:[#allocation2 + $0x588] sm:$0xff] %vm1289, %v2108
      %2404 = vst.msk [vmem:[#allocation2 + $0x598] sm:$0xff] %vm1289, %v2110
      %2405 = vst.msk [vmem:[#allocation2 + $0x5a8] sm:$0xff] %vm1289, %v2112
      %2406 = vst.msk [vmem:[#allocation2 + $0x5b8] sm:$0xff] %vm1289, %v2114
      %2407 = vst.msk [vmem:[#allocation2 + $0x5c8] sm:$0xff] %vm1289, %v2116
      %2408 = vst.msk [vmem:[#allocation2 + $0x5d8] sm:$0xff] %vm1289, %v2118
      %2409 = vst.msk [vmem:[#allocation2 + $0x5e8] sm:$0xff] %vm1289, %v2120
      %2410 = vst.msk [vmem:[#allocation2 + $0x5f8] sm:$0xff] %vm1289, %v2122
      %2411 = vst.msk [vmem:[#allocation2 + $0x608] sm:$0xff] %vm1289, %v2124
      %2412 = vst.msk [vmem:[#allocation2 + $0x618] sm:$0xff] %vm1289, %v2126
      %2413 = vst.msk [vmem:[#allocation2 + $0x628] sm:$0xff] %vm1289, %v2128
      %2414 = vst.msk [vmem:[#allocation2 + $0x638] sm:$0xff] %vm1289, %v2130
      %2415 = vst.msk [vmem:[#allocation2 + $0x648] sm:$0xff] %vm1289, %v2132
      %2416 = vst.msk [vmem:[#allocation2 + $0x658] sm:$0xff] %vm1289, %v2134
      %2417 = vst.msk [vmem:[#allocation2 + $0x668] sm:$0xff] %vm1289, %v2136
      %2418 = vst.msk [vmem:[#allocation2 + $0x678] sm:$0xff] %vm1289, %v2138
      %2419 = vst.msk [vmem:[#allocation2 + $0x688] sm:$0xff] %vm1289, %v2140
      %2420 = vst.msk [vmem:[#allocation2 + $0x698] sm:$0xff] %vm1289, %v2142
      %2421 = vst.msk [vmem:[#allocation2 + $0x6a8] sm:$0xff] %vm1289, %v2144
      %2422 = vst.msk [vmem:[#allocation2 + $0x6b8] sm:$0xff] %vm1289, %v2146
      %2423 = vst.msk [vmem:[#allocation2 + $0x6c8] sm:$0xff] %vm1289, %v2148
      %2424 = vst.msk [vmem:[#allocation2 + $0x6d8] sm:$0xff] %vm1289, %v2150
      %2425 = vst.msk [vmem:[#allocation2 + $0x6e8] sm:$0xff] %vm1289, %v2152
      %2426 = vst.msk [vmem:[#allocation2 + $0x6f8] sm:$0xff] %vm1289, %v2154
      %2427 = vst.msk [vmem:[#allocation2 + $0x708] sm:$0xff] %vm1289, %v2156
      %2428 = vst.msk [vmem:[#allocation2 + $0x718] sm:$0xff] %vm1289, %v2158
      %2429 = vst.msk [vmem:[#allocation2 + $0x728] sm:$0xff] %vm1289, %v2160
      %2430 = vst.msk [vmem:[#allocation2 + $0x738] sm:$0xff] %vm1289, %v2162
      %2431 = vst.msk [vmem:[#allocation2 + $0x748] sm:$0xff] %vm1289, %v2164
      %2432 = vst.msk [vmem:[#allocation2 + $0x758] sm:$0xff] %vm1289, %v2166
      %2433 = vst.msk [vmem:[#allocation2 + $0x768] sm:$0xff] %vm1289, %v2168
      %2434 = vst.msk [vmem:[#allocation2 + $0x778] sm:$0xff] %vm1289, %v2170
      %2435 = vst.msk [vmem:[#allocation2 + $0x788] sm:$0xff] %vm1289, %v2172
      %2436 = vst.msk [vmem:[#allocation2 + $0x798] sm:$0xff] %vm1289, %v2174
      %2437 = vst.msk [vmem:[#allocation2 + $0x7a8] sm:$0xff] %vm1289, %v2176
      %2438 = vst.msk [vmem:[#allocation2 + $0x7b8] sm:$0xff] %vm1289, %v2178
      %2439 = vst.msk [vmem:[#allocation2 + $0x7c8] sm:$0xff] %vm1289, %v2180
      %2440 = vst.msk [vmem:[#allocation2 + $0x7d8] sm:$0xff] %vm1289, %v2182
      %2441 = vst.msk [vmem:[#allocation2 + $0x7e8] sm:$0xff] %vm1289, %v2184
      %2442 = vst.msk [vmem:[#allocation2 + $0x7f8] sm:$0xff] %vm1289, %v2186
      %v2443 = vld [vmem:[#allocation2] sm:$0xff]
      %v2444 = vld [vmem:[#allocation2 + $0x8] sm:$0xff]
      %v2445 = vld [vmem:[#allocation2 + $0x10] sm:$0xff]
      %v2446 = vld [vmem:[#allocation2 + $0x18] sm:$0xff]
      %v2447 = vld [vmem:[#allocation2 + $0x20] sm:$0xff]
      %v2448 = vld [vmem:[#allocation2 + $0x28] sm:$0xff]
      %v2449 = vld [vmem:[#allocation2 + $0x30] sm:$0xff]
      %v2450 = vld [vmem:[#allocation2 + $0x38] sm:$0xff]
      %v2451 = vld [vmem:[#allocation2 + $0x40] sm:$0xff]
      %v2452 = vld [vmem:[#allocation2 + $0x48] sm:$0xff]
      %v2453 = vld [vmem:[#allocation2 + $0x50] sm:$0xff]
      %v2454 = vld [vmem:[#allocation2 + $0x58] sm:$0xff]
      %v2455 = vld [vmem:[#allocation2 + $0x60] sm:$0xff]
      %v2456 = vld [vmem:[#allocation2 + $0x68] sm:$0xff]
      %v2457 = vld [vmem:[#allocation2 + $0x70] sm:$0xff]
      %v2458 = vld [vmem:[#allocation2 + $0x78] sm:$0xff]
      %v2459 = vld [vmem:[#allocation2 + $0x80] sm:$0xff]
      %v2460 = vld [vmem:[#allocation2 + $0x88] sm:$0xff]
      %v2461 = vld [vmem:[#allocation2 + $0x90] sm:$0xff]
      %v2462 = vld [vmem:[#allocation2 + $0x98] sm:$0xff]
      %v2463 = vld [vmem:[#allocation2 + $0xa0] sm:$0xff]
      %v2464 = vld [vmem:[#allocation2 + $0xa8] sm:$0xff]
      %v2465 = vld [vmem:[#allocation2 + $0xb0] sm:$0xff]
      %v2466 = vld [vmem:[#allocation2 + $0xb8] sm:$0xff]
      %v2467 = vld [vmem:[#allocation2 + $0xc0] sm:$0xff]
      %v2468 = vld [vmem:[#allocation2 + $0xc8] sm:$0xff]
      %v2469 = vld [vmem:[#allocation2 + $0xd0] sm:$0xff]
      %v2470 = vld [vmem:[#allocation2 + $0xd8] sm:$0xff]
      %v2471 = vld [vmem:[#allocation2 + $0xe0] sm:$0xff]
      %v2472 = vld [vmem:[#allocation2 + $0xe8] sm:$0xff]
      %v2473 = vld [vmem:[#allocation2 + $0xf0] sm:$0xff]
      %v2474 = vld [vmem:[#allocation2 + $0xf8] sm:$0xff]
      %v2475 = vld [vmem:[#allocation2 + $0x100] sm:$0xff]
      %v2476 = vld [vmem:[#allocation2 + $0x108] sm:$0xff]
      %v2477 = vld [vmem:[#allocation2 + $0x110] sm:$0xff]
      %v2478 = vld [vmem:[#allocation2 + $0x118] sm:$0xff]
      %v2479 = vld [vmem:[#allocation2 + $0x120] sm:$0xff]
      %v2480 = vld [vmem:[#allocation2 + $0x128] sm:$0xff]
      %v2481 = vld [vmem:[#allocation2 + $0x130] sm:$0xff]
      %v2482 = vld [vmem:[#allocation2 + $0x138] sm:$0xff]
      %v2483 = vld [vmem:[#allocation2 + $0x140] sm:$0xff]
      %v2484 = vld [vmem:[#allocation2 + $0x148] sm:$0xff]
      %v2485 = vld [vmem:[#allocation2 + $0x150] sm:$0xff]
      %v2486 = vld [vmem:[#allocation2 + $0x158] sm:$0xff]
      %v2487 = vld [vmem:[#allocation2 + $0x160] sm:$0xff]
      %v2488 = vld [vmem:[#allocation2 + $0x168] sm:$0xff]
      %v2489 = vld [vmem:[#allocation2 + $0x170] sm:$0xff]
      %v2490 = vld [vmem:[#allocation2 + $0x178] sm:$0xff]
      %v2491 = vld [vmem:[#allocation2 + $0x180] sm:$0xff]
      %v2492 = vld [vmem:[#allocation2 + $0x188] sm:$0xff]
      %v2493 = vld [vmem:[#allocation2 + $0x190] sm:$0xff]
      %v2494 = vld [vmem:[#allocation2 + $0x198] sm:$0xff]
      %v2495 = vld [vmem:[#allocation2 + $0x1a0] sm:$0xff]
      %v2496 = vld [vmem:[#allocation2 + $0x1a8] sm:$0xff]
      %v2497 = vld [vmem:[#allocation2 + $0x1b0] sm:$0xff]
      %v2498 = vld [vmem:[#allocation2 + $0x1b8] sm:$0xff]
      %v2499 = vld [vmem:[#allocation2 + $0x1c0] sm:$0xff]
      %v2500 = vld [vmem:[#allocation2 + $0x1c8] sm:$0xff]
      %v2501 = vld [vmem:[#allocation2 + $0x1d0] sm:$0xff]
      %v2502 = vld [vmem:[#allocation2 + $0x1d8] sm:$0xff]
      %v2503 = vld [vmem:[#allocation2 + $0x1e0] sm:$0xff]
      %v2504 = vld [vmem:[#allocation2 + $0x1e8] sm:$0xff]
      %v2505 = vld [vmem:[#allocation2 + $0x1f0] sm:$0xff]
      %v2506 = vld [vmem:[#allocation2 + $0x1f8] sm:$0xff]
      %v2507 = vld [vmem:[#allocation2 + $0x200] sm:$0xff]
      %v2508 = vld [vmem:[#allocation2 + $0x208] sm:$0xff]
      %v2509 = vld [vmem:[#allocation2 + $0x210] sm:$0xff]
      %v2510 = vld [vmem:[#allocation2 + $0x218] sm:$0xff]
      %v2511 = vld [vmem:[#allocation2 + $0x220] sm:$0xff]
      %v2512 = vld [vmem:[#allocation2 + $0x228] sm:$0xff]
      %v2513 = vld [vmem:[#allocation2 + $0x230] sm:$0xff]
      %v2514 = vld [vmem:[#allocation2 + $0x238] sm:$0xff]
      %v2515 = vld [vmem:[#allocation2 + $0x240] sm:$0xff]
      %v2516 = vld [vmem:[#allocation2 + $0x248] sm:$0xff]
      %v2517 = vld [vmem:[#allocation2 + $0x250] sm:$0xff]
      %v2518 = vld [vmem:[#allocation2 + $0x258] sm:$0xff]
      %v2519 = vld [vmem:[#allocation2 + $0x260] sm:$0xff]
      %v2520 = vld [vmem:[#allocation2 + $0x268] sm:$0xff]
      %v2521 = vld [vmem:[#allocation2 + $0x270] sm:$0xff]
      %v2522 = vld [vmem:[#allocation2 + $0x278] sm:$0xff]
      %v2523 = vld [vmem:[#allocation2 + $0x280] sm:$0xff]
      %v2524 = vld [vmem:[#allocation2 + $0x288] sm:$0xff]
      %v2525 = vld [vmem:[#allocation2 + $0x290] sm:$0xff]
      %v2526 = vld [vmem:[#allocation2 + $0x298] sm:$0xff]
      %v2527 = vld [vmem:[#allocation2 + $0x2a0] sm:$0xff]
      %v2528 = vld [vmem:[#allocation2 + $0x2a8] sm:$0xff]
      %v2529 = vld [vmem:[#allocation2 + $0x2b0] sm:$0xff]
      %v2530 = vld [vmem:[#allocation2 + $0x2b8] sm:$0xff]
      %v2531 = vld [vmem:[#allocation2 + $0x2c0] sm:$0xff]
      %v2532 = vld [vmem:[#allocation2 + $0x2c8] sm:$0xff]
      %v2533 = vld [vmem:[#allocation2 + $0x2d0] sm:$0xff]
      %v2534 = vld [vmem:[#allocation2 + $0x2d8] sm:$0xff]
      %v2535 = vld [vmem:[#allocation2 + $0x2e0] sm:$0xff]
      %v2536 = vld [vmem:[#allocation2 + $0x2e8] sm:$0xff]
      %v2537 = vld [vmem:[#allocation2 + $0x2f0] sm:$0xff]
      %v2538 = vld [vmem:[#allocation2 + $0x2f8] sm:$0xff]
      %v2539 = vld [vmem:[#allocation2 + $0x300] sm:$0xff]
      %v2540 = vld [vmem:[#allocation2 + $0x308] sm:$0xff]
      %v2541 = vld [vmem:[#allocation2 + $0x310] sm:$0xff]
      %v2542 = vld [vmem:[#allocation2 + $0x318] sm:$0xff]
      %v2543 = vld [vmem:[#allocation2 + $0x320] sm:$0xff]
      %v2544 = vld [vmem:[#allocation2 + $0x328] sm:$0xff]
      %v2545 = vld [vmem:[#allocation2 + $0x330] sm:$0xff]
      %v2546 = vld [vmem:[#allocation2 + $0x338] sm:$0xff]
      %v2547 = vld [vmem:[#allocation2 + $0x340] sm:$0xff]
      %v2548 = vld [vmem:[#allocation2 + $0x348] sm:$0xff]
      %v2549 = vld [vmem:[#allocation2 + $0x350] sm:$0xff]
      %v2550 = vld [vmem:[#allocation2 + $0x358] sm:$0xff]
      %v2551 = vld [vmem:[#allocation2 + $0x360] sm:$0xff]
      %v2552 = vld [vmem:[#allocation2 + $0x368] sm:$0xff]
      %v2553 = vld [vmem:[#allocation2 + $0x370] sm:$0xff]
      %v2554 = vld [vmem:[#allocation2 + $0x378] sm:$0xff]
      %v2555 = vld [vmem:[#allocation2 + $0x380] sm:$0xff]
      %v2556 = vld [vmem:[#allocation2 + $0x388] sm:$0xff]
      %v2557 = vld [vmem:[#allocation2 + $0x390] sm:$0xff]
      %v2558 = vld [vmem:[#allocation2 + $0x398] sm:$0xff]
      %v2559 = vld [vmem:[#allocation2 + $0x3a0] sm:$0xff]
      %v2560 = vld [vmem:[#allocation2 + $0x3a8] sm:$0xff]
      %v2561 = vld [vmem:[#allocation2 + $0x3b0] sm:$0xff]
      %v2562 = vld [vmem:[#allocation2 + $0x3b8] sm:$0xff]
      %v2563 = vld [vmem:[#allocation2 + $0x3c0] sm:$0xff]
      %v2564 = vld [vmem:[#allocation2 + $0x3c8] sm:$0xff]
      %v2565 = vld [vmem:[#allocation2 + $0x3d0] sm:$0xff]
      %v2566 = vld [vmem:[#allocation2 + $0x3d8] sm:$0xff]
      %v2567 = vld [vmem:[#allocation2 + $0x3e0] sm:$0xff]
      %v2568 = vld [vmem:[#allocation2 + $0x3e8] sm:$0xff]
      %v2569 = vld [vmem:[#allocation2 + $0x3f0] sm:$0xff]
      %v2570 = vld [vmem:[#allocation2 + $0x3f8] sm:$0xff]
      %v2571 = vld [vmem:[#allocation2 + $0x400] sm:$0xff]
      %v2572 = vld [vmem:[#allocation2 + $0x408] sm:$0xff]
      %v2573 = vld [vmem:[#allocation2 + $0x410] sm:$0xff]
      %v2574 = vld [vmem:[#allocation2 + $0x418] sm:$0xff]
      %v2575 = vld [vmem:[#allocation2 + $0x420] sm:$0xff]
      %v2576 = vld [vmem:[#allocation2 + $0x428] sm:$0xff]
      %v2577 = vld [vmem:[#allocation2 + $0x430] sm:$0xff]
      %v2578 = vld [vmem:[#allocation2 + $0x438] sm:$0xff]
      %v2579 = vld [vmem:[#allocation2 + $0x440] sm:$0xff]
      %v2580 = vld [vmem:[#allocation2 + $0x448] sm:$0xff]
      %v2581 = vld [vmem:[#allocation2 + $0x450] sm:$0xff]
      %v2582 = vld [vmem:[#allocation2 + $0x458] sm:$0xff]
      %v2583 = vld [vmem:[#allocation2 + $0x460] sm:$0xff]
      %v2584 = vld [vmem:[#allocation2 + $0x468] sm:$0xff]
      %v2585 = vld [vmem:[#allocation2 + $0x470] sm:$0xff]
      %v2586 = vld [vmem:[#allocation2 + $0x478] sm:$0xff]
      %v2587 = vld [vmem:[#allocation2 + $0x480] sm:$0xff]
      %v2588 = vld [vmem:[#allocation2 + $0x488] sm:$0xff]
      %v2589 = vld [vmem:[#allocation2 + $0x490] sm:$0xff]
      %v2590 = vld [vmem:[#allocation2 + $0x498] sm:$0xff]
      %v2591 = vld [vmem:[#allocation2 + $0x4a0] sm:$0xff]
      %v2592 = vld [vmem:[#allocation2 + $0x4a8] sm:$0xff]
      %v2593 = vld [vmem:[#allocation2 + $0x4b0] sm:$0xff]
      %v2594 = vld [vmem:[#allocation2 + $0x4b8] sm:$0xff]
      %v2595 = vld [vmem:[#allocation2 + $0x4c0] sm:$0xff]
      %v2596 = vld [vmem:[#allocation2 + $0x4c8] sm:$0xff]
      %v2597 = vld [vmem:[#allocation2 + $0x4d0] sm:$0xff]
      %v2598 = vld [vmem:[#allocation2 + $0x4d8] sm:$0xff]
      %v2599 = vld [vmem:[#allocation2 + $0x4e0] sm:$0xff]
      %v2600 = vld [vmem:[#allocation2 + $0x4e8] sm:$0xff]
      %v2601 = vld [vmem:[#allocation2 + $0x4f0] sm:$0xff]
      %v2602 = vld [vmem:[#allocation2 + $0x4f8] sm:$0xff]
      %v2603 = vld [vmem:[#allocation2 + $0x500] sm:$0xff]
      %v2604 = vld [vmem:[#allocation2 + $0x508] sm:$0xff]
      %v2605 = vld [vmem:[#allocation2 + $0x510] sm:$0xff]
      %v2606 = vld [vmem:[#allocation2 + $0x518] sm:$0xff]
      %v2607 = vld [vmem:[#allocation2 + $0x520] sm:$0xff]
      %v2608 = vld [vmem:[#allocation2 + $0x528] sm:$0xff]
      %v2609 = vld [vmem:[#allocation2 + $0x530] sm:$0xff]
      %v2610 = vld [vmem:[#allocation2 + $0x538] sm:$0xff]
      %v2611 = vld [vmem:[#allocation2 + $0x540] sm:$0xff]
      %v2612 = vld [vmem:[#allocation2 + $0x548] sm:$0xff]
      %v2613 = vld [vmem:[#allocation2 + $0x550] sm:$0xff]
      %v2614 = vld [vmem:[#allocation2 + $0x558] sm:$0xff]
      %v2615 = vld [vmem:[#allocation2 + $0x560] sm:$0xff]
      %v2616 = vld [vmem:[#allocation2 + $0x568] sm:$0xff]
      %v2617 = vld [vmem:[#allocation2 + $0x570] sm:$0xff]
      %v2618 = vld [vmem:[#allocation2 + $0x578] sm:$0xff]
      %v2619 = vld [vmem:[#allocation2 + $0x580] sm:$0xff]
      %v2620 = vld [vmem:[#allocation2 + $0x588] sm:$0xff]
      %v2621 = vld [vmem:[#allocation2 + $0x590] sm:$0xff]
      %v2622 = vld [vmem:[#allocation2 + $0x598] sm:$0xff]
      %v2623 = vld [vmem:[#allocation2 + $0x5a0] sm:$0xff]
      %v2624 = vld [vmem:[#allocation2 + $0x5a8] sm:$0xff]
      %v2625 = vld [vmem:[#allocation2 + $0x5b0] sm:$0xff]
      %v2626 = vld [vmem:[#allocation2 + $0x5b8] sm:$0xff]
      %v2627 = vld [vmem:[#allocation2 + $0x5c0] sm:$0xff]
      %v2628 = vld [vmem:[#allocation2 + $0x5c8] sm:$0xff]
      %v2629 = vld [vmem:[#allocation2 + $0x5d0] sm:$0xff]
      %v2630 = vld [vmem:[#allocation2 + $0x5d8] sm:$0xff]
      %v2631 = vld [vmem:[#allocation2 + $0x5e0] sm:$0xff]
      %v2632 = vld [vmem:[#allocation2 + $0x5e8] sm:$0xff]
      %v2633 = vld [vmem:[#allocation2 + $0x5f0] sm:$0xff]
      %v2634 = vld [vmem:[#allocation2 + $0x5f8] sm:$0xff]
      %v2635 = vld [vmem:[#allocation2 + $0x600] sm:$0xff]
      %v2636 = vld [vmem:[#allocation2 + $0x608] sm:$0xff]
      %v2637 = vld [vmem:[#allocation2 + $0x610] sm:$0xff]
      %v2638 = vld [vmem:[#allocation2 + $0x618] sm:$0xff]
      %v2639 = vld [vmem:[#allocation2 + $0x620] sm:$0xff]
      %v2640 = vld [vmem:[#allocation2 + $0x628] sm:$0xff]
      %v2641 = vld [vmem:[#allocation2 + $0x630] sm:$0xff]
      %v2642 = vld [vmem:[#allocation2 + $0x638] sm:$0xff]
      %v2643 = vld [vmem:[#allocation2 + $0x640] sm:$0xff]
      %v2644 = vld [vmem:[#allocation2 + $0x648] sm:$0xff]
      %v2645 = vld [vmem:[#allocation2 + $0x650] sm:$0xff]
      %v2646 = vld [vmem:[#allocation2 + $0x658] sm:$0xff]
      %v2647 = vld [vmem:[#allocation2 + $0x660] sm:$0xff]
      %v2648 = vld [vmem:[#allocation2 + $0x668] sm:$0xff]
      %v2649 = vld [vmem:[#allocation2 + $0x670] sm:$0xff]
      %v2650 = vld [vmem:[#allocation2 + $0x678] sm:$0xff]
      %v2651 = vld [vmem:[#allocation2 + $0x680] sm:$0xff]
      %v2652 = vld [vmem:[#allocation2 + $0x688] sm:$0xff]
      %v2653 = vld [vmem:[#allocation2 + $0x690] sm:$0xff]
      %v2654 = vld [vmem:[#allocation2 + $0x698] sm:$0xff]
      %v2655 = vld [vmem:[#allocation2 + $0x6a0] sm:$0xff]
      %v2656 = vld [vmem:[#allocation2 + $0x6a8] sm:$0xff]
      %v2657 = vld [vmem:[#allocation2 + $0x6b0] sm:$0xff]
      %v2658 = vld [vmem:[#allocation2 + $0x6b8] sm:$0xff]
      %v2659 = vld [vmem:[#allocation2 + $0x6c0] sm:$0xff]
      %v2660 = vld [vmem:[#allocation2 + $0x6c8] sm:$0xff]
      %v2661 = vld [vmem:[#allocation2 + $0x6d0] sm:$0xff]
      %v2662 = vld [vmem:[#allocation2 + $0x6d8] sm:$0xff]
      %v2663 = vld [vmem:[#allocation2 + $0x6e0] sm:$0xff]
      %v2664 = vld [vmem:[#allocation2 + $0x6e8] sm:$0xff]
      %v2665 = vld [vmem:[#allocation2 + $0x6f0] sm:$0xff]
      %v2666 = vld [vmem:[#allocation2 + $0x6f8] sm:$0xff]
      %v2667 = vld [vmem:[#allocation2 + $0x700] sm:$0xff]
      %v2668 = vld [vmem:[#allocation2 + $0x708] sm:$0xff]
      %v2669 = vld [vmem:[#allocation2 + $0x710] sm:$0xff]
      %v2670 = vld [vmem:[#allocation2 + $0x718] sm:$0xff]
      %v2671 = vld [vmem:[#allocation2 + $0x720] sm:$0xff]
      %v2672 = vld [vmem:[#allocation2 + $0x728] sm:$0xff]
      %v2673 = vld [vmem:[#allocation2 + $0x730] sm:$0xff]
      %v2674 = vld [vmem:[#allocation2 + $0x738] sm:$0xff]
      %v2675 = vld [vmem:[#allocation2 + $0x740] sm:$0xff]
      %v2676 = vld [vmem:[#allocation2 + $0x748] sm:$0xff]
      %v2677 = vld [vmem:[#allocation2 + $0x750] sm:$0xff]
      %v2678 = vld [vmem:[#allocation2 + $0x758] sm:$0xff]
      %v2679 = vld [vmem:[#allocation2 + $0x760] sm:$0xff]
      %v2680 = vld [vmem:[#allocation2 + $0x768] sm:$0xff]
      %v2681 = vld [vmem:[#allocation2 + $0x770] sm:$0xff]
      %v2682 = vld [vmem:[#allocation2 + $0x778] sm:$0xff]
      %v2683 = vld [vmem:[#allocation2 + $0x780] sm:$0xff]
      %v2684 = vld [vmem:[#allocation2 + $0x788] sm:$0xff]
      %v2685 = vld [vmem:[#allocation2 + $0x790] sm:$0xff]
      %v2686 = vld [vmem:[#allocation2 + $0x798] sm:$0xff]
      %v2687 = vld [vmem:[#allocation2 + $0x7a0] sm:$0xff]
      %v2688 = vld [vmem:[#allocation2 + $0x7a8] sm:$0xff]
      %v2689 = vld [vmem:[#allocation2 + $0x7b0] sm:$0xff]
      %v2690 = vld [vmem:[#allocation2 + $0x7b8] sm:$0xff]
      %v2691 = vld [vmem:[#allocation2 + $0x7c0] sm:$0xff]
      %v2692 = vld [vmem:[#allocation2 + $0x7c8] sm:$0xff]
      %v2693 = vld [vmem:[#allocation2 + $0x7d0] sm:$0xff]
      %v2694 = vld [vmem:[#allocation2 + $0x7d8] sm:$0xff]
      %v2695 = vld [vmem:[#allocation2 + $0x7e0] sm:$0xff]
      %v2696 = vld [vmem:[#allocation2 + $0x7e8] sm:$0xff]
      %v2697 = vld [vmem:[#allocation2 + $0x7f0] sm:$0xff]
      %v2698 = vld [vmem:[#allocation2 + $0x7f8] sm:$0xff]
      %v2699 = vld [vmem:[%s1] sm:$0xff]
      %v2700 = vld [vmem:[%s1 + $0x8] sm:$0xff]
      %v2701 = vld [vmem:[%s1 + $0x10] sm:$0xff]
      %v2702 = vld [vmem:[%s1 + $0x18] sm:$0xff]
      %v2703 = vld [vmem:[%s1 + $0x20] sm:$0xff]
      %v2704 = vld [vmem:[%s1 + $0x28] sm:$0xff]
      %v2705 = vld [vmem:[%s1 + $0x30] sm:$0xff]
      %v2706 = vld [vmem:[%s1 + $0x38] sm:$0xff]
      %v2707 = vld [vmem:[%s1 + $0x40] sm:$0xff]
      %v2708 = vld [vmem:[%s1 + $0x48] sm:$0xff]
      %v2709 = vld [vmem:[%s1 + $0x50] sm:$0xff]
      %v2710 = vld [vmem:[%s1 + $0x58] sm:$0xff]
      %v2711 = vld [vmem:[%s1 + $0x60] sm:$0xff]
      %v2712 = vld [vmem:[%s1 + $0x68] sm:$0xff]
      %v2713 = vld [vmem:[%s1 + $0x70] sm:$0xff]
      %v2714 = vld [vmem:[%s1 + $0x78] sm:$0xff]
      %v2715 = vld [vmem:[%s1 + $0x80] sm:$0xff]
      %v2716 = vld [vmem:[%s1 + $0x88] sm:$0xff]
      %v2717 = vld [vmem:[%s1 + $0x90] sm:$0xff]
      %v2718 = vld [vmem:[%s1 + $0x98] sm:$0xff]
      %v2719 = vld [vmem:[%s1 + $0xa0] sm:$0xff]
      %v2720 = vld [vmem:[%s1 + $0xa8] sm:$0xff]
      %v2721 = vld [vmem:[%s1 + $0xb0] sm:$0xff]
      %v2722 = vld [vmem:[%s1 + $0xb8] sm:$0xff]
      %v2723 = vld [vmem:[%s1 + $0xc0] sm:$0xff]
      %v2724 = vld [vmem:[%s1 + $0xc8] sm:$0xff]
      %v2725 = vld [vmem:[%s1 + $0xd0] sm:$0xff]
      %v2726 = vld [vmem:[%s1 + $0xd8] sm:$0xff]
      %v2727 = vld [vmem:[%s1 + $0xe0] sm:$0xff]
      %v2728 = vld [vmem:[%s1 + $0xe8] sm:$0xff]
      %v2729 = vld [vmem:[%s1 + $0xf0] sm:$0xff]
      %v2730 = vld [vmem:[%s1 + $0xf8] sm:$0xff]
      %v2731 = vld [vmem:[%s2] sm:$0x1]
      %v2733 = vlaneseq
      %v2734 = vshrl.u32 %v2733, 7
      %v2735 = vsub.s32 0, %v2734
      %v2736 = vrot.slane %v2731, %v2735
      %2738 = vmatprep.subr.mxu0 0.0
      %2739 = vmatpush1.msra.mxu0 %v2699
      %2740 = vmatprep.subr.mxu0 0.0
      %2741 = vmatpush1.msra.mxu0 %v2700
      %2742 = vmatprep.subr.mxu0 0.0
      %2743 = vmatpush1.msra.mxu0 %v2701
      %2744 = vmatprep.subr.mxu0 0.0
      %2745 = vmatpush1.msra.mxu0 %v2702
      %2746 = vmatprep.subr.mxu0 0.0
      %2747 = vmatpush1.msra.mxu0 %v2703
      %2748 = vmatprep.subr.mxu0 0.0
      %2749 = vmatpush1.msra.mxu0 %v2704
      %2750 = vmatprep.subr.mxu0 0.0
      %2751 = vmatpush1.msra.mxu0 %v2705
      %2752 = vmatprep.subr.mxu0 0.0
      %2753 = vmatpush1.msra.mxu0 %v2706
      %2754 = vmatprep.subr.mxu0 0.0
      %2755 = vmatpush1.msra.mxu0 %v2707
      %2756 = vmatprep.subr.mxu0 0.0
      %2757 = vmatpush1.msra.mxu0 %v2708
      %2758 = vmatprep.subr.mxu0 0.0
      %2759 = vmatpush1.msra.mxu0 %v2709
      %2760 = vmatprep.subr.mxu0 0.0
      %2761 = vmatpush1.msra.mxu0 %v2710
      %2762 = vmatprep.subr.mxu0 0.0
      %2763 = vmatpush1.msra.mxu0 %v2711
      %2764 = vmatprep.subr.mxu0 0.0
      %2765 = vmatpush1.msra.mxu0 %v2712
      %2766 = vmatprep.subr.mxu0 0.0
      %2767 = vmatpush1.msra.mxu0 %v2713
      %2768 = vmatprep.subr.mxu0 0.0
      %2769 = vmatpush1.msra.mxu0 %v2714
      %2770 = vmatprep.subr.mxu0 0.0
      %2771 = vmatpush1.msra.mxu0 %v2715
      %2772 = vmatprep.subr.mxu0 0.0
      %2773 = vmatpush1.msra.mxu0 %v2716
      %2774 = vmatprep.subr.mxu0 0.0
      %2775 = vmatpush1.msra.mxu0 %v2717
      %2776 = vmatprep.subr.mxu0 0.0
      %2777 = vmatpush1.msra.mxu0 %v2718
      %2778 = vmatprep.subr.mxu0 0.0
      %2779 = vmatpush1.msra.mxu0 %v2719
      %2780 = vmatprep.subr.mxu0 0.0
      %2781 = vmatpush1.msra.mxu0 %v2720
      %2782 = vmatprep.subr.mxu0 0.0
      %2783 = vmatpush1.msra.mxu0 %v2721
      %2784 = vmatprep.subr.mxu0 0.0
      %2785 = vmatpush1.msra.mxu0 %v2722
      %2786 = vmatprep.subr.mxu0 0.0
      %2787 = vmatpush1.msra.mxu0 %v2723
      %2788 = vmatprep.subr.mxu0 0.0
      %2789 = vmatpush1.msra.mxu0 %v2724
      %2790 = vmatprep.subr.mxu0 0.0
      %2791 = vmatpush1.msra.mxu0 %v2725
      %2792 = vmatprep.subr.mxu0 0.0
      %2793 = vmatpush1.msra.mxu0 %v2726
      %2794 = vmatprep.subr.mxu0 0.0
      %2795 = vmatpush1.msra.mxu0 %v2727
      %2796 = vmatprep.subr.mxu0 0.0
      %2797 = vmatpush1.msra.mxu0 %v2728
      %2798 = vmatprep.subr.mxu0 0.0
      %2799 = vmatpush1.msra.mxu0 %v2729
      %2800 = vmatprep.subr.mxu0 0.0
      %2801 = vmatpush1.msra.mxu0 %v2730
      %2802 = vmatprep.mubr.f32.mxu0 %v2444
      %2803 = vmatmul.mubr.f32.gmra.mrb[0].mxu0 %v2443
      %v2804 = vpop.f32.mrb[0].mxu0
      %v2805 = vadd.f32 %v2736, %v2804
      %v2806 = vpop.f32.mrb[0].mxu0
      %2807 = vmatprep.mubr.f32.mxu0 %v2446
      %2808 = vmatmul.mubr.f32.gmra.mrb[0].mxu0 %v2445
      %v2809 = vpop.f32.mrb[0].mxu0
      %v2810 = vadd.f32 %v2736, %v2809
      %v2811 = vpop.f32.mrb[0].mxu0
      %2812 = vmatprep.mubr.f32.mxu0 %v2448
      %2813 = vmatmul.mubr.f32.gmra.mrb[0].mxu0 %v2447
      %v2814 = vpop.f32.mrb[0].mxu0
      %v2815 = vadd.f32 %v2736, %v2814
      %v2816 = vpop.f32.mrb[0].mxu0
      %2817 = vmatprep.mubr.f32.mxu0 %v2450
      %2818 = vmatmul.mubr.f32.gmra.mrb[0].mxu0 %v2449
      %v2819 = vpop.f32.mrb[0].mxu0
      %v2820 = vadd.f32 %v2736, %v2819
      %v2821 = vpop.f32.mrb[0].mxu0
      %2822 = vmatprep.mubr.f32.mxu0 %v2452
      %2823 = vmatmul.mubr.f32.gmra.mrb[0].mxu0 %v2451
      %v2824 = vpop.f32.mrb[0].mxu0
      %v2825 = vadd.f32 %v2736, %v2824
      %v2826 = vpop.f32.mrb[0].mxu0
      %2827 = vmatprep.mubr.f32.mxu0 %v2454
      %2828 = vmatmul.mubr.f32.gmra.mrb[0].mxu0 %v2453
      %v2829 = vpop.f32.mrb[0].mxu0
      %v2830 = vadd.f32 %v2736, %v2829
      %v2831 = vpop.f32.mrb[0].mxu0
      %2832 = vmatprep.mubr.f32.mxu0 %v2456
      %2833 = vmatmul.mubr.f32.gmra.mrb[0].mxu0 %v2455
      %v2834 = vpop.f32.mrb[0].mxu0
      %v2835 = vadd.f32 %v2736, %v2834
      %v2836 = vpop.f32.mrb[0].mxu0
      %2837 = vmatprep.mubr.f32.mxu0 %v2458
      %2838 = vmatmul.mubr.f32.gmra.mrb[0].mxu0 %v2457
      %v2839 = vpop.f32.mrb[0].mxu0
      %v2840 = vadd.f32 %v2736, %v2839
      %v2841 = vpop.f32.mrb[0].mxu0
      %2842 = vmatprep.mubr.f32.mxu0 %v2460
      %2843 = vmatmul.mubr.f32.gmra.mrb[0].mxu0 %v2459
      %v2844 = vpop.f32.mrb[0].mxu0
      %v2845 = vadd.f32 %v2736, %v2844
      %v2846 = vpop.f32.mrb[0].mxu0
      %2847 = vmatprep.mubr.f32.mxu0 %v2462
      %2848 = vmatmul.mubr.f32.gmra.mrb[0].mxu0 %v2461
      %v2849 = vpop.f32.mrb[0].mxu0
      %v2850 = vadd.f32 %v2736, %v2849
      %v2851 = vpop.f32.mrb[0].mxu0
      %2852 = vmatprep.mubr.f32.mxu0 %v2464
      %2853 = vmatmul.mubr.f32.gmra.mrb[0].mxu0 %v2463
      %v2854 = vpop.f32.mrb[0].mxu0
      %v2855 = vadd.f32 %v2736, %v2854
      %v2856 = vpop.f32.mrb[0].mxu0
      %2857 = vmatprep.mubr.f32.mxu0 %v2466
      %2858 = vmatmul.mubr.f32.gmra.mrb[0].mxu0 %v2465
      %v2859 = vpop.f32.mrb[0].mxu0
      %v2860 = vadd.f32 %v2736, %v2859
      %v2861 = vpop.f32.mrb[0].mxu0
      %2862 = vmatprep.mubr.f32.mxu0 %v2468
      %2863 = vmatmul.mubr.f32.gmra.mrb[0].mxu0 %v2467
      %v2864 = vpop.f32.mrb[0].mxu0
      %v2865 = vadd.f32 %v2736, %v2864
      %v2866 = vpop.f32.mrb[0].mxu0
      %2867 = vmatprep.mubr.f32.mxu0 %v2470
      %2868 = vmatmul.mubr.f32.gmra.mrb[0].mxu0 %v2469
      %v2869 = vpop.f32.mrb[0].mxu0
      %v2870 = vadd.f32 %v2736, %v2869
      %v2871 = vpop.f32.mrb[0].mxu0
      %2872 = vmatprep.mubr.f32.mxu0 %v2472
      %2873 = vmatmul.mubr.f32.gmra.mrb[0].mxu0 %v2471
      %v2874 = vpop.f32.mrb[0].mxu0
      %v2875 = vadd.f32 %v2736, %v2874
      %v2876 = vpop.f32.mrb[0].mxu0
      %2877 = vmatprep.mubr.f32.mxu0 %v2474
      %2878 = vmatmul.mubr.f32.gmra.mrb[0].mxu0 %v2473
      %v2879 = vpop.f32.mrb[0].mxu0
      %v2880 = vadd.f32 %v2736, %v2879
      %v2881 = vpop.f32.mrb[0].mxu0
      %2882 = vmatprep.mubr.f32.mxu0 %v2476
      %2883 = vmatmul.mubr.f32.gmra.mrb[0].mxu0 %v2475
      %v2884 = vpop.f32.mrb[0].mxu0
      %v2885 = vadd.f32 %v2736, %v2884
      %v2886 = vpop.f32.mrb[0].mxu0
      %2887 = vmatprep.mubr.f32.mxu0 %v2478
      %2888 = vmatmul.mubr.f32.gmra.mrb[0].mxu0 %v2477
      %v2889 = vpop.f32.mrb[0].mxu0
      %v2890 = vadd.f32 %v2736, %v2889
      %v2891 = vpop.f32.mrb[0].mxu0
      %2892 = vmatprep.mubr.f32.mxu0 %v2480
      %2893 = vmatmul.mubr.f32.gmra.mrb[0].mxu0 %v2479
      %v2894 = vpop.f32.mrb[0].mxu0
      %v2895 = vadd.f32 %v2736, %v2894
      %v2896 = vpop.f32.mrb[0].mxu0
      %2897 = vmatprep.mubr.f32.mxu0 %v2482
      %2898 = vmatmul.mubr.f32.gmra.mrb[0].mxu0 %v2481
      %v2899 = vpop.f32.mrb[0].mxu0
      %v2900 = vadd.f32 %v2736, %v2899
      %v2901 = vpop.f32.mrb[0].mxu0
      %2902 = vmatprep.mubr.f32.mxu0 %v2484
      %2903 = vmatmul.mubr.f32.gmra.mrb[0].mxu0 %v2483
      %v2904 = vpop.f32.mrb[0].mxu0
      %v2905 = vadd.f32 %v2736, %v2904
      %v2906 = vpop.f32.mrb[0].mxu0
      %2907 = vmatprep.mubr.f32.mxu0 %v2486
      %2908 = vmatmul.mubr.f32.gmra.mrb[0].mxu0 %v2485
      %v2909 = vpop.f32.mrb[0].mxu0
      %v2910 = vadd.f32 %v2736, %v2909
      %v2911 = vpop.f32.mrb[0].mxu0
      %2912 = vmatprep.mubr.f32.mxu0 %v2488
      %2913 = vmatmul.mubr.f32.gmra.mrb[0].mxu0 %v2487
      %v2914 = vpop.f32.mrb[0].mxu0
      %v2915 = vadd.f32 %v2736, %v2914
      %v2916 = vpop.f32.mrb[0].mxu0
      %2917 = vmatprep.mubr.f32.mxu0 %v2490
      %2918 = vmatmul.mubr.f32.gmra.mrb[0].mxu0 %v2489
      %v2919 = vpop.f32.mrb[0].mxu0
      %v2920 = vadd.f32 %v2736, %v2919
      %v2921 = vpop.f32.mrb[0].mxu0
      %2922 = vmatprep.mubr.f32.mxu0 %v2492
      %2923 = vmatmul.mubr.f32.gmra.mrb[0].mxu0 %v2491
      %v2924 = vpop.f32.mrb[0].mxu0
      %v2925 = vadd.f32 %v2736, %v2924
      %v2926 = vpop.f32.mrb[0].mxu0
      %2927 = vmatprep.mubr.f32.mxu0 %v2494
      %2928 = vmatmul.mubr.f32.gmra.mrb[0].mxu0 %v2493
      %v2929 = vpop.f32.mrb[0].mxu0
      %v2930 = vadd.f32 %v2736, %v2929
      %v2931 = vpop.f32.mrb[0].mxu0
      %2932 = vmatprep.mubr.f32.mxu0 %v2496
      %2933 = vmatmul.mubr.f32.gmra.mrb[0].mxu0 %v2495
      %v2934 = vpop.f32.mrb[0].mxu0
      %v2935 = vadd.f32 %v2736, %v2934
      %v2936 = vpop.f32.mrb[0].mxu0
      %2937 = vmatprep.mubr.f32.mxu0 %v2498
      %2938 = vmatmul.mubr.f32.gmra.mrb[0].mxu0 %v2497
      %v2939 = vpop.f32.mrb[0].mxu0
      %v2940 = vadd.f32 %v2736, %v2939
      %v2941 = vpop.f32.mrb[0].mxu0
      %2942 = vmatprep.mubr.f32.mxu0 %v2500
      %2943 = vmatmul.mubr.f32.gmra.mrb[0].mxu0 %v2499
      %v2944 = vpop.f32.mrb[0].mxu0
      %v2945 = vadd.f32 %v2736, %v2944
      %v2946 = vpop.f32.mrb[0].mxu0
      %2947 = vmatprep.mubr.f32.mxu0 %v2502
      %2948 = vmatmul.mubr.f32.gmra.mrb[0].mxu0 %v2501
      %v2949 = vpop.f32.mrb[0].mxu0
      %v2950 = vadd.f32 %v2736, %v2949
      %v2951 = vpop.f32.mrb[0].mxu0
      %2952 = vmatprep.mubr.f32.mxu0 %v2504
      %2953 = vmatmul.mubr.f32.gmra.mrb[0].mxu0 %v2503
      %v2954 = vpop.f32.mrb[0].mxu0
      %v2955 = vadd.f32 %v2736, %v2954
      %v2956 = vpop.f32.mrb[0].mxu0
      %2957 = vmatprep.mubr.f32.mxu0 %v2506
      %2958 = vmatmul.mubr.f32.gmra.mrb[0].mxu0 %v2505
      %v2959 = vpop.f32.mrb[0].mxu0
      %v2960 = vadd.f32 %v2736, %v2959
      %v2961 = vpop.f32.mrb[0].mxu0
      %2962 = vmatprep.mubr.f32.mxu0 %v2508
      %2963 = vmatmul.mubr.f32.gmra.mrb[0].mxu0 %v2507
      %v2964 = vpop.f32.mrb[0].mxu0
      %v2965 = vadd.f32 %v2736, %v2964
      %v2966 = vpop.f32.mrb[0].mxu0
      %2967 = vmatprep.mubr.f32.mxu0 %v2510
      %2968 = vmatmul.mubr.f32.gmra.mrb[0].mxu0 %v2509
      %v2969 = vpop.f32.mrb[0].mxu0
      %v2970 = vadd.f32 %v2736, %v2969
      %v2971 = vpop.f32.mrb[0].mxu0
      %2972 = vmatprep.mubr.f32.mxu0 %v2512
      %2973 = vmatmul.mubr.f32.gmra.mrb[0].mxu0 %v2511
      %v2974 = vpop.f32.mrb[0].mxu0
      %v2975 = vadd.f32 %v2736, %v2974
      %v2976 = vpop.f32.mrb[0].mxu0
      %2977 = vmatprep.mubr.f32.mxu0 %v2514
      %2978 = vmatmul.mubr.f32.gmra.mrb[0].mxu0 %v2513
      %v2979 = vpop.f32.mrb[0].mxu0
      %v2980 = vadd.f32 %v2736, %v2979
      %v2981 = vpop.f32.mrb[0].mxu0
      %2982 = vmatprep.mubr.f32.mxu0 %v2516
      %2983 = vmatmul.mubr.f32.gmra.mrb[0].mxu0 %v2515
      %v2984 = vpop.f32.mrb[0].mxu0
      %v2985 = vadd.f32 %v2736, %v2984
      %v2986 = vpop.f32.mrb[0].mxu0
      %2987 = vmatprep.mubr.f32.mxu0 %v2518
      %2988 = vmatmul.mubr.f32.gmra.mrb[0].mxu0 %v2517
      %v2989 = vpop.f32.mrb[0].mxu0
      %v2990 = vadd.f32 %v2736, %v2989
      %v2991 = vpop.f32.mrb[0].mxu0
      %2992 = vmatprep.mubr.f32.mxu0 %v2520
      %2993 = vmatmul.mubr.f32.gmra.mrb[0].mxu0 %v2519
      %v2994 = vpop.f32.mrb[0].mxu0
      %v2995 = vadd.f32 %v2736, %v2994
      %v2996 = vpop.f32.mrb[0].mxu0
      %2997 = vmatprep.mubr.f32.mxu0 %v2522
      %2998 = vmatmul.mubr.f32.gmra.mrb[0].mxu0 %v2521
      %v2999 = vpop.f32.mrb[0].mxu0
      %v3000 = vadd.f32 %v2736, %v2999
      %v3001 = vpop.f32.mrb[0].mxu0
      %3002 = vmatprep.mubr.f32.mxu0 %v2524
      %3003 = vmatmul.mubr.f32.gmra.mrb[0].mxu0 %v2523
      %v3004 = vpop.f32.mrb[0].mxu0
      %v3005 = vadd.f32 %v2736, %v3004
      %v3006 = vpop.f32.mrb[0].mxu0
      %3007 = vmatprep.mubr.f32.mxu0 %v2526
      %3008 = vmatmul.mubr.f32.gmra.mrb[0].mxu0 %v2525
      %v3009 = vpop.f32.mrb[0].mxu0
      %v3010 = vadd.f32 %v2736, %v3009
      %v3011 = vpop.f32.mrb[0].mxu0
      %3012 = vmatprep.mubr.f32.mxu0 %v2528
      %3013 = vmatmul.mubr.f32.gmra.mrb[0].mxu0 %v2527
      %v3014 = vpop.f32.mrb[0].mxu0
      %v3015 = vadd.f32 %v2736, %v3014
      %v3016 = vpop.f32.mrb[0].mxu0
      %3017 = vmatprep.mubr.f32.mxu0 %v2530
      %3018 = vmatmul.mubr.f32.gmra.mrb[0].mxu0 %v2529
      %v3019 = vpop.f32.mrb[0].mxu0
      %v3020 = vadd.f32 %v2736, %v3019
      %v3021 = vpop.f32.mrb[0].mxu0
      %3022 = vmatprep.mubr.f32.mxu0 %v2532
      %3023 = vmatmul.mubr.f32.gmra.mrb[0].mxu0 %v2531
      %v3024 = vpop.f32.mrb[0].mxu0
      %v3025 = vadd.f32 %v2736, %v3024
      %v3026 = vpop.f32.mrb[0].mxu0
      %3027 = vmatprep.mubr.f32.mxu0 %v2534
      %3028 = vmatmul.mubr.f32.gmra.mrb[0].mxu0 %v2533
      %v3029 = vpop.f32.mrb[0].mxu0
      %v3030 = vadd.f32 %v2736, %v3029
      %v3031 = vpop.f32.mrb[0].mxu0
      %3032 = vmatprep.mubr.f32.mxu0 %v2536
      %3033 = vmatmul.mubr.f32.gmra.mrb[0].mxu0 %v2535
      %v3034 = vpop.f32.mrb[0].mxu0
      %v3035 = vadd.f32 %v2736, %v3034
      %v3036 = vpop.f32.mrb[0].mxu0
      %3037 = vmatprep.mubr.f32.mxu0 %v2538
      %3038 = vmatmul.mubr.f32.gmra.mrb[0].mxu0 %v2537
      %v3039 = vpop.f32.mrb[0].mxu0
      %v3040 = vadd.f32 %v2736, %v3039
      %v3041 = vpop.f32.mrb[0].mxu0
      %3042 = vmatprep.mubr.f32.mxu0 %v2540
      %3043 = vmatmul.mubr.f32.gmra.mrb[0].mxu0 %v2539
      %v3044 = vpop.f32.mrb[0].mxu0
      %v3045 = vadd.f32 %v2736, %v3044
      %v3046 = vpop.f32.mrb[0].mxu0
      %3047 = vmatprep.mubr.f32.mxu0 %v2542
      %3048 = vmatmul.mubr.f32.gmra.mrb[0].mxu0 %v2541
      %v3049 = vpop.f32.mrb[0].mxu0
      %v3050 = vadd.f32 %v2736, %v3049
      %v3051 = vpop.f32.mrb[0].mxu0
      %3052 = vmatprep.mubr.f32.mxu0 %v2544
      %3053 = vmatmul.mubr.f32.gmra.mrb[0].mxu0 %v2543
      %v3054 = vpop.f32.mrb[0].mxu0
      %v3055 = vadd.f32 %v2736, %v3054
      %v3056 = vpop.f32.mrb[0].mxu0
      %3057 = vmatprep.mubr.f32.mxu0 %v2546
      %3058 = vmatmul.mubr.f32.gmra.mrb[0].mxu0 %v2545
      %v3059 = vpop.f32.mrb[0].mxu0
      %v3060 = vadd.f32 %v2736, %v3059
      %v3061 = vpop.f32.mrb[0].mxu0
      %3062 = vmatprep.mubr.f32.mxu0 %v2548
      %3063 = vmatmul.mubr.f32.gmra.mrb[0].mxu0 %v2547
      %v3064 = vpop.f32.mrb[0].mxu0
      %v3065 = vadd.f32 %v2736, %v3064
      %v3066 = vpop.f32.mrb[0].mxu0
      %3067 = vmatprep.mubr.f32.mxu0 %v2550
      %3068 = vmatmul.mubr.f32.gmra.mrb[0].mxu0 %v2549
      %v3069 = vpop.f32.mrb[0].mxu0
      %v3070 = vadd.f32 %v2736, %v3069
      %v3071 = vpop.f32.mrb[0].mxu0
      %3072 = vmatprep.mubr.f32.mxu0 %v2552
      %3073 = vmatmul.mubr.f32.gmra.mrb[0].mxu0 %v2551
      %v3074 = vpop.f32.mrb[0].mxu0
      %v3075 = vadd.f32 %v2736, %v3074
      %v3076 = vpop.f32.mrb[0].mxu0
      %3077 = vmatprep.mubr.f32.mxu0 %v2554
      %3078 = vmatmul.mubr.f32.gmra.mrb[0].mxu0 %v2553
      %v3079 = vpop.f32.mrb[0].mxu0
      %v3080 = vadd.f32 %v2736, %v3079
      %v3081 = vpop.f32.mrb[0].mxu0
      %3082 = vmatprep.mubr.f32.mxu0 %v2556
      %3083 = vmatmul.mubr.f32.gmra.mrb[0].mxu0 %v2555
      %v3084 = vpop.f32.mrb[0].mxu0
      %v3085 = vadd.f32 %v2736, %v3084
      %v3086 = vpop.f32.mrb[0].mxu0
      %3087 = vmatprep.mubr.f32.mxu0 %v2558
      %3088 = vmatmul.mubr.f32.gmra.mrb[0].mxu0 %v2557
      %v3089 = vpop.f32.mrb[0].mxu0
      %v3090 = vadd.f32 %v2736, %v3089
      %v3091 = vpop.f32.mrb[0].mxu0
      %3092 = vmatprep.mubr.f32.mxu0 %v2560
      %3093 = vmatmul.mubr.f32.gmra.mrb[0].mxu0 %v2559
      %v3094 = vpop.f32.mrb[0].mxu0
      %v3095 = vadd.f32 %v2736, %v3094
      %v3096 = vpop.f32.mrb[0].mxu0
      %3097 = vmatprep.mubr.f32.mxu0 %v2562
      %3098 = vmatmul.mubr.f32.gmra.mrb[0].mxu0 %v2561
      %v3099 = vpop.f32.mrb[0].mxu0
      %v3100 = vadd.f32 %v2736, %v3099
      %v3101 = vpop.f32.mrb[0].mxu0
      %3102 = vmatprep.mubr.f32.mxu0 %v2564
      %3103 = vmatmul.mubr.f32.gmra.mrb[0].mxu0 %v2563
      %v3104 = vpop.f32.mrb[0].mxu0
      %v3105 = vadd.f32 %v2736, %v3104
      %v3106 = vpop.f32.mrb[0].mxu0
      %3107 = vmatprep.mubr.f32.mxu0 %v2566
      %3108 = vmatmul.mubr.f32.gmra.mrb[0].mxu0 %v2565
      %v3109 = vpop.f32.mrb[0].mxu0
      %v3110 = vadd.f32 %v2736, %v3109
      %v3111 = vpop.f32.mrb[0].mxu0
      %3112 = vmatprep.mubr.f32.mxu0 %v2568
      %3113 = vmatmul.mubr.f32.gmra.mrb[0].mxu0 %v2567
      %v3114 = vpop.f32.mrb[0].mxu0
      %v3115 = vadd.f32 %v2736, %v3114
      %v3116 = vpop.f32.mrb[0].mxu0
      %3117 = vmatprep.mubr.f32.mxu0 %v2570
      %3118 = vmatmul.mubr.f32.gmra.mrb[0].mxu0 %v2569
      %v3119 = vpop.f32.mrb[0].mxu0
      %v3120 = vadd.f32 %v2736, %v3119
      %v3121 = vpop.f32.mrb[0].mxu0
      %3122 = vmatprep.mubr.f32.mxu0 %v2572
      %3123 = vmatmul.mubr.f32.gmra.mrb[0].mxu0 %v2571
      %v3124 = vpop.f32.mrb[0].mxu0
      %v3125 = vadd.f32 %v2736, %v3124
      %v3126 = vpop.f32.mrb[0].mxu0
      %3127 = vmatprep.mubr.f32.mxu0 %v2574
      %3128 = vmatmul.mubr.f32.gmra.mrb[0].mxu0 %v2573
      %v3129 = vpop.f32.mrb[0].mxu0
      %v3130 = vadd.f32 %v2736, %v3129
      %v3131 = vpop.f32.mrb[0].mxu0
      %3132 = vmatprep.mubr.f32.mxu0 %v2576
      %3133 = vmatmul.mubr.f32.gmra.mrb[0].mxu0 %v2575
      %v3134 = vpop.f32.mrb[0].mxu0
      %v3135 = vadd.f32 %v2736, %v3134
      %v3136 = vpop.f32.mrb[0].mxu0
      %3137 = vmatprep.mubr.f32.mxu0 %v2578
      %3138 = vmatmul.mubr.f32.gmra.mrb[0].mxu0 %v2577
      %v3139 = vpop.f32.mrb[0].mxu0
      %v3140 = vadd.f32 %v2736, %v3139
      %v3141 = vpop.f32.mrb[0].mxu0
      %3142 = vmatprep.mubr.f32.mxu0 %v2580
      %3143 = vmatmul.mubr.f32.gmra.mrb[0].mxu0 %v2579
      %v3144 = vpop.f32.mrb[0].mxu0
      %v3145 = vadd.f32 %v2736, %v3144
      %v3146 = vpop.f32.mrb[0].mxu0
      %3147 = vmatprep.mubr.f32.mxu0 %v2582
      %3148 = vmatmul.mubr.f32.gmra.mrb[0].mxu0 %v2581
      %v3149 = vpop.f32.mrb[0].mxu0
      %v3150 = vadd.f32 %v2736, %v3149
      %v3151 = vpop.f32.mrb[0].mxu0
      %3152 = vmatprep.mubr.f32.mxu0 %v2584
      %3153 = vmatmul.mubr.f32.gmra.mrb[0].mxu0 %v2583
      %v3154 = vpop.f32.mrb[0].mxu0
      %v3155 = vadd.f32 %v2736, %v3154
      %v3156 = vpop.f32.mrb[0].mxu0
      %3157 = vmatprep.mubr.f32.mxu0 %v2586
      %3158 = vmatmul.mubr.f32.gmra.mrb[0].mxu0 %v2585
      %v3159 = vpop.f32.mrb[0].mxu0
      %v3160 = vadd.f32 %v2736, %v3159
      %v3161 = vpop.f32.mrb[0].mxu0
      %3162 = vmatprep.mubr.f32.mxu0 %v2588
      %3163 = vmatmul.mubr.f32.gmra.mrb[0].mxu0 %v2587
      %v3164 = vpop.f32.mrb[0].mxu0
      %v3165 = vadd.f32 %v2736, %v3164
      %v3166 = vpop.f32.mrb[0].mxu0
      %3167 = vmatprep.mubr.f32.mxu0 %v2590
      %3168 = vmatmul.mubr.f32.gmra.mrb[0].mxu0 %v2589
      %v3169 = vpop.f32.mrb[0].mxu0
      %v3170 = vadd.f32 %v2736, %v3169
      %v3171 = vpop.f32.mrb[0].mxu0
      %3172 = vmatprep.mubr.f32.mxu0 %v2592
      %3173 = vmatmul.mubr.f32.gmra.mrb[0].mxu0 %v2591
      %v3174 = vpop.f32.mrb[0].mxu0
      %v3175 = vadd.f32 %v2736, %v3174
      %v3176 = vpop.f32.mrb[0].mxu0
      %3177 = vmatprep.mubr.f32.mxu0 %v2594
      %3178 = vmatmul.mubr.f32.gmra.mrb[0].mxu0 %v2593
      %v3179 = vpop.f32.mrb[0].mxu0
      %v3180 = vadd.f32 %v2736, %v3179
      %v3181 = vpop.f32.mrb[0].mxu0
      %3182 = vmatprep.mubr.f32.mxu0 %v2596
      %3183 = vmatmul.mubr.f32.gmra.mrb[0].mxu0 %v2595
      %v3184 = vpop.f32.mrb[0].mxu0
      %v3185 = vadd.f32 %v2736, %v3184
      %v3186 = vpop.f32.mrb[0].mxu0
      %3187 = vmatprep.mubr.f32.mxu0 %v2598
      %3188 = vmatmul.mubr.f32.gmra.mrb[0].mxu0 %v2597
      %v3189 = vpop.f32.mrb[0].mxu0
      %v3190 = vadd.f32 %v2736, %v3189
      %v3191 = vpop.f32.mrb[0].mxu0
      %3192 = vmatprep.mubr.f32.mxu0 %v2600
      %3193 = vmatmul.mubr.f32.gmra.mrb[0].mxu0 %v2599
      %v3194 = vpop.f32.mrb[0].mxu0
      %v3195 = vadd.f32 %v2736, %v3194
      %v3196 = vpop.f32.mrb[0].mxu0
      %3197 = vmatprep.mubr.f32.mxu0 %v2602
      %3198 = vmatmul.mubr.f32.gmra.mrb[0].mxu0 %v2601
      %v3199 = vpop.f32.mrb[0].mxu0
      %v3200 = vadd.f32 %v2736, %v3199
      %v3201 = vpop.f32.mrb[0].mxu0
      %3202 = vmatprep.mubr.f32.mxu0 %v2604
      %3203 = vmatmul.mubr.f32.gmra.mrb[0].mxu0 %v2603
      %v3204 = vpop.f32.mrb[0].mxu0
      %v3205 = vadd.f32 %v2736, %v3204
      %v3206 = vpop.f32.mrb[0].mxu0
      %3207 = vmatprep.mubr.f32.mxu0 %v2606
      %3208 = vmatmul.mubr.f32.gmra.mrb[0].mxu0 %v2605
      %v3209 = vpop.f32.mrb[0].mxu0
      %v3210 = vadd.f32 %v2736, %v3209
      %v3211 = vpop.f32.mrb[0].mxu0
      %3212 = vmatprep.mubr.f32.mxu0 %v2608
      %3213 = vmatmul.mubr.f32.gmra.mrb[0].mxu0 %v2607
      %v3214 = vpop.f32.mrb[0].mxu0
      %v3215 = vadd.f32 %v2736, %v3214
      %v3216 = vpop.f32.mrb[0].mxu0
      %3217 = vmatprep.mubr.f32.mxu0 %v2610
      %3218 = vmatmul.mubr.f32.gmra.mrb[0].mxu0 %v2609
      %v3219 = vpop.f32.mrb[0].mxu0
      %v3220 = vadd.f32 %v2736, %v3219
      %v3221 = vpop.f32.mrb[0].mxu0
      %3222 = vmatprep.mubr.f32.mxu0 %v2612
      %3223 = vmatmul.mubr.f32.gmra.mrb[0].mxu0 %v2611
      %v3224 = vpop.f32.mrb[0].mxu0
      %v3225 = vadd.f32 %v2736, %v3224
      %v3226 = vpop.f32.mrb[0].mxu0
      %3227 = vmatprep.mubr.f32.mxu0 %v2614
      %3228 = vmatmul.mubr.f32.gmra.mrb[0].mxu0 %v2613
      %v3229 = vpop.f32.mrb[0].mxu0
      %v3230 = vadd.f32 %v2736, %v3229
      %v3231 = vpop.f32.mrb[0].mxu0
      %3232 = vmatprep.mubr.f32.mxu0 %v2616
      %3233 = vmatmul.mubr.f32.gmra.mrb[0].mxu0 %v2615
      %v3234 = vpop.f32.mrb[0].mxu0
      %v3235 = vadd.f32 %v2736, %v3234
      %v3236 = vpop.f32.mrb[0].mxu0
      %3237 = vmatprep.mubr.f32.mxu0 %v2618
      %3238 = vmatmul.mubr.f32.gmra.mrb[0].mxu0 %v2617
      %v3239 = vpop.f32.mrb[0].mxu0
      %v3240 = vadd.f32 %v2736, %v3239
      %v3241 = vpop.f32.mrb[0].mxu0
      %3242 = vmatprep.mubr.f32.mxu0 %v2620
      %3243 = vmatmul.mubr.f32.gmra.mrb[0].mxu0 %v2619
      %v3244 = vpop.f32.mrb[0].mxu0
      %v3245 = vadd.f32 %v2736, %v3244
      %v3246 = vpop.f32.mrb[0].mxu0
      %3247 = vmatprep.mubr.f32.mxu0 %v2622
      %3248 = vmatmul.mubr.f32.gmra.mrb[0].mxu0 %v2621
      %v3249 = vpop.f32.mrb[0].mxu0
      %v3250 = vadd.f32 %v2736, %v3249
      %v3251 = vpop.f32.mrb[0].mxu0
      %3252 = vmatprep.mubr.f32.mxu0 %v2624
      %3253 = vmatmul.mubr.f32.gmra.mrb[0].mxu0 %v2623
      %v3254 = vpop.f32.mrb[0].mxu0
      %v3255 = vadd.f32 %v2736, %v3254
      %v3256 = vpop.f32.mrb[0].mxu0
      %3257 = vmatprep.mubr.f32.mxu0 %v2626
      %3258 = vmatmul.mubr.f32.gmra.mrb[0].mxu0 %v2625
      %v3259 = vpop.f32.mrb[0].mxu0
      %v3260 = vadd.f32 %v2736, %v3259
      %v3261 = vpop.f32.mrb[0].mxu0
      %3262 = vmatprep.mubr.f32.mxu0 %v2628
      %3263 = vmatmul.mubr.f32.gmra.mrb[0].mxu0 %v2627
      %v3264 = vpop.f32.mrb[0].mxu0
      %v3265 = vadd.f32 %v2736, %v3264
      %v3266 = vpop.f32.mrb[0].mxu0
      %3267 = vmatprep.mubr.f32.mxu0 %v2630
      %3268 = vmatmul.mubr.f32.gmra.mrb[0].mxu0 %v2629
      %v3269 = vpop.f32.mrb[0].mxu0
      %v3270 = vadd.f32 %v2736, %v3269
      %v3271 = vpop.f32.mrb[0].mxu0
      %3272 = vmatprep.mubr.f32.mxu0 %v2632
      %3273 = vmatmul.mubr.f32.gmra.mrb[0].mxu0 %v2631
      %v3274 = vpop.f32.mrb[0].mxu0
      %v3275 = vadd.f32 %v2736, %v3274
      %v3276 = vpop.f32.mrb[0].mxu0
      %3277 = vmatprep.mubr.f32.mxu0 %v2634
      %3278 = vmatmul.mubr.f32.gmra.mrb[0].mxu0 %v2633
      %v3279 = vpop.f32.mrb[0].mxu0
      %v3280 = vadd.f32 %v2736, %v3279
      %v3281 = vpop.f32.mrb[0].mxu0
      %3282 = vmatprep.mubr.f32.mxu0 %v2636
      %3283 = vmatmul.mubr.f32.gmra.mrb[0].mxu0 %v2635
      %v3284 = vpop.f32.mrb[0].mxu0
      %v3285 = vadd.f32 %v2736, %v3284
      %v3286 = vpop.f32.mrb[0].mxu0
      %3287 = vmatprep.mubr.f32.mxu0 %v2638
      %3288 = vmatmul.mubr.f32.gmra.mrb[0].mxu0 %v2637
      %v3289 = vpop.f32.mrb[0].mxu0
      %v3290 = vadd.f32 %v2736, %v3289
      %v3291 = vpop.f32.mrb[0].mxu0
      %3292 = vmatprep.mubr.f32.mxu0 %v2640
      %3293 = vmatmul.mubr.f32.gmra.mrb[0].mxu0 %v2639
      %v3294 = vpop.f32.mrb[0].mxu0
      %v3295 = vadd.f32 %v2736, %v3294
      %v3296 = vpop.f32.mrb[0].mxu0
      %3297 = vmatprep.mubr.f32.mxu0 %v2642
      %3298 = vmatmul.mubr.f32.gmra.mrb[0].mxu0 %v2641
      %v3299 = vpop.f32.mrb[0].mxu0
      %v3300 = vadd.f32 %v2736, %v3299
      %v3301 = vpop.f32.mrb[0].mxu0
      %3302 = vmatprep.mubr.f32.mxu0 %v2644
      %3303 = vmatmul.mubr.f32.gmra.mrb[0].mxu0 %v2643
      %v3304 = vpop.f32.mrb[0].mxu0
      %v3305 = vadd.f32 %v2736, %v3304
      %v3306 = vpop.f32.mrb[0].mxu0
      %3307 = vmatprep.mubr.f32.mxu0 %v2646
      %3308 = vmatmul.mubr.f32.gmra.mrb[0].mxu0 %v2645
      %v3309 = vpop.f32.mrb[0].mxu0
      %v3310 = vadd.f32 %v2736, %v3309
      %v3311 = vpop.f32.mrb[0].mxu0
      %3312 = vmatprep.mubr.f32.mxu0 %v2648
      %3313 = vmatmul.mubr.f32.gmra.mrb[0].mxu0 %v2647
      %v3314 = vpop.f32.mrb[0].mxu0
      %v3315 = vadd.f32 %v2736, %v3314
      %v3316 = vpop.f32.mrb[0].mxu0
      %3317 = vmatprep.mubr.f32.mxu0 %v2650
      %3318 = vmatmul.mubr.f32.gmra.mrb[0].mxu0 %v2649
      %v3319 = vpop.f32.mrb[0].mxu0
      %v3320 = vadd.f32 %v2736, %v3319
      %v3321 = vpop.f32.mrb[0].mxu0
      %3322 = vmatprep.mubr.f32.mxu0 %v2652
      %3323 = vmatmul.mubr.f32.gmra.mrb[0].mxu0 %v2651
      %v3324 = vpop.f32.mrb[0].mxu0
      %v3325 = vadd.f32 %v2736, %v3324
      %v3326 = vpop.f32.mrb[0].mxu0
      %3327 = vmatprep.mubr.f32.mxu0 %v2654
      %3328 = vmatmul.mubr.f32.gmra.mrb[0].mxu0 %v2653
      %v3329 = vpop.f32.mrb[0].mxu0
      %v3330 = vadd.f32 %v2736, %v3329
      %v3331 = vpop.f32.mrb[0].mxu0
      %3332 = vmatprep.mubr.f32.mxu0 %v2656
      %3333 = vmatmul.mubr.f32.gmra.mrb[0].mxu0 %v2655
      %v3334 = vpop.f32.mrb[0].mxu0
      %v3335 = vadd.f32 %v2736, %v3334
      %v3336 = vpop.f32.mrb[0].mxu0
      %3337 = vmatprep.mubr.f32.mxu0 %v2658
      %3338 = vmatmul.mubr.f32.gmra.mrb[0].mxu0 %v2657
      %v3339 = vpop.f32.mrb[0].mxu0
      %v3340 = vadd.f32 %v2736, %v3339
      %v3341 = vpop.f32.mrb[0].mxu0
      %3342 = vmatprep.mubr.f32.mxu0 %v2660
      %3343 = vmatmul.mubr.f32.gmra.mrb[0].mxu0 %v2659
      %v3344 = vpop.f32.mrb[0].mxu0
      %v3345 = vadd.f32 %v2736, %v3344
      %v3346 = vpop.f32.mrb[0].mxu0
      %3347 = vmatprep.mubr.f32.mxu0 %v2662
      %3348 = vmatmul.mubr.f32.gmra.mrb[0].mxu0 %v2661
      %v3349 = vpop.f32.mrb[0].mxu0
      %v3350 = vadd.f32 %v2736, %v3349
      %v3351 = vpop.f32.mrb[0].mxu0
      %3352 = vmatprep.mubr.f32.mxu0 %v2664
      %3353 = vmatmul.mubr.f32.gmra.mrb[0].mxu0 %v2663
      %v3354 = vpop.f32.mrb[0].mxu0
      %v3355 = vadd.f32 %v2736, %v3354
      %v3356 = vpop.f32.mrb[0].mxu0
      %3357 = vmatprep.mubr.f32.mxu0 %v2666
      %3358 = vmatmul.mubr.f32.gmra.mrb[0].mxu0 %v2665
      %v3359 = vpop.f32.mrb[0].mxu0
      %v3360 = vadd.f32 %v2736, %v3359
      %v3361 = vpop.f32.mrb[0].mxu0
      %3362 = vmatprep.mubr.f32.mxu0 %v2668
      %3363 = vmatmul.mubr.f32.gmra.mrb[0].mxu0 %v2667
      %v3364 = vpop.f32.mrb[0].mxu0
      %v3365 = vadd.f32 %v2736, %v3364
      %v3366 = vpop.f32.mrb[0].mxu0
      %3367 = vmatprep.mubr.f32.mxu0 %v2670
      %3368 = vmatmul.mubr.f32.gmra.mrb[0].mxu0 %v2669
      %v3369 = vpop.f32.mrb[0].mxu0
      %v3370 = vadd.f32 %v2736, %v3369
      %v3371 = vpop.f32.mrb[0].mxu0
      %3372 = vmatprep.mubr.f32.mxu0 %v2672
      %3373 = vmatmul.mubr.f32.gmra.mrb[0].mxu0 %v2671
      %v3374 = vpop.f32.mrb[0].mxu0
      %v3375 = vadd.f32 %v2736, %v3374
      %v3376 = vpop.f32.mrb[0].mxu0
      %3377 = vmatprep.mubr.f32.mxu0 %v2674
      %3378 = vmatmul.mubr.f32.gmra.mrb[0].mxu0 %v2673
      %v3379 = vpop.f32.mrb[0].mxu0
      %v3380 = vadd.f32 %v2736, %v3379
      %v3381 = vpop.f32.mrb[0].mxu0
      %3382 = vmatprep.mubr.f32.mxu0 %v2676
      %3383 = vmatmul.mubr.f32.gmra.mrb[0].mxu0 %v2675
      %v3384 = vpop.f32.mrb[0].mxu0
      %v3385 = vadd.f32 %v2736, %v3384
      %v3386 = vpop.f32.mrb[0].mxu0
      %3387 = vmatprep.mubr.f32.mxu0 %v2678
      %3388 = vmatmul.mubr.f32.gmra.mrb[0].mxu0 %v2677
      %v3389 = vpop.f32.mrb[0].mxu0
      %v3390 = vadd.f32 %v2736, %v3389
      %v3391 = vpop.f32.mrb[0].mxu0
      %3392 = vmatprep.mubr.f32.mxu0 %v2680
      %3393 = vmatmul.mubr.f32.gmra.mrb[0].mxu0 %v2679
      %v3394 = vpop.f32.mrb[0].mxu0
      %v3395 = vadd.f32 %v2736, %v3394
      %v3396 = vpop.f32.mrb[0].mxu0
      %3397 = vmatprep.mubr.f32.mxu0 %v2682
      %3398 = vmatmul.mubr.f32.gmra.mrb[0].mxu0 %v2681
      %v3399 = vpop.f32.mrb[0].mxu0
      %v3400 = vadd.f32 %v2736, %v3399
      %v3401 = vpop.f32.mrb[0].mxu0
      %3402 = vmatprep.mubr.f32.mxu0 %v2684
      %3403 = vmatmul.mubr.f32.gmra.mrb[0].mxu0 %v2683
      %v3404 = vpop.f32.mrb[0].mxu0
      %v3405 = vadd.f32 %v2736, %v3404
      %v3406 = vpop.f32.mrb[0].mxu0
      %3407 = vmatprep.mubr.f32.mxu0 %v2686
      %3408 = vmatmul.mubr.f32.gmra.mrb[0].mxu0 %v2685
      %v3409 = vpop.f32.mrb[0].mxu0
      %v3410 = vadd.f32 %v2736, %v3409
      %v3411 = vpop.f32.mrb[0].mxu0
      %3412 = vmatprep.mubr.f32.mxu0 %v2688
      %3413 = vmatmul.mubr.f32.gmra.mrb[0].mxu0 %v2687
      %v3414 = vpop.f32.mrb[0].mxu0
      %v3415 = vadd.f32 %v2736, %v3414
      %v3416 = vpop.f32.mrb[0].mxu0
      %3417 = vmatprep.mubr.f32.mxu0 %v2690
      %3418 = vmatmul.mubr.f32.gmra.mrb[0].mxu0 %v2689
      %v3419 = vpop.f32.mrb[0].mxu0
      %v3420 = vadd.f32 %v2736, %v3419
      %v3421 = vpop.f32.mrb[0].mxu0
      %3422 = vmatprep.mubr.f32.mxu0 %v2692
      %3423 = vmatmul.mubr.f32.gmra.mrb[0].mxu0 %v2691
      %v3424 = vpop.f32.mrb[0].mxu0
      %v3425 = vadd.f32 %v2736, %v3424
      %v3426 = vpop.f32.mrb[0].mxu0
      %3427 = vmatprep.mubr.f32.mxu0 %v2694
      %3428 = vmatmul.mubr.f32.gmra.mrb[0].mxu0 %v2693
      %v3429 = vpop.f32.mrb[0].mxu0
      %v3430 = vadd.f32 %v2736, %v3429
      %v3431 = vpop.f32.mrb[0].mxu0
      %3432 = vmatprep.mubr.f32.mxu0 %v2696
      %3433 = vmatmul.mubr.f32.gmra.mrb[0].mxu0 %v2695
      %v3434 = vpop.f32.mrb[0].mxu0
      %v3435 = vadd.f32 %v2736, %v3434
      %v3436 = vpop.f32.mrb[0].mxu0
      %3437 = vmatprep.mubr.f32.mxu0 %v2698
      %3438 = vmatmul.mubr.f32.gmra.mrb[0].mxu0 %v2697
      %v3439 = vpop.f32.mrb[0].mxu0
      %v3440 = vadd.f32 %v2736, %v3439
      %v3441 = vpop.f32.mrb[0].mxu0
      %3442 = vdwg.mxu0
      %v3443 = vmax.f32 %v2805, 0.0
      %v3444 = vmax.f32 %v2810, 0.0
      %v3445 = vmax.f32 %v2815, 0.0
      %v3446 = vmax.f32 %v2820, 0.0
      %v3447 = vmax.f32 %v2825, 0.0
      %v3448 = vmax.f32 %v2830, 0.0
      %v3449 = vmax.f32 %v2835, 0.0
      %v3450 = vmax.f32 %v2840, 0.0
      %v3451 = vmax.f32 %v2845, 0.0
      %v3452 = vmax.f32 %v2850, 0.0
      %v3453 = vmax.f32 %v2855, 0.0
      %v3454 = vmax.f32 %v2860, 0.0
      %v3455 = vmax.f32 %v2865, 0.0
      %v3456 = vmax.f32 %v2870, 0.0
      %v3457 = vmax.f32 %v2875, 0.0
      %v3458 = vmax.f32 %v2880, 0.0
      %v3459 = vmax.f32 %v2885, 0.0
      %v3460 = vmax.f32 %v2890, 0.0
      %v3461 = vmax.f32 %v2895, 0.0
      %v3462 = vmax.f32 %v2900, 0.0
      %v3463 = vmax.f32 %v2905, 0.0
      %v3464 = vmax.f32 %v2910, 0.0
      %v3465 = vmax.f32 %v2915, 0.0
      %v3466 = vmax.f32 %v2920, 0.0
      %v3467 = vmax.f32 %v2925, 0.0
      %v3468 = vmax.f32 %v2930, 0.0
      %v3469 = vmax.f32 %v2935, 0.0
      %v3470 = vmax.f32 %v2940, 0.0
      %v3471 = vmax.f32 %v2945, 0.0
      %v3472 = vmax.f32 %v2950, 0.0
      %v3473 = vmax.f32 %v2955, 0.0
      %v3474 = vmax.f32 %v2960, 0.0
      %v3475 = vmax.f32 %v2965, 0.0
      %v3476 = vmax.f32 %v2970, 0.0
      %v3477 = vmax.f32 %v2975, 0.0
      %v3478 = vmax.f32 %v2980, 0.0
      %v3479 = vmax.f32 %v2985, 0.0
      %v3480 = vmax.f32 %v2990, 0.0
      %v3481 = vmax.f32 %v2995, 0.0
      %v3482 = vmax.f32 %v3000, 0.0
      %v3483 = vmax.f32 %v3005, 0.0
      %v3484 = vmax.f32 %v3010, 0.0
      %v3485 = vmax.f32 %v3015, 0.0
      %v3486 = vmax.f32 %v3020, 0.0
      %v3487 = vmax.f32 %v3025, 0.0
      %v3488 = vmax.f32 %v3030, 0.0
      %v3489 = vmax.f32 %v3035, 0.0
      %v3490 = vmax.f32 %v3040, 0.0
      %v3491 = vmax.f32 %v3045, 0.0
      %v3492 = vmax.f32 %v3050, 0.0
      %v3493 = vmax.f32 %v3055, 0.0
      %v3494 = vmax.f32 %v3060, 0.0
      %v3495 = vmax.f32 %v3065, 0.0
      %v3496 = vmax.f32 %v3070, 0.0
      %v3497 = vmax.f32 %v3075, 0.0
      %v3498 = vmax.f32 %v3080, 0.0
      %v3499 = vmax.f32 %v3085, 0.0
      %v3500 = vmax.f32 %v3090, 0.0
      %v3501 = vmax.f32 %v3095, 0.0
      %v3502 = vmax.f32 %v3100, 0.0
      %v3503 = vmax.f32 %v3105, 0.0
      %v3504 = vmax.f32 %v3110, 0.0
      %v3505 = vmax.f32 %v3115, 0.0
      %v3506 = vmax.f32 %v3120, 0.0
      %v3507 = vmax.f32 %v3125, 0.0
      %v3508 = vmax.f32 %v3130, 0.0
      %v3509 = vmax.f32 %v3135, 0.0
      %v3510 = vmax.f32 %v3140, 0.0
      %v3511 = vmax.f32 %v3145, 0.0
      %v3512 = vmax.f32 %v3150, 0.0
      %v3513 = vmax.f32 %v3155, 0.0
      %v3514 = vmax.f32 %v3160, 0.0
      %v3515 = vmax.f32 %v3165, 0.0
      %v3516 = vmax.f32 %v3170, 0.0
      %v3517 = vmax.f32 %v3175, 0.0
      %v3518 = vmax.f32 %v3180, 0.0
      %v3519 = vmax.f32 %v3185, 0.0
      %v3520 = vmax.f32 %v3190, 0.0
      %v3521 = vmax.f32 %v3195, 0.0
      %v3522 = vmax.f32 %v3200, 0.0
      %v3523 = vmax.f32 %v3205, 0.0
      %v3524 = vmax.f32 %v3210, 0.0
      %v3525 = vmax.f32 %v3215, 0.0
      %v3526 = vmax.f32 %v3220, 0.0
      %v3527 = vmax.f32 %v3225, 0.0
      %v3528 = vmax.f32 %v3230, 0.0
      %v3529 = vmax.f32 %v3235, 0.0
      %v3530 = vmax.f32 %v3240, 0.0
      %v3531 = vmax.f32 %v3245, 0.0
      %v3532 = vmax.f32 %v3250, 0.0
      %v3533 = vmax.f32 %v3255, 0.0
      %v3534 = vmax.f32 %v3260, 0.0
      %v3535 = vmax.f32 %v3265, 0.0
      %v3536 = vmax.f32 %v3270, 0.0
      %v3537 = vmax.f32 %v3275, 0.0
      %v3538 = vmax.f32 %v3280, 0.0
      %v3539 = vmax.f32 %v3285, 0.0
      %v3540 = vmax.f32 %v3290, 0.0
      %v3541 = vmax.f32 %v3295, 0.0
      %v3542 = vmax.f32 %v3300, 0.0
      %v3543 = vmax.f32 %v3305, 0.0
      %v3544 = vmax.f32 %v3310, 0.0
      %v3545 = vmax.f32 %v3315, 0.0
      %v3546 = vmax.f32 %v3320, 0.0
      %v3547 = vmax.f32 %v3325, 0.0
      %v3548 = vmax.f32 %v3330, 0.0
      %v3549 = vmax.f32 %v3335, 0.0
      %v3550 = vmax.f32 %v3340, 0.0
      %v3551 = vmax.f32 %v3345, 0.0
      %v3552 = vmax.f32 %v3350, 0.0
      %v3553 = vmax.f32 %v3355, 0.0
      %v3554 = vmax.f32 %v3360, 0.0
      %v3555 = vmax.f32 %v3365, 0.0
      %v3556 = vmax.f32 %v3370, 0.0
      %v3557 = vmax.f32 %v3375, 0.0
      %v3558 = vmax.f32 %v3380, 0.0
      %v3559 = vmax.f32 %v3385, 0.0
      %v3560 = vmax.f32 %v3390, 0.0
      %v3561 = vmax.f32 %v3395, 0.0
      %v3562 = vmax.f32 %v3400, 0.0
      %v3563 = vmax.f32 %v3405, 0.0
      %v3564 = vmax.f32 %v3410, 0.0
      %v3565 = vmax.f32 %v3415, 0.0
      %v3566 = vmax.f32 %v3420, 0.0
      %v3567 = vmax.f32 %v3425, 0.0
      %v3568 = vmax.f32 %v3430, 0.0
      %v3569 = vmax.f32 %v3435, 0.0
      %v3570 = vmax.f32 %v3440, 0.0
      %v3699 = vrot.slane %v3444, 7
      %vm3700 = vcmask 1041409
      %v3701 = vsel %vm3700, %v3699, %v3443
      %v3702 = vrot.slane %v3445, 6
      %vm3703 = vcmask 1042434
      %v3704 = vsel %vm3703, %v3702, %v3701
      %v3705 = vrot.slane %v3446, 5
      %vm3706 = vcmask 1043459
      %v3707 = vsel %vm3706, %v3705, %v3704
      %v3708 = vrot.slane %v3447, 4
      %vm3709 = vcmask 1044484
      %v3710 = vsel %vm3709, %v3708, %v3707
      %v3711 = vrot.slane %v3448, 3
      %vm3712 = vcmask 1045509
      %v3713 = vsel %vm3712, %v3711, %v3710
      %v3714 = vrot.slane %v3449, 2
      %vm3715 = vcmask 1046534
      %v3716 = vsel %vm3715, %v3714, %v3713
      %v3717 = vrot.slane %v3450, 1
      %vm3718 = vcmask 1047559
      %v3719 = vsel %vm3718, %v3717, %v3716
      %v3720 = vrot.slane %v3452, 7
      %v3721 = vsel %vm3700, %v3720, %v3451
      %v3722 = vrot.slane %v3453, 6
      %v3723 = vsel %vm3703, %v3722, %v3721
      %v3724 = vrot.slane %v3454, 5
      %v3725 = vsel %vm3706, %v3724, %v3723
      %v3726 = vrot.slane %v3455, 4
      %v3727 = vsel %vm3709, %v3726, %v3725
      %v3728 = vrot.slane %v3456, 3
      %v3729 = vsel %vm3712, %v3728, %v3727
      %v3730 = vrot.slane %v3457, 2
      %v3731 = vsel %vm3715, %v3730, %v3729
      %v3732 = vrot.slane %v3458, 1
      %v3733 = vsel %vm3718, %v3732, %v3731
      %v3734 = vrot.slane %v3460, 7
      %v3735 = vsel %vm3700, %v3734, %v3459
      %v3736 = vrot.slane %v3461, 6
      %v3737 = vsel %vm3703, %v3736, %v3735
      %v3738 = vrot.slane %v3462, 5
      %v3739 = vsel %vm3706, %v3738, %v3737
      %v3740 = vrot.slane %v3463, 4
      %v3741 = vsel %vm3709, %v3740, %v3739
      %v3742 = vrot.slane %v3464, 3
      %v3743 = vsel %vm3712, %v3742, %v3741
      %v3744 = vrot.slane %v3465, 2
      %v3745 = vsel %vm3715, %v3744, %v3743
      %v3746 = vrot.slane %v3466, 1
      %v3747 = vsel %vm3718, %v3746, %v3745
      %v3748 = vrot.slane %v3468, 7
      %v3749 = vsel %vm3700, %v3748, %v3467
      %v3750 = vrot.slane %v3469, 6
      %v3751 = vsel %vm3703, %v3750, %v3749
      %v3752 = vrot.slane %v3470, 5
      %v3753 = vsel %vm3706, %v3752, %v3751
      %v3754 = vrot.slane %v3471, 4
      %v3755 = vsel %vm3709, %v3754, %v3753
      %v3756 = vrot.slane %v3472, 3
      %v3757 = vsel %vm3712, %v3756, %v3755
      %v3758 = vrot.slane %v3473, 2
      %v3759 = vsel %vm3715, %v3758, %v3757
      %v3760 = vrot.slane %v3474, 1
      %v3761 = vsel %vm3718, %v3760, %v3759
      %v3762 = vrot.slane %v3476, 7
      %v3763 = vsel %vm3700, %v3762, %v3475
      %v3764 = vrot.slane %v3477, 6
      %v3765 = vsel %vm3703, %v3764, %v3763
      %v3766 = vrot.slane %v3478, 5
      %v3767 = vsel %vm3706, %v3766, %v3765
      %v3768 = vrot.slane %v3479, 4
      %v3769 = vsel %vm3709, %v3768, %v3767
      %v3770 = vrot.slane %v3480, 3
      %v3771 = vsel %vm3712, %v3770, %v3769
      %v3772 = vrot.slane %v3481, 2
      %v3773 = vsel %vm3715, %v3772, %v3771
      %v3774 = vrot.slane %v3482, 1
      %v3775 = vsel %vm3718, %v3774, %v3773
      %v3776 = vrot.slane %v3484, 7
      %v3777 = vsel %vm3700, %v3776, %v3483
      %v3778 = vrot.slane %v3485, 6
      %v3779 = vsel %vm3703, %v3778, %v3777
      %v3780 = vrot.slane %v3486, 5
      %v3781 = vsel %vm3706, %v3780, %v3779
      %v3782 = vrot.slane %v3487, 4
      %v3783 = vsel %vm3709, %v3782, %v3781
      %v3784 = vrot.slane %v3488, 3
      %v3785 = vsel %vm3712, %v3784, %v3783
      %v3786 = vrot.slane %v3489, 2
      %v3787 = vsel %vm3715, %v3786, %v3785
      %v3788 = vrot.slane %v3490, 1
      %v3789 = vsel %vm3718, %v3788, %v3787
      %v3790 = vrot.slane %v3492, 7
      %v3791 = vsel %vm3700, %v3790, %v3491
      %v3792 = vrot.slane %v3493, 6
      %v3793 = vsel %vm3703, %v3792, %v3791
      %v3794 = vrot.slane %v3494, 5
      %v3795 = vsel %vm3706, %v3794, %v3793
      %v3796 = vrot.slane %v3495, 4
      %v3797 = vsel %vm3709, %v3796, %v3795
      %v3798 = vrot.slane %v3496, 3
      %v3799 = vsel %vm3712, %v3798, %v3797
      %v3800 = vrot.slane %v3497, 2
      %v3801 = vsel %vm3715, %v3800, %v3799
      %v3802 = vrot.slane %v3498, 1
      %v3803 = vsel %vm3718, %v3802, %v3801
      %v3804 = vrot.slane %v3500, 7
      %v3805 = vsel %vm3700, %v3804, %v3499
      %v3806 = vrot.slane %v3501, 6
      %v3807 = vsel %vm3703, %v3806, %v3805
      %v3808 = vrot.slane %v3502, 5
      %v3809 = vsel %vm3706, %v3808, %v3807
      %v3810 = vrot.slane %v3503, 4
      %v3811 = vsel %vm3709, %v3810, %v3809
      %v3812 = vrot.slane %v3504, 3
      %v3813 = vsel %vm3712, %v3812, %v3811
      %v3814 = vrot.slane %v3505, 2
      %v3815 = vsel %vm3715, %v3814, %v3813
      %v3816 = vrot.slane %v3506, 1
      %v3817 = vsel %vm3718, %v3816, %v3815
      %v3818 = vrot.slane %v3508, 7
      %v3819 = vsel %vm3700, %v3818, %v3507
      %v3820 = vrot.slane %v3509, 6
      %v3821 = vsel %vm3703, %v3820, %v3819
      %v3822 = vrot.slane %v3510, 5
      %v3823 = vsel %vm3706, %v3822, %v3821
      %v3824 = vrot.slane %v3511, 4
      %v3825 = vsel %vm3709, %v3824, %v3823
      %v3826 = vrot.slane %v3512, 3
      %v3827 = vsel %vm3712, %v3826, %v3825
      %v3828 = vrot.slane %v3513, 2
      %v3829 = vsel %vm3715, %v3828, %v3827
      %v3830 = vrot.slane %v3514, 1
      %v3831 = vsel %vm3718, %v3830, %v3829
      %v3832 = vrot.slane %v3516, 7
      %v3833 = vsel %vm3700, %v3832, %v3515
      %v3834 = vrot.slane %v3517, 6
      %v3835 = vsel %vm3703, %v3834, %v3833
      %v3836 = vrot.slane %v3518, 5
      %v3837 = vsel %vm3706, %v3836, %v3835
      %v3838 = vrot.slane %v3519, 4
      %v3839 = vsel %vm3709, %v3838, %v3837
      %v3840 = vrot.slane %v3520, 3
      %v3841 = vsel %vm3712, %v3840, %v3839
      %v3842 = vrot.slane %v3521, 2
      %v3843 = vsel %vm3715, %v3842, %v3841
      %v3844 = vrot.slane %v3522, 1
      %v3845 = vsel %vm3718, %v3844, %v3843
      %v3846 = vrot.slane %v3524, 7
      %v3847 = vsel %vm3700, %v3846, %v3523
      %v3848 = vrot.slane %v3525, 6
      %v3849 = vsel %vm3703, %v3848, %v3847
      %v3850 = vrot.slane %v3526, 5
      %v3851 = vsel %vm3706, %v3850, %v3849
      %v3852 = vrot.slane %v3527, 4
      %v3853 = vsel %vm3709, %v3852, %v3851
      %v3854 = vrot.slane %v3528, 3
      %v3855 = vsel %vm3712, %v3854, %v3853
      %v3856 = vrot.slane %v3529, 2
      %v3857 = vsel %vm3715, %v3856, %v3855
      %v3858 = vrot.slane %v3530, 1
      %v3859 = vsel %vm3718, %v3858, %v3857
      %v3860 = vrot.slane %v3532, 7
      %v3861 = vsel %vm3700, %v3860, %v3531
      %v3862 = vrot.slane %v3533, 6
      %v3863 = vsel %vm3703, %v3862, %v3861
      %v3864 = vrot.slane %v3534, 5
      %v3865 = vsel %vm3706, %v3864, %v3863
      %v3866 = vrot.slane %v3535, 4
      %v3867 = vsel %vm3709, %v3866, %v3865
      %v3868 = vrot.slane %v3536, 3
      %v3869 = vsel %vm3712, %v3868, %v3867
      %v3870 = vrot.slane %v3537, 2
      %v3871 = vsel %vm3715, %v3870, %v3869
      %v3872 = vrot.slane %v3538, 1
      %v3873 = vsel %vm3718, %v3872, %v3871
      %v3874 = vrot.slane %v3540, 7
      %v3875 = vsel %vm3700, %v3874, %v3539
      %v3876 = vrot.slane %v3541, 6
      %v3877 = vsel %vm3703, %v3876, %v3875
      %v3878 = vrot.slane %v3542, 5
      %v3879 = vsel %vm3706, %v3878, %v3877
      %v3880 = vrot.slane %v3543, 4
      %v3881 = vsel %vm3709, %v3880, %v3879
      %v3882 = vrot.slane %v3544, 3
      %v3883 = vsel %vm3712, %v3882, %v3881
      %v3884 = vrot.slane %v3545, 2
      %v3885 = vsel %vm3715, %v3884, %v3883
      %v3886 = vrot.slane %v3546, 1
      %v3887 = vsel %vm3718, %v3886, %v3885
      %v3888 = vrot.slane %v3548, 7
      %v3889 = vsel %vm3700, %v3888, %v3547
      %v3890 = vrot.slane %v3549, 6
      %v3891 = vsel %vm3703, %v3890, %v3889
      %v3892 = vrot.slane %v3550, 5
      %v3893 = vsel %vm3706, %v3892, %v3891
      %v3894 = vrot.slane %v3551, 4
      %v3895 = vsel %vm3709, %v3894, %v3893
      %v3896 = vrot.slane %v3552, 3
      %v3897 = vsel %vm3712, %v3896, %v3895
      %v3898 = vrot.slane %v3553, 2
      %v3899 = vsel %vm3715, %v3898, %v3897
      %v3900 = vrot.slane %v3554, 1
      %v3901 = vsel %vm3718, %v3900, %v3899
      %v3902 = vrot.slane %v3556, 7
      %v3903 = vsel %vm3700, %v3902, %v3555
      %v3904 = vrot.slane %v3557, 6
      %v3905 = vsel %vm3703, %v3904, %v3903
      %v3906 = vrot.slane %v3558, 5
      %v3907 = vsel %vm3706, %v3906, %v3905
      %v3908 = vrot.slane %v3559, 4
      %v3909 = vsel %vm3709, %v3908, %v3907
      %v3910 = vrot.slane %v3560, 3
      %v3911 = vsel %vm3712, %v3910, %v3909
      %v3912 = vrot.slane %v3561, 2
      %v3913 = vsel %vm3715, %v3912, %v3911
      %v3914 = vrot.slane %v3562, 1
      %v3915 = vsel %vm3718, %v3914, %v3913
      %v3916 = vrot.slane %v3564, 7
      %v3917 = vsel %vm3700, %v3916, %v3563
      %v3918 = vrot.slane %v3565, 6
      %v3919 = vsel %vm3703, %v3918, %v3917
      %v3920 = vrot.slane %v3566, 5
      %v3921 = vsel %vm3706, %v3920, %v3919
      %v3922 = vrot.slane %v3567, 4
      %v3923 = vsel %vm3709, %v3922, %v3921
      %v3924 = vrot.slane %v3568, 3
      %v3925 = vsel %vm3712, %v3924, %v3923
      %v3926 = vrot.slane %v3569, 2
      %v3927 = vsel %vm3715, %v3926, %v3925
      %v3928 = vrot.slane %v3570, 1
      %v3929 = vsel %vm3718, %v3928, %v3927
      %vm3946 = vcmask 261120
      %3947 = vst.msk [vmem:[#allocation3] sm:$0xff] %vm3946, %v3719
      %3948 = vst.msk [vmem:[#allocation3 + $0x10] sm:$0xff] %vm3946, %v3733
      %3949 = vst.msk [vmem:[#allocation3 + $0x20] sm:$0xff] %vm3946, %v3747
      %3950 = vst.msk [vmem:[#allocation3 + $0x30] sm:$0xff] %vm3946, %v3761
      %3951 = vst.msk [vmem:[#allocation3 + $0x40] sm:$0xff] %vm3946, %v3775
      %3952 = vst.msk [vmem:[#allocation3 + $0x50] sm:$0xff] %vm3946, %v3789
      %3953 = vst.msk [vmem:[#allocation3 + $0x60] sm:$0xff] %vm3946, %v3803
      %3954 = vst.msk [vmem:[#allocation3 + $0x70] sm:$0xff] %vm3946, %v3817
      %3955 = vst.msk [vmem:[#allocation3 + $0x80] sm:$0xff] %vm3946, %v3831
      %3956 = vst.msk [vmem:[#allocation3 + $0x90] sm:$0xff] %vm3946, %v3845
      %3957 = vst.msk [vmem:[#allocation3 + $0xa0] sm:$0xff] %vm3946, %v3859
      %3958 = vst.msk [vmem:[#allocation3 + $0xb0] sm:$0xff] %vm3946, %v3873
      %3959 = vst.msk [vmem:[#allocation3 + $0xc0] sm:$0xff] %vm3946, %v3887
      %3960 = vst.msk [vmem:[#allocation3 + $0xd0] sm:$0xff] %vm3946, %v3901
      %3961 = vst.msk [vmem:[#allocation3 + $0xe0] sm:$0xff] %vm3946, %v3915
      %3962 = vst.msk [vmem:[#allocation3 + $0xf0] sm:$0xff] %vm3946, %v3929
      %v3963 = vrot.slane %v3443, 1
      %v3964 = vsel %vm3700, %v3444, %v3963
      %v3965 = vrot.slane %v3445, 7
      %v3966 = vsel %vm3703, %v3965, %v3964
      %v3967 = vrot.slane %v3446, 6
      %v3968 = vsel %vm3706, %v3967, %v3966
      %v3969 = vrot.slane %v3447, 5
      %v3970 = vsel %vm3709, %v3969, %v3968
      %v3971 = vrot.slane %v3448, 4
      %v3972 = vsel %vm3712, %v3971, %v3970
      %v3973 = vrot.slane %v3449, 3
      %v3974 = vsel %vm3715, %v3973, %v3972
      %v3975 = vrot.slane %v3450, 2
      %v3976 = vsel %vm3718, %v3975, %v3974
      %v3977 = vrot.slane %v3451, 1
      %v3978 = vsel %vm3700, %v3452, %v3977
      %v3979 = vrot.slane %v3453, 7
      %v3980 = vsel %vm3703, %v3979, %v3978
      %v3981 = vrot.slane %v3454, 6
      %v3982 = vsel %vm3706, %v3981, %v3980
      %v3983 = vrot.slane %v3455, 5
      %v3984 = vsel %vm3709, %v3983, %v3982
      %v3985 = vrot.slane %v3456, 4
      %v3986 = vsel %vm3712, %v3985, %v3984
      %v3987 = vrot.slane %v3457, 3
      %v3988 = vsel %vm3715, %v3987, %v3986
      %v3989 = vrot.slane %v3458, 2
      %v3990 = vsel %vm3718, %v3989, %v3988
      %v3991 = vrot.slane %v3459, 1
      %v3992 = vsel %vm3700, %v3460, %v3991
      %v3993 = vrot.slane %v3461, 7
      %v3994 = vsel %vm3703, %v3993, %v3992
      %v3995 = vrot.slane %v3462, 6
      %v3996 = vsel %vm3706, %v3995, %v3994
      %v3997 = vrot.slane %v3463, 5
      %v3998 = vsel %vm3709, %v3997, %v3996
      %v3999 = vrot.slane %v3464, 4
      %v4000 = vsel %vm3712, %v3999, %v3998
      %v4001 = vrot.slane %v3465, 3
      %v4002 = vsel %vm3715, %v4001, %v4000
      %v4003 = vrot.slane %v3466, 2
      %v4004 = vsel %vm3718, %v4003, %v4002
      %v4005 = vrot.slane %v3467, 1
      %v4006 = vsel %vm3700, %v3468, %v4005
      %v4007 = vrot.slane %v3469, 7
      %v4008 = vsel %vm3703, %v4007, %v4006
      %v4009 = vrot.slane %v3470, 6
      %v4010 = vsel %vm3706, %v4009, %v4008
      %v4011 = vrot.slane %v3471, 5
      %v4012 = vsel %vm3709, %v4011, %v4010
      %v4013 = vrot.slane %v3472, 4
      %v4014 = vsel %vm3712, %v4013, %v4012
      %v4015 = vrot.slane %v3473, 3
      %v4016 = vsel %vm3715, %v4015, %v4014
      %v4017 = vrot.slane %v3474, 2
      %v4018 = vsel %vm3718, %v4017, %v4016
      %v4019 = vrot.slane %v3475, 1
      %v4020 = vsel %vm3700, %v3476, %v4019
      %v4021 = vrot.slane %v3477, 7
      %v4022 = vsel %vm3703, %v4021, %v4020
      %v4023 = vrot.slane %v3478, 6
      %v4024 = vsel %vm3706, %v4023, %v4022
      %v4025 = vrot.slane %v3479, 5
      %v4026 = vsel %vm3709, %v4025, %v4024
      %v4027 = vrot.slane %v3480, 4
      %v4028 = vsel %vm3712, %v4027, %v4026
      %v4029 = vrot.slane %v3481, 3
      %v4030 = vsel %vm3715, %v4029, %v4028
      %v4031 = vrot.slane %v3482, 2
      %v4032 = vsel %vm3718, %v4031, %v4030
      %v4033 = vrot.slane %v3483, 1
      %v4034 = vsel %vm3700, %v3484, %v4033
      %v4035 = vrot.slane %v3485, 7
      %v4036 = vsel %vm3703, %v4035, %v4034
      %v4037 = vrot.slane %v3486, 6
      %v4038 = vsel %vm3706, %v4037, %v4036
      %v4039 = vrot.slane %v3487, 5
      %v4040 = vsel %vm3709, %v4039, %v4038
      %v4041 = vrot.slane %v3488, 4
      %v4042 = vsel %vm3712, %v4041, %v4040
      %v4043 = vrot.slane %v3489, 3
      %v4044 = vsel %vm3715, %v4043, %v4042
      %v4045 = vrot.slane %v3490, 2
      %v4046 = vsel %vm3718, %v4045, %v4044
      %v4047 = vrot.slane %v3491, 1
      %v4048 = vsel %vm3700, %v3492, %v4047
      %v4049 = vrot.slane %v3493, 7
      %v4050 = vsel %vm3703, %v4049, %v4048
      %v4051 = vrot.slane %v3494, 6
      %v4052 = vsel %vm3706, %v4051, %v4050
      %v4053 = vrot.slane %v3495, 5
      %v4054 = vsel %vm3709, %v4053, %v4052
      %v4055 = vrot.slane %v3496, 4
      %v4056 = vsel %vm3712, %v4055, %v4054
      %v4057 = vrot.slane %v3497, 3
      %v4058 = vsel %vm3715, %v4057, %v4056
      %v4059 = vrot.slane %v3498, 2
      %v4060 = vsel %vm3718, %v4059, %v4058
      %v4061 = vrot.slane %v3499, 1
      %v4062 = vsel %vm3700, %v3500, %v4061
      %v4063 = vrot.slane %v3501, 7
      %v4064 = vsel %vm3703, %v4063, %v4062
      %v4065 = vrot.slane %v3502, 6
      %v4066 = vsel %vm3706, %v4065, %v4064
      %v4067 = vrot.slane %v3503, 5
      %v4068 = vsel %vm3709, %v4067, %v4066
      %v4069 = vrot.slane %v3504, 4
      %v4070 = vsel %vm3712, %v4069, %v4068
      %v4071 = vrot.slane %v3505, 3
      %v4072 = vsel %vm3715, %v4071, %v4070
      %v4073 = vrot.slane %v3506, 2
      %v4074 = vsel %vm3718, %v4073, %v4072
      %v4075 = vrot.slane %v3507, 1
      %v4076 = vsel %vm3700, %v3508, %v4075
      %v4077 = vrot.slane %v3509, 7
      %v4078 = vsel %vm3703, %v4077, %v4076
      %v4079 = vrot.slane %v3510, 6
      %v4080 = vsel %vm3706, %v4079, %v4078
      %v4081 = vrot.slane %v3511, 5
      %v4082 = vsel %vm3709, %v4081, %v4080
      %v4083 = vrot.slane %v3512, 4
      %v4084 = vsel %vm3712, %v4083, %v4082
      %v4085 = vrot.slane %v3513, 3
      %v4086 = vsel %vm3715, %v4085, %v4084
      %v4087 = vrot.slane %v3514, 2
      %v4088 = vsel %vm3718, %v4087, %v4086
      %v4089 = vrot.slane %v3515, 1
      %v4090 = vsel %vm3700, %v3516, %v4089
      %v4091 = vrot.slane %v3517, 7
      %v4092 = vsel %vm3703, %v4091, %v4090
      %v4093 = vrot.slane %v3518, 6
      %v4094 = vsel %vm3706, %v4093, %v4092
      %v4095 = vrot.slane %v3519, 5
      %v4096 = vsel %vm3709, %v4095, %v4094
      %v4097 = vrot.slane %v3520, 4
      %v4098 = vsel %vm3712, %v4097, %v4096
      %v4099 = vrot.slane %v3521, 3
      %v4100 = vsel %vm3715, %v4099, %v4098
      %v4101 = vrot.slane %v3522, 2
      %v4102 = vsel %vm3718, %v4101, %v4100
      %v4103 = vrot.slane %v3523, 1
      %v4104 = vsel %vm3700, %v3524, %v4103
      %v4105 = vrot.slane %v3525, 7
      %v4106 = vsel %vm3703, %v4105, %v4104
      %v4107 = vrot.slane %v3526, 6
      %v4108 = vsel %vm3706, %v4107, %v4106
      %v4109 = vrot.slane %v3527, 5
      %v4110 = vsel %vm3709, %v4109, %v4108
      %v4111 = vrot.slane %v3528, 4
      %v4112 = vsel %vm3712, %v4111, %v4110
      %v4113 = vrot.slane %v3529, 3
      %v4114 = vsel %vm3715, %v4113, %v4112
      %v4115 = vrot.slane %v3530, 2
      %v4116 = vsel %vm3718, %v4115, %v4114
      %v4117 = vrot.slane %v3531, 1
      %v4118 = vsel %vm3700, %v3532, %v4117
      %v4119 = vrot.slane %v3533, 7
      %v4120 = vsel %vm3703, %v4119, %v4118
      %v4121 = vrot.slane %v3534, 6
      %v4122 = vsel %vm3706, %v4121, %v4120
      %v4123 = vrot.slane %v3535, 5
      %v4124 = vsel %vm3709, %v4123, %v4122
      %v4125 = vrot.slane %v3536, 4
      %v4126 = vsel %vm3712, %v4125, %v4124
      %v4127 = vrot.slane %v3537, 3
      %v4128 = vsel %vm3715, %v4127, %v4126
      %v4129 = vrot.slane %v3538, 2
      %v4130 = vsel %vm3718, %v4129, %v4128
      %v4131 = vrot.slane %v3539, 1
      %v4132 = vsel %vm3700, %v3540, %v4131
      %v4133 = vrot.slane %v3541, 7
      %v4134 = vsel %vm3703, %v4133, %v4132
      %v4135 = vrot.slane %v3542, 6
      %v4136 = vsel %vm3706, %v4135, %v4134
      %v4137 = vrot.slane %v3543, 5
      %v4138 = vsel %vm3709, %v4137, %v4136
      %v4139 = vrot.slane %v3544, 4
      %v4140 = vsel %vm3712, %v4139, %v4138
      %v4141 = vrot.slane %v3545, 3
      %v4142 = vsel %vm3715, %v4141, %v4140
      %v4143 = vrot.slane %v3546, 2
      %v4144 = vsel %vm3718, %v4143, %v4142
      %v4145 = vrot.slane %v3547, 1
      %v4146 = vsel %vm3700, %v3548, %v4145
      %v4147 = vrot.slane %v3549, 7
      %v4148 = vsel %vm3703, %v4147, %v4146
      %v4149 = vrot.slane %v3550, 6
      %v4150 = vsel %vm3706, %v4149, %v4148
      %v4151 = vrot.slane %v3551, 5
      %v4152 = vsel %vm3709, %v4151, %v4150
      %v4153 = vrot.slane %v3552, 4
      %v4154 = vsel %vm3712, %v4153, %v4152
      %v4155 = vrot.slane %v3553, 3
      %v4156 = vsel %vm3715, %v4155, %v4154
      %v4157 = vrot.slane %v3554, 2
      %v4158 = vsel %vm3718, %v4157, %v4156
      %v4159 = vrot.slane %v3555, 1
      %v4160 = vsel %vm3700, %v3556, %v4159
      %v4161 = vrot.slane %v3557, 7
      %v4162 = vsel %vm3703, %v4161, %v4160
      %v4163 = vrot.slane %v3558, 6
      %v4164 = vsel %vm3706, %v4163, %v4162
      %v4165 = vrot.slane %v3559, 5
      %v4166 = vsel %vm3709, %v4165, %v4164
      %v4167 = vrot.slane %v3560, 4
      %v4168 = vsel %vm3712, %v4167, %v4166
      %v4169 = vrot.slane %v3561, 3
      %v4170 = vsel %vm3715, %v4169, %v4168
      %v4171 = vrot.slane %v3562, 2
      %v4172 = vsel %vm3718, %v4171, %v4170
      %v4173 = vrot.slane %v3563, 1
      %v4174 = vsel %vm3700, %v3564, %v4173
      %v4175 = vrot.slane %v3565, 7
      %v4176 = vsel %vm3703, %v4175, %v4174
      %v4177 = vrot.slane %v3566, 6
      %v4178 = vsel %vm3706, %v4177, %v4176
      %v4179 = vrot.slane %v3567, 5
      %v4180 = vsel %vm3709, %v4179, %v4178
      %v4181 = vrot.slane %v3568, 4
      %v4182 = vsel %vm3712, %v4181, %v4180
      %v4183 = vrot.slane %v3569, 3
      %v4184 = vsel %vm3715, %v4183, %v4182
      %v4185 = vrot.slane %v3570, 2
      %v4186 = vsel %vm3718, %v4185, %v4184
      %4187 = vrot.lane.b32.xlu0 %v3976, 32
      %v4188 = vpop.permute.xlu0 %4187
      %4189 = vrot.lane.b32.xlu0 %v3990, 32
      %v4190 = vpop.permute.xlu0 %4189
      %4191 = vrot.lane.b32.xlu0 %v4004, 32
      %v4192 = vpop.permute.xlu0 %4191
      %4193 = vrot.lane.b32.xlu0 %v4018, 32
      %v4194 = vpop.permute.xlu0 %4193
      %4195 = vrot.lane.b32.xlu0 %v4032, 32
      %v4196 = vpop.permute.xlu0 %4195
      %4197 = vrot.lane.b32.xlu0 %v4046, 32
      %v4198 = vpop.permute.xlu0 %4197
      %4199 = vrot.lane.b32.xlu0 %v4060, 32
      %v4200 = vpop.permute.xlu0 %4199
      %4201 = vrot.lane.b32.xlu0 %v4074, 32
      %v4202 = vpop.permute.xlu0 %4201
      %4203 = vrot.lane.b32.xlu0 %v4088, 32
      %v4204 = vpop.permute.xlu0 %4203
      %4205 = vrot.lane.b32.xlu0 %v4102, 32
      %v4206 = vpop.permute.xlu0 %4205
      %4207 = vrot.lane.b32.xlu0 %v4116, 32
      %v4208 = vpop.permute.xlu0 %4207
      %4209 = vrot.lane.b32.xlu0 %v4130, 32
      %v4210 = vpop.permute.xlu0 %4209
      %4211 = vrot.lane.b32.xlu0 %v4144, 32
      %v4212 = vpop.permute.xlu0 %4211
      %4213 = vrot.lane.b32.xlu0 %v4158, 32
      %v4214 = vpop.permute.xlu0 %4213
      %4215 = vrot.lane.b32.xlu0 %v4172, 32
      %v4216 = vpop.permute.xlu0 %4215
      %4217 = vrot.lane.b32.xlu0 %v4186, 32
      %v4218 = vpop.permute.xlu0 %4217
      %vm4235 = vcmask 523520
      %4236 = vst.msk [vmem:[#allocation3] sm:$0xff] %vm4235, %v4188
      %4237 = vst.msk [vmem:[#allocation3 + $0x10] sm:$0xff] %vm4235, %v4190
      %4238 = vst.msk [vmem:[#allocation3 + $0x20] sm:$0xff] %vm4235, %v4192
      %4239 = vst.msk [vmem:[#allocation3 + $0x30] sm:$0xff] %vm4235, %v4194
      %4240 = vst.msk [vmem:[#allocation3 + $0x40] sm:$0xff] %vm4235, %v4196
      %4241 = vst.msk [vmem:[#allocation3 + $0x50] sm:$0xff] %vm4235, %v4198
      %4242 = vst.msk [vmem:[#allocation3 + $0x60] sm:$0xff] %vm4235, %v4200
      %4243 = vst.msk [vmem:[#allocation3 + $0x70] sm:$0xff] %vm4235, %v4202
      %4244 = vst.msk [vmem:[#allocation3 + $0x80] sm:$0xff] %vm4235, %v4204
      %4245 = vst.msk [vmem:[#allocation3 + $0x90] sm:$0xff] %vm4235, %v4206
      %4246 = vst.msk [vmem:[#allocation3 + $0xa0] sm:$0xff] %vm4235, %v4208
      %4247 = vst.msk [vmem:[#allocation3 + $0xb0] sm:$0xff] %vm4235, %v4210
      %4248 = vst.msk [vmem:[#allocation3 + $0xc0] sm:$0xff] %vm4235, %v4212
      %4249 = vst.msk [vmem:[#allocation3 + $0xd0] sm:$0xff] %vm4235, %v4214
      %4250 = vst.msk [vmem:[#allocation3 + $0xe0] sm:$0xff] %vm4235, %v4216
      %4251 = vst.msk [vmem:[#allocation3 + $0xf0] sm:$0xff] %vm4235, %v4218
      %v4252 = vrot.slane %v3443, 2
      %v4253 = vrot.slane %v3444, 1
      %v4254 = vsel %vm3700, %v4253, %v4252
      %v4255 = vsel %vm3703, %v3445, %v4254
      %v4256 = vrot.slane %v3446, 7
      %v4257 = vsel %vm3706, %v4256, %v4255
      %v4258 = vrot.slane %v3447, 6
      %v4259 = vsel %vm3709, %v4258, %v4257
      %v4260 = vrot.slane %v3448, 5
      %v4261 = vsel %vm3712, %v4260, %v4259
      %v4262 = vrot.slane %v3449, 4
      %v4263 = vsel %vm3715, %v4262, %v4261
      %v4264 = vrot.slane %v3450, 3
      %v4265 = vsel %vm3718, %v4264, %v4263
      %v4266 = vrot.slane %v3451, 2
      %v4267 = vrot.slane %v3452, 1
      %v4268 = vsel %vm3700, %v4267, %v4266
      %v4269 = vsel %vm3703, %v3453, %v4268
      %v4270 = vrot.slane %v3454, 7
      %v4271 = vsel %vm3706, %v4270, %v4269
      %v4272 = vrot.slane %v3455, 6
      %v4273 = vsel %vm3709, %v4272, %v4271
      %v4274 = vrot.slane %v3456, 5
      %v4275 = vsel %vm3712, %v4274, %v4273
      %v4276 = vrot.slane %v3457, 4
      %v4277 = vsel %vm3715, %v4276, %v4275
      %v4278 = vrot.slane %v3458, 3
      %v4279 = vsel %vm3718, %v4278, %v4277
      %v4280 = vrot.slane %v3459, 2
      %v4281 = vrot.slane %v3460, 1
      %v4282 = vsel %vm3700, %v4281, %v4280
      %v4283 = vsel %vm3703, %v3461, %v4282
      %v4284 = vrot.slane %v3462, 7
      %v4285 = vsel %vm3706, %v4284, %v4283
      %v4286 = vrot.slane %v3463, 6
      %v4287 = vsel %vm3709, %v4286, %v4285
      %v4288 = vrot.slane %v3464, 5
      %v4289 = vsel %vm3712, %v4288, %v4287
      %v4290 = vrot.slane %v3465, 4
      %v4291 = vsel %vm3715, %v4290, %v4289
      %v4292 = vrot.slane %v3466, 3
      %v4293 = vsel %vm3718, %v4292, %v4291
      %v4294 = vrot.slane %v3467, 2
      %v4295 = vrot.slane %v3468, 1
      %v4296 = vsel %vm3700, %v4295, %v4294
      %v4297 = vsel %vm3703, %v3469, %v4296
      %v4298 = vrot.slane %v3470, 7
      %v4299 = vsel %vm3706, %v4298, %v4297
      %v4300 = vrot.slane %v3471, 6
      %v4301 = vsel %vm3709, %v4300, %v4299
      %v4302 = vrot.slane %v3472, 5
      %v4303 = vsel %vm3712, %v4302, %v4301
      %v4304 = vrot.slane %v3473, 4
      %v4305 = vsel %vm3715, %v4304, %v4303
      %v4306 = vrot.slane %v3474, 3
      %v4307 = vsel %vm3718, %v4306, %v4305
      %v4308 = vrot.slane %v3475, 2
      %v4309 = vrot.slane %v3476, 1
      %v4310 = vsel %vm3700, %v4309, %v4308
      %v4311 = vsel %vm3703, %v3477, %v4310
      %v4312 = vrot.slane %v3478, 7
      %v4313 = vsel %vm3706, %v4312, %v4311
      %v4314 = vrot.slane %v3479, 6
      %v4315 = vsel %vm3709, %v4314, %v4313
      %v4316 = vrot.slane %v3480, 5
      %v4317 = vsel %vm3712, %v4316, %v4315
      %v4318 = vrot.slane %v3481, 4
      %v4319 = vsel %vm3715, %v4318, %v4317
      %v4320 = vrot.slane %v3482, 3
      %v4321 = vsel %vm3718, %v4320, %v4319
      %v4322 = vrot.slane %v3483, 2
      %v4323 = vrot.slane %v3484, 1
      %v4324 = vsel %vm3700, %v4323, %v4322
      %v4325 = vsel %vm3703, %v3485, %v4324
      %v4326 = vrot.slane %v3486, 7
      %v4327 = vsel %vm3706, %v4326, %v4325
      %v4328 = vrot.slane %v3487, 6
      %v4329 = vsel %vm3709, %v4328, %v4327
      %v4330 = vrot.slane %v3488, 5
      %v4331 = vsel %vm3712, %v4330, %v4329
      %v4332 = vrot.slane %v3489, 4
      %v4333 = vsel %vm3715, %v4332, %v4331
      %v4334 = vrot.slane %v3490, 3
      %v4335 = vsel %vm3718, %v4334, %v4333
      %v4336 = vrot.slane %v3491, 2
      %v4337 = vrot.slane %v3492, 1
      %v4338 = vsel %vm3700, %v4337, %v4336
      %v4339 = vsel %vm3703, %v3493, %v4338
      %v4340 = vrot.slane %v3494, 7
      %v4341 = vsel %vm3706, %v4340, %v4339
      %v4342 = vrot.slane %v3495, 6
      %v4343 = vsel %vm3709, %v4342, %v4341
      %v4344 = vrot.slane %v3496, 5
      %v4345 = vsel %vm3712, %v4344, %v4343
      %v4346 = vrot.slane %v3497, 4
      %v4347 = vsel %vm3715, %v4346, %v4345
      %v4348 = vrot.slane %v3498, 3
      %v4349 = vsel %vm3718, %v4348, %v4347
      %v4350 = vrot.slane %v3499, 2
      %v4351 = vrot.slane %v3500, 1
      %v4352 = vsel %vm3700, %v4351, %v4350
      %v4353 = vsel %vm3703, %v3501, %v4352
      %v4354 = vrot.slane %v3502, 7
      %v4355 = vsel %vm3706, %v4354, %v4353
      %v4356 = vrot.slane %v3503, 6
      %v4357 = vsel %vm3709, %v4356, %v4355
      %v4358 = vrot.slane %v3504, 5
      %v4359 = vsel %vm3712, %v4358, %v4357
      %v4360 = vrot.slane %v3505, 4
      %v4361 = vsel %vm3715, %v4360, %v4359
      %v4362 = vrot.slane %v3506, 3
      %v4363 = vsel %vm3718, %v4362, %v4361
      %v4364 = vrot.slane %v3507, 2
      %v4365 = vrot.slane %v3508, 1
      %v4366 = vsel %vm3700, %v4365, %v4364
      %v4367 = vsel %vm3703, %v3509, %v4366
      %v4368 = vrot.slane %v3510, 7
      %v4369 = vsel %vm3706, %v4368, %v4367
      %v4370 = vrot.slane %v3511, 6
      %v4371 = vsel %vm3709, %v4370, %v4369
      %v4372 = vrot.slane %v3512, 5
      %v4373 = vsel %vm3712, %v4372, %v4371
      %v4374 = vrot.slane %v3513, 4
      %v4375 = vsel %vm3715, %v4374, %v4373
      %v4376 = vrot.slane %v3514, 3
      %v4377 = vsel %vm3718, %v4376, %v4375
      %v4378 = vrot.slane %v3515, 2
      %v4379 = vrot.slane %v3516, 1
      %v4380 = vsel %vm3700, %v4379, %v4378
      %v4381 = vsel %vm3703, %v3517, %v4380
      %v4382 = vrot.slane %v3518, 7
      %v4383 = vsel %vm3706, %v4382, %v4381
      %v4384 = vrot.slane %v3519, 6
      %v4385 = vsel %vm3709, %v4384, %v4383
      %v4386 = vrot.slane %v3520, 5
      %v4387 = vsel %vm3712, %v4386, %v4385
      %v4388 = vrot.slane %v3521, 4
      %v4389 = vsel %vm3715, %v4388, %v4387
      %v4390 = vrot.slane %v3522, 3
      %v4391 = vsel %vm3718, %v4390, %v4389
      %v4392 = vrot.slane %v3523, 2
      %v4393 = vrot.slane %v3524, 1
      %v4394 = vsel %vm3700, %v4393, %v4392
      %v4395 = vsel %vm3703, %v3525, %v4394
      %v4396 = vrot.slane %v3526, 7
      %v4397 = vsel %vm3706, %v4396, %v4395
      %v4398 = vrot.slane %v3527, 6
      %v4399 = vsel %vm3709, %v4398, %v4397
      %v4400 = vrot.slane %v3528, 5
      %v4401 = vsel %vm3712, %v4400, %v4399
      %v4402 = vrot.slane %v3529, 4
      %v4403 = vsel %vm3715, %v4402, %v4401
      %v4404 = vrot.slane %v3530, 3
      %v4405 = vsel %vm3718, %v4404, %v4403
      %v4406 = vrot.slane %v3531, 2
      %v4407 = vrot.slane %v3532, 1
      %v4408 = vsel %vm3700, %v4407, %v4406
      %v4409 = vsel %vm3703, %v3533, %v4408
      %v4410 = vrot.slane %v3534, 7
      %v4411 = vsel %vm3706, %v4410, %v4409
      %v4412 = vrot.slane %v3535, 6
      %v4413 = vsel %vm3709, %v4412, %v4411
      %v4414 = vrot.slane %v3536, 5
      %v4415 = vsel %vm3712, %v4414, %v4413
      %v4416 = vrot.slane %v3537, 4
      %v4417 = vsel %vm3715, %v4416, %v4415
      %v4418 = vrot.slane %v3538, 3
      %v4419 = vsel %vm3718, %v4418, %v4417
      %v4420 = vrot.slane %v3539, 2
      %v4421 = vrot.slane %v3540, 1
      %v4422 = vsel %vm3700, %v4421, %v4420
      %v4423 = vsel %vm3703, %v3541, %v4422
      %v4424 = vrot.slane %v3542, 7
      %v4425 = vsel %vm3706, %v4424, %v4423
      %v4426 = vrot.slane %v3543, 6
      %v4427 = vsel %vm3709, %v4426, %v4425
      %v4428 = vrot.slane %v3544, 5
      %v4429 = vsel %vm3712, %v4428, %v4427
      %v4430 = vrot.slane %v3545, 4
      %v4431 = vsel %vm3715, %v4430, %v4429
      %v4432 = vrot.slane %v3546, 3
      %v4433 = vsel %vm3718, %v4432, %v4431
      %v4434 = vrot.slane %v3547, 2
      %v4435 = vrot.slane %v3548, 1
      %v4436 = vsel %vm3700, %v4435, %v4434
      %v4437 = vsel %vm3703, %v3549, %v4436
      %v4438 = vrot.slane %v3550, 7
      %v4439 = vsel %vm3706, %v4438, %v4437
      %v4440 = vrot.slane %v3551, 6
      %v4441 = vsel %vm3709, %v4440, %v4439
      %v4442 = vrot.slane %v3552, 5
      %v4443 = vsel %vm3712, %v4442, %v4441
      %v4444 = vrot.slane %v3553, 4
      %v4445 = vsel %vm3715, %v4444, %v4443
      %v4446 = vrot.slane %v3554, 3
      %v4447 = vsel %vm3718, %v4446, %v4445
      %v4448 = vrot.slane %v3555, 2
      %v4449 = vrot.slane %v3556, 1
      %v4450 = vsel %vm3700, %v4449, %v4448
      %v4451 = vsel %vm3703, %v3557, %v4450
      %v4452 = vrot.slane %v3558, 7
      %v4453 = vsel %vm3706, %v4452, %v4451
      %v4454 = vrot.slane %v3559, 6
      %v4455 = vsel %vm3709, %v4454, %v4453
      %v4456 = vrot.slane %v3560, 5
      %v4457 = vsel %vm3712, %v4456, %v4455
      %v4458 = vrot.slane %v3561, 4
      %v4459 = vsel %vm3715, %v4458, %v4457
      %v4460 = vrot.slane %v3562, 3
      %v4461 = vsel %vm3718, %v4460, %v4459
      %v4462 = vrot.slane %v3563, 2
      %v4463 = vrot.slane %v3564, 1
      %v4464 = vsel %vm3700, %v4463, %v4462
      %v4465 = vsel %vm3703, %v3565, %v4464
      %v4466 = vrot.slane %v3566, 7
      %v4467 = vsel %vm3706, %v4466, %v4465
      %v4468 = vrot.slane %v3567, 6
      %v4469 = vsel %vm3709, %v4468, %v4467
      %v4470 = vrot.slane %v3568, 5
      %v4471 = vsel %vm3712, %v4470, %v4469
      %v4472 = vrot.slane %v3569, 4
      %v4473 = vsel %vm3715, %v4472, %v4471
      %v4474 = vrot.slane %v3570, 3
      %v4475 = vsel %vm3718, %v4474, %v4473
      %4476 = vrot.lane.b32.xlu0 %v4265, 64
      %v4477 = vpop.permute.xlu0 %4476
      %4478 = vrot.lane.b32.xlu0 %v4279, 64
      %v4479 = vpop.permute.xlu0 %4478
      %4480 = vrot.lane.b32.xlu0 %v4293, 64
      %v4481 = vpop.permute.xlu0 %4480
      %4482 = vrot.lane.b32.xlu0 %v4307, 64
      %v4483 = vpop.permute.xlu0 %4482
      %4484 = vrot.lane.b32.xlu0 %v4321, 64
      %v4485 = vpop.permute.xlu0 %4484
      %4486 = vrot.lane.b32.xlu0 %v4335, 64
      %v4487 = vpop.permute.xlu0 %4486
      %4488 = vrot.lane.b32.xlu0 %v4349, 64
      %v4489 = vpop.permute.xlu0 %4488
      %4490 = vrot.lane.b32.xlu0 %v4363, 64
      %v4491 = vpop.permute.xlu0 %4490
      %4492 = vrot.lane.b32.xlu0 %v4377, 64
      %v4493 = vpop.permute.xlu0 %4492
      %4494 = vrot.lane.b32.xlu0 %v4391, 64
      %v4495 = vpop.permute.xlu0 %4494
      %4496 = vrot.lane.b32.xlu0 %v4405, 64
      %v4497 = vpop.permute.xlu0 %4496
      %4498 = vrot.lane.b32.xlu0 %v4419, 64
      %v4499 = vpop.permute.xlu0 %4498
      %4500 = vrot.lane.b32.xlu0 %v4433, 64
      %v4501 = vpop.permute.xlu0 %4500
      %4502 = vrot.lane.b32.xlu0 %v4447, 64
      %v4503 = vpop.permute.xlu0 %4502
      %4504 = vrot.lane.b32.xlu0 %v4461, 64
      %v4505 = vpop.permute.xlu0 %4504
      %4506 = vrot.lane.b32.xlu0 %v4475, 64
      %v4507 = vpop.permute.xlu0 %4506
      %vm4524 = vcmask 785920
      %4525 = vst.msk [vmem:[#allocation3] sm:$0xff] %vm4524, %v4477
      %4526 = vst.msk [vmem:[#allocation3 + $0x10] sm:$0xff] %vm4524, %v4479
      %4527 = vst.msk [vmem:[#allocation3 + $0x20] sm:$0xff] %vm4524, %v4481
      %4528 = vst.msk [vmem:[#allocation3 + $0x30] sm:$0xff] %vm4524, %v4483
      %4529 = vst.msk [vmem:[#allocation3 + $0x40] sm:$0xff] %vm4524, %v4485
      %4530 = vst.msk [vmem:[#allocation3 + $0x50] sm:$0xff] %vm4524, %v4487
      %4531 = vst.msk [vmem:[#allocation3 + $0x60] sm:$0xff] %vm4524, %v4489
      %4532 = vst.msk [vmem:[#allocation3 + $0x70] sm:$0xff] %vm4524, %v4491
      %4533 = vst.msk [vmem:[#allocation3 + $0x80] sm:$0xff] %vm4524, %v4493
      %4534 = vst.msk [vmem:[#allocation3 + $0x90] sm:$0xff] %vm4524, %v4495
      %4535 = vst.msk [vmem:[#allocation3 + $0xa0] sm:$0xff] %vm4524, %v4497
      %4536 = vst.msk [vmem:[#allocation3 + $0xb0] sm:$0xff] %vm4524, %v4499
      %4537 = vst.msk [vmem:[#allocation3 + $0xc0] sm:$0xff] %vm4524, %v4501
      %4538 = vst.msk [vmem:[#allocation3 + $0xd0] sm:$0xff] %vm4524, %v4503
      %4539 = vst.msk [vmem:[#allocation3 + $0xe0] sm:$0xff] %vm4524, %v4505
      %4540 = vst.msk [vmem:[#allocation3 + $0xf0] sm:$0xff] %vm4524, %v4507
      %v4541 = vrot.slane %v3443, 3
      %v4542 = vrot.slane %v3444, 2
      %v4543 = vsel %vm3700, %v4542, %v4541
      %v4544 = vrot.slane %v3445, 1
      %v4545 = vsel %vm3703, %v4544, %v4543
      %v4546 = vsel %vm3706, %v3446, %v4545
      %v4547 = vrot.slane %v3447, 7
      %v4548 = vsel %vm3709, %v4547, %v4546
      %v4549 = vrot.slane %v3448, 6
      %v4550 = vsel %vm3712, %v4549, %v4548
      %v4551 = vrot.slane %v3449, 5
      %v4552 = vsel %vm3715, %v4551, %v4550
      %v4553 = vrot.slane %v3450, 4
      %v4554 = vsel %vm3718, %v4553, %v4552
      %v4555 = vrot.slane %v3451, 3
      %v4556 = vrot.slane %v3452, 2
      %v4557 = vsel %vm3700, %v4556, %v4555
      %v4558 = vrot.slane %v3453, 1
      %v4559 = vsel %vm3703, %v4558, %v4557
      %v4560 = vsel %vm3706, %v3454, %v4559
      %v4561 = vrot.slane %v3455, 7
      %v4562 = vsel %vm3709, %v4561, %v4560
      %v4563 = vrot.slane %v3456, 6
      %v4564 = vsel %vm3712, %v4563, %v4562
      %v4565 = vrot.slane %v3457, 5
      %v4566 = vsel %vm3715, %v4565, %v4564
      %v4567 = vrot.slane %v3458, 4
      %v4568 = vsel %vm3718, %v4567, %v4566
      %v4569 = vrot.slane %v3459, 3
      %v4570 = vrot.slane %v3460, 2
      %v4571 = vsel %vm3700, %v4570, %v4569
      %v4572 = vrot.slane %v3461, 1
      %v4573 = vsel %vm3703, %v4572, %v4571
      %v4574 = vsel %vm3706, %v3462, %v4573
      %v4575 = vrot.slane %v3463, 7
      %v4576 = vsel %vm3709, %v4575, %v4574
      %v4577 = vrot.slane %v3464, 6
      %v4578 = vsel %vm3712, %v4577, %v4576
      %v4579 = vrot.slane %v3465, 5
      %v4580 = vsel %vm3715, %v4579, %v4578
      %v4581 = vrot.slane %v3466, 4
      %v4582 = vsel %vm3718, %v4581, %v4580
      %v4583 = vrot.slane %v3467, 3
      %v4584 = vrot.slane %v3468, 2
      %v4585 = vsel %vm3700, %v4584, %v4583
      %v4586 = vrot.slane %v3469, 1
      %v4587 = vsel %vm3703, %v4586, %v4585
      %v4588 = vsel %vm3706, %v3470, %v4587
      %v4589 = vrot.slane %v3471, 7
      %v4590 = vsel %vm3709, %v4589, %v4588
      %v4591 = vrot.slane %v3472, 6
      %v4592 = vsel %vm3712, %v4591, %v4590
      %v4593 = vrot.slane %v3473, 5
      %v4594 = vsel %vm3715, %v4593, %v4592
      %v4595 = vrot.slane %v3474, 4
      %v4596 = vsel %vm3718, %v4595, %v4594
      %v4597 = vrot.slane %v3475, 3
      %v4598 = vrot.slane %v3476, 2
      %v4599 = vsel %vm3700, %v4598, %v4597
      %v4600 = vrot.slane %v3477, 1
      %v4601 = vsel %vm3703, %v4600, %v4599
      %v4602 = vsel %vm3706, %v3478, %v4601
      %v4603 = vrot.slane %v3479, 7
      %v4604 = vsel %vm3709, %v4603, %v4602
      %v4605 = vrot.slane %v3480, 6
      %v4606 = vsel %vm3712, %v4605, %v4604
      %v4607 = vrot.slane %v3481, 5
      %v4608 = vsel %vm3715, %v4607, %v4606
      %v4609 = vrot.slane %v3482, 4
      %v4610 = vsel %vm3718, %v4609, %v4608
      %v4611 = vrot.slane %v3483, 3
      %v4612 = vrot.slane %v3484, 2
      %v4613 = vsel %vm3700, %v4612, %v4611
      %v4614 = vrot.slane %v3485, 1
      %v4615 = vsel %vm3703, %v4614, %v4613
      %v4616 = vsel %vm3706, %v3486, %v4615
      %v4617 = vrot.slane %v3487, 7
      %v4618 = vsel %vm3709, %v4617, %v4616
      %v4619 = vrot.slane %v3488, 6
      %v4620 = vsel %vm3712, %v4619, %v4618
      %v4621 = vrot.slane %v3489, 5
      %v4622 = vsel %vm3715, %v4621, %v4620
      %v4623 = vrot.slane %v3490, 4
      %v4624 = vsel %vm3718, %v4623, %v4622
      %v4625 = vrot.slane %v3491, 3
      %v4626 = vrot.slane %v3492, 2
      %v4627 = vsel %vm3700, %v4626, %v4625
      %v4628 = vrot.slane %v3493, 1
      %v4629 = vsel %vm3703, %v4628, %v4627
      %v4630 = vsel %vm3706, %v3494, %v4629
      %v4631 = vrot.slane %v3495, 7
      %v4632 = vsel %vm3709, %v4631, %v4630
      %v4633 = vrot.slane %v3496, 6
      %v4634 = vsel %vm3712, %v4633, %v4632
      %v4635 = vrot.slane %v3497, 5
      %v4636 = vsel %vm3715, %v4635, %v4634
      %v4637 = vrot.slane %v3498, 4
      %v4638 = vsel %vm3718, %v4637, %v4636
      %v4639 = vrot.slane %v3499, 3
      %v4640 = vrot.slane %v3500, 2
      %v4641 = vsel %vm3700, %v4640, %v4639
      %v4642 = vrot.slane %v3501, 1
      %v4643 = vsel %vm3703, %v4642, %v4641
      %v4644 = vsel %vm3706, %v3502, %v4643
      %v4645 = vrot.slane %v3503, 7
      %v4646 = vsel %vm3709, %v4645, %v4644
      %v4647 = vrot.slane %v3504, 6
      %v4648 = vsel %vm3712, %v4647, %v4646
      %v4649 = vrot.slane %v3505, 5
      %v4650 = vsel %vm3715, %v4649, %v4648
      %v4651 = vrot.slane %v3506, 4
      %v4652 = vsel %vm3718, %v4651, %v4650
      %v4653 = vrot.slane %v3507, 3
      %v4654 = vrot.slane %v3508, 2
      %v4655 = vsel %vm3700, %v4654, %v4653
      %v4656 = vrot.slane %v3509, 1
      %v4657 = vsel %vm3703, %v4656, %v4655
      %v4658 = vsel %vm3706, %v3510, %v4657
      %v4659 = vrot.slane %v3511, 7
      %v4660 = vsel %vm3709, %v4659, %v4658
      %v4661 = vrot.slane %v3512, 6
      %v4662 = vsel %vm3712, %v4661, %v4660
      %v4663 = vrot.slane %v3513, 5
      %v4664 = vsel %vm3715, %v4663, %v4662
      %v4665 = vrot.slane %v3514, 4
      %v4666 = vsel %vm3718, %v4665, %v4664
      %v4667 = vrot.slane %v3515, 3
      %v4668 = vrot.slane %v3516, 2
      %v4669 = vsel %vm3700, %v4668, %v4667
      %v4670 = vrot.slane %v3517, 1
      %v4671 = vsel %vm3703, %v4670, %v4669
      %v4672 = vsel %vm3706, %v3518, %v4671
      %v4673 = vrot.slane %v3519, 7
      %v4674 = vsel %vm3709, %v4673, %v4672
      %v4675 = vrot.slane %v3520, 6
      %v4676 = vsel %vm3712, %v4675, %v4674
      %v4677 = vrot.slane %v3521, 5
      %v4678 = vsel %vm3715, %v4677, %v4676
      %v4679 = vrot.slane %v3522, 4
      %v4680 = vsel %vm3718, %v4679, %v4678
      %v4681 = vrot.slane %v3523, 3
      %v4682 = vrot.slane %v3524, 2
      %v4683 = vsel %vm3700, %v4682, %v4681
      %v4684 = vrot.slane %v3525, 1
      %v4685 = vsel %vm3703, %v4684, %v4683
      %v4686 = vsel %vm3706, %v3526, %v4685
      %v4687 = vrot.slane %v3527, 7
      %v4688 = vsel %vm3709, %v4687, %v4686
      %v4689 = vrot.slane %v3528, 6
      %v4690 = vsel %vm3712, %v4689, %v4688
      %v4691 = vrot.slane %v3529, 5
      %v4692 = vsel %vm3715, %v4691, %v4690
      %v4693 = vrot.slane %v3530, 4
      %v4694 = vsel %vm3718, %v4693, %v4692
      %v4695 = vrot.slane %v3531, 3
      %v4696 = vrot.slane %v3532, 2
      %v4697 = vsel %vm3700, %v4696, %v4695
      %v4698 = vrot.slane %v3533, 1
      %v4699 = vsel %vm3703, %v4698, %v4697
      %v4700 = vsel %vm3706, %v3534, %v4699
      %v4701 = vrot.slane %v3535, 7
      %v4702 = vsel %vm3709, %v4701, %v4700
      %v4703 = vrot.slane %v3536, 6
      %v4704 = vsel %vm3712, %v4703, %v4702
      %v4705 = vrot.slane %v3537, 5
      %v4706 = vsel %vm3715, %v4705, %v4704
      %v4707 = vrot.slane %v3538, 4
      %v4708 = vsel %vm3718, %v4707, %v4706
      %v4709 = vrot.slane %v3539, 3
      %v4710 = vrot.slane %v3540, 2
      %v4711 = vsel %vm3700, %v4710, %v4709
      %v4712 = vrot.slane %v3541, 1
      %v4713 = vsel %vm3703, %v4712, %v4711
      %v4714 = vsel %vm3706, %v3542, %v4713
      %v4715 = vrot.slane %v3543, 7
      %v4716 = vsel %vm3709, %v4715, %v4714
      %v4717 = vrot.slane %v3544, 6
      %v4718 = vsel %vm3712, %v4717, %v4716
      %v4719 = vrot.slane %v3545, 5
      %v4720 = vsel %vm3715, %v4719, %v4718
      %v4721 = vrot.slane %v3546, 4
      %v4722 = vsel %vm3718, %v4721, %v4720
      %v4723 = vrot.slane %v3547, 3
      %v4724 = vrot.slane %v3548, 2
      %v4725 = vsel %vm3700, %v4724, %v4723
      %v4726 = vrot.slane %v3549, 1
      %v4727 = vsel %vm3703, %v4726, %v4725
      %v4728 = vsel %vm3706, %v3550, %v4727
      %v4729 = vrot.slane %v3551, 7
      %v4730 = vsel %vm3709, %v4729, %v4728
      %v4731 = vrot.slane %v3552, 6
      %v4732 = vsel %vm3712, %v4731, %v4730
      %v4733 = vrot.slane %v3553, 5
      %v4734 = vsel %vm3715, %v4733, %v4732
      %v4735 = vrot.slane %v3554, 4
      %v4736 = vsel %vm3718, %v4735, %v4734
      %v4737 = vrot.slane %v3555, 3
      %v4738 = vrot.slane %v3556, 2
      %v4739 = vsel %vm3700, %v4738, %v4737
      %v4740 = vrot.slane %v3557, 1
      %v4741 = vsel %vm3703, %v4740, %v4739
      %v4742 = vsel %vm3706, %v3558, %v4741
      %v4743 = vrot.slane %v3559, 7
      %v4744 = vsel %vm3709, %v4743, %v4742
      %v4745 = vrot.slane %v3560, 6
      %v4746 = vsel %vm3712, %v4745, %v4744
      %v4747 = vrot.slane %v3561, 5
      %v4748 = vsel %vm3715, %v4747, %v4746
      %v4749 = vrot.slane %v3562, 4
      %v4750 = vsel %vm3718, %v4749, %v4748
      %v4751 = vrot.slane %v3563, 3
      %v4752 = vrot.slane %v3564, 2
      %v4753 = vsel %vm3700, %v4752, %v4751
      %v4754 = vrot.slane %v3565, 1
      %v4755 = vsel %vm3703, %v4754, %v4753
      %v4756 = vsel %vm3706, %v3566, %v4755
      %v4757 = vrot.slane %v3567, 7
      %v4758 = vsel %vm3709, %v4757, %v4756
      %v4759 = vrot.slane %v3568, 6
      %v4760 = vsel %vm3712, %v4759, %v4758
      %v4761 = vrot.slane %v3569, 5
      %v4762 = vsel %vm3715, %v4761, %v4760
      %v4763 = vrot.slane %v3570, 4
      %v4764 = vsel %vm3718, %v4763, %v4762
      %4765 = vrot.lane.b32.xlu0 %v4554, 96
      %v4766 = vpop.permute.xlu0 %4765
      %4767 = vrot.lane.b32.xlu0 %v4568, 96
      %v4768 = vpop.permute.xlu0 %4767
      %4769 = vrot.lane.b32.xlu0 %v4582, 96
      %v4770 = vpop.permute.xlu0 %4769
      %4771 = vrot.lane.b32.xlu0 %v4596, 96
      %v4772 = vpop.permute.xlu0 %4771
      %4773 = vrot.lane.b32.xlu0 %v4610, 96
      %v4774 = vpop.permute.xlu0 %4773
      %4775 = vrot.lane.b32.xlu0 %v4624, 96
      %v4776 = vpop.permute.xlu0 %4775
      %4777 = vrot.lane.b32.xlu0 %v4638, 96
      %v4778 = vpop.permute.xlu0 %4777
      %4779 = vrot.lane.b32.xlu0 %v4652, 96
      %v4780 = vpop.permute.xlu0 %4779
      %4781 = vrot.lane.b32.xlu0 %v4666, 96
      %v4782 = vpop.permute.xlu0 %4781
      %4783 = vrot.lane.b32.xlu0 %v4680, 96
      %v4784 = vpop.permute.xlu0 %4783
      %4785 = vrot.lane.b32.xlu0 %v4694, 96
      %v4786 = vpop.permute.xlu0 %4785
      %4787 = vrot.lane.b32.xlu0 %v4708, 96
      %v4788 = vpop.permute.xlu0 %4787
      %4789 = vrot.lane.b32.xlu0 %v4722, 96
      %v4790 = vpop.permute.xlu0 %4789
      %4791 = vrot.lane.b32.xlu0 %v4736, 96
      %v4792 = vpop.permute.xlu0 %4791
      %4793 = vrot.lane.b32.xlu0 %v4750, 96
      %v4794 = vpop.permute.xlu0 %4793
      %4795 = vrot.lane.b32.xlu0 %v4764, 96
      %v4796 = vpop.permute.xlu0 %4795
      %vm4813 = vcmask 1048320
      %4814 = vst.msk [vmem:[#allocation3] sm:$0xff] %vm4813, %v4766
      %4815 = vst.msk [vmem:[#allocation3 + $0x10] sm:$0xff] %vm4813, %v4768
      %4816 = vst.msk [vmem:[#allocation3 + $0x20] sm:$0xff] %vm4813, %v4770
      %4817 = vst.msk [vmem:[#allocation3 + $0x30] sm:$0xff] %vm4813, %v4772
      %4818 = vst.msk [vmem:[#allocation3 + $0x40] sm:$0xff] %vm4813, %v4774
      %4819 = vst.msk [vmem:[#allocation3 + $0x50] sm:$0xff] %vm4813, %v4776
      %4820 = vst.msk [vmem:[#allocation3 + $0x60] sm:$0xff] %vm4813, %v4778
      %4821 = vst.msk [vmem:[#allocation3 + $0x70] sm:$0xff] %vm4813, %v4780
      %4822 = vst.msk [vmem:[#allocation3 + $0x80] sm:$0xff] %vm4813, %v4782
      %4823 = vst.msk [vmem:[#allocation3 + $0x90] sm:$0xff] %vm4813, %v4784
      %4824 = vst.msk [vmem:[#allocation3 + $0xa0] sm:$0xff] %vm4813, %v4786
      %4825 = vst.msk [vmem:[#allocation3 + $0xb0] sm:$0xff] %vm4813, %v4788
      %4826 = vst.msk [vmem:[#allocation3 + $0xc0] sm:$0xff] %vm4813, %v4790
      %4827 = vst.msk [vmem:[#allocation3 + $0xd0] sm:$0xff] %vm4813, %v4792
      %4828 = vst.msk [vmem:[#allocation3 + $0xe0] sm:$0xff] %vm4813, %v4794
      %4829 = vst.msk [vmem:[#allocation3 + $0xf0] sm:$0xff] %vm4813, %v4796
      %v4830 = vrot.slane %v3443, 4
      %v4831 = vrot.slane %v3444, 3
      %v4832 = vsel %vm3700, %v4831, %v4830
      %v4833 = vrot.slane %v3445, 2
      %v4834 = vsel %vm3703, %v4833, %v4832
      %v4835 = vrot.slane %v3446, 1
      %v4836 = vsel %vm3706, %v4835, %v4834
      %v4837 = vsel %vm3709, %v3447, %v4836
      %v4838 = vrot.slane %v3448, 7
      %v4839 = vsel %vm3712, %v4838, %v4837
      %v4840 = vrot.slane %v3449, 6
      %v4841 = vsel %vm3715, %v4840, %v4839
      %v4842 = vrot.slane %v3450, 5
      %v4843 = vsel %vm3718, %v4842, %v4841
      %v4844 = vrot.slane %v3451, 4
      %v4845 = vrot.slane %v3452, 3
      %v4846 = vsel %vm3700, %v4845, %v4844
      %v4847 = vrot.slane %v3453, 2
      %v4848 = vsel %vm3703, %v4847, %v4846
      %v4849 = vrot.slane %v3454, 1
      %v4850 = vsel %vm3706, %v4849, %v4848
      %v4851 = vsel %vm3709, %v3455, %v4850
      %v4852 = vrot.slane %v3456, 7
      %v4853 = vsel %vm3712, %v4852, %v4851
      %v4854 = vrot.slane %v3457, 6
      %v4855 = vsel %vm3715, %v4854, %v4853
      %v4856 = vrot.slane %v3458, 5
      %v4857 = vsel %vm3718, %v4856, %v4855
      %v4858 = vrot.slane %v3459, 4
      %v4859 = vrot.slane %v3460, 3
      %v4860 = vsel %vm3700, %v4859, %v4858
      %v4861 = vrot.slane %v3461, 2
      %v4862 = vsel %vm3703, %v4861, %v4860
      %v4863 = vrot.slane %v3462, 1
      %v4864 = vsel %vm3706, %v4863, %v4862
      %v4865 = vsel %vm3709, %v3463, %v4864
      %v4866 = vrot.slane %v3464, 7
      %v4867 = vsel %vm3712, %v4866, %v4865
      %v4868 = vrot.slane %v3465, 6
      %v4869 = vsel %vm3715, %v4868, %v4867
      %v4870 = vrot.slane %v3466, 5
      %v4871 = vsel %vm3718, %v4870, %v4869
      %v4872 = vrot.slane %v3467, 4
      %v4873 = vrot.slane %v3468, 3
      %v4874 = vsel %vm3700, %v4873, %v4872
      %v4875 = vrot.slane %v3469, 2
      %v4876 = vsel %vm3703, %v4875, %v4874
      %v4877 = vrot.slane %v3470, 1
      %v4878 = vsel %vm3706, %v4877, %v4876
      %v4879 = vsel %vm3709, %v3471, %v4878
      %v4880 = vrot.slane %v3472, 7
      %v4881 = vsel %vm3712, %v4880, %v4879
      %v4882 = vrot.slane %v3473, 6
      %v4883 = vsel %vm3715, %v4882, %v4881
      %v4884 = vrot.slane %v3474, 5
      %v4885 = vsel %vm3718, %v4884, %v4883
      %v4886 = vrot.slane %v3475, 4
      %v4887 = vrot.slane %v3476, 3
      %v4888 = vsel %vm3700, %v4887, %v4886
      %v4889 = vrot.slane %v3477, 2
      %v4890 = vsel %vm3703, %v4889, %v4888
      %v4891 = vrot.slane %v3478, 1
      %v4892 = vsel %vm3706, %v4891, %v4890
      %v4893 = vsel %vm3709, %v3479, %v4892
      %v4894 = vrot.slane %v3480, 7
      %v4895 = vsel %vm3712, %v4894, %v4893
      %v4896 = vrot.slane %v3481, 6
      %v4897 = vsel %vm3715, %v4896, %v4895
      %v4898 = vrot.slane %v3482, 5
      %v4899 = vsel %vm3718, %v4898, %v4897
      %v4900 = vrot.slane %v3483, 4
      %v4901 = vrot.slane %v3484, 3
      %v4902 = vsel %vm3700, %v4901, %v4900
      %v4903 = vrot.slane %v3485, 2
      %v4904 = vsel %vm3703, %v4903, %v4902
      %v4905 = vrot.slane %v3486, 1
      %v4906 = vsel %vm3706, %v4905, %v4904
      %v4907 = vsel %vm3709, %v3487, %v4906
      %v4908 = vrot.slane %v3488, 7
      %v4909 = vsel %vm3712, %v4908, %v4907
      %v4910 = vrot.slane %v3489, 6
      %v4911 = vsel %vm3715, %v4910, %v4909
      %v4912 = vrot.slane %v3490, 5
      %v4913 = vsel %vm3718, %v4912, %v4911
      %v4914 = vrot.slane %v3491, 4
      %v4915 = vrot.slane %v3492, 3
      %v4916 = vsel %vm3700, %v4915, %v4914
      %v4917 = vrot.slane %v3493, 2
      %v4918 = vsel %vm3703, %v4917, %v4916
      %v4919 = vrot.slane %v3494, 1
      %v4920 = vsel %vm3706, %v4919, %v4918
      %v4921 = vsel %vm3709, %v3495, %v4920
      %v4922 = vrot.slane %v3496, 7
      %v4923 = vsel %vm3712, %v4922, %v4921
      %v4924 = vrot.slane %v3497, 6
      %v4925 = vsel %vm3715, %v4924, %v4923
      %v4926 = vrot.slane %v3498, 5
      %v4927 = vsel %vm3718, %v4926, %v4925
      %v4928 = vrot.slane %v3499, 4
      %v4929 = vrot.slane %v3500, 3
      %v4930 = vsel %vm3700, %v4929, %v4928
      %v4931 = vrot.slane %v3501, 2
      %v4932 = vsel %vm3703, %v4931, %v4930
      %v4933 = vrot.slane %v3502, 1
      %v4934 = vsel %vm3706, %v4933, %v4932
      %v4935 = vsel %vm3709, %v3503, %v4934
      %v4936 = vrot.slane %v3504, 7
      %v4937 = vsel %vm3712, %v4936, %v4935
      %v4938 = vrot.slane %v3505, 6
      %v4939 = vsel %vm3715, %v4938, %v4937
      %v4940 = vrot.slane %v3506, 5
      %v4941 = vsel %vm3718, %v4940, %v4939
      %v4942 = vrot.slane %v3507, 4
      %v4943 = vrot.slane %v3508, 3
      %v4944 = vsel %vm3700, %v4943, %v4942
      %v4945 = vrot.slane %v3509, 2
      %v4946 = vsel %vm3703, %v4945, %v4944
      %v4947 = vrot.slane %v3510, 1
      %v4948 = vsel %vm3706, %v4947, %v4946
      %v4949 = vsel %vm3709, %v3511, %v4948
      %v4950 = vrot.slane %v3512, 7
      %v4951 = vsel %vm3712, %v4950, %v4949
      %v4952 = vrot.slane %v3513, 6
      %v4953 = vsel %vm3715, %v4952, %v4951
      %v4954 = vrot.slane %v3514, 5
      %v4955 = vsel %vm3718, %v4954, %v4953
      %v4956 = vrot.slane %v3515, 4
      %v4957 = vrot.slane %v3516, 3
      %v4958 = vsel %vm3700, %v4957, %v4956
      %v4959 = vrot.slane %v3517, 2
      %v4960 = vsel %vm3703, %v4959, %v4958
      %v4961 = vrot.slane %v3518, 1
      %v4962 = vsel %vm3706, %v4961, %v4960
      %v4963 = vsel %vm3709, %v3519, %v4962
      %v4964 = vrot.slane %v3520, 7
      %v4965 = vsel %vm3712, %v4964, %v4963
      %v4966 = vrot.slane %v3521, 6
      %v4967 = vsel %vm3715, %v4966, %v4965
      %v4968 = vrot.slane %v3522, 5
      %v4969 = vsel %vm3718, %v4968, %v4967
      %v4970 = vrot.slane %v3523, 4
      %v4971 = vrot.slane %v3524, 3
      %v4972 = vsel %vm3700, %v4971, %v4970
      %v4973 = vrot.slane %v3525, 2
      %v4974 = vsel %vm3703, %v4973, %v4972
      %v4975 = vrot.slane %v3526, 1
      %v4976 = vsel %vm3706, %v4975, %v4974
      %v4977 = vsel %vm3709, %v3527, %v4976
      %v4978 = vrot.slane %v3528, 7
      %v4979 = vsel %vm3712, %v4978, %v4977
      %v4980 = vrot.slane %v3529, 6
      %v4981 = vsel %vm3715, %v4980, %v4979
      %v4982 = vrot.slane %v3530, 5
      %v4983 = vsel %vm3718, %v4982, %v4981
      %v4984 = vrot.slane %v3531, 4
      %v4985 = vrot.slane %v3532, 3
      %v4986 = vsel %vm3700, %v4985, %v4984
      %v4987 = vrot.slane %v3533, 2
      %v4988 = vsel %vm3703, %v4987, %v4986
      %v4989 = vrot.slane %v3534, 1
      %v4990 = vsel %vm3706, %v4989, %v4988
      %v4991 = vsel %vm3709, %v3535, %v4990
      %v4992 = vrot.slane %v3536, 7
      %v4993 = vsel %vm3712, %v4992, %v4991
      %v4994 = vrot.slane %v3537, 6
      %v4995 = vsel %vm3715, %v4994, %v4993
      %v4996 = vrot.slane %v3538, 5
      %v4997 = vsel %vm3718, %v4996, %v4995
      %v4998 = vrot.slane %v3539, 4
      %v4999 = vrot.slane %v3540, 3
      %v5000 = vsel %vm3700, %v4999, %v4998
      %v5001 = vrot.slane %v3541, 2
      %v5002 = vsel %vm3703, %v5001, %v5000
      %v5003 = vrot.slane %v3542, 1
      %v5004 = vsel %vm3706, %v5003, %v5002
      %v5005 = vsel %vm3709, %v3543, %v5004
      %v5006 = vrot.slane %v3544, 7
      %v5007 = vsel %vm3712, %v5006, %v5005
      %v5008 = vrot.slane %v3545, 6
      %v5009 = vsel %vm3715, %v5008, %v5007
      %v5010 = vrot.slane %v3546, 5
      %v5011 = vsel %vm3718, %v5010, %v5009
      %v5012 = vrot.slane %v3547, 4
      %v5013 = vrot.slane %v3548, 3
      %v5014 = vsel %vm3700, %v5013, %v5012
      %v5015 = vrot.slane %v3549, 2
      %v5016 = vsel %vm3703, %v5015, %v5014
      %v5017 = vrot.slane %v3550, 1
      %v5018 = vsel %vm3706, %v5017, %v5016
      %v5019 = vsel %vm3709, %v3551, %v5018
      %v5020 = vrot.slane %v3552, 7
      %v5021 = vsel %vm3712, %v5020, %v5019
      %v5022 = vrot.slane %v3553, 6
      %v5023 = vsel %vm3715, %v5022, %v5021
      %v5024 = vrot.slane %v3554, 5
      %v5025 = vsel %vm3718, %v5024, %v5023
      %v5026 = vrot.slane %v3555, 4
      %v5027 = vrot.slane %v3556, 3
      %v5028 = vsel %vm3700, %v5027, %v5026
      %v5029 = vrot.slane %v3557, 2
      %v5030 = vsel %vm3703, %v5029, %v5028
      %v5031 = vrot.slane %v3558, 1
      %v5032 = vsel %vm3706, %v5031, %v5030
      %v5033 = vsel %vm3709, %v3559, %v5032
      %v5034 = vrot.slane %v3560, 7
      %v5035 = vsel %vm3712, %v5034, %v5033
      %v5036 = vrot.slane %v3561, 6
      %v5037 = vsel %vm3715, %v5036, %v5035
      %v5038 = vrot.slane %v3562, 5
      %v5039 = vsel %vm3718, %v5038, %v5037
      %v5040 = vrot.slane %v3563, 4
      %v5041 = vrot.slane %v3564, 3
      %v5042 = vsel %vm3700, %v5041, %v5040
      %v5043 = vrot.slane %v3565, 2
      %v5044 = vsel %vm3703, %v5043, %v5042
      %v5045 = vrot.slane %v3566, 1
      %v5046 = vsel %vm3706, %v5045, %v5044
      %v5047 = vsel %vm3709, %v3567, %v5046
      %v5048 = vrot.slane %v3568, 7
      %v5049 = vsel %vm3712, %v5048, %v5047
      %v5050 = vrot.slane %v3569, 6
      %v5051 = vsel %vm3715, %v5050, %v5049
      %v5052 = vrot.slane %v3570, 5
      %v5053 = vsel %vm3718, %v5052, %v5051
      %5070 = vst.msk [vmem:[#allocation3 + $0x8] sm:$0xff] %vm3946, %v4843
      %5071 = vst.msk [vmem:[#allocation3 + $0x18] sm:$0xff] %vm3946, %v4857
      %5072 = vst.msk [vmem:[#allocation3 + $0x28] sm:$0xff] %vm3946, %v4871
      %5073 = vst.msk [vmem:[#allocation3 + $0x38] sm:$0xff] %vm3946, %v4885
      %5074 = vst.msk [vmem:[#allocation3 + $0x48] sm:$0xff] %vm3946, %v4899
      %5075 = vst.msk [vmem:[#allocation3 + $0x58] sm:$0xff] %vm3946, %v4913
      %5076 = vst.msk [vmem:[#allocation3 + $0x68] sm:$0xff] %vm3946, %v4927
      %5077 = vst.msk [vmem:[#allocation3 + $0x78] sm:$0xff] %vm3946, %v4941
      %5078 = vst.msk [vmem:[#allocation3 + $0x88] sm:$0xff] %vm3946, %v4955
      %5079 = vst.msk [vmem:[#allocation3 + $0x98] sm:$0xff] %vm3946, %v4969
      %5080 = vst.msk [vmem:[#allocation3 + $0xa8] sm:$0xff] %vm3946, %v4983
      %5081 = vst.msk [vmem:[#allocation3 + $0xb8] sm:$0xff] %vm3946, %v4997
      %5082 = vst.msk [vmem:[#allocation3 + $0xc8] sm:$0xff] %vm3946, %v5011
      %5083 = vst.msk [vmem:[#allocation3 + $0xd8] sm:$0xff] %vm3946, %v5025
      %5084 = vst.msk [vmem:[#allocation3 + $0xe8] sm:$0xff] %vm3946, %v5039
      %5085 = vst.msk [vmem:[#allocation3 + $0xf8] sm:$0xff] %vm3946, %v5053
      %v5086 = vrot.slane %v3443, 5
      %v5087 = vrot.slane %v3444, 4
      %v5088 = vsel %vm3700, %v5087, %v5086
      %v5089 = vrot.slane %v3445, 3
      %v5090 = vsel %vm3703, %v5089, %v5088
      %v5091 = vrot.slane %v3446, 2
      %v5092 = vsel %vm3706, %v5091, %v5090
      %v5093 = vrot.slane %v3447, 1
      %v5094 = vsel %vm3709, %v5093, %v5092
      %v5095 = vsel %vm3712, %v3448, %v5094
      %v5096 = vrot.slane %v3449, 7
      %v5097 = vsel %vm3715, %v5096, %v5095
      %v5098 = vrot.slane %v3450, 6
      %v5099 = vsel %vm3718, %v5098, %v5097
      %v5100 = vrot.slane %v3451, 5
      %v5101 = vrot.slane %v3452, 4
      %v5102 = vsel %vm3700, %v5101, %v5100
      %v5103 = vrot.slane %v3453, 3
      %v5104 = vsel %vm3703, %v5103, %v5102
      %v5105 = vrot.slane %v3454, 2
      %v5106 = vsel %vm3706, %v5105, %v5104
      %v5107 = vrot.slane %v3455, 1
      %v5108 = vsel %vm3709, %v5107, %v5106
      %v5109 = vsel %vm3712, %v3456, %v5108
      %v5110 = vrot.slane %v3457, 7
      %v5111 = vsel %vm3715, %v5110, %v5109
      %v5112 = vrot.slane %v3458, 6
      %v5113 = vsel %vm3718, %v5112, %v5111
      %v5114 = vrot.slane %v3459, 5
      %v5115 = vrot.slane %v3460, 4
      %v5116 = vsel %vm3700, %v5115, %v5114
      %v5117 = vrot.slane %v3461, 3
      %v5118 = vsel %vm3703, %v5117, %v5116
      %v5119 = vrot.slane %v3462, 2
      %v5120 = vsel %vm3706, %v5119, %v5118
      %v5121 = vrot.slane %v3463, 1
      %v5122 = vsel %vm3709, %v5121, %v5120
      %v5123 = vsel %vm3712, %v3464, %v5122
      %v5124 = vrot.slane %v3465, 7
      %v5125 = vsel %vm3715, %v5124, %v5123
      %v5126 = vrot.slane %v3466, 6
      %v5127 = vsel %vm3718, %v5126, %v5125
      %v5128 = vrot.slane %v3467, 5
      %v5129 = vrot.slane %v3468, 4
      %v5130 = vsel %vm3700, %v5129, %v5128
      %v5131 = vrot.slane %v3469, 3
      %v5132 = vsel %vm3703, %v5131, %v5130
      %v5133 = vrot.slane %v3470, 2
      %v5134 = vsel %vm3706, %v5133, %v5132
      %v5135 = vrot.slane %v3471, 1
      %v5136 = vsel %vm3709, %v5135, %v5134
      %v5137 = vsel %vm3712, %v3472, %v5136
      %v5138 = vrot.slane %v3473, 7
      %v5139 = vsel %vm3715, %v5138, %v5137
      %v5140 = vrot.slane %v3474, 6
      %v5141 = vsel %vm3718, %v5140, %v5139
      %v5142 = vrot.slane %v3475, 5
      %v5143 = vrot.slane %v3476, 4
      %v5144 = vsel %vm3700, %v5143, %v5142
      %v5145 = vrot.slane %v3477, 3
      %v5146 = vsel %vm3703, %v5145, %v5144
      %v5147 = vrot.slane %v3478, 2
      %v5148 = vsel %vm3706, %v5147, %v5146
      %v5149 = vrot.slane %v3479, 1
      %v5150 = vsel %vm3709, %v5149, %v5148
      %v5151 = vsel %vm3712, %v3480, %v5150
      %v5152 = vrot.slane %v3481, 7
      %v5153 = vsel %vm3715, %v5152, %v5151
      %v5154 = vrot.slane %v3482, 6
      %v5155 = vsel %vm3718, %v5154, %v5153
      %v5156 = vrot.slane %v3483, 5
      %v5157 = vrot.slane %v3484, 4
      %v5158 = vsel %vm3700, %v5157, %v5156
      %v5159 = vrot.slane %v3485, 3
      %v5160 = vsel %vm3703, %v5159, %v5158
      %v5161 = vrot.slane %v3486, 2
      %v5162 = vsel %vm3706, %v5161, %v5160
      %v5163 = vrot.slane %v3487, 1
      %v5164 = vsel %vm3709, %v5163, %v5162
      %v5165 = vsel %vm3712, %v3488, %v5164
      %v5166 = vrot.slane %v3489, 7
      %v5167 = vsel %vm3715, %v5166, %v5165
      %v5168 = vrot.slane %v3490, 6
      %v5169 = vsel %vm3718, %v5168, %v5167
      %v5170 = vrot.slane %v3491, 5
      %v5171 = vrot.slane %v3492, 4
      %v5172 = vsel %vm3700, %v5171, %v5170
      %v5173 = vrot.slane %v3493, 3
      %v5174 = vsel %vm3703, %v5173, %v5172
      %v5175 = vrot.slane %v3494, 2
      %v5176 = vsel %vm3706, %v5175, %v5174
      %v5177 = vrot.slane %v3495, 1
      %v5178 = vsel %vm3709, %v5177, %v5176
      %v5179 = vsel %vm3712, %v3496, %v5178
      %v5180 = vrot.slane %v3497, 7
      %v5181 = vsel %vm3715, %v5180, %v5179
      %v5182 = vrot.slane %v3498, 6
      %v5183 = vsel %vm3718, %v5182, %v5181
      %v5184 = vrot.slane %v3499, 5
      %v5185 = vrot.slane %v3500, 4
      %v5186 = vsel %vm3700, %v5185, %v5184
      %v5187 = vrot.slane %v3501, 3
      %v5188 = vsel %vm3703, %v5187, %v5186
      %v5189 = vrot.slane %v3502, 2
      %v5190 = vsel %vm3706, %v5189, %v5188
      %v5191 = vrot.slane %v3503, 1
      %v5192 = vsel %vm3709, %v5191, %v5190
      %v5193 = vsel %vm3712, %v3504, %v5192
      %v5194 = vrot.slane %v3505, 7
      %v5195 = vsel %vm3715, %v5194, %v5193
      %v5196 = vrot.slane %v3506, 6
      %v5197 = vsel %vm3718, %v5196, %v5195
      %v5198 = vrot.slane %v3507, 5
      %v5199 = vrot.slane %v3508, 4
      %v5200 = vsel %vm3700, %v5199, %v5198
      %v5201 = vrot.slane %v3509, 3
      %v5202 = vsel %vm3703, %v5201, %v5200
      %v5203 = vrot.slane %v3510, 2
      %v5204 = vsel %vm3706, %v5203, %v5202
      %v5205 = vrot.slane %v3511, 1
      %v5206 = vsel %vm3709, %v5205, %v5204
      %v5207 = vsel %vm3712, %v3512, %v5206
      %v5208 = vrot.slane %v3513, 7
      %v5209 = vsel %vm3715, %v5208, %v5207
      %v5210 = vrot.slane %v3514, 6
      %v5211 = vsel %vm3718, %v5210, %v5209
      %v5212 = vrot.slane %v3515, 5
      %v5213 = vrot.slane %v3516, 4
      %v5214 = vsel %vm3700, %v5213, %v5212
      %v5215 = vrot.slane %v3517, 3
      %v5216 = vsel %vm3703, %v5215, %v5214
      %v5217 = vrot.slane %v3518, 2
      %v5218 = vsel %vm3706, %v5217, %v5216
      %v5219 = vrot.slane %v3519, 1
      %v5220 = vsel %vm3709, %v5219, %v5218
      %v5221 = vsel %vm3712, %v3520, %v5220
      %v5222 = vrot.slane %v3521, 7
      %v5223 = vsel %vm3715, %v5222, %v5221
      %v5224 = vrot.slane %v3522, 6
      %v5225 = vsel %vm3718, %v5224, %v5223
      %v5226 = vrot.slane %v3523, 5
      %v5227 = vrot.slane %v3524, 4
      %v5228 = vsel %vm3700, %v5227, %v5226
      %v5229 = vrot.slane %v3525, 3
      %v5230 = vsel %vm3703, %v5229, %v5228
      %v5231 = vrot.slane %v3526, 2
      %v5232 = vsel %vm3706, %v5231, %v5230
      %v5233 = vrot.slane %v3527, 1
      %v5234 = vsel %vm3709, %v5233, %v5232
      %v5235 = vsel %vm3712, %v3528, %v5234
      %v5236 = vrot.slane %v3529, 7
      %v5237 = vsel %vm3715, %v5236, %v5235
      %v5238 = vrot.slane %v3530, 6
      %v5239 = vsel %vm3718, %v5238, %v5237
      %v5240 = vrot.slane %v3531, 5
      %v5241 = vrot.slane %v3532, 4
      %v5242 = vsel %vm3700, %v5241, %v5240
      %v5243 = vrot.slane %v3533, 3
      %v5244 = vsel %vm3703, %v5243, %v5242
      %v5245 = vrot.slane %v3534, 2
      %v5246 = vsel %vm3706, %v5245, %v5244
      %v5247 = vrot.slane %v3535, 1
      %v5248 = vsel %vm3709, %v5247, %v5246
      %v5249 = vsel %vm3712, %v3536, %v5248
      %v5250 = vrot.slane %v3537, 7
      %v5251 = vsel %vm3715, %v5250, %v5249
      %v5252 = vrot.slane %v3538, 6
      %v5253 = vsel %vm3718, %v5252, %v5251
      %v5254 = vrot.slane %v3539, 5
      %v5255 = vrot.slane %v3540, 4
      %v5256 = vsel %vm3700, %v5255, %v5254
      %v5257 = vrot.slane %v3541, 3
      %v5258 = vsel %vm3703, %v5257, %v5256
      %v5259 = vrot.slane %v3542, 2
      %v5260 = vsel %vm3706, %v5259, %v5258
      %v5261 = vrot.slane %v3543, 1
      %v5262 = vsel %vm3709, %v5261, %v5260
      %v5263 = vsel %vm3712, %v3544, %v5262
      %v5264 = vrot.slane %v3545, 7
      %v5265 = vsel %vm3715, %v5264, %v5263
      %v5266 = vrot.slane %v3546, 6
      %v5267 = vsel %vm3718, %v5266, %v5265
      %v5268 = vrot.slane %v3547, 5
      %v5269 = vrot.slane %v3548, 4
      %v5270 = vsel %vm3700, %v5269, %v5268
      %v5271 = vrot.slane %v3549, 3
      %v5272 = vsel %vm3703, %v5271, %v5270
      %v5273 = vrot.slane %v3550, 2
      %v5274 = vsel %vm3706, %v5273, %v5272
      %v5275 = vrot.slane %v3551, 1
      %v5276 = vsel %vm3709, %v5275, %v5274
      %v5277 = vsel %vm3712, %v3552, %v5276
      %v5278 = vrot.slane %v3553, 7
      %v5279 = vsel %vm3715, %v5278, %v5277
      %v5280 = vrot.slane %v3554, 6
      %v5281 = vsel %vm3718, %v5280, %v5279
      %v5282 = vrot.slane %v3555, 5
      %v5283 = vrot.slane %v3556, 4
      %v5284 = vsel %vm3700, %v5283, %v5282
      %v5285 = vrot.slane %v3557, 3
      %v5286 = vsel %vm3703, %v5285, %v5284
      %v5287 = vrot.slane %v3558, 2
      %v5288 = vsel %vm3706, %v5287, %v5286
      %v5289 = vrot.slane %v3559, 1
      %v5290 = vsel %vm3709, %v5289, %v5288
      %v5291 = vsel %vm3712, %v3560, %v5290
      %v5292 = vrot.slane %v3561, 7
      %v5293 = vsel %vm3715, %v5292, %v5291
      %v5294 = vrot.slane %v3562, 6
      %v5295 = vsel %vm3718, %v5294, %v5293
      %v5296 = vrot.slane %v3563, 5
      %v5297 = vrot.slane %v3564, 4
      %v5298 = vsel %vm3700, %v5297, %v5296
      %v5299 = vrot.slane %v3565, 3
      %v5300 = vsel %vm3703, %v5299, %v5298
      %v5301 = vrot.slane %v3566, 2
      %v5302 = vsel %vm3706, %v5301, %v5300
      %v5303 = vrot.slane %v3567, 1
      %v5304 = vsel %vm3709, %v5303, %v5302
      %v5305 = vsel %vm3712, %v3568, %v5304
      %v5306 = vrot.slane %v3569, 7
      %v5307 = vsel %vm3715, %v5306, %v5305
      %v5308 = vrot.slane %v3570, 6
      %v5309 = vsel %vm3718, %v5308, %v5307
      %5310 = vrot.lane.b32.xlu0 %v5099, 32
      %v5311 = vpop.permute.xlu0 %5310
      %5312 = vrot.lane.b32.xlu0 %v5113, 32
      %v5313 = vpop.permute.xlu0 %5312
      %5314 = vrot.lane.b32.xlu0 %v5127, 32
      %v5315 = vpop.permute.xlu0 %5314
      %5316 = vrot.lane.b32.xlu0 %v5141, 32
      %v5317 = vpop.permute.xlu0 %5316
      %5318 = vrot.lane.b32.xlu0 %v5155, 32
      %v5319 = vpop.permute.xlu0 %5318
      %5320 = vrot.lane.b32.xlu0 %v5169, 32
      %v5321 = vpop.permute.xlu0 %5320
      %5322 = vrot.lane.b32.xlu0 %v5183, 32
      %v5323 = vpop.permute.xlu0 %5322
      %5324 = vrot.lane.b32.xlu0 %v5197, 32
      %v5325 = vpop.permute.xlu0 %5324
      %5326 = vrot.lane.b32.xlu0 %v5211, 32
      %v5327 = vpop.permute.xlu0 %5326
      %5328 = vrot.lane.b32.xlu0 %v5225, 32
      %v5329 = vpop.permute.xlu0 %5328
      %5330 = vrot.lane.b32.xlu0 %v5239, 32
      %v5331 = vpop.permute.xlu0 %5330
      %5332 = vrot.lane.b32.xlu0 %v5253, 32
      %v5333 = vpop.permute.xlu0 %5332
      %5334 = vrot.lane.b32.xlu0 %v5267, 32
      %v5335 = vpop.permute.xlu0 %5334
      %5336 = vrot.lane.b32.xlu0 %v5281, 32
      %v5337 = vpop.permute.xlu0 %5336
      %5338 = vrot.lane.b32.xlu0 %v5295, 32
      %v5339 = vpop.permute.xlu0 %5338
      %5340 = vrot.lane.b32.xlu0 %v5309, 32
      %v5341 = vpop.permute.xlu0 %5340
      %5358 = vst.msk [vmem:[#allocation3 + $0x8] sm:$0xff] %vm4235, %v5311
      %5359 = vst.msk [vmem:[#allocation3 + $0x18] sm:$0xff] %vm4235, %v5313
      %5360 = vst.msk [vmem:[#allocation3 + $0x28] sm:$0xff] %vm4235, %v5315
      %5361 = vst.msk [vmem:[#allocation3 + $0x38] sm:$0xff] %vm4235, %v5317
      %5362 = vst.msk [vmem:[#allocation3 + $0x48] sm:$0xff] %vm4235, %v5319
      %5363 = vst.msk [vmem:[#allocation3 + $0x58] sm:$0xff] %vm4235, %v5321
      %5364 = vst.msk [vmem:[#allocation3 + $0x68] sm:$0xff] %vm4235, %v5323
      %5365 = vst.msk [vmem:[#allocation3 + $0x78] sm:$0xff] %vm4235, %v5325
      %5366 = vst.msk [vmem:[#allocation3 + $0x88] sm:$0xff] %vm4235, %v5327
      %5367 = vst.msk [vmem:[#allocation3 + $0x98] sm:$0xff] %vm4235, %v5329
      %5368 = vst.msk [vmem:[#allocation3 + $0xa8] sm:$0xff] %vm4235, %v5331
      %5369 = vst.msk [vmem:[#allocation3 + $0xb8] sm:$0xff] %vm4235, %v5333
      %5370 = vst.msk [vmem:[#allocation3 + $0xc8] sm:$0xff] %vm4235, %v5335
      %5371 = vst.msk [vmem:[#allocation3 + $0xd8] sm:$0xff] %vm4235, %v5337
      %5372 = vst.msk [vmem:[#allocation3 + $0xe8] sm:$0xff] %vm4235, %v5339
      %5373 = vst.msk [vmem:[#allocation3 + $0xf8] sm:$0xff] %vm4235, %v5341
      %v5374 = vrot.slane %v3443, 6
      %v5375 = vrot.slane %v3444, 5
      %v5376 = vsel %vm3700, %v5375, %v5374
      %v5377 = vrot.slane %v3445, 4
      %v5378 = vsel %vm3703, %v5377, %v5376
      %v5379 = vrot.slane %v3446, 3
      %v5380 = vsel %vm3706, %v5379, %v5378
      %v5381 = vrot.slane %v3447, 2
      %v5382 = vsel %vm3709, %v5381, %v5380
      %v5383 = vrot.slane %v3448, 1
      %v5384 = vsel %vm3712, %v5383, %v5382
      %v5385 = vsel %vm3715, %v3449, %v5384
      %v5386 = vrot.slane %v3450, 7
      %v5387 = vsel %vm3718, %v5386, %v5385
      %v5388 = vrot.slane %v3451, 6
      %v5389 = vrot.slane %v3452, 5
      %v5390 = vsel %vm3700, %v5389, %v5388
      %v5391 = vrot.slane %v3453, 4
      %v5392 = vsel %vm3703, %v5391, %v5390
      %v5393 = vrot.slane %v3454, 3
      %v5394 = vsel %vm3706, %v5393, %v5392
      %v5395 = vrot.slane %v3455, 2
      %v5396 = vsel %vm3709, %v5395, %v5394
      %v5397 = vrot.slane %v3456, 1
      %v5398 = vsel %vm3712, %v5397, %v5396
      %v5399 = vsel %vm3715, %v3457, %v5398
      %v5400 = vrot.slane %v3458, 7
      %v5401 = vsel %vm3718, %v5400, %v5399
      %v5402 = vrot.slane %v3459, 6
      %v5403 = vrot.slane %v3460, 5
      %v5404 = vsel %vm3700, %v5403, %v5402
      %v5405 = vrot.slane %v3461, 4
      %v5406 = vsel %vm3703, %v5405, %v5404
      %v5407 = vrot.slane %v3462, 3
      %v5408 = vsel %vm3706, %v5407, %v5406
      %v5409 = vrot.slane %v3463, 2
      %v5410 = vsel %vm3709, %v5409, %v5408
      %v5411 = vrot.slane %v3464, 1
      %v5412 = vsel %vm3712, %v5411, %v5410
      %v5413 = vsel %vm3715, %v3465, %v5412
      %v5414 = vrot.slane %v3466, 7
      %v5415 = vsel %vm3718, %v5414, %v5413
      %v5416 = vrot.slane %v3467, 6
      %v5417 = vrot.slane %v3468, 5
      %v5418 = vsel %vm3700, %v5417, %v5416
      %v5419 = vrot.slane %v3469, 4
      %v5420 = vsel %vm3703, %v5419, %v5418
      %v5421 = vrot.slane %v3470, 3
      %v5422 = vsel %vm3706, %v5421, %v5420
      %v5423 = vrot.slane %v3471, 2
      %v5424 = vsel %vm3709, %v5423, %v5422
      %v5425 = vrot.slane %v3472, 1
      %v5426 = vsel %vm3712, %v5425, %v5424
      %v5427 = vsel %vm3715, %v3473, %v5426
      %v5428 = vrot.slane %v3474, 7
      %v5429 = vsel %vm3718, %v5428, %v5427
      %v5430 = vrot.slane %v3475, 6
      %v5431 = vrot.slane %v3476, 5
      %v5432 = vsel %vm3700, %v5431, %v5430
      %v5433 = vrot.slane %v3477, 4
      %v5434 = vsel %vm3703, %v5433, %v5432
      %v5435 = vrot.slane %v3478, 3
      %v5436 = vsel %vm3706, %v5435, %v5434
      %v5437 = vrot.slane %v3479, 2
      %v5438 = vsel %vm3709, %v5437, %v5436
      %v5439 = vrot.slane %v3480, 1
      %v5440 = vsel %vm3712, %v5439, %v5438
      %v5441 = vsel %vm3715, %v3481, %v5440
      %v5442 = vrot.slane %v3482, 7
      %v5443 = vsel %vm3718, %v5442, %v5441
      %v5444 = vrot.slane %v3483, 6
      %v5445 = vrot.slane %v3484, 5
      %v5446 = vsel %vm3700, %v5445, %v5444
      %v5447 = vrot.slane %v3485, 4
      %v5448 = vsel %vm3703, %v5447, %v5446
      %v5449 = vrot.slane %v3486, 3
      %v5450 = vsel %vm3706, %v5449, %v5448
      %v5451 = vrot.slane %v3487, 2
      %v5452 = vsel %vm3709, %v5451, %v5450
      %v5453 = vrot.slane %v3488, 1
      %v5454 = vsel %vm3712, %v5453, %v5452
      %v5455 = vsel %vm3715, %v3489, %v5454
      %v5456 = vrot.slane %v3490, 7
      %v5457 = vsel %vm3718, %v5456, %v5455
      %v5458 = vrot.slane %v3491, 6
      %v5459 = vrot.slane %v3492, 5
      %v5460 = vsel %vm3700, %v5459, %v5458
      %v5461 = vrot.slane %v3493, 4
      %v5462 = vsel %vm3703, %v5461, %v5460
      %v5463 = vrot.slane %v3494, 3
      %v5464 = vsel %vm3706, %v5463, %v5462
      %v5465 = vrot.slane %v3495, 2
      %v5466 = vsel %vm3709, %v5465, %v5464
      %v5467 = vrot.slane %v3496, 1
      %v5468 = vsel %vm3712, %v5467, %v5466
      %v5469 = vsel %vm3715, %v3497, %v5468
      %v5470 = vrot.slane %v3498, 7
      %v5471 = vsel %vm3718, %v5470, %v5469
      %v5472 = vrot.slane %v3499, 6
      %v5473 = vrot.slane %v3500, 5
      %v5474 = vsel %vm3700, %v5473, %v5472
      %v5475 = vrot.slane %v3501, 4
      %v5476 = vsel %vm3703, %v5475, %v5474
      %v5477 = vrot.slane %v3502, 3
      %v5478 = vsel %vm3706, %v5477, %v5476
      %v5479 = vrot.slane %v3503, 2
      %v5480 = vsel %vm3709, %v5479, %v5478
      %v5481 = vrot.slane %v3504, 1
      %v5482 = vsel %vm3712, %v5481, %v5480
      %v5483 = vsel %vm3715, %v3505, %v5482
      %v5484 = vrot.slane %v3506, 7
      %v5485 = vsel %vm3718, %v5484, %v5483
      %v5486 = vrot.slane %v3507, 6
      %v5487 = vrot.slane %v3508, 5
      %v5488 = vsel %vm3700, %v5487, %v5486
      %v5489 = vrot.slane %v3509, 4
      %v5490 = vsel %vm3703, %v5489, %v5488
      %v5491 = vrot.slane %v3510, 3
      %v5492 = vsel %vm3706, %v5491, %v5490
      %v5493 = vrot.slane %v3511, 2
      %v5494 = vsel %vm3709, %v5493, %v5492
      %v5495 = vrot.slane %v3512, 1
      %v5496 = vsel %vm3712, %v5495, %v5494
      %v5497 = vsel %vm3715, %v3513, %v5496
      %v5498 = vrot.slane %v3514, 7
      %v5499 = vsel %vm3718, %v5498, %v5497
      %v5500 = vrot.slane %v3515, 6
      %v5501 = vrot.slane %v3516, 5
      %v5502 = vsel %vm3700, %v5501, %v5500
      %v5503 = vrot.slane %v3517, 4
      %v5504 = vsel %vm3703, %v5503, %v5502
      %v5505 = vrot.slane %v3518, 3
      %v5506 = vsel %vm3706, %v5505, %v5504
      %v5507 = vrot.slane %v3519, 2
      %v5508 = vsel %vm3709, %v5507, %v5506
      %v5509 = vrot.slane %v3520, 1
      %v5510 = vsel %vm3712, %v5509, %v5508
      %v5511 = vsel %vm3715, %v3521, %v5510
      %v5512 = vrot.slane %v3522, 7
      %v5513 = vsel %vm3718, %v5512, %v5511
      %v5514 = vrot.slane %v3523, 6
      %v5515 = vrot.slane %v3524, 5
      %v5516 = vsel %vm3700, %v5515, %v5514
      %v5517 = vrot.slane %v3525, 4
      %v5518 = vsel %vm3703, %v5517, %v5516
      %v5519 = vrot.slane %v3526, 3
      %v5520 = vsel %vm3706, %v5519, %v5518
      %v5521 = vrot.slane %v3527, 2
      %v5522 = vsel %vm3709, %v5521, %v5520
      %v5523 = vrot.slane %v3528, 1
      %v5524 = vsel %vm3712, %v5523, %v5522
      %v5525 = vsel %vm3715, %v3529, %v5524
      %v5526 = vrot.slane %v3530, 7
      %v5527 = vsel %vm3718, %v5526, %v5525
      %v5528 = vrot.slane %v3531, 6
      %v5529 = vrot.slane %v3532, 5
      %v5530 = vsel %vm3700, %v5529, %v5528
      %v5531 = vrot.slane %v3533, 4
      %v5532 = vsel %vm3703, %v5531, %v5530
      %v5533 = vrot.slane %v3534, 3
      %v5534 = vsel %vm3706, %v5533, %v5532
      %v5535 = vrot.slane %v3535, 2
      %v5536 = vsel %vm3709, %v5535, %v5534
      %v5537 = vrot.slane %v3536, 1
      %v5538 = vsel %vm3712, %v5537, %v5536
      %v5539 = vsel %vm3715, %v3537, %v5538
      %v5540 = vrot.slane %v3538, 7
      %v5541 = vsel %vm3718, %v5540, %v5539
      %v5542 = vrot.slane %v3539, 6
      %v5543 = vrot.slane %v3540, 5
      %v5544 = vsel %vm3700, %v5543, %v5542
      %v5545 = vrot.slane %v3541, 4
      %v5546 = vsel %vm3703, %v5545, %v5544
      %v5547 = vrot.slane %v3542, 3
      %v5548 = vsel %vm3706, %v5547, %v5546
      %v5549 = vrot.slane %v3543, 2
      %v5550 = vsel %vm3709, %v5549, %v5548
      %v5551 = vrot.slane %v3544, 1
      %v5552 = vsel %vm3712, %v5551, %v5550
      %v5553 = vsel %vm3715, %v3545, %v5552
      %v5554 = vrot.slane %v3546, 7
      %v5555 = vsel %vm3718, %v5554, %v5553
      %v5556 = vrot.slane %v3547, 6
      %v5557 = vrot.slane %v3548, 5
      %v5558 = vsel %vm3700, %v5557, %v5556
      %v5559 = vrot.slane %v3549, 4
      %v5560 = vsel %vm3703, %v5559, %v5558
      %v5561 = vrot.slane %v3550, 3
      %v5562 = vsel %vm3706, %v5561, %v5560
      %v5563 = vrot.slane %v3551, 2
      %v5564 = vsel %vm3709, %v5563, %v5562
      %v5565 = vrot.slane %v3552, 1
      %v5566 = vsel %vm3712, %v5565, %v5564
      %v5567 = vsel %vm3715, %v3553, %v5566
      %v5568 = vrot.slane %v3554, 7
      %v5569 = vsel %vm3718, %v5568, %v5567
      %v5570 = vrot.slane %v3555, 6
      %v5571 = vrot.slane %v3556, 5
      %v5572 = vsel %vm3700, %v5571, %v5570
      %v5573 = vrot.slane %v3557, 4
      %v5574 = vsel %vm3703, %v5573, %v5572
      %v5575 = vrot.slane %v3558, 3
      %v5576 = vsel %vm3706, %v5575, %v5574
      %v5577 = vrot.slane %v3559, 2
      %v5578 = vsel %vm3709, %v5577, %v5576
      %v5579 = vrot.slane %v3560, 1
      %v5580 = vsel %vm3712, %v5579, %v5578
      %v5581 = vsel %vm3715, %v3561, %v5580
      %v5582 = vrot.slane %v3562, 7
      %v5583 = vsel %vm3718, %v5582, %v5581
      %v5584 = vrot.slane %v3563, 6
      %v5585 = vrot.slane %v3564, 5
      %v5586 = vsel %vm3700, %v5585, %v5584
      %v5587 = vrot.slane %v3565, 4
      %v5588 = vsel %vm3703, %v5587, %v5586
      %v5589 = vrot.slane %v3566, 3
      %v5590 = vsel %vm3706, %v5589, %v5588
      %v5591 = vrot.slane %v3567, 2
      %v5592 = vsel %vm3709, %v5591, %v5590
      %v5593 = vrot.slane %v3568, 1
      %v5594 = vsel %vm3712, %v5593, %v5592
      %v5595 = vsel %vm3715, %v3569, %v5594
      %v5596 = vrot.slane %v3570, 7
      %v5597 = vsel %vm3718, %v5596, %v5595
      %5598 = vrot.lane.b32.xlu0 %v5387, 64
      %v5599 = vpop.permute.xlu0 %5598
      %5600 = vrot.lane.b32.xlu0 %v5401, 64
      %v5601 = vpop.permute.xlu0 %5600
      %5602 = vrot.lane.b32.xlu0 %v5415, 64
      %v5603 = vpop.permute.xlu0 %5602
      %5604 = vrot.lane.b32.xlu0 %v5429, 64
      %v5605 = vpop.permute.xlu0 %5604
      %5606 = vrot.lane.b32.xlu0 %v5443, 64
      %v5607 = vpop.permute.xlu0 %5606
      %5608 = vrot.lane.b32.xlu0 %v5457, 64
      %v5609 = vpop.permute.xlu0 %5608
      %5610 = vrot.lane.b32.xlu0 %v5471, 64
      %v5611 = vpop.permute.xlu0 %5610
      %5612 = vrot.lane.b32.xlu0 %v5485, 64
      %v5613 = vpop.permute.xlu0 %5612
      %5614 = vrot.lane.b32.xlu0 %v5499, 64
      %v5615 = vpop.permute.xlu0 %5614
      %5616 = vrot.lane.b32.xlu0 %v5513, 64
      %v5617 = vpop.permute.xlu0 %5616
      %5618 = vrot.lane.b32.xlu0 %v5527, 64
      %v5619 = vpop.permute.xlu0 %5618
      %5620 = vrot.lane.b32.xlu0 %v5541, 64
      %v5621 = vpop.permute.xlu0 %5620
      %5622 = vrot.lane.b32.xlu0 %v5555, 64
      %v5623 = vpop.permute.xlu0 %5622
      %5624 = vrot.lane.b32.xlu0 %v5569, 64
      %v5625 = vpop.permute.xlu0 %5624
      %5626 = vrot.lane.b32.xlu0 %v5583, 64
      %v5627 = vpop.permute.xlu0 %5626
      %5628 = vrot.lane.b32.xlu0 %v5597, 64
      %v5629 = vpop.permute.xlu0 %5628
      %5646 = vst.msk [vmem:[#allocation3 + $0x8] sm:$0xff] %vm4524, %v5599
      %5647 = vst.msk [vmem:[#allocation3 + $0x18] sm:$0xff] %vm4524, %v5601
      %5648 = vst.msk [vmem:[#allocation3 + $0x28] sm:$0xff] %vm4524, %v5603
      %5649 = vst.msk [vmem:[#allocation3 + $0x38] sm:$0xff] %vm4524, %v5605
      %5650 = vst.msk [vmem:[#allocation3 + $0x48] sm:$0xff] %vm4524, %v5607
      %5651 = vst.msk [vmem:[#allocation3 + $0x58] sm:$0xff] %vm4524, %v5609
      %5652 = vst.msk [vmem:[#allocation3 + $0x68] sm:$0xff] %vm4524, %v5611
      %5653 = vst.msk [vmem:[#allocation3 + $0x78] sm:$0xff] %vm4524, %v5613
      %5654 = vst.msk [vmem:[#allocation3 + $0x88] sm:$0xff] %vm4524, %v5615
      %5655 = vst.msk [vmem:[#allocation3 + $0x98] sm:$0xff] %vm4524, %v5617
      %5656 = vst.msk [vmem:[#allocation3 + $0xa8] sm:$0xff] %vm4524, %v5619
      %5657 = vst.msk [vmem:[#allocation3 + $0xb8] sm:$0xff] %vm4524, %v5621
      %5658 = vst.msk [vmem:[#allocation3 + $0xc8] sm:$0xff] %vm4524, %v5623
      %5659 = vst.msk [vmem:[#allocation3 + $0xd8] sm:$0xff] %vm4524, %v5625
      %5660 = vst.msk [vmem:[#allocation3 + $0xe8] sm:$0xff] %vm4524, %v5627
      %5661 = vst.msk [vmem:[#allocation3 + $0xf8] sm:$0xff] %vm4524, %v5629
      %v5662 = vrot.slane %v3443, 7
      %v5663 = vrot.slane %v3444, 6
      %v5664 = vsel %vm3700, %v5663, %v5662
      %v5665 = vrot.slane %v3445, 5
      %v5666 = vsel %vm3703, %v5665, %v5664
      %v5667 = vrot.slane %v3446, 4
      %v5668 = vsel %vm3706, %v5667, %v5666
      %v5669 = vrot.slane %v3447, 3
      %v5670 = vsel %vm3709, %v5669, %v5668
      %v5671 = vrot.slane %v3448, 2
      %v5672 = vsel %vm3712, %v5671, %v5670
      %v5673 = vrot.slane %v3449, 1
      %v5674 = vsel %vm3715, %v5673, %v5672
      %v5675 = vsel %vm3718, %v3450, %v5674
      %v5676 = vrot.slane %v3451, 7
      %v5677 = vrot.slane %v3452, 6
      %v5678 = vsel %vm3700, %v5677, %v5676
      %v5679 = vrot.slane %v3453, 5
      %v5680 = vsel %vm3703, %v5679, %v5678
      %v5681 = vrot.slane %v3454, 4
      %v5682 = vsel %vm3706, %v5681, %v5680
      %v5683 = vrot.slane %v3455, 3
      %v5684 = vsel %vm3709, %v5683, %v5682
      %v5685 = vrot.slane %v3456, 2
      %v5686 = vsel %vm3712, %v5685, %v5684
      %v5687 = vrot.slane %v3457, 1
      %v5688 = vsel %vm3715, %v5687, %v5686
      %v5689 = vsel %vm3718, %v3458, %v5688
      %v5690 = vrot.slane %v3459, 7
      %v5691 = vrot.slane %v3460, 6
      %v5692 = vsel %vm3700, %v5691, %v5690
      %v5693 = vrot.slane %v3461, 5
      %v5694 = vsel %vm3703, %v5693, %v5692
      %v5695 = vrot.slane %v3462, 4
      %v5696 = vsel %vm3706, %v5695, %v5694
      %v5697 = vrot.slane %v3463, 3
      %v5698 = vsel %vm3709, %v5697, %v5696
      %v5699 = vrot.slane %v3464, 2
      %v5700 = vsel %vm3712, %v5699, %v5698
      %v5701 = vrot.slane %v3465, 1
      %v5702 = vsel %vm3715, %v5701, %v5700
      %v5703 = vsel %vm3718, %v3466, %v5702
      %v5704 = vrot.slane %v3467, 7
      %v5705 = vrot.slane %v3468, 6
      %v5706 = vsel %vm3700, %v5705, %v5704
      %v5707 = vrot.slane %v3469, 5
      %v5708 = vsel %vm3703, %v5707, %v5706
      %v5709 = vrot.slane %v3470, 4
      %v5710 = vsel %vm3706, %v5709, %v5708
      %v5711 = vrot.slane %v3471, 3
      %v5712 = vsel %vm3709, %v5711, %v5710
      %v5713 = vrot.slane %v3472, 2
      %v5714 = vsel %vm3712, %v5713, %v5712
      %v5715 = vrot.slane %v3473, 1
      %v5716 = vsel %vm3715, %v5715, %v5714
      %v5717 = vsel %vm3718, %v3474, %v5716
      %v5718 = vrot.slane %v3475, 7
      %v5719 = vrot.slane %v3476, 6
      %v5720 = vsel %vm3700, %v5719, %v5718
      %v5721 = vrot.slane %v3477, 5
      %v5722 = vsel %vm3703, %v5721, %v5720
      %v5723 = vrot.slane %v3478, 4
      %v5724 = vsel %vm3706, %v5723, %v5722
      %v5725 = vrot.slane %v3479, 3
      %v5726 = vsel %vm3709, %v5725, %v5724
      %v5727 = vrot.slane %v3480, 2
      %v5728 = vsel %vm3712, %v5727, %v5726
      %v5729 = vrot.slane %v3481, 1
      %v5730 = vsel %vm3715, %v5729, %v5728
      %v5731 = vsel %vm3718, %v3482, %v5730
      %v5732 = vrot.slane %v3483, 7
      %v5733 = vrot.slane %v3484, 6
      %v5734 = vsel %vm3700, %v5733, %v5732
      %v5735 = vrot.slane %v3485, 5
      %v5736 = vsel %vm3703, %v5735, %v5734
      %v5737 = vrot.slane %v3486, 4
      %v5738 = vsel %vm3706, %v5737, %v5736
      %v5739 = vrot.slane %v3487, 3
      %v5740 = vsel %vm3709, %v5739, %v5738
      %v5741 = vrot.slane %v3488, 2
      %v5742 = vsel %vm3712, %v5741, %v5740
      %v5743 = vrot.slane %v3489, 1
      %v5744 = vsel %vm3715, %v5743, %v5742
      %v5745 = vsel %vm3718, %v3490, %v5744
      %v5746 = vrot.slane %v3491, 7
      %v5747 = vrot.slane %v3492, 6
      %v5748 = vsel %vm3700, %v5747, %v5746
      %v5749 = vrot.slane %v3493, 5
      %v5750 = vsel %vm3703, %v5749, %v5748
      %v5751 = vrot.slane %v3494, 4
      %v5752 = vsel %vm3706, %v5751, %v5750
      %v5753 = vrot.slane %v3495, 3
      %v5754 = vsel %vm3709, %v5753, %v5752
      %v5755 = vrot.slane %v3496, 2
      %v5756 = vsel %vm3712, %v5755, %v5754
      %v5757 = vrot.slane %v3497, 1
      %v5758 = vsel %vm3715, %v5757, %v5756
      %v5759 = vsel %vm3718, %v3498, %v5758
      %v5760 = vrot.slane %v3499, 7
      %v5761 = vrot.slane %v3500, 6
      %v5762 = vsel %vm3700, %v5761, %v5760
      %v5763 = vrot.slane %v3501, 5
      %v5764 = vsel %vm3703, %v5763, %v5762
      %v5765 = vrot.slane %v3502, 4
      %v5766 = vsel %vm3706, %v5765, %v5764
      %v5767 = vrot.slane %v3503, 3
      %v5768 = vsel %vm3709, %v5767, %v5766
      %v5769 = vrot.slane %v3504, 2
      %v5770 = vsel %vm3712, %v5769, %v5768
      %v5771 = vrot.slane %v3505, 1
      %v5772 = vsel %vm3715, %v5771, %v5770
      %v5773 = vsel %vm3718, %v3506, %v5772
      %v5774 = vrot.slane %v3507, 7
      %v5775 = vrot.slane %v3508, 6
      %v5776 = vsel %vm3700, %v5775, %v5774
      %v5777 = vrot.slane %v3509, 5
      %v5778 = vsel %vm3703, %v5777, %v5776
      %v5779 = vrot.slane %v3510, 4
      %v5780 = vsel %vm3706, %v5779, %v5778
      %v5781 = vrot.slane %v3511, 3
      %v5782 = vsel %vm3709, %v5781, %v5780
      %v5783 = vrot.slane %v3512, 2
      %v5784 = vsel %vm3712, %v5783, %v5782
      %v5785 = vrot.slane %v3513, 1
      %v5786 = vsel %vm3715, %v5785, %v5784
      %v5787 = vsel %vm3718, %v3514, %v5786
      %v5788 = vrot.slane %v3515, 7
      %v5789 = vrot.slane %v3516, 6
      %v5790 = vsel %vm3700, %v5789, %v5788
      %v5791 = vrot.slane %v3517, 5
      %v5792 = vsel %vm3703, %v5791, %v5790
      %v5793 = vrot.slane %v3518, 4
      %v5794 = vsel %vm3706, %v5793, %v5792
      %v5795 = vrot.slane %v3519, 3
      %v5796 = vsel %vm3709, %v5795, %v5794
      %v5797 = vrot.slane %v3520, 2
      %v5798 = vsel %vm3712, %v5797, %v5796
      %v5799 = vrot.slane %v3521, 1
      %v5800 = vsel %vm3715, %v5799, %v5798
      %v5801 = vsel %vm3718, %v3522, %v5800
      %v5802 = vrot.slane %v3523, 7
      %v5803 = vrot.slane %v3524, 6
      %v5804 = vsel %vm3700, %v5803, %v5802
      %v5805 = vrot.slane %v3525, 5
      %v5806 = vsel %vm3703, %v5805, %v5804
      %v5807 = vrot.slane %v3526, 4
      %v5808 = vsel %vm3706, %v5807, %v5806
      %v5809 = vrot.slane %v3527, 3
      %v5810 = vsel %vm3709, %v5809, %v5808
      %v5811 = vrot.slane %v3528, 2
      %v5812 = vsel %vm3712, %v5811, %v5810
      %v5813 = vrot.slane %v3529, 1
      %v5814 = vsel %vm3715, %v5813, %v5812
      %v5815 = vsel %vm3718, %v3530, %v5814
      %v5816 = vrot.slane %v3531, 7
      %v5817 = vrot.slane %v3532, 6
      %v5818 = vsel %vm3700, %v5817, %v5816
      %v5819 = vrot.slane %v3533, 5
      %v5820 = vsel %vm3703, %v5819, %v5818
      %v5821 = vrot.slane %v3534, 4
      %v5822 = vsel %vm3706, %v5821, %v5820
      %v5823 = vrot.slane %v3535, 3
      %v5824 = vsel %vm3709, %v5823, %v5822
      %v5825 = vrot.slane %v3536, 2
      %v5826 = vsel %vm3712, %v5825, %v5824
      %v5827 = vrot.slane %v3537, 1
      %v5828 = vsel %vm3715, %v5827, %v5826
      %v5829 = vsel %vm3718, %v3538, %v5828
      %v5830 = vrot.slane %v3539, 7
      %v5831 = vrot.slane %v3540, 6
      %v5832 = vsel %vm3700, %v5831, %v5830
      %v5833 = vrot.slane %v3541, 5
      %v5834 = vsel %vm3703, %v5833, %v5832
      %v5835 = vrot.slane %v3542, 4
      %v5836 = vsel %vm3706, %v5835, %v5834
      %v5837 = vrot.slane %v3543, 3
      %v5838 = vsel %vm3709, %v5837, %v5836
      %v5839 = vrot.slane %v3544, 2
      %v5840 = vsel %vm3712, %v5839, %v5838
      %v5841 = vrot.slane %v3545, 1
      %v5842 = vsel %vm3715, %v5841, %v5840
      %v5843 = vsel %vm3718, %v3546, %v5842
      %v5844 = vrot.slane %v3547, 7
      %v5845 = vrot.slane %v3548, 6
      %v5846 = vsel %vm3700, %v5845, %v5844
      %v5847 = vrot.slane %v3549, 5
      %v5848 = vsel %vm3703, %v5847, %v5846
      %v5849 = vrot.slane %v3550, 4
      %v5850 = vsel %vm3706, %v5849, %v5848
      %v5851 = vrot.slane %v3551, 3
      %v5852 = vsel %vm3709, %v5851, %v5850
      %v5853 = vrot.slane %v3552, 2
      %v5854 = vsel %vm3712, %v5853, %v5852
      %v5855 = vrot.slane %v3553, 1
      %v5856 = vsel %vm3715, %v5855, %v5854
      %v5857 = vsel %vm3718, %v3554, %v5856
      %v5858 = vrot.slane %v3555, 7
      %v5859 = vrot.slane %v3556, 6
      %v5860 = vsel %vm3700, %v5859, %v5858
      %v5861 = vrot.slane %v3557, 5
      %v5862 = vsel %vm3703, %v5861, %v5860
      %v5863 = vrot.slane %v3558, 4
      %v5864 = vsel %vm3706, %v5863, %v5862
      %v5865 = vrot.slane %v3559, 3
      %v5866 = vsel %vm3709, %v5865, %v5864
      %v5867 = vrot.slane %v3560, 2
      %v5868 = vsel %vm3712, %v5867, %v5866
      %v5869 = vrot.slane %v3561, 1
      %v5870 = vsel %vm3715, %v5869, %v5868
      %v5871 = vsel %vm3718, %v3562, %v5870
      %v5872 = vrot.slane %v3563, 7
      %v5873 = vrot.slane %v3564, 6
      %v5874 = vsel %vm3700, %v5873, %v5872
      %v5875 = vrot.slane %v3565, 5
      %v5876 = vsel %vm3703, %v5875, %v5874
      %v5877 = vrot.slane %v3566, 4
      %v5878 = vsel %vm3706, %v5877, %v5876
      %v5879 = vrot.slane %v3567, 3
      %v5880 = vsel %vm3709, %v5879, %v5878
      %v5881 = vrot.slane %v3568, 2
      %v5882 = vsel %vm3712, %v5881, %v5880
      %v5883 = vrot.slane %v3569, 1
      %v5884 = vsel %vm3715, %v5883, %v5882
      %v5885 = vsel %vm3718, %v3570, %v5884
      %5886 = vrot.lane.b32.xlu0 %v5675, 96
      %v5887 = vpop.permute.xlu0 %5886
      %5888 = vrot.lane.b32.xlu0 %v5689, 96
      %v5889 = vpop.permute.xlu0 %5888
      %5890 = vrot.lane.b32.xlu0 %v5703, 96
      %v5891 = vpop.permute.xlu0 %5890
      %5892 = vrot.lane.b32.xlu0 %v5717, 96
      %v5893 = vpop.permute.xlu0 %5892
      %5894 = vrot.lane.b32.xlu0 %v5731, 96
      %v5895 = vpop.permute.xlu0 %5894
      %5896 = vrot.lane.b32.xlu0 %v5745, 96
      %v5897 = vpop.permute.xlu0 %5896
      %5898 = vrot.lane.b32.xlu0 %v5759, 96
      %v5899 = vpop.permute.xlu0 %5898
      %5900 = vrot.lane.b32.xlu0 %v5773, 96
      %v5901 = vpop.permute.xlu0 %5900
      %5902 = vrot.lane.b32.xlu0 %v5787, 96
      %v5903 = vpop.permute.xlu0 %5902
      %5904 = vrot.lane.b32.xlu0 %v5801, 96
      %v5905 = vpop.permute.xlu0 %5904
      %5906 = vrot.lane.b32.xlu0 %v5815, 96
      %v5907 = vpop.permute.xlu0 %5906
      %5908 = vrot.lane.b32.xlu0 %v5829, 96
      %v5909 = vpop.permute.xlu0 %5908
      %5910 = vrot.lane.b32.xlu0 %v5843, 96
      %v5911 = vpop.permute.xlu0 %5910
      %5912 = vrot.lane.b32.xlu0 %v5857, 96
      %v5913 = vpop.permute.xlu0 %5912
      %5914 = vrot.lane.b32.xlu0 %v5871, 96
      %v5915 = vpop.permute.xlu0 %5914
      %5916 = vrot.lane.b32.xlu0 %v5885, 96
      %v5917 = vpop.permute.xlu0 %5916
      %5934 = vst.msk [vmem:[#allocation3 + $0x8] sm:$0xff] %vm4813, %v5887
      %5935 = vst.msk [vmem:[#allocation3 + $0x18] sm:$0xff] %vm4813, %v5889
      %5936 = vst.msk [vmem:[#allocation3 + $0x28] sm:$0xff] %vm4813, %v5891
      %5937 = vst.msk [vmem:[#allocation3 + $0x38] sm:$0xff] %vm4813, %v5893
      %5938 = vst.msk [vmem:[#allocation3 + $0x48] sm:$0xff] %vm4813, %v5895
      %5939 = vst.msk [vmem:[#allocation3 + $0x58] sm:$0xff] %vm4813, %v5897
      %5940 = vst.msk [vmem:[#allocation3 + $0x68] sm:$0xff] %vm4813, %v5899
      %5941 = vst.msk [vmem:[#allocation3 + $0x78] sm:$0xff] %vm4813, %v5901
      %5942 = vst.msk [vmem:[#allocation3 + $0x88] sm:$0xff] %vm4813, %v5903
      %5943 = vst.msk [vmem:[#allocation3 + $0x98] sm:$0xff] %vm4813, %v5905
      %5944 = vst.msk [vmem:[#allocation3 + $0xa8] sm:$0xff] %vm4813, %v5907
      %5945 = vst.msk [vmem:[#allocation3 + $0xb8] sm:$0xff] %vm4813, %v5909
      %5946 = vst.msk [vmem:[#allocation3 + $0xc8] sm:$0xff] %vm4813, %v5911
      %5947 = vst.msk [vmem:[#allocation3 + $0xd8] sm:$0xff] %vm4813, %v5913
      %5948 = vst.msk [vmem:[#allocation3 + $0xe8] sm:$0xff] %vm4813, %v5915
      %5949 = vst.msk [vmem:[#allocation3 + $0xf8] sm:$0xff] %vm4813, %v5917
      %v5950 = vld [vmem:[#allocation3] ss:$8 sm:$0x3]
      %s5951 = scalar_lea.vmem [#allocation3], 16
      %v5952 = vld [vmem:[%s5951] ss:$8 sm:$0x3]
      %s5953 = scalar_lea.vmem [#allocation3], 32
      %v5954 = vld [vmem:[%s5953] ss:$8 sm:$0x3]
      %s5955 = scalar_lea.vmem [#allocation3], 48
      %v5956 = vld [vmem:[%s5955] ss:$8 sm:$0x3]
      %s5957 = scalar_lea.vmem [#allocation3], 64
      %v5958 = vld [vmem:[%s5957] ss:$8 sm:$0x3]
      %s5959 = scalar_lea.vmem [#allocation3], 80
      %v5960 = vld [vmem:[%s5959] ss:$8 sm:$0x3]
      %s5961 = scalar_lea.vmem [#allocation3], 96
      %v5962 = vld [vmem:[%s5961] ss:$8 sm:$0x3]
      %s5963 = scalar_lea.vmem [#allocation3], 112
      %v5964 = vld [vmem:[%s5963] ss:$8 sm:$0x3]
      %s5965 = scalar_lea.vmem [#allocation3], 128
      %v5966 = vld [vmem:[%s5965] ss:$8 sm:$0x3]
      %s5967 = scalar_lea.vmem [#allocation3], 144
      %v5968 = vld [vmem:[%s5967] ss:$8 sm:$0x3]
      %s5969 = scalar_lea.vmem [#allocation3], 160
      %v5970 = vld [vmem:[%s5969] ss:$8 sm:$0x3]
      %s5971 = scalar_lea.vmem [#allocation3], 176
      %v5972 = vld [vmem:[%s5971] ss:$8 sm:$0x3]
      %s5973 = scalar_lea.vmem [#allocation3], 192
      %v5974 = vld [vmem:[%s5973] ss:$8 sm:$0x3]
      %s5975 = scalar_lea.vmem [#allocation3], 208
      %v5976 = vld [vmem:[%s5975] ss:$8 sm:$0x3]
      %s5977 = scalar_lea.vmem [#allocation3], 224
      %v5978 = vld [vmem:[%s5977] ss:$8 sm:$0x3]
      %s5979 = scalar_lea.vmem [#allocation3], 240
      %v5980 = vld [vmem:[%s5979] ss:$8 sm:$0x3]
      %v5997 = vcombine.low %v5950, %v5952
      %v5998 = vcombine.low %v5954, %v5956
      %v5999 = vcombine.low %v5958, %v5960
      %v6000 = vcombine.low %v5962, %v5964
      %v6002 = vunpack.c.l.s4 1966171168
      %v6003 = vunpack.c.0.s8 %v6002
      %v6004 = vlaneseq
      %v6005 = vshrl.u32 %v6004, 7
      %v6006 = vsub.s32 %v6003, %v6005
      %v6007 = vrot.slane %v5997, %v6006
      %v6009 = vunpack.c.l.s4 1966171168
      %v6010 = vunpack.c.0.s8 %v6009
      %v6011 = vlaneseq
      %v6012 = vshrl.u32 %v6011, 7
      %v6013 = vsub.s32 %v6010, %v6012
      %v6014 = vrot.slane %v5998, %v6013
      %v6016 = vunpack.c.l.s4 1966171168
      %v6017 = vunpack.c.0.s8 %v6016
      %v6018 = vlaneseq
      %v6019 = vshrl.u32 %v6018, 7
      %v6020 = vsub.s32 %v6017, %v6019
      %v6021 = vrot.slane %v5999, %v6020
      %v6023 = vunpack.c.l.s4 1966171168
      %v6024 = vunpack.c.0.s8 %v6023
      %v6025 = vlaneseq
      %v6026 = vshrl.u32 %v6025, 7
      %v6027 = vsub.s32 %v6024, %v6026
      %v6028 = vrot.slane %v6000, %v6027
      %v6029 = vcombine.low %v6007, %v6014
      %v6030 = vcombine.low %v6021, %v6028
      %v6032 = vunpack.c.l.s4 1966171168
      %v6033 = vunpack.c.0.s8 %v6032
      %v6034 = vlaneseq
      %v6035 = vshrl.u32 %v6034, 7
      %v6036 = vsub.s32 %v6033, %v6035
      %v6037 = vrot.slane %v6029, %v6036
      %v6039 = vunpack.c.l.s4 1966171168
      %v6040 = vunpack.c.0.s8 %v6039
      %v6041 = vlaneseq
      %v6042 = vshrl.u32 %v6041, 7
      %v6043 = vsub.s32 %v6040, %v6042
      %v6044 = vrot.slane %v6030, %v6043
      %v6045 = vcombine.low %v6037, %v6044
      %v6046 = vcombine.low %v5966, %v5968
      %v6047 = vcombine.low %v5970, %v5972
      %v6048 = vcombine.low %v5974, %v5976
      %v6049 = vcombine.low %v5978, %v5980
      %v6051 = vunpack.c.l.s4 1966171168
      %v6052 = vunpack.c.0.s8 %v6051
      %v6053 = vlaneseq
      %v6054 = vshrl.u32 %v6053, 7
      %v6055 = vsub.s32 %v6052, %v6054
      %v6056 = vrot.slane %v6046, %v6055
      %v6058 = vunpack.c.l.s4 1966171168
      %v6059 = vunpack.c.0.s8 %v6058
      %v6060 = vlaneseq
      %v6061 = vshrl.u32 %v6060, 7
      %v6062 = vsub.s32 %v6059, %v6061
      %v6063 = vrot.slane %v6047, %v6062
      %v6065 = vunpack.c.l.s4 1966171168
      %v6066 = vunpack.c.0.s8 %v6065
      %v6067 = vlaneseq
      %v6068 = vshrl.u32 %v6067, 7
      %v6069 = vsub.s32 %v6066, %v6068
      %v6070 = vrot.slane %v6048, %v6069
      %v6072 = vunpack.c.l.s4 1966171168
      %v6073 = vunpack.c.0.s8 %v6072
      %v6074 = vlaneseq
      %v6075 = vshrl.u32 %v6074, 7
      %v6076 = vsub.s32 %v6073, %v6075
      %v6077 = vrot.slane %v6049, %v6076
      %v6078 = vcombine.low %v6056, %v6063
      %v6079 = vcombine.low %v6070, %v6077
      %v6081 = vunpack.c.l.s4 1966171168
      %v6082 = vunpack.c.0.s8 %v6081
      %v6083 = vlaneseq
      %v6084 = vshrl.u32 %v6083, 7
      %v6085 = vsub.s32 %v6082, %v6084
      %v6086 = vrot.slane %v6078, %v6085
      %v6088 = vunpack.c.l.s4 1966171168
      %v6089 = vunpack.c.0.s8 %v6088
      %v6090 = vlaneseq
      %v6091 = vshrl.u32 %v6090, 7
      %v6092 = vsub.s32 %v6089, %v6091
      %v6093 = vrot.slane %v6079, %v6092
      %v6094 = vcombine.low %v6086, %v6093
      %6097 = vst [vmem:[#allocation4] sm:$0xff] %v6045
      %6098 = vst [vmem:[#allocation4 + $0x20] sm:$0xff] %v6094
      %v6099 = vcombine.high %v6007, %v6014
      %v6100 = vcombine.high %v6021, %v6028
      %v6102 = vunpack.c.l.s4 1966171168
      %v6103 = vunpack.c.0.s8 %v6102
      %v6104 = vlaneseq
      %v6105 = vshrl.u32 %v6104, 7
      %v6106 = vsub.s32 %v6103, %v6105
      %v6107 = vrot.slane %v6099, %v6106
      %v6109 = vunpack.c.l.s4 1966171168
      %v6110 = vunpack.c.0.s8 %v6109
      %v6111 = vlaneseq
      %v6112 = vshrl.u32 %v6111, 7
      %v6113 = vsub.s32 %v6110, %v6112
      %v6114 = vrot.slane %v6100, %v6113
      %v6115 = vcombine.low %v6107, %v6114
      %v6116 = vcombine.high %v6056, %v6063
      %v6117 = vcombine.high %v6070, %v6077
      %v6119 = vunpack.c.l.s4 1966171168
      %v6120 = vunpack.c.0.s8 %v6119
      %v6121 = vlaneseq
      %v6122 = vshrl.u32 %v6121, 7
      %v6123 = vsub.s32 %v6120, %v6122
      %v6124 = vrot.slane %v6116, %v6123
      %v6126 = vunpack.c.l.s4 1966171168
      %v6127 = vunpack.c.0.s8 %v6126
      %v6128 = vlaneseq
      %v6129 = vshrl.u32 %v6128, 7
      %v6130 = vsub.s32 %v6127, %v6129
      %v6131 = vrot.slane %v6117, %v6130
      %v6132 = vcombine.low %v6124, %v6131
      %6133 = vrot.lane.b32.xlu0 %v6045, 64
      %v6134 = vpop.permute.xlu0 %6133
      %6135 = vrot.lane.b32.xlu0 %v6115, 64
      %v6136 = vpop.permute.xlu0 %6135
      %6137 = vrot.lane.b32.xlu0 %v6094, 64
      %v6138 = vpop.permute.xlu0 %6137
      %6139 = vrot.lane.b32.xlu0 %v6132, 64
      %v6140 = vpop.permute.xlu0 %6139
      %v6141 = vsel %vm520, %v6134, %v6136
      %v6142 = vsel %vm520, %v6138, %v6140
      %6145 = vst [vmem:[#allocation4 + $0x40] sm:$0xff] %v6141
      %6146 = vst [vmem:[#allocation4 + $0x60] sm:$0xff] %v6142
      %6149 = vst [vmem:[#allocation4 + $0x80] sm:$0xff] %v6115
      %6150 = vst [vmem:[#allocation4 + $0xa0] sm:$0xff] %v6132
      %s6151 = scalar_lea.vmem [#allocation3], 1
      %v6152 = vld [vmem:[%s6151] ss:$8 sm:$0x3]
      %s6153 = scalar_lea.vmem [#allocation3], 17
      %v6154 = vld [vmem:[%s6153] ss:$8 sm:$0x3]
      %s6155 = scalar_lea.vmem [#allocation3], 33
      %v6156 = vld [vmem:[%s6155] ss:$8 sm:$0x3]
      %s6157 = scalar_lea.vmem [#allocation3], 49
      %v6158 = vld [vmem:[%s6157] ss:$8 sm:$0x3]
      %s6159 = scalar_lea.vmem [#allocation3], 65
      %v6160 = vld [vmem:[%s6159] ss:$8 sm:$0x3]
      %s6161 = scalar_lea.vmem [#allocation3], 81
      %v6162 = vld [vmem:[%s6161] ss:$8 sm:$0x3]
      %s6163 = scalar_lea.vmem [#allocation3], 97
      %v6164 = vld [vmem:[%s6163] ss:$8 sm:$0x3]
      %s6165 = scalar_lea.vmem [#allocation3], 113
      %v6166 = vld [vmem:[%s6165] ss:$8 sm:$0x3]
      %s6167 = scalar_lea.vmem [#allocation3], 129
      %v6168 = vld [vmem:[%s6167] ss:$8 sm:$0x3]
      %s6169 = scalar_lea.vmem [#allocation3], 145
      %v6170 = vld [vmem:[%s6169] ss:$8 sm:$0x3]
      %s6171 = scalar_lea.vmem [#allocation3], 161
      %v6172 = vld [vmem:[%s6171] ss:$8 sm:$0x3]
      %s6173 = scalar_lea.vmem [#allocation3], 177
      %v6174 = vld [vmem:[%s6173] ss:$8 sm:$0x3]
      %s6175 = scalar_lea.vmem [#allocation3], 193
      %v6176 = vld [vmem:[%s6175] ss:$8 sm:$0x3]
      %s6177 = scalar_lea.vmem [#allocation3], 209
      %v6178 = vld [vmem:[%s6177] ss:$8 sm:$0x3]
      %s6179 = scalar_lea.vmem [#allocation3], 225
      %v6180 = vld [vmem:[%s6179] ss:$8 sm:$0x3]
      %s6181 = scalar_lea.vmem [#allocation3], 241
      %v6182 = vld [vmem:[%s6181] ss:$8 sm:$0x3]
      %v6199 = vcombine.low %v6152, %v6154
      %v6200 = vcombine.low %v6156, %v6158
      %v6201 = vcombine.low %v6160, %v6162
      %v6202 = vcombine.low %v6164, %v6166
      %v6204 = vunpack.c.l.s4 1966171168
      %v6205 = vunpack.c.0.s8 %v6204
      %v6206 = vlaneseq
      %v6207 = vshrl.u32 %v6206, 7
      %v6208 = vsub.s32 %v6205, %v6207
      %v6209 = vrot.slane %v6199, %v6208
      %v6211 = vunpack.c.l.s4 1966171168
      %v6212 = vunpack.c.0.s8 %v6211
      %v6213 = vlaneseq
      %v6214 = vshrl.u32 %v6213, 7
      %v6215 = vsub.s32 %v6212, %v6214
      %v6216 = vrot.slane %v6200, %v6215
      %v6218 = vunpack.c.l.s4 1966171168
      %v6219 = vunpack.c.0.s8 %v6218
      %v6220 = vlaneseq
      %v6221 = vshrl.u32 %v6220, 7
      %v6222 = vsub.s32 %v6219, %v6221
      %v6223 = vrot.slane %v6201, %v6222
      %v6225 = vunpack.c.l.s4 1966171168
      %v6226 = vunpack.c.0.s8 %v6225
      %v6227 = vlaneseq
      %v6228 = vshrl.u32 %v6227, 7
      %v6229 = vsub.s32 %v6226, %v6228
      %v6230 = vrot.slane %v6202, %v6229
      %v6231 = vcombine.low %v6209, %v6216
      %v6232 = vcombine.low %v6223, %v6230
      %v6234 = vunpack.c.l.s4 1966171168
      %v6235 = vunpack.c.0.s8 %v6234
      %v6236 = vlaneseq
      %v6237 = vshrl.u32 %v6236, 7
      %v6238 = vsub.s32 %v6235, %v6237
      %v6239 = vrot.slane %v6231, %v6238
      %v6241 = vunpack.c.l.s4 1966171168
      %v6242 = vunpack.c.0.s8 %v6241
      %v6243 = vlaneseq
      %v6244 = vshrl.u32 %v6243, 7
      %v6245 = vsub.s32 %v6242, %v6244
      %v6246 = vrot.slane %v6232, %v6245
      %v6247 = vcombine.low %v6239, %v6246
      %v6248 = vcombine.low %v6168, %v6170
      %v6249 = vcombine.low %v6172, %v6174
      %v6250 = vcombine.low %v6176, %v6178
      %v6251 = vcombine.low %v6180, %v6182
      %v6253 = vunpack.c.l.s4 1966171168
      %v6254 = vunpack.c.0.s8 %v6253
      %v6255 = vlaneseq
      %v6256 = vshrl.u32 %v6255, 7
      %v6257 = vsub.s32 %v6254, %v6256
      %v6258 = vrot.slane %v6248, %v6257
      %v6260 = vunpack.c.l.s4 1966171168
      %v6261 = vunpack.c.0.s8 %v6260
      %v6262 = vlaneseq
      %v6263 = vshrl.u32 %v6262, 7
      %v6264 = vsub.s32 %v6261, %v6263
      %v6265 = vrot.slane %v6249, %v6264
      %v6267 = vunpack.c.l.s4 1966171168
      %v6268 = vunpack.c.0.s8 %v6267
      %v6269 = vlaneseq
      %v6270 = vshrl.u32 %v6269, 7
      %v6271 = vsub.s32 %v6268, %v6270
      %v6272 = vrot.slane %v6250, %v6271
      %v6274 = vunpack.c.l.s4 1966171168
      %v6275 = vunpack.c.0.s8 %v6274
      %v6276 = vlaneseq
      %v6277 = vshrl.u32 %v6276, 7
      %v6278 = vsub.s32 %v6275, %v6277
      %v6279 = vrot.slane %v6251, %v6278
      %v6280 = vcombine.low %v6258, %v6265
      %v6281 = vcombine.low %v6272, %v6279
      %v6283 = vunpack.c.l.s4 1966171168
      %v6284 = vunpack.c.0.s8 %v6283
      %v6285 = vlaneseq
      %v6286 = vshrl.u32 %v6285, 7
      %v6287 = vsub.s32 %v6284, %v6286
      %v6288 = vrot.slane %v6280, %v6287
      %v6290 = vunpack.c.l.s4 1966171168
      %v6291 = vunpack.c.0.s8 %v6290
      %v6292 = vlaneseq
      %v6293 = vshrl.u32 %v6292, 7
      %v6294 = vsub.s32 %v6291, %v6293
      %v6295 = vrot.slane %v6281, %v6294
      %v6296 = vcombine.low %v6288, %v6295
      %6299 = vst [vmem:[#allocation4 + $0x8] sm:$0xff] %v6247
      %6300 = vst [vmem:[#allocation4 + $0x28] sm:$0xff] %v6296
      %v6301 = vcombine.high %v6209, %v6216
      %v6302 = vcombine.high %v6223, %v6230
      %v6304 = vunpack.c.l.s4 1966171168
      %v6305 = vunpack.c.0.s8 %v6304
      %v6306 = vlaneseq
      %v6307 = vshrl.u32 %v6306, 7
      %v6308 = vsub.s32 %v6305, %v6307
      %v6309 = vrot.slane %v6301, %v6308
      %v6311 = vunpack.c.l.s4 1966171168
      %v6312 = vunpack.c.0.s8 %v6311
      %v6313 = vlaneseq
      %v6314 = vshrl.u32 %v6313, 7
      %v6315 = vsub.s32 %v6312, %v6314
      %v6316 = vrot.slane %v6302, %v6315
      %v6317 = vcombine.low %v6309, %v6316
      %v6318 = vcombine.high %v6258, %v6265
      %v6319 = vcombine.high %v6272, %v6279
      %v6321 = vunpack.c.l.s4 1966171168
      %v6322 = vunpack.c.0.s8 %v6321
      %v6323 = vlaneseq
      %v6324 = vshrl.u32 %v6323, 7
      %v6325 = vsub.s32 %v6322, %v6324
      %v6326 = vrot.slane %v6318, %v6325
      %v6328 = vunpack.c.l.s4 1966171168
      %v6329 = vunpack.c.0.s8 %v6328
      %v6330 = vlaneseq
      %v6331 = vshrl.u32 %v6330, 7
      %v6332 = vsub.s32 %v6329, %v6331
      %v6333 = vrot.slane %v6319, %v6332
      %v6334 = vcombine.low %v6326, %v6333
      %6335 = vrot.lane.b32.xlu0 %v6247, 64
      %v6336 = vpop.permute.xlu0 %6335
      %6337 = vrot.lane.b32.xlu0 %v6317, 64
      %v6338 = vpop.permute.xlu0 %6337
      %6339 = vrot.lane.b32.xlu0 %v6296, 64
      %v6340 = vpop.permute.xlu0 %6339
      %6341 = vrot.lane.b32.xlu0 %v6334, 64
      %v6342 = vpop.permute.xlu0 %6341
      %v6343 = vsel %vm520, %v6336, %v6338
      %v6344 = vsel %vm520, %v6340, %v6342
      %6347 = vst [vmem:[#allocation4 + $0x48] sm:$0xff] %v6343
      %6348 = vst [vmem:[#allocation4 + $0x68] sm:$0xff] %v6344
      %6351 = vst [vmem:[#allocation4 + $0x88] sm:$0xff] %v6317
      %6352 = vst [vmem:[#allocation4 + $0xa8] sm:$0xff] %v6334
      %s6353 = scalar_lea.vmem [#allocation3], 2
      %v6354 = vld [vmem:[%s6353] ss:$8 sm:$0x3]
      %s6355 = scalar_lea.vmem [#allocation3], 18
      %v6356 = vld [vmem:[%s6355] ss:$8 sm:$0x3]
      %s6357 = scalar_lea.vmem [#allocation3], 34
      %v6358 = vld [vmem:[%s6357] ss:$8 sm:$0x3]
      %s6359 = scalar_lea.vmem [#allocation3], 50
      %v6360 = vld [vmem:[%s6359] ss:$8 sm:$0x3]
      %s6361 = scalar_lea.vmem [#allocation3], 66
      %v6362 = vld [vmem:[%s6361] ss:$8 sm:$0x3]
      %s6363 = scalar_lea.vmem [#allocation3], 82
      %v6364 = vld [vmem:[%s6363] ss:$8 sm:$0x3]
      %s6365 = scalar_lea.vmem [#allocation3], 98
      %v6366 = vld [vmem:[%s6365] ss:$8 sm:$0x3]
      %s6367 = scalar_lea.vmem [#allocation3], 114
      %v6368 = vld [vmem:[%s6367] ss:$8 sm:$0x3]
      %s6369 = scalar_lea.vmem [#allocation3], 130
      %v6370 = vld [vmem:[%s6369] ss:$8 sm:$0x3]
      %s6371 = scalar_lea.vmem [#allocation3], 146
      %v6372 = vld [vmem:[%s6371] ss:$8 sm:$0x3]
      %s6373 = scalar_lea.vmem [#allocation3], 162
      %v6374 = vld [vmem:[%s6373] ss:$8 sm:$0x3]
      %s6375 = scalar_lea.vmem [#allocation3], 178
      %v6376 = vld [vmem:[%s6375] ss:$8 sm:$0x3]
      %s6377 = scalar_lea.vmem [#allocation3], 194
      %v6378 = vld [vmem:[%s6377] ss:$8 sm:$0x3]
      %s6379 = scalar_lea.vmem [#allocation3], 210
      %v6380 = vld [vmem:[%s6379] ss:$8 sm:$0x3]
      %s6381 = scalar_lea.vmem [#allocation3], 226
      %v6382 = vld [vmem:[%s6381] ss:$8 sm:$0x3]
      %s6383 = scalar_lea.vmem [#allocation3], 242
      %v6384 = vld [vmem:[%s6383] ss:$8 sm:$0x3]
      %v6401 = vcombine.low %v6354, %v6356
      %v6402 = vcombine.low %v6358, %v6360
      %v6403 = vcombine.low %v6362, %v6364
      %v6404 = vcombine.low %v6366, %v6368
      %v6406 = vunpack.c.l.s4 1966171168
      %v6407 = vunpack.c.0.s8 %v6406
      %v6408 = vlaneseq
      %v6409 = vshrl.u32 %v6408, 7
      %v6410 = vsub.s32 %v6407, %v6409
      %v6411 = vrot.slane %v6401, %v6410
      %v6413 = vunpack.c.l.s4 1966171168
      %v6414 = vunpack.c.0.s8 %v6413
      %v6415 = vlaneseq
      %v6416 = vshrl.u32 %v6415, 7
      %v6417 = vsub.s32 %v6414, %v6416
      %v6418 = vrot.slane %v6402, %v6417
      %v6420 = vunpack.c.l.s4 1966171168
      %v6421 = vunpack.c.0.s8 %v6420
      %v6422 = vlaneseq
      %v6423 = vshrl.u32 %v6422, 7
      %v6424 = vsub.s32 %v6421, %v6423
      %v6425 = vrot.slane %v6403, %v6424
      %v6427 = vunpack.c.l.s4 1966171168
      %v6428 = vunpack.c.0.s8 %v6427
      %v6429 = vlaneseq
      %v6430 = vshrl.u32 %v6429, 7
      %v6431 = vsub.s32 %v6428, %v6430
      %v6432 = vrot.slane %v6404, %v6431
      %v6433 = vcombine.low %v6411, %v6418
      %v6434 = vcombine.low %v6425, %v6432
      %v6436 = vunpack.c.l.s4 1966171168
      %v6437 = vunpack.c.0.s8 %v6436
      %v6438 = vlaneseq
      %v6439 = vshrl.u32 %v6438, 7
      %v6440 = vsub.s32 %v6437, %v6439
      %v6441 = vrot.slane %v6433, %v6440
      %v6443 = vunpack.c.l.s4 1966171168
      %v6444 = vunpack.c.0.s8 %v6443
      %v6445 = vlaneseq
      %v6446 = vshrl.u32 %v6445, 7
      %v6447 = vsub.s32 %v6444, %v6446
      %v6448 = vrot.slane %v6434, %v6447
      %v6449 = vcombine.low %v6441, %v6448
      %v6450 = vcombine.low %v6370, %v6372
      %v6451 = vcombine.low %v6374, %v6376
      %v6452 = vcombine.low %v6378, %v6380
      %v6453 = vcombine.low %v6382, %v6384
      %v6455 = vunpack.c.l.s4 1966171168
      %v6456 = vunpack.c.0.s8 %v6455
      %v6457 = vlaneseq
      %v6458 = vshrl.u32 %v6457, 7
      %v6459 = vsub.s32 %v6456, %v6458
      %v6460 = vrot.slane %v6450, %v6459
      %v6462 = vunpack.c.l.s4 1966171168
      %v6463 = vunpack.c.0.s8 %v6462
      %v6464 = vlaneseq
      %v6465 = vshrl.u32 %v6464, 7
      %v6466 = vsub.s32 %v6463, %v6465
      %v6467 = vrot.slane %v6451, %v6466
      %v6469 = vunpack.c.l.s4 1966171168
      %v6470 = vunpack.c.0.s8 %v6469
      %v6471 = vlaneseq
      %v6472 = vshrl.u32 %v6471, 7
      %v6473 = vsub.s32 %v6470, %v6472
      %v6474 = vrot.slane %v6452, %v6473
      %v6476 = vunpack.c.l.s4 1966171168
      %v6477 = vunpack.c.0.s8 %v6476
      %v6478 = vlaneseq
      %v6479 = vshrl.u32 %v6478, 7
      %v6480 = vsub.s32 %v6477, %v6479
      %v6481 = vrot.slane %v6453, %v6480
      %v6482 = vcombine.low %v6460, %v6467
      %v6483 = vcombine.low %v6474, %v6481
      %v6485 = vunpack.c.l.s4 1966171168
      %v6486 = vunpack.c.0.s8 %v6485
      %v6487 = vlaneseq
      %v6488 = vshrl.u32 %v6487, 7
      %v6489 = vsub.s32 %v6486, %v6488
      %v6490 = vrot.slane %v6482, %v6489
      %v6492 = vunpack.c.l.s4 1966171168
      %v6493 = vunpack.c.0.s8 %v6492
      %v6494 = vlaneseq
      %v6495 = vshrl.u32 %v6494, 7
      %v6496 = vsub.s32 %v6493, %v6495
      %v6497 = vrot.slane %v6483, %v6496
      %v6498 = vcombine.low %v6490, %v6497
      %6501 = vst [vmem:[#allocation4 + $0x10] sm:$0xff] %v6449
      %6502 = vst [vmem:[#allocation4 + $0x30] sm:$0xff] %v6498
      %v6503 = vcombine.high %v6411, %v6418
      %v6504 = vcombine.high %v6425, %v6432
      %v6506 = vunpack.c.l.s4 1966171168
      %v6507 = vunpack.c.0.s8 %v6506
      %v6508 = vlaneseq
      %v6509 = vshrl.u32 %v6508, 7
      %v6510 = vsub.s32 %v6507, %v6509
      %v6511 = vrot.slane %v6503, %v6510
      %v6513 = vunpack.c.l.s4 1966171168
      %v6514 = vunpack.c.0.s8 %v6513
      %v6515 = vlaneseq
      %v6516 = vshrl.u32 %v6515, 7
      %v6517 = vsub.s32 %v6514, %v6516
      %v6518 = vrot.slane %v6504, %v6517
      %v6519 = vcombine.low %v6511, %v6518
      %v6520 = vcombine.high %v6460, %v6467
      %v6521 = vcombine.high %v6474, %v6481
      %v6523 = vunpack.c.l.s4 1966171168
      %v6524 = vunpack.c.0.s8 %v6523
      %v6525 = vlaneseq
      %v6526 = vshrl.u32 %v6525, 7
      %v6527 = vsub.s32 %v6524, %v6526
      %v6528 = vrot.slane %v6520, %v6527
      %v6530 = vunpack.c.l.s4 1966171168
      %v6531 = vunpack.c.0.s8 %v6530
      %v6532 = vlaneseq
      %v6533 = vshrl.u32 %v6532, 7
      %v6534 = vsub.s32 %v6531, %v6533
      %v6535 = vrot.slane %v6521, %v6534
      %v6536 = vcombine.low %v6528, %v6535
      %6537 = vrot.lane.b32.xlu0 %v6449, 64
      %v6538 = vpop.permute.xlu0 %6537
      %6539 = vrot.lane.b32.xlu0 %v6519, 64
      %v6540 = vpop.permute.xlu0 %6539
      %6541 = vrot.lane.b32.xlu0 %v6498, 64
      %v6542 = vpop.permute.xlu0 %6541
      %6543 = vrot.lane.b32.xlu0 %v6536, 64
      %v6544 = vpop.permute.xlu0 %6543
      %v6545 = vsel %vm520, %v6538, %v6540
      %v6546 = vsel %vm520, %v6542, %v6544
      %6549 = vst [vmem:[#allocation4 + $0x50] sm:$0xff] %v6545
      %6550 = vst [vmem:[#allocation4 + $0x70] sm:$0xff] %v6546
      %6553 = vst [vmem:[#allocation4 + $0x90] sm:$0xff] %v6519
      %6554 = vst [vmem:[#allocation4 + $0xb0] sm:$0xff] %v6536
      %s6555 = scalar_lea.vmem [#allocation3], 3
      %v6556 = vld [vmem:[%s6555] ss:$8 sm:$0x3]
      %s6557 = scalar_lea.vmem [#allocation3], 19
      %v6558 = vld [vmem:[%s6557] ss:$8 sm:$0x3]
      %s6559 = scalar_lea.vmem [#allocation3], 35
      %v6560 = vld [vmem:[%s6559] ss:$8 sm:$0x3]
      %s6561 = scalar_lea.vmem [#allocation3], 51
      %v6562 = vld [vmem:[%s6561] ss:$8 sm:$0x3]
      %s6563 = scalar_lea.vmem [#allocation3], 67
      %v6564 = vld [vmem:[%s6563] ss:$8 sm:$0x3]
      %s6565 = scalar_lea.vmem [#allocation3], 83
      %v6566 = vld [vmem:[%s6565] ss:$8 sm:$0x3]
      %s6567 = scalar_lea.vmem [#allocation3], 99
      %v6568 = vld [vmem:[%s6567] ss:$8 sm:$0x3]
      %s6569 = scalar_lea.vmem [#allocation3], 115
      %v6570 = vld [vmem:[%s6569] ss:$8 sm:$0x3]
      %s6571 = scalar_lea.vmem [#allocation3], 131
      %v6572 = vld [vmem:[%s6571] ss:$8 sm:$0x3]
      %s6573 = scalar_lea.vmem [#allocation3], 147
      %v6574 = vld [vmem:[%s6573] ss:$8 sm:$0x3]
      %s6575 = scalar_lea.vmem [#allocation3], 163
      %v6576 = vld [vmem:[%s6575] ss:$8 sm:$0x3]
      %s6577 = scalar_lea.vmem [#allocation3], 179
      %v6578 = vld [vmem:[%s6577] ss:$8 sm:$0x3]
      %s6579 = scalar_lea.vmem [#allocation3], 195
      %v6580 = vld [vmem:[%s6579] ss:$8 sm:$0x3]
      %s6581 = scalar_lea.vmem [#allocation3], 211
      %v6582 = vld [vmem:[%s6581] ss:$8 sm:$0x3]
      %s6583 = scalar_lea.vmem [#allocation3], 227
      %v6584 = vld [vmem:[%s6583] ss:$8 sm:$0x3]
      %s6585 = scalar_lea.vmem [#allocation3], 243
      %v6586 = vld [vmem:[%s6585] ss:$8 sm:$0x3]
      %v6603 = vcombine.low %v6556, %v6558
      %v6604 = vcombine.low %v6560, %v6562
      %v6605 = vcombine.low %v6564, %v6566
      %v6606 = vcombine.low %v6568, %v6570
      %v6608 = vunpack.c.l.s4 1966171168
      %v6609 = vunpack.c.0.s8 %v6608
      %v6610 = vlaneseq
      %v6611 = vshrl.u32 %v6610, 7
      %v6612 = vsub.s32 %v6609, %v6611
      %v6613 = vrot.slane %v6603, %v6612
      %v6615 = vunpack.c.l.s4 1966171168
      %v6616 = vunpack.c.0.s8 %v6615
      %v6617 = vlaneseq
      %v6618 = vshrl.u32 %v6617, 7
      %v6619 = vsub.s32 %v6616, %v6618
      %v6620 = vrot.slane %v6604, %v6619
      %v6622 = vunpack.c.l.s4 1966171168
      %v6623 = vunpack.c.0.s8 %v6622
      %v6624 = vlaneseq
      %v6625 = vshrl.u32 %v6624, 7
      %v6626 = vsub.s32 %v6623, %v6625
      %v6627 = vrot.slane %v6605, %v6626
      %v6629 = vunpack.c.l.s4 1966171168
      %v6630 = vunpack.c.0.s8 %v6629
      %v6631 = vlaneseq
      %v6632 = vshrl.u32 %v6631, 7
      %v6633 = vsub.s32 %v6630, %v6632
      %v6634 = vrot.slane %v6606, %v6633
      %v6635 = vcombine.low %v6613, %v6620
      %v6636 = vcombine.low %v6627, %v6634
      %v6638 = vunpack.c.l.s4 1966171168
      %v6639 = vunpack.c.0.s8 %v6638
      %v6640 = vlaneseq
      %v6641 = vshrl.u32 %v6640, 7
      %v6642 = vsub.s32 %v6639, %v6641
      %v6643 = vrot.slane %v6635, %v6642
      %v6645 = vunpack.c.l.s4 1966171168
      %v6646 = vunpack.c.0.s8 %v6645
      %v6647 = vlaneseq
      %v6648 = vshrl.u32 %v6647, 7
      %v6649 = vsub.s32 %v6646, %v6648
      %v6650 = vrot.slane %v6636, %v6649
      %v6651 = vcombine.low %v6643, %v6650
      %v6652 = vcombine.low %v6572, %v6574
      %v6653 = vcombine.low %v6576, %v6578
      %v6654 = vcombine.low %v6580, %v6582
      %v6655 = vcombine.low %v6584, %v6586
      %v6657 = vunpack.c.l.s4 1966171168
      %v6658 = vunpack.c.0.s8 %v6657
      %v6659 = vlaneseq
      %v6660 = vshrl.u32 %v6659, 7
      %v6661 = vsub.s32 %v6658, %v6660
      %v6662 = vrot.slane %v6652, %v6661
      %v6664 = vunpack.c.l.s4 1966171168
      %v6665 = vunpack.c.0.s8 %v6664
      %v6666 = vlaneseq
      %v6667 = vshrl.u32 %v6666, 7
      %v6668 = vsub.s32 %v6665, %v6667
      %v6669 = vrot.slane %v6653, %v6668
      %v6671 = vunpack.c.l.s4 1966171168
      %v6672 = vunpack.c.0.s8 %v6671
      %v6673 = vlaneseq
      %v6674 = vshrl.u32 %v6673, 7
      %v6675 = vsub.s32 %v6672, %v6674
      %v6676 = vrot.slane %v6654, %v6675
      %v6678 = vunpack.c.l.s4 1966171168
      %v6679 = vunpack.c.0.s8 %v6678
      %v6680 = vlaneseq
      %v6681 = vshrl.u32 %v6680, 7
      %v6682 = vsub.s32 %v6679, %v6681
      %v6683 = vrot.slane %v6655, %v6682
      %v6684 = vcombine.low %v6662, %v6669
      %v6685 = vcombine.low %v6676, %v6683
      %v6687 = vunpack.c.l.s4 1966171168
      %v6688 = vunpack.c.0.s8 %v6687
      %v6689 = vlaneseq
      %v6690 = vshrl.u32 %v6689, 7
      %v6691 = vsub.s32 %v6688, %v6690
      %v6692 = vrot.slane %v6684, %v6691
      %v6694 = vunpack.c.l.s4 1966171168
      %v6695 = vunpack.c.0.s8 %v6694
      %v6696 = vlaneseq
      %v6697 = vshrl.u32 %v6696, 7
      %v6698 = vsub.s32 %v6695, %v6697
      %v6699 = vrot.slane %v6685, %v6698
      %v6700 = vcombine.low %v6692, %v6699
      %6703 = vst [vmem:[#allocation4 + $0x18] sm:$0xff] %v6651
      %6704 = vst [vmem:[#allocation4 + $0x38] sm:$0xff] %v6700
      %v6705 = vcombine.high %v6613, %v6620
      %v6706 = vcombine.high %v6627, %v6634
      %v6708 = vunpack.c.l.s4 1966171168
      %v6709 = vunpack.c.0.s8 %v6708
      %v6710 = vlaneseq
      %v6711 = vshrl.u32 %v6710, 7
      %v6712 = vsub.s32 %v6709, %v6711
      %v6713 = vrot.slane %v6705, %v6712
      %v6715 = vunpack.c.l.s4 1966171168
      %v6716 = vunpack.c.0.s8 %v6715
      %v6717 = vlaneseq
      %v6718 = vshrl.u32 %v6717, 7
      %v6719 = vsub.s32 %v6716, %v6718
      %v6720 = vrot.slane %v6706, %v6719
      %v6721 = vcombine.low %v6713, %v6720
      %v6722 = vcombine.high %v6662, %v6669
      %v6723 = vcombine.high %v6676, %v6683
      %v6725 = vunpack.c.l.s4 1966171168
      %v6726 = vunpack.c.0.s8 %v6725
      %v6727 = vlaneseq
      %v6728 = vshrl.u32 %v6727, 7
      %v6729 = vsub.s32 %v6726, %v6728
      %v6730 = vrot.slane %v6722, %v6729
      %v6732 = vunpack.c.l.s4 1966171168
      %v6733 = vunpack.c.0.s8 %v6732
      %v6734 = vlaneseq
      %v6735 = vshrl.u32 %v6734, 7
      %v6736 = vsub.s32 %v6733, %v6735
      %v6737 = vrot.slane %v6723, %v6736
      %v6738 = vcombine.low %v6730, %v6737
      %6739 = vrot.lane.b32.xlu0 %v6651, 64
      %v6740 = vpop.permute.xlu0 %6739
      %6741 = vrot.lane.b32.xlu0 %v6721, 64
      %v6742 = vpop.permute.xlu0 %6741
      %6743 = vrot.lane.b32.xlu0 %v6700, 64
      %v6744 = vpop.permute.xlu0 %6743
      %6745 = vrot.lane.b32.xlu0 %v6738, 64
      %v6746 = vpop.permute.xlu0 %6745
      %v6747 = vsel %vm520, %v6740, %v6742
      %v6748 = vsel %vm520, %v6744, %v6746
      %6751 = vst [vmem:[#allocation4 + $0x58] sm:$0xff] %v6747
      %6752 = vst [vmem:[#allocation4 + $0x78] sm:$0xff] %v6748
      %6755 = vst [vmem:[#allocation4 + $0x98] sm:$0xff] %v6721
      %6756 = vst [vmem:[#allocation4 + $0xb8] sm:$0xff] %v6738
      %v6757 = vld [vmem:[%s6353] ss:$8 sm:$0x3]
      %v6758 = vld [vmem:[%s6355] ss:$8 sm:$0x3]
      %v6759 = vld [vmem:[%s6357] ss:$8 sm:$0x3]
      %v6760 = vld [vmem:[%s6359] ss:$8 sm:$0x3]
      %v6761 = vld [vmem:[%s6361] ss:$8 sm:$0x3]
      %v6762 = vld [vmem:[%s6363] ss:$8 sm:$0x3]
      %v6763 = vld [vmem:[%s6365] ss:$8 sm:$0x3]
      %v6764 = vld [vmem:[%s6367] ss:$8 sm:$0x3]
      %v6765 = vld [vmem:[%s6369] ss:$8 sm:$0x3]
      %v6766 = vld [vmem:[%s6371] ss:$8 sm:$0x3]
      %v6767 = vld [vmem:[%s6373] ss:$8 sm:$0x3]
      %v6768 = vld [vmem:[%s6375] ss:$8 sm:$0x3]
      %v6769 = vld [vmem:[%s6377] ss:$8 sm:$0x3]
      %v6770 = vld [vmem:[%s6379] ss:$8 sm:$0x3]
      %v6771 = vld [vmem:[%s6381] ss:$8 sm:$0x3]
      %v6772 = vld [vmem:[%s6383] ss:$8 sm:$0x3]
      %v6789 = vcombine.low %v6757, %v6758
      %v6790 = vcombine.low %v6759, %v6760
      %v6791 = vcombine.low %v6761, %v6762
      %v6792 = vcombine.low %v6763, %v6764
      %v6794 = vunpack.c.l.s4 1966171168
      %v6795 = vunpack.c.0.s8 %v6794
      %v6796 = vlaneseq
      %v6797 = vshrl.u32 %v6796, 7
      %v6798 = vsub.s32 %v6795, %v6797
      %v6799 = vrot.slane %v6789, %v6798
      %v6801 = vunpack.c.l.s4 1966171168
      %v6802 = vunpack.c.0.s8 %v6801
      %v6803 = vlaneseq
      %v6804 = vshrl.u32 %v6803, 7
      %v6805 = vsub.s32 %v6802, %v6804
      %v6806 = vrot.slane %v6790, %v6805
      %v6808 = vunpack.c.l.s4 1966171168
      %v6809 = vunpack.c.0.s8 %v6808
      %v6810 = vlaneseq
      %v6811 = vshrl.u32 %v6810, 7
      %v6812 = vsub.s32 %v6809, %v6811
      %v6813 = vrot.slane %v6791, %v6812
      %v6815 = vunpack.c.l.s4 1966171168
      %v6816 = vunpack.c.0.s8 %v6815
      %v6817 = vlaneseq
      %v6818 = vshrl.u32 %v6817, 7
      %v6819 = vsub.s32 %v6816, %v6818
      %v6820 = vrot.slane %v6792, %v6819
      %v6821 = vcombine.low %v6799, %v6806
      %v6822 = vcombine.low %v6813, %v6820
      %v6824 = vunpack.c.l.s4 1966171168
      %v6825 = vunpack.c.0.s8 %v6824
      %v6826 = vlaneseq
      %v6827 = vshrl.u32 %v6826, 7
      %v6828 = vsub.s32 %v6825, %v6827
      %v6829 = vrot.slane %v6821, %v6828
      %v6831 = vunpack.c.l.s4 1966171168
      %v6832 = vunpack.c.0.s8 %v6831
      %v6833 = vlaneseq
      %v6834 = vshrl.u32 %v6833, 7
      %v6835 = vsub.s32 %v6832, %v6834
      %v6836 = vrot.slane %v6822, %v6835
      %v6837 = vcombine.low %v6829, %v6836
      %v6838 = vcombine.low %v6765, %v6766
      %v6839 = vcombine.low %v6767, %v6768
      %v6840 = vcombine.low %v6769, %v6770
      %v6841 = vcombine.low %v6771, %v6772
      %v6843 = vunpack.c.l.s4 1966171168
      %v6844 = vunpack.c.0.s8 %v6843
      %v6845 = vlaneseq
      %v6846 = vshrl.u32 %v6845, 7
      %v6847 = vsub.s32 %v6844, %v6846
      %v6848 = vrot.slane %v6838, %v6847
      %v6850 = vunpack.c.l.s4 1966171168
      %v6851 = vunpack.c.0.s8 %v6850
      %v6852 = vlaneseq
      %v6853 = vshrl.u32 %v6852, 7
      %v6854 = vsub.s32 %v6851, %v6853
      %v6855 = vrot.slane %v6839, %v6854
      %v6857 = vunpack.c.l.s4 1966171168
      %v6858 = vunpack.c.0.s8 %v6857
      %v6859 = vlaneseq
      %v6860 = vshrl.u32 %v6859, 7
      %v6861 = vsub.s32 %v6858, %v6860
      %v6862 = vrot.slane %v6840, %v6861
      %v6864 = vunpack.c.l.s4 1966171168
      %v6865 = vunpack.c.0.s8 %v6864
      %v6866 = vlaneseq
      %v6867 = vshrl.u32 %v6866, 7
      %v6868 = vsub.s32 %v6865, %v6867
      %v6869 = vrot.slane %v6841, %v6868
      %v6870 = vcombine.low %v6848, %v6855
      %v6871 = vcombine.low %v6862, %v6869
      %v6873 = vunpack.c.l.s4 1966171168
      %v6874 = vunpack.c.0.s8 %v6873
      %v6875 = vlaneseq
      %v6876 = vshrl.u32 %v6875, 7
      %v6877 = vsub.s32 %v6874, %v6876
      %v6878 = vrot.slane %v6870, %v6877
      %v6880 = vunpack.c.l.s4 1966171168
      %v6881 = vunpack.c.0.s8 %v6880
      %v6882 = vlaneseq
      %v6883 = vshrl.u32 %v6882, 7
      %v6884 = vsub.s32 %v6881, %v6883
      %v6885 = vrot.slane %v6871, %v6884
      %v6886 = vcombine.low %v6878, %v6885
      %6889 = vst [vmem:[#allocation4 + $0xc0] sm:$0xff] %v6837
      %6890 = vst [vmem:[#allocation4 + $0xe0] sm:$0xff] %v6886
      %v6891 = vcombine.high %v6799, %v6806
      %v6892 = vcombine.high %v6813, %v6820
      %v6894 = vunpack.c.l.s4 1966171168
      %v6895 = vunpack.c.0.s8 %v6894
      %v6896 = vlaneseq
      %v6897 = vshrl.u32 %v6896, 7
      %v6898 = vsub.s32 %v6895, %v6897
      %v6899 = vrot.slane %v6891, %v6898
      %v6901 = vunpack.c.l.s4 1966171168
      %v6902 = vunpack.c.0.s8 %v6901
      %v6903 = vlaneseq
      %v6904 = vshrl.u32 %v6903, 7
      %v6905 = vsub.s32 %v6902, %v6904
      %v6906 = vrot.slane %v6892, %v6905
      %v6907 = vcombine.low %v6899, %v6906
      %v6908 = vcombine.high %v6848, %v6855
      %v6909 = vcombine.high %v6862, %v6869
      %v6911 = vunpack.c.l.s4 1966171168
      %v6912 = vunpack.c.0.s8 %v6911
      %v6913 = vlaneseq
      %v6914 = vshrl.u32 %v6913, 7
      %v6915 = vsub.s32 %v6912, %v6914
      %v6916 = vrot.slane %v6908, %v6915
      %v6918 = vunpack.c.l.s4 1966171168
      %v6919 = vunpack.c.0.s8 %v6918
      %v6920 = vlaneseq
      %v6921 = vshrl.u32 %v6920, 7
      %v6922 = vsub.s32 %v6919, %v6921
      %v6923 = vrot.slane %v6909, %v6922
      %v6924 = vcombine.low %v6916, %v6923
      %6925 = vrot.lane.b32.xlu0 %v6837, 64
      %v6926 = vpop.permute.xlu0 %6925
      %6927 = vrot.lane.b32.xlu0 %v6907, 64
      %v6928 = vpop.permute.xlu0 %6927
      %6929 = vrot.lane.b32.xlu0 %v6886, 64
      %v6930 = vpop.permute.xlu0 %6929
      %6931 = vrot.lane.b32.xlu0 %v6924, 64
      %v6932 = vpop.permute.xlu0 %6931
      %v6933 = vsel %vm520, %v6926, %v6928
      %v6934 = vsel %vm520, %v6930, %v6932
      %6937 = vst [vmem:[#allocation4 + $0x100] sm:$0xff] %v6933
      %6938 = vst [vmem:[#allocation4 + $0x120] sm:$0xff] %v6934
      %6941 = vst [vmem:[#allocation4 + $0x140] sm:$0xff] %v6907
      %6942 = vst [vmem:[#allocation4 + $0x160] sm:$0xff] %v6924
      %v6943 = vld [vmem:[%s6555] ss:$8 sm:$0x3]
      %v6944 = vld [vmem:[%s6557] ss:$8 sm:$0x3]
      %v6945 = vld [vmem:[%s6559] ss:$8 sm:$0x3]
      %v6946 = vld [vmem:[%s6561] ss:$8 sm:$0x3]
      %v6947 = vld [vmem:[%s6563] ss:$8 sm:$0x3]
      %v6948 = vld [vmem:[%s6565] ss:$8 sm:$0x3]
      %v6949 = vld [vmem:[%s6567] ss:$8 sm:$0x3]
      %v6950 = vld [vmem:[%s6569] ss:$8 sm:$0x3]
      %v6951 = vld [vmem:[%s6571] ss:$8 sm:$0x3]
      %v6952 = vld [vmem:[%s6573] ss:$8 sm:$0x3]
      %v6953 = vld [vmem:[%s6575] ss:$8 sm:$0x3]
      %v6954 = vld [vmem:[%s6577] ss:$8 sm:$0x3]
      %v6955 = vld [vmem:[%s6579] ss:$8 sm:$0x3]
      %v6956 = vld [vmem:[%s6581] ss:$8 sm:$0x3]
      %v6957 = vld [vmem:[%s6583] ss:$8 sm:$0x3]
      %v6958 = vld [vmem:[%s6585] ss:$8 sm:$0x3]
      %v6975 = vcombine.low %v6943, %v6944
      %v6976 = vcombine.low %v6945, %v6946
      %v6977 = vcombine.low %v6947, %v6948
      %v6978 = vcombine.low %v6949, %v6950
      %v6980 = vunpack.c.l.s4 1966171168
      %v6981 = vunpack.c.0.s8 %v6980
      %v6982 = vlaneseq
      %v6983 = vshrl.u32 %v6982, 7
      %v6984 = vsub.s32 %v6981, %v6983
      %v6985 = vrot.slane %v6975, %v6984
      %v6987 = vunpack.c.l.s4 1966171168
      %v6988 = vunpack.c.0.s8 %v6987
      %v6989 = vlaneseq
      %v6990 = vshrl.u32 %v6989, 7
      %v6991 = vsub.s32 %v6988, %v6990
      %v6992 = vrot.slane %v6976, %v6991
      %v6994 = vunpack.c.l.s4 1966171168
      %v6995 = vunpack.c.0.s8 %v6994
      %v6996 = vlaneseq
      %v6997 = vshrl.u32 %v6996, 7
      %v6998 = vsub.s32 %v6995, %v6997
      %v6999 = vrot.slane %v6977, %v6998
      %v7001 = vunpack.c.l.s4 1966171168
      %v7002 = vunpack.c.0.s8 %v7001
      %v7003 = vlaneseq
      %v7004 = vshrl.u32 %v7003, 7
      %v7005 = vsub.s32 %v7002, %v7004
      %v7006 = vrot.slane %v6978, %v7005
      %v7007 = vcombine.low %v6985, %v6992
      %v7008 = vcombine.low %v6999, %v7006
      %v7010 = vunpack.c.l.s4 1966171168
      %v7011 = vunpack.c.0.s8 %v7010
      %v7012 = vlaneseq
      %v7013 = vshrl.u32 %v7012, 7
      %v7014 = vsub.s32 %v7011, %v7013
      %v7015 = vrot.slane %v7007, %v7014
      %v7017 = vunpack.c.l.s4 1966171168
      %v7018 = vunpack.c.0.s8 %v7017
      %v7019 = vlaneseq
      %v7020 = vshrl.u32 %v7019, 7
      %v7021 = vsub.s32 %v7018, %v7020
      %v7022 = vrot.slane %v7008, %v7021
      %v7023 = vcombine.low %v7015, %v7022
      %v7024 = vcombine.low %v6951, %v6952
      %v7025 = vcombine.low %v6953, %v6954
      %v7026 = vcombine.low %v6955, %v6956
      %v7027 = vcombine.low %v6957, %v6958
      %v7029 = vunpack.c.l.s4 1966171168
      %v7030 = vunpack.c.0.s8 %v7029
      %v7031 = vlaneseq
      %v7032 = vshrl.u32 %v7031, 7
      %v7033 = vsub.s32 %v7030, %v7032
      %v7034 = vrot.slane %v7024, %v7033
      %v7036 = vunpack.c.l.s4 1966171168
      %v7037 = vunpack.c.0.s8 %v7036
      %v7038 = vlaneseq
      %v7039 = vshrl.u32 %v7038, 7
      %v7040 = vsub.s32 %v7037, %v7039
      %v7041 = vrot.slane %v7025, %v7040
      %v7043 = vunpack.c.l.s4 1966171168
      %v7044 = vunpack.c.0.s8 %v7043
      %v7045 = vlaneseq
      %v7046 = vshrl.u32 %v7045, 7
      %v7047 = vsub.s32 %v7044, %v7046
      %v7048 = vrot.slane %v7026, %v7047
      %v7050 = vunpack.c.l.s4 1966171168
      %v7051 = vunpack.c.0.s8 %v7050
      %v7052 = vlaneseq
      %v7053 = vshrl.u32 %v7052, 7
      %v7054 = vsub.s32 %v7051, %v7053
      %v7055 = vrot.slane %v7027, %v7054
      %v7056 = vcombine.low %v7034, %v7041
      %v7057 = vcombine.low %v7048, %v7055
      %v7059 = vunpack.c.l.s4 1966171168
      %v7060 = vunpack.c.0.s8 %v7059
      %v7061 = vlaneseq
      %v7062 = vshrl.u32 %v7061, 7
      %v7063 = vsub.s32 %v7060, %v7062
      %v7064 = vrot.slane %v7056, %v7063
      %v7066 = vunpack.c.l.s4 1966171168
      %v7067 = vunpack.c.0.s8 %v7066
      %v7068 = vlaneseq
      %v7069 = vshrl.u32 %v7068, 7
      %v7070 = vsub.s32 %v7067, %v7069
      %v7071 = vrot.slane %v7057, %v7070
      %v7072 = vcombine.low %v7064, %v7071
      %7075 = vst [vmem:[#allocation4 + $0xc8] sm:$0xff] %v7023
      %7076 = vst [vmem:[#allocation4 + $0xe8] sm:$0xff] %v7072
      %v7077 = vcombine.high %v6985, %v6992
      %v7078 = vcombine.high %v6999, %v7006
      %v7080 = vunpack.c.l.s4 1966171168
      %v7081 = vunpack.c.0.s8 %v7080
      %v7082 = vlaneseq
      %v7083 = vshrl.u32 %v7082, 7
      %v7084 = vsub.s32 %v7081, %v7083
      %v7085 = vrot.slane %v7077, %v7084
      %v7087 = vunpack.c.l.s4 1966171168
      %v7088 = vunpack.c.0.s8 %v7087
      %v7089 = vlaneseq
      %v7090 = vshrl.u32 %v7089, 7
      %v7091 = vsub.s32 %v7088, %v7090
      %v7092 = vrot.slane %v7078, %v7091
      %v7093 = vcombine.low %v7085, %v7092
      %v7094 = vcombine.high %v7034, %v7041
      %v7095 = vcombine.high %v7048, %v7055
      %v7097 = vunpack.c.l.s4 1966171168
      %v7098 = vunpack.c.0.s8 %v7097
      %v7099 = vlaneseq
      %v7100 = vshrl.u32 %v7099, 7
      %v7101 = vsub.s32 %v7098, %v7100
      %v7102 = vrot.slane %v7094, %v7101
      %v7104 = vunpack.c.l.s4 1966171168
      %v7105 = vunpack.c.0.s8 %v7104
      %v7106 = vlaneseq
      %v7107 = vshrl.u32 %v7106, 7
      %v7108 = vsub.s32 %v7105, %v7107
      %v7109 = vrot.slane %v7095, %v7108
      %v7110 = vcombine.low %v7102, %v7109
      %7111 = vrot.lane.b32.xlu0 %v7023, 64
      %v7112 = vpop.permute.xlu0 %7111
      %7113 = vrot.lane.b32.xlu0 %v7093, 64
      %v7114 = vpop.permute.xlu0 %7113
      %7115 = vrot.lane.b32.xlu0 %v7072, 64
      %v7116 = vpop.permute.xlu0 %7115
      %7117 = vrot.lane.b32.xlu0 %v7110, 64
      %v7118 = vpop.permute.xlu0 %7117
      %v7119 = vsel %vm520, %v7112, %v7114
      %v7120 = vsel %vm520, %v7116, %v7118
      %7123 = vst [vmem:[#allocation4 + $0x108] sm:$0xff] %v7119
      %7124 = vst [vmem:[#allocation4 + $0x128] sm:$0xff] %v7120
      %7127 = vst [vmem:[#allocation4 + $0x148] sm:$0xff] %v7093
      %7128 = vst [vmem:[#allocation4 + $0x168] sm:$0xff] %v7110
      %s7129 = scalar_lea.vmem [#allocation3], 4
      %v7130 = vld [vmem:[%s7129] ss:$8 sm:$0x3]
      %s7131 = scalar_lea.vmem [#allocation3], 20
      %v7132 = vld [vmem:[%s7131] ss:$8 sm:$0x3]
      %s7133 = scalar_lea.vmem [#allocation3], 36
      %v7134 = vld [vmem:[%s7133] ss:$8 sm:$0x3]
      %s7135 = scalar_lea.vmem [#allocation3], 52
      %v7136 = vld [vmem:[%s7135] ss:$8 sm:$0x3]
      %s7137 = scalar_lea.vmem [#allocation3], 68
      %v7138 = vld [vmem:[%s7137] ss:$8 sm:$0x3]
      %s7139 = scalar_lea.vmem [#allocation3], 84
      %v7140 = vld [vmem:[%s7139] ss:$8 sm:$0x3]
      %s7141 = scalar_lea.vmem [#allocation3], 100
      %v7142 = vld [vmem:[%s7141] ss:$8 sm:$0x3]
      %s7143 = scalar_lea.vmem [#allocation3], 116
      %v7144 = vld [vmem:[%s7143] ss:$8 sm:$0x3]
      %s7145 = scalar_lea.vmem [#allocation3], 132
      %v7146 = vld [vmem:[%s7145] ss:$8 sm:$0x3]
      %s7147 = scalar_lea.vmem [#allocation3], 148
      %v7148 = vld [vmem:[%s7147] ss:$8 sm:$0x3]
      %s7149 = scalar_lea.vmem [#allocation3], 164
      %v7150 = vld [vmem:[%s7149] ss:$8 sm:$0x3]
      %s7151 = scalar_lea.vmem [#allocation3], 180
      %v7152 = vld [vmem:[%s7151] ss:$8 sm:$0x3]
      %s7153 = scalar_lea.vmem [#allocation3], 196
      %v7154 = vld [vmem:[%s7153] ss:$8 sm:$0x3]
      %s7155 = scalar_lea.vmem [#allocation3], 212
      %v7156 = vld [vmem:[%s7155] ss:$8 sm:$0x3]
      %s7157 = scalar_lea.vmem [#allocation3], 228
      %v7158 = vld [vmem:[%s7157] ss:$8 sm:$0x3]
      %s7159 = scalar_lea.vmem [#allocation3], 244
      %v7160 = vld [vmem:[%s7159] ss:$8 sm:$0x3]
      %v7177 = vcombine.low %v7130, %v7132
      %v7178 = vcombine.low %v7134, %v7136
      %v7179 = vcombine.low %v7138, %v7140
      %v7180 = vcombine.low %v7142, %v7144
      %v7182 = vunpack.c.l.s4 1966171168
      %v7183 = vunpack.c.0.s8 %v7182
      %v7184 = vlaneseq
      %v7185 = vshrl.u32 %v7184, 7
      %v7186 = vsub.s32 %v7183, %v7185
      %v7187 = vrot.slane %v7177, %v7186
      %v7189 = vunpack.c.l.s4 1966171168
      %v7190 = vunpack.c.0.s8 %v7189
      %v7191 = vlaneseq
      %v7192 = vshrl.u32 %v7191, 7
      %v7193 = vsub.s32 %v7190, %v7192
      %v7194 = vrot.slane %v7178, %v7193
      %v7196 = vunpack.c.l.s4 1966171168
      %v7197 = vunpack.c.0.s8 %v7196
      %v7198 = vlaneseq
      %v7199 = vshrl.u32 %v7198, 7
      %v7200 = vsub.s32 %v7197, %v7199
      %v7201 = vrot.slane %v7179, %v7200
      %v7203 = vunpack.c.l.s4 1966171168
      %v7204 = vunpack.c.0.s8 %v7203
      %v7205 = vlaneseq
      %v7206 = vshrl.u32 %v7205, 7
      %v7207 = vsub.s32 %v7204, %v7206
      %v7208 = vrot.slane %v7180, %v7207
      %v7209 = vcombine.low %v7187, %v7194
      %v7210 = vcombine.low %v7201, %v7208
      %v7212 = vunpack.c.l.s4 1966171168
      %v7213 = vunpack.c.0.s8 %v7212
      %v7214 = vlaneseq
      %v7215 = vshrl.u32 %v7214, 7
      %v7216 = vsub.s32 %v7213, %v7215
      %v7217 = vrot.slane %v7209, %v7216
      %v7219 = vunpack.c.l.s4 1966171168
      %v7220 = vunpack.c.0.s8 %v7219
      %v7221 = vlaneseq
      %v7222 = vshrl.u32 %v7221, 7
      %v7223 = vsub.s32 %v7220, %v7222
      %v7224 = vrot.slane %v7210, %v7223
      %v7225 = vcombine.low %v7217, %v7224
      %v7226 = vcombine.low %v7146, %v7148
      %v7227 = vcombine.low %v7150, %v7152
      %v7228 = vcombine.low %v7154, %v7156
      %v7229 = vcombine.low %v7158, %v7160
      %v7231 = vunpack.c.l.s4 1966171168
      %v7232 = vunpack.c.0.s8 %v7231
      %v7233 = vlaneseq
      %v7234 = vshrl.u32 %v7233, 7
      %v7235 = vsub.s32 %v7232, %v7234
      %v7236 = vrot.slane %v7226, %v7235
      %v7238 = vunpack.c.l.s4 1966171168
      %v7239 = vunpack.c.0.s8 %v7238
      %v7240 = vlaneseq
      %v7241 = vshrl.u32 %v7240, 7
      %v7242 = vsub.s32 %v7239, %v7241
      %v7243 = vrot.slane %v7227, %v7242
      %v7245 = vunpack.c.l.s4 1966171168
      %v7246 = vunpack.c.0.s8 %v7245
      %v7247 = vlaneseq
      %v7248 = vshrl.u32 %v7247, 7
      %v7249 = vsub.s32 %v7246, %v7248
      %v7250 = vrot.slane %v7228, %v7249
      %v7252 = vunpack.c.l.s4 1966171168
      %v7253 = vunpack.c.0.s8 %v7252
      %v7254 = vlaneseq
      %v7255 = vshrl.u32 %v7254, 7
      %v7256 = vsub.s32 %v7253, %v7255
      %v7257 = vrot.slane %v7229, %v7256
      %v7258 = vcombine.low %v7236, %v7243
      %v7259 = vcombine.low %v7250, %v7257
      %v7261 = vunpack.c.l.s4 1966171168
      %v7262 = vunpack.c.0.s8 %v7261
      %v7263 = vlaneseq
      %v7264 = vshrl.u32 %v7263, 7
      %v7265 = vsub.s32 %v7262, %v7264
      %v7266 = vrot.slane %v7258, %v7265
      %v7268 = vunpack.c.l.s4 1966171168
      %v7269 = vunpack.c.0.s8 %v7268
      %v7270 = vlaneseq
      %v7271 = vshrl.u32 %v7270, 7
      %v7272 = vsub.s32 %v7269, %v7271
      %v7273 = vrot.slane %v7259, %v7272
      %v7274 = vcombine.low %v7266, %v7273
      %7277 = vst [vmem:[#allocation4 + $0xd0] sm:$0xff] %v7225
      %7278 = vst [vmem:[#allocation4 + $0xf0] sm:$0xff] %v7274
      %v7279 = vcombine.high %v7187, %v7194
      %v7280 = vcombine.high %v7201, %v7208
      %v7282 = vunpack.c.l.s4 1966171168
      %v7283 = vunpack.c.0.s8 %v7282
      %v7284 = vlaneseq
      %v7285 = vshrl.u32 %v7284, 7
      %v7286 = vsub.s32 %v7283, %v7285
      %v7287 = vrot.slane %v7279, %v7286
      %v7289 = vunpack.c.l.s4 1966171168
      %v7290 = vunpack.c.0.s8 %v7289
      %v7291 = vlaneseq
      %v7292 = vshrl.u32 %v7291, 7
      %v7293 = vsub.s32 %v7290, %v7292
      %v7294 = vrot.slane %v7280, %v7293
      %v7295 = vcombine.low %v7287, %v7294
      %v7296 = vcombine.high %v7236, %v7243
      %v7297 = vcombine.high %v7250, %v7257
      %v7299 = vunpack.c.l.s4 1966171168
      %v7300 = vunpack.c.0.s8 %v7299
      %v7301 = vlaneseq
      %v7302 = vshrl.u32 %v7301, 7
      %v7303 = vsub.s32 %v7300, %v7302
      %v7304 = vrot.slane %v7296, %v7303
      %v7306 = vunpack.c.l.s4 1966171168
      %v7307 = vunpack.c.0.s8 %v7306
      %v7308 = vlaneseq
      %v7309 = vshrl.u32 %v7308, 7
      %v7310 = vsub.s32 %v7307, %v7309
      %v7311 = vrot.slane %v7297, %v7310
      %v7312 = vcombine.low %v7304, %v7311
      %7313 = vrot.lane.b32.xlu0 %v7225, 64
      %v7314 = vpop.permute.xlu0 %7313
      %7315 = vrot.lane.b32.xlu0 %v7295, 64
      %v7316 = vpop.permute.xlu0 %7315
      %7317 = vrot.lane.b32.xlu0 %v7274, 64
      %v7318 = vpop.permute.xlu0 %7317
      %7319 = vrot.lane.b32.xlu0 %v7312, 64
      %v7320 = vpop.permute.xlu0 %7319
      %v7321 = vsel %vm520, %v7314, %v7316
      %v7322 = vsel %vm520, %v7318, %v7320
      %7325 = vst [vmem:[#allocation4 + $0x110] sm:$0xff] %v7321
      %7326 = vst [vmem:[#allocation4 + $0x130] sm:$0xff] %v7322
      %7329 = vst [vmem:[#allocation4 + $0x150] sm:$0xff] %v7295
      %7330 = vst [vmem:[#allocation4 + $0x170] sm:$0xff] %v7312
      %s7331 = scalar_lea.vmem [#allocation3], 5
      %v7332 = vld [vmem:[%s7331] ss:$8 sm:$0x3]
      %s7333 = scalar_lea.vmem [#allocation3], 21
      %v7334 = vld [vmem:[%s7333] ss:$8 sm:$0x3]
      %s7335 = scalar_lea.vmem [#allocation3], 37
      %v7336 = vld [vmem:[%s7335] ss:$8 sm:$0x3]
      %s7337 = scalar_lea.vmem [#allocation3], 53
      %v7338 = vld [vmem:[%s7337] ss:$8 sm:$0x3]
      %s7339 = scalar_lea.vmem [#allocation3], 69
      %v7340 = vld [vmem:[%s7339] ss:$8 sm:$0x3]
      %s7341 = scalar_lea.vmem [#allocation3], 85
      %v7342 = vld [vmem:[%s7341] ss:$8 sm:$0x3]
      %s7343 = scalar_lea.vmem [#allocation3], 101
      %v7344 = vld [vmem:[%s7343] ss:$8 sm:$0x3]
      %s7345 = scalar_lea.vmem [#allocation3], 117
      %v7346 = vld [vmem:[%s7345] ss:$8 sm:$0x3]
      %s7347 = scalar_lea.vmem [#allocation3], 133
      %v7348 = vld [vmem:[%s7347] ss:$8 sm:$0x3]
      %s7349 = scalar_lea.vmem [#allocation3], 149
      %v7350 = vld [vmem:[%s7349] ss:$8 sm:$0x3]
      %s7351 = scalar_lea.vmem [#allocation3], 165
      %v7352 = vld [vmem:[%s7351] ss:$8 sm:$0x3]
      %s7353 = scalar_lea.vmem [#allocation3], 181
      %v7354 = vld [vmem:[%s7353] ss:$8 sm:$0x3]
      %s7355 = scalar_lea.vmem [#allocation3], 197
      %v7356 = vld [vmem:[%s7355] ss:$8 sm:$0x3]
      %s7357 = scalar_lea.vmem [#allocation3], 213
      %v7358 = vld [vmem:[%s7357] ss:$8 sm:$0x3]
      %s7359 = scalar_lea.vmem [#allocation3], 229
      %v7360 = vld [vmem:[%s7359] ss:$8 sm:$0x3]
      %s7361 = scalar_lea.vmem [#allocation3], 245
      %v7362 = vld [vmem:[%s7361] ss:$8 sm:$0x3]
      %v7379 = vcombine.low %v7332, %v7334
      %v7380 = vcombine.low %v7336, %v7338
      %v7381 = vcombine.low %v7340, %v7342
      %v7382 = vcombine.low %v7344, %v7346
      %v7384 = vunpack.c.l.s4 1966171168
      %v7385 = vunpack.c.0.s8 %v7384
      %v7386 = vlaneseq
      %v7387 = vshrl.u32 %v7386, 7
      %v7388 = vsub.s32 %v7385, %v7387
      %v7389 = vrot.slane %v7379, %v7388
      %v7391 = vunpack.c.l.s4 1966171168
      %v7392 = vunpack.c.0.s8 %v7391
      %v7393 = vlaneseq
      %v7394 = vshrl.u32 %v7393, 7
      %v7395 = vsub.s32 %v7392, %v7394
      %v7396 = vrot.slane %v7380, %v7395
      %v7398 = vunpack.c.l.s4 1966171168
      %v7399 = vunpack.c.0.s8 %v7398
      %v7400 = vlaneseq
      %v7401 = vshrl.u32 %v7400, 7
      %v7402 = vsub.s32 %v7399, %v7401
      %v7403 = vrot.slane %v7381, %v7402
      %v7405 = vunpack.c.l.s4 1966171168
      %v7406 = vunpack.c.0.s8 %v7405
      %v7407 = vlaneseq
      %v7408 = vshrl.u32 %v7407, 7
      %v7409 = vsub.s32 %v7406, %v7408
      %v7410 = vrot.slane %v7382, %v7409
      %v7411 = vcombine.low %v7389, %v7396
      %v7412 = vcombine.low %v7403, %v7410
      %v7414 = vunpack.c.l.s4 1966171168
      %v7415 = vunpack.c.0.s8 %v7414
      %v7416 = vlaneseq
      %v7417 = vshrl.u32 %v7416, 7
      %v7418 = vsub.s32 %v7415, %v7417
      %v7419 = vrot.slane %v7411, %v7418
      %v7421 = vunpack.c.l.s4 1966171168
      %v7422 = vunpack.c.0.s8 %v7421
      %v7423 = vlaneseq
      %v7424 = vshrl.u32 %v7423, 7
      %v7425 = vsub.s32 %v7422, %v7424
      %v7426 = vrot.slane %v7412, %v7425
      %v7427 = vcombine.low %v7419, %v7426
      %v7428 = vcombine.low %v7348, %v7350
      %v7429 = vcombine.low %v7352, %v7354
      %v7430 = vcombine.low %v7356, %v7358
      %v7431 = vcombine.low %v7360, %v7362
      %v7433 = vunpack.c.l.s4 1966171168
      %v7434 = vunpack.c.0.s8 %v7433
      %v7435 = vlaneseq
      %v7436 = vshrl.u32 %v7435, 7
      %v7437 = vsub.s32 %v7434, %v7436
      %v7438 = vrot.slane %v7428, %v7437
      %v7440 = vunpack.c.l.s4 1966171168
      %v7441 = vunpack.c.0.s8 %v7440
      %v7442 = vlaneseq
      %v7443 = vshrl.u32 %v7442, 7
      %v7444 = vsub.s32 %v7441, %v7443
      %v7445 = vrot.slane %v7429, %v7444
      %v7447 = vunpack.c.l.s4 1966171168
      %v7448 = vunpack.c.0.s8 %v7447
      %v7449 = vlaneseq
      %v7450 = vshrl.u32 %v7449, 7
      %v7451 = vsub.s32 %v7448, %v7450
      %v7452 = vrot.slane %v7430, %v7451
      %v7454 = vunpack.c.l.s4 1966171168
      %v7455 = vunpack.c.0.s8 %v7454
      %v7456 = vlaneseq
      %v7457 = vshrl.u32 %v7456, 7
      %v7458 = vsub.s32 %v7455, %v7457
      %v7459 = vrot.slane %v7431, %v7458
      %v7460 = vcombine.low %v7438, %v7445
      %v7461 = vcombine.low %v7452, %v7459
      %v7463 = vunpack.c.l.s4 1966171168
      %v7464 = vunpack.c.0.s8 %v7463
      %v7465 = vlaneseq
      %v7466 = vshrl.u32 %v7465, 7
      %v7467 = vsub.s32 %v7464, %v7466
      %v7468 = vrot.slane %v7460, %v7467
      %v7470 = vunpack.c.l.s4 1966171168
      %v7471 = vunpack.c.0.s8 %v7470
      %v7472 = vlaneseq
      %v7473 = vshrl.u32 %v7472, 7
      %v7474 = vsub.s32 %v7471, %v7473
      %v7475 = vrot.slane %v7461, %v7474
      %v7476 = vcombine.low %v7468, %v7475
      %7479 = vst [vmem:[#allocation4 + $0xd8] sm:$0xff] %v7427
      %7480 = vst [vmem:[#allocation4 + $0xf8] sm:$0xff] %v7476
      %v7481 = vcombine.high %v7389, %v7396
      %v7482 = vcombine.high %v7403, %v7410
      %v7484 = vunpack.c.l.s4 1966171168
      %v7485 = vunpack.c.0.s8 %v7484
      %v7486 = vlaneseq
      %v7487 = vshrl.u32 %v7486, 7
      %v7488 = vsub.s32 %v7485, %v7487
      %v7489 = vrot.slane %v7481, %v7488
      %v7491 = vunpack.c.l.s4 1966171168
      %v7492 = vunpack.c.0.s8 %v7491
      %v7493 = vlaneseq
      %v7494 = vshrl.u32 %v7493, 7
      %v7495 = vsub.s32 %v7492, %v7494
      %v7496 = vrot.slane %v7482, %v7495
      %v7497 = vcombine.low %v7489, %v7496
      %v7498 = vcombine.high %v7438, %v7445
      %v7499 = vcombine.high %v7452, %v7459
      %v7501 = vunpack.c.l.s4 1966171168
      %v7502 = vunpack.c.0.s8 %v7501
      %v7503 = vlaneseq
      %v7504 = vshrl.u32 %v7503, 7
      %v7505 = vsub.s32 %v7502, %v7504
      %v7506 = vrot.slane %v7498, %v7505
      %v7508 = vunpack.c.l.s4 1966171168
      %v7509 = vunpack.c.0.s8 %v7508
      %v7510 = vlaneseq
      %v7511 = vshrl.u32 %v7510, 7
      %v7512 = vsub.s32 %v7509, %v7511
      %v7513 = vrot.slane %v7499, %v7512
      %v7514 = vcombine.low %v7506, %v7513
      %7515 = vrot.lane.b32.xlu0 %v7427, 64
      %v7516 = vpop.permute.xlu0 %7515
      %7517 = vrot.lane.b32.xlu0 %v7497, 64
      %v7518 = vpop.permute.xlu0 %7517
      %7519 = vrot.lane.b32.xlu0 %v7476, 64
      %v7520 = vpop.permute.xlu0 %7519
      %7521 = vrot.lane.b32.xlu0 %v7514, 64
      %v7522 = vpop.permute.xlu0 %7521
      %v7523 = vsel %vm520, %v7516, %v7518
      %v7524 = vsel %vm520, %v7520, %v7522
      %7527 = vst [vmem:[#allocation4 + $0x118] sm:$0xff] %v7523
      %7528 = vst [vmem:[#allocation4 + $0x138] sm:$0xff] %v7524
      %7531 = vst [vmem:[#allocation4 + $0x158] sm:$0xff] %v7497
      %7532 = vst [vmem:[#allocation4 + $0x178] sm:$0xff] %v7514
      %v7533 = vld [vmem:[%s7129] ss:$8 sm:$0x3]
      %v7534 = vld [vmem:[%s7131] ss:$8 sm:$0x3]
      %v7535 = vld [vmem:[%s7133] ss:$8 sm:$0x3]
      %v7536 = vld [vmem:[%s7135] ss:$8 sm:$0x3]
      %v7537 = vld [vmem:[%s7137] ss:$8 sm:$0x3]
      %v7538 = vld [vmem:[%s7139] ss:$8 sm:$0x3]
      %v7539 = vld [vmem:[%s7141] ss:$8 sm:$0x3]
      %v7540 = vld [vmem:[%s7143] ss:$8 sm:$0x3]
      %v7541 = vld [vmem:[%s7145] ss:$8 sm:$0x3]
      %v7542 = vld [vmem:[%s7147] ss:$8 sm:$0x3]
      %v7543 = vld [vmem:[%s7149] ss:$8 sm:$0x3]
      %v7544 = vld [vmem:[%s7151] ss:$8 sm:$0x3]
      %v7545 = vld [vmem:[%s7153] ss:$8 sm:$0x3]
      %v7546 = vld [vmem:[%s7155] ss:$8 sm:$0x3]
      %v7547 = vld [vmem:[%s7157] ss:$8 sm:$0x3]
      %v7548 = vld [vmem:[%s7159] ss:$8 sm:$0x3]
      %v7565 = vcombine.low %v7533, %v7534
      %v7566 = vcombine.low %v7535, %v7536
      %v7567 = vcombine.low %v7537, %v7538
      %v7568 = vcombine.low %v7539, %v7540
      %v7570 = vunpack.c.l.s4 1966171168
      %v7571 = vunpack.c.0.s8 %v7570
      %v7572 = vlaneseq
      %v7573 = vshrl.u32 %v7572, 7
      %v7574 = vsub.s32 %v7571, %v7573
      %v7575 = vrot.slane %v7565, %v7574
      %v7577 = vunpack.c.l.s4 1966171168
      %v7578 = vunpack.c.0.s8 %v7577
      %v7579 = vlaneseq
      %v7580 = vshrl.u32 %v7579, 7
      %v7581 = vsub.s32 %v7578, %v7580
      %v7582 = vrot.slane %v7566, %v7581
      %v7584 = vunpack.c.l.s4 1966171168
      %v7585 = vunpack.c.0.s8 %v7584
      %v7586 = vlaneseq
      %v7587 = vshrl.u32 %v7586, 7
      %v7588 = vsub.s32 %v7585, %v7587
      %v7589 = vrot.slane %v7567, %v7588
      %v7591 = vunpack.c.l.s4 1966171168
      %v7592 = vunpack.c.0.s8 %v7591
      %v7593 = vlaneseq
      %v7594 = vshrl.u32 %v7593, 7
      %v7595 = vsub.s32 %v7592, %v7594
      %v7596 = vrot.slane %v7568, %v7595
      %v7597 = vcombine.low %v7575, %v7582
      %v7598 = vcombine.low %v7589, %v7596
      %v7600 = vunpack.c.l.s4 1966171168
      %v7601 = vunpack.c.0.s8 %v7600
      %v7602 = vlaneseq
      %v7603 = vshrl.u32 %v7602, 7
      %v7604 = vsub.s32 %v7601, %v7603
      %v7605 = vrot.slane %v7597, %v7604
      %v7607 = vunpack.c.l.s4 1966171168
      %v7608 = vunpack.c.0.s8 %v7607
      %v7609 = vlaneseq
      %v7610 = vshrl.u32 %v7609, 7
      %v7611 = vsub.s32 %v7608, %v7610
      %v7612 = vrot.slane %v7598, %v7611
      %v7613 = vcombine.low %v7605, %v7612
      %v7614 = vcombine.low %v7541, %v7542
      %v7615 = vcombine.low %v7543, %v7544
      %v7616 = vcombine.low %v7545, %v7546
      %v7617 = vcombine.low %v7547, %v7548
      %v7619 = vunpack.c.l.s4 1966171168
      %v7620 = vunpack.c.0.s8 %v7619
      %v7621 = vlaneseq
      %v7622 = vshrl.u32 %v7621, 7
      %v7623 = vsub.s32 %v7620, %v7622
      %v7624 = vrot.slane %v7614, %v7623
      %v7626 = vunpack.c.l.s4 1966171168
      %v7627 = vunpack.c.0.s8 %v7626
      %v7628 = vlaneseq
      %v7629 = vshrl.u32 %v7628, 7
      %v7630 = vsub.s32 %v7627, %v7629
      %v7631 = vrot.slane %v7615, %v7630
      %v7633 = vunpack.c.l.s4 1966171168
      %v7634 = vunpack.c.0.s8 %v7633
      %v7635 = vlaneseq
      %v7636 = vshrl.u32 %v7635, 7
      %v7637 = vsub.s32 %v7634, %v7636
      %v7638 = vrot.slane %v7616, %v7637
      %v7640 = vunpack.c.l.s4 1966171168
      %v7641 = vunpack.c.0.s8 %v7640
      %v7642 = vlaneseq
      %v7643 = vshrl.u32 %v7642, 7
      %v7644 = vsub.s32 %v7641, %v7643
      %v7645 = vrot.slane %v7617, %v7644
      %v7646 = vcombine.low %v7624, %v7631
      %v7647 = vcombine.low %v7638, %v7645
      %v7649 = vunpack.c.l.s4 1966171168
      %v7650 = vunpack.c.0.s8 %v7649
      %v7651 = vlaneseq
      %v7652 = vshrl.u32 %v7651, 7
      %v7653 = vsub.s32 %v7650, %v7652
      %v7654 = vrot.slane %v7646, %v7653
      %v7656 = vunpack.c.l.s4 1966171168
      %v7657 = vunpack.c.0.s8 %v7656
      %v7658 = vlaneseq
      %v7659 = vshrl.u32 %v7658, 7
      %v7660 = vsub.s32 %v7657, %v7659
      %v7661 = vrot.slane %v7647, %v7660
      %v7662 = vcombine.low %v7654, %v7661
      %7665 = vst [vmem:[#allocation4 + $0x180] sm:$0xff] %v7613
      %7666 = vst [vmem:[#allocation4 + $0x1a0] sm:$0xff] %v7662
      %v7667 = vcombine.high %v7575, %v7582
      %v7668 = vcombine.high %v7589, %v7596
      %v7670 = vunpack.c.l.s4 1966171168
      %v7671 = vunpack.c.0.s8 %v7670
      %v7672 = vlaneseq
      %v7673 = vshrl.u32 %v7672, 7
      %v7674 = vsub.s32 %v7671, %v7673
      %v7675 = vrot.slane %v7667, %v7674
      %v7677 = vunpack.c.l.s4 1966171168
      %v7678 = vunpack.c.0.s8 %v7677
      %v7679 = vlaneseq
      %v7680 = vshrl.u32 %v7679, 7
      %v7681 = vsub.s32 %v7678, %v7680
      %v7682 = vrot.slane %v7668, %v7681
      %v7683 = vcombine.low %v7675, %v7682
      %v7684 = vcombine.high %v7624, %v7631
      %v7685 = vcombine.high %v7638, %v7645
      %v7687 = vunpack.c.l.s4 1966171168
      %v7688 = vunpack.c.0.s8 %v7687
      %v7689 = vlaneseq
      %v7690 = vshrl.u32 %v7689, 7
      %v7691 = vsub.s32 %v7688, %v7690
      %v7692 = vrot.slane %v7684, %v7691
      %v7694 = vunpack.c.l.s4 1966171168
      %v7695 = vunpack.c.0.s8 %v7694
      %v7696 = vlaneseq
      %v7697 = vshrl.u32 %v7696, 7
      %v7698 = vsub.s32 %v7695, %v7697
      %v7699 = vrot.slane %v7685, %v7698
      %v7700 = vcombine.low %v7692, %v7699
      %7701 = vrot.lane.b32.xlu0 %v7613, 64
      %v7702 = vpop.permute.xlu0 %7701
      %7703 = vrot.lane.b32.xlu0 %v7683, 64
      %v7704 = vpop.permute.xlu0 %7703
      %7705 = vrot.lane.b32.xlu0 %v7662, 64
      %v7706 = vpop.permute.xlu0 %7705
      %7707 = vrot.lane.b32.xlu0 %v7700, 64
      %v7708 = vpop.permute.xlu0 %7707
      %v7709 = vsel %vm520, %v7702, %v7704
      %v7710 = vsel %vm520, %v7706, %v7708
      %7713 = vst [vmem:[#allocation4 + $0x1c0] sm:$0xff] %v7709
      %7714 = vst [vmem:[#allocation4 + $0x1e0] sm:$0xff] %v7710
      %7717 = vst [vmem:[#allocation4 + $0x200] sm:$0xff] %v7683
      %7718 = vst [vmem:[#allocation4 + $0x220] sm:$0xff] %v7700
      %v7719 = vld [vmem:[%s7331] ss:$8 sm:$0x3]
      %v7720 = vld [vmem:[%s7333] ss:$8 sm:$0x3]
      %v7721 = vld [vmem:[%s7335] ss:$8 sm:$0x3]
      %v7722 = vld [vmem:[%s7337] ss:$8 sm:$0x3]
      %v7723 = vld [vmem:[%s7339] ss:$8 sm:$0x3]
      %v7724 = vld [vmem:[%s7341] ss:$8 sm:$0x3]
      %v7725 = vld [vmem:[%s7343] ss:$8 sm:$0x3]
      %v7726 = vld [vmem:[%s7345] ss:$8 sm:$0x3]
      %v7727 = vld [vmem:[%s7347] ss:$8 sm:$0x3]
      %v7728 = vld [vmem:[%s7349] ss:$8 sm:$0x3]
      %v7729 = vld [vmem:[%s7351] ss:$8 sm:$0x3]
      %v7730 = vld [vmem:[%s7353] ss:$8 sm:$0x3]
      %v7731 = vld [vmem:[%s7355] ss:$8 sm:$0x3]
      %v7732 = vld [vmem:[%s7357] ss:$8 sm:$0x3]
      %v7733 = vld [vmem:[%s7359] ss:$8 sm:$0x3]
      %v7734 = vld [vmem:[%s7361] ss:$8 sm:$0x3]
      %v7751 = vcombine.low %v7719, %v7720
      %v7752 = vcombine.low %v7721, %v7722
      %v7753 = vcombine.low %v7723, %v7724
      %v7754 = vcombine.low %v7725, %v7726
      %v7756 = vunpack.c.l.s4 1966171168
      %v7757 = vunpack.c.0.s8 %v7756
      %v7758 = vlaneseq
      %v7759 = vshrl.u32 %v7758, 7
      %v7760 = vsub.s32 %v7757, %v7759
      %v7761 = vrot.slane %v7751, %v7760
      %v7763 = vunpack.c.l.s4 1966171168
      %v7764 = vunpack.c.0.s8 %v7763
      %v7765 = vlaneseq
      %v7766 = vshrl.u32 %v7765, 7
      %v7767 = vsub.s32 %v7764, %v7766
      %v7768 = vrot.slane %v7752, %v7767
      %v7770 = vunpack.c.l.s4 1966171168
      %v7771 = vunpack.c.0.s8 %v7770
      %v7772 = vlaneseq
      %v7773 = vshrl.u32 %v7772, 7
      %v7774 = vsub.s32 %v7771, %v7773
      %v7775 = vrot.slane %v7753, %v7774
      %v7777 = vunpack.c.l.s4 1966171168
      %v7778 = vunpack.c.0.s8 %v7777
      %v7779 = vlaneseq
      %v7780 = vshrl.u32 %v7779, 7
      %v7781 = vsub.s32 %v7778, %v7780
      %v7782 = vrot.slane %v7754, %v7781
      %v7783 = vcombine.low %v7761, %v7768
      %v7784 = vcombine.low %v7775, %v7782
      %v7786 = vunpack.c.l.s4 1966171168
      %v7787 = vunpack.c.0.s8 %v7786
      %v7788 = vlaneseq
      %v7789 = vshrl.u32 %v7788, 7
      %v7790 = vsub.s32 %v7787, %v7789
      %v7791 = vrot.slane %v7783, %v7790
      %v7793 = vunpack.c.l.s4 1966171168
      %v7794 = vunpack.c.0.s8 %v7793
      %v7795 = vlaneseq
      %v7796 = vshrl.u32 %v7795, 7
      %v7797 = vsub.s32 %v7794, %v7796
      %v7798 = vrot.slane %v7784, %v7797
      %v7799 = vcombine.low %v7791, %v7798
      %v7800 = vcombine.low %v7727, %v7728
      %v7801 = vcombine.low %v7729, %v7730
      %v7802 = vcombine.low %v7731, %v7732
      %v7803 = vcombine.low %v7733, %v7734
      %v7805 = vunpack.c.l.s4 1966171168
      %v7806 = vunpack.c.0.s8 %v7805
      %v7807 = vlaneseq
      %v7808 = vshrl.u32 %v7807, 7
      %v7809 = vsub.s32 %v7806, %v7808
      %v7810 = vrot.slane %v7800, %v7809
      %v7812 = vunpack.c.l.s4 1966171168
      %v7813 = vunpack.c.0.s8 %v7812
      %v7814 = vlaneseq
      %v7815 = vshrl.u32 %v7814, 7
      %v7816 = vsub.s32 %v7813, %v7815
      %v7817 = vrot.slane %v7801, %v7816
      %v7819 = vunpack.c.l.s4 1966171168
      %v7820 = vunpack.c.0.s8 %v7819
      %v7821 = vlaneseq
      %v7822 = vshrl.u32 %v7821, 7
      %v7823 = vsub.s32 %v7820, %v7822
      %v7824 = vrot.slane %v7802, %v7823
      %v7826 = vunpack.c.l.s4 1966171168
      %v7827 = vunpack.c.0.s8 %v7826
      %v7828 = vlaneseq
      %v7829 = vshrl.u32 %v7828, 7
      %v7830 = vsub.s32 %v7827, %v7829
      %v7831 = vrot.slane %v7803, %v7830
      %v7832 = vcombine.low %v7810, %v7817
      %v7833 = vcombine.low %v7824, %v7831
      %v7835 = vunpack.c.l.s4 1966171168
      %v7836 = vunpack.c.0.s8 %v7835
      %v7837 = vlaneseq
      %v7838 = vshrl.u32 %v7837, 7
      %v7839 = vsub.s32 %v7836, %v7838
      %v7840 = vrot.slane %v7832, %v7839
      %v7842 = vunpack.c.l.s4 1966171168
      %v7843 = vunpack.c.0.s8 %v7842
      %v7844 = vlaneseq
      %v7845 = vshrl.u32 %v7844, 7
      %v7846 = vsub.s32 %v7843, %v7845
      %v7847 = vrot.slane %v7833, %v7846
      %v7848 = vcombine.low %v7840, %v7847
      %7851 = vst [vmem:[#allocation4 + $0x188] sm:$0xff] %v7799
      %7852 = vst [vmem:[#allocation4 + $0x1a8] sm:$0xff] %v7848
      %v7853 = vcombine.high %v7761, %v7768
      %v7854 = vcombine.high %v7775, %v7782
      %v7856 = vunpack.c.l.s4 1966171168
      %v7857 = vunpack.c.0.s8 %v7856
      %v7858 = vlaneseq
      %v7859 = vshrl.u32 %v7858, 7
      %v7860 = vsub.s32 %v7857, %v7859
      %v7861 = vrot.slane %v7853, %v7860
      %v7863 = vunpack.c.l.s4 1966171168
      %v7864 = vunpack.c.0.s8 %v7863
      %v7865 = vlaneseq
      %v7866 = vshrl.u32 %v7865, 7
      %v7867 = vsub.s32 %v7864, %v7866
      %v7868 = vrot.slane %v7854, %v7867
      %v7869 = vcombine.low %v7861, %v7868
      %v7870 = vcombine.high %v7810, %v7817
      %v7871 = vcombine.high %v7824, %v7831
      %v7873 = vunpack.c.l.s4 1966171168
      %v7874 = vunpack.c.0.s8 %v7873
      %v7875 = vlaneseq
      %v7876 = vshrl.u32 %v7875, 7
      %v7877 = vsub.s32 %v7874, %v7876
      %v7878 = vrot.slane %v7870, %v7877
      %v7880 = vunpack.c.l.s4 1966171168
      %v7881 = vunpack.c.0.s8 %v7880
      %v7882 = vlaneseq
      %v7883 = vshrl.u32 %v7882, 7
      %v7884 = vsub.s32 %v7881, %v7883
      %v7885 = vrot.slane %v7871, %v7884
      %v7886 = vcombine.low %v7878, %v7885
      %7887 = vrot.lane.b32.xlu0 %v7799, 64
      %v7888 = vpop.permute.xlu0 %7887
      %7889 = vrot.lane.b32.xlu0 %v7869, 64
      %v7890 = vpop.permute.xlu0 %7889
      %7891 = vrot.lane.b32.xlu0 %v7848, 64
      %v7892 = vpop.permute.xlu0 %7891
      %7893 = vrot.lane.b32.xlu0 %v7886, 64
      %v7894 = vpop.permute.xlu0 %7893
      %v7895 = vsel %vm520, %v7888, %v7890
      %v7896 = vsel %vm520, %v7892, %v7894
      %7899 = vst [vmem:[#allocation4 + $0x1c8] sm:$0xff] %v7895
      %7900 = vst [vmem:[#allocation4 + $0x1e8] sm:$0xff] %v7896
      %7903 = vst [vmem:[#allocation4 + $0x208] sm:$0xff] %v7869
      %7904 = vst [vmem:[#allocation4 + $0x228] sm:$0xff] %v7886
      %s7905 = scalar_lea.vmem [#allocation3], 6
      %v7906 = vld [vmem:[%s7905] ss:$8 sm:$0x3]
      %s7907 = scalar_lea.vmem [#allocation3], 22
      %v7908 = vld [vmem:[%s7907] ss:$8 sm:$0x3]
      %s7909 = scalar_lea.vmem [#allocation3], 38
      %v7910 = vld [vmem:[%s7909] ss:$8 sm:$0x3]
      %s7911 = scalar_lea.vmem [#allocation3], 54
      %v7912 = vld [vmem:[%s7911] ss:$8 sm:$0x3]
      %s7913 = scalar_lea.vmem [#allocation3], 70
      %v7914 = vld [vmem:[%s7913] ss:$8 sm:$0x3]
      %s7915 = scalar_lea.vmem [#allocation3], 86
      %v7916 = vld [vmem:[%s7915] ss:$8 sm:$0x3]
      %s7917 = scalar_lea.vmem [#allocation3], 102
      %v7918 = vld [vmem:[%s7917] ss:$8 sm:$0x3]
      %s7919 = scalar_lea.vmem [#allocation3], 118
      %v7920 = vld [vmem:[%s7919] ss:$8 sm:$0x3]
      %s7921 = scalar_lea.vmem [#allocation3], 134
      %v7922 = vld [vmem:[%s7921] ss:$8 sm:$0x3]
      %s7923 = scalar_lea.vmem [#allocation3], 150
      %v7924 = vld [vmem:[%s7923] ss:$8 sm:$0x3]
      %s7925 = scalar_lea.vmem [#allocation3], 166
      %v7926 = vld [vmem:[%s7925] ss:$8 sm:$0x3]
      %s7927 = scalar_lea.vmem [#allocation3], 182
      %v7928 = vld [vmem:[%s7927] ss:$8 sm:$0x3]
      %s7929 = scalar_lea.vmem [#allocation3], 198
      %v7930 = vld [vmem:[%s7929] ss:$8 sm:$0x3]
      %s7931 = scalar_lea.vmem [#allocation3], 214
      %v7932 = vld [vmem:[%s7931] ss:$8 sm:$0x3]
      %s7933 = scalar_lea.vmem [#allocation3], 230
      %v7934 = vld [vmem:[%s7933] ss:$8 sm:$0x3]
      %s7935 = scalar_lea.vmem [#allocation3], 246
      %v7936 = vld [vmem:[%s7935] ss:$8 sm:$0x3]
      %v7953 = vcombine.low %v7906, %v7908
      %v7954 = vcombine.low %v7910, %v7912
      %v7955 = vcombine.low %v7914, %v7916
      %v7956 = vcombine.low %v7918, %v7920
      %v7958 = vunpack.c.l.s4 1966171168
      %v7959 = vunpack.c.0.s8 %v7958
      %v7960 = vlaneseq
      %v7961 = vshrl.u32 %v7960, 7
      %v7962 = vsub.s32 %v7959, %v7961
      %v7963 = vrot.slane %v7953, %v7962
      %v7965 = vunpack.c.l.s4 1966171168
      %v7966 = vunpack.c.0.s8 %v7965
      %v7967 = vlaneseq
      %v7968 = vshrl.u32 %v7967, 7
      %v7969 = vsub.s32 %v7966, %v7968
      %v7970 = vrot.slane %v7954, %v7969
      %v7972 = vunpack.c.l.s4 1966171168
      %v7973 = vunpack.c.0.s8 %v7972
      %v7974 = vlaneseq
      %v7975 = vshrl.u32 %v7974, 7
      %v7976 = vsub.s32 %v7973, %v7975
      %v7977 = vrot.slane %v7955, %v7976
      %v7979 = vunpack.c.l.s4 1966171168
      %v7980 = vunpack.c.0.s8 %v7979
      %v7981 = vlaneseq
      %v7982 = vshrl.u32 %v7981, 7
      %v7983 = vsub.s32 %v7980, %v7982
      %v7984 = vrot.slane %v7956, %v7983
      %v7985 = vcombine.low %v7963, %v7970
      %v7986 = vcombine.low %v7977, %v7984
      %v7988 = vunpack.c.l.s4 1966171168
      %v7989 = vunpack.c.0.s8 %v7988
      %v7990 = vlaneseq
      %v7991 = vshrl.u32 %v7990, 7
      %v7992 = vsub.s32 %v7989, %v7991
      %v7993 = vrot.slane %v7985, %v7992
      %v7995 = vunpack.c.l.s4 1966171168
      %v7996 = vunpack.c.0.s8 %v7995
      %v7997 = vlaneseq
      %v7998 = vshrl.u32 %v7997, 7
      %v7999 = vsub.s32 %v7996, %v7998
      %v8000 = vrot.slane %v7986, %v7999
      %v8001 = vcombine.low %v7993, %v8000
      %v8002 = vcombine.low %v7922, %v7924
      %v8003 = vcombine.low %v7926, %v7928
      %v8004 = vcombine.low %v7930, %v7932
      %v8005 = vcombine.low %v7934, %v7936
      %v8007 = vunpack.c.l.s4 1966171168
      %v8008 = vunpack.c.0.s8 %v8007
      %v8009 = vlaneseq
      %v8010 = vshrl.u32 %v8009, 7
      %v8011 = vsub.s32 %v8008, %v8010
      %v8012 = vrot.slane %v8002, %v8011
      %v8014 = vunpack.c.l.s4 1966171168
      %v8015 = vunpack.c.0.s8 %v8014
      %v8016 = vlaneseq
      %v8017 = vshrl.u32 %v8016, 7
      %v8018 = vsub.s32 %v8015, %v8017
      %v8019 = vrot.slane %v8003, %v8018
      %v8021 = vunpack.c.l.s4 1966171168
      %v8022 = vunpack.c.0.s8 %v8021
      %v8023 = vlaneseq
      %v8024 = vshrl.u32 %v8023, 7
      %v8025 = vsub.s32 %v8022, %v8024
      %v8026 = vrot.slane %v8004, %v8025
      %v8028 = vunpack.c.l.s4 1966171168
      %v8029 = vunpack.c.0.s8 %v8028
      %v8030 = vlaneseq
      %v8031 = vshrl.u32 %v8030, 7
      %v8032 = vsub.s32 %v8029, %v8031
      %v8033 = vrot.slane %v8005, %v8032
      %v8034 = vcombine.low %v8012, %v8019
      %v8035 = vcombine.low %v8026, %v8033
      %v8037 = vunpack.c.l.s4 1966171168
      %v8038 = vunpack.c.0.s8 %v8037
      %v8039 = vlaneseq
      %v8040 = vshrl.u32 %v8039, 7
      %v8041 = vsub.s32 %v8038, %v8040
      %v8042 = vrot.slane %v8034, %v8041
      %v8044 = vunpack.c.l.s4 1966171168
      %v8045 = vunpack.c.0.s8 %v8044
      %v8046 = vlaneseq
      %v8047 = vshrl.u32 %v8046, 7
      %v8048 = vsub.s32 %v8045, %v8047
      %v8049 = vrot.slane %v8035, %v8048
      %v8050 = vcombine.low %v8042, %v8049
      %8053 = vst [vmem:[#allocation4 + $0x190] sm:$0xff] %v8001
      %8054 = vst [vmem:[#allocation4 + $0x1b0] sm:$0xff] %v8050
      %v8055 = vcombine.high %v7963, %v7970
      %v8056 = vcombine.high %v7977, %v7984
      %v8058 = vunpack.c.l.s4 1966171168
      %v8059 = vunpack.c.0.s8 %v8058
      %v8060 = vlaneseq
      %v8061 = vshrl.u32 %v8060, 7
      %v8062 = vsub.s32 %v8059, %v8061
      %v8063 = vrot.slane %v8055, %v8062
      %v8065 = vunpack.c.l.s4 1966171168
      %v8066 = vunpack.c.0.s8 %v8065
      %v8067 = vlaneseq
      %v8068 = vshrl.u32 %v8067, 7
      %v8069 = vsub.s32 %v8066, %v8068
      %v8070 = vrot.slane %v8056, %v8069
      %v8071 = vcombine.low %v8063, %v8070
      %v8072 = vcombine.high %v8012, %v8019
      %v8073 = vcombine.high %v8026, %v8033
      %v8075 = vunpack.c.l.s4 1966171168
      %v8076 = vunpack.c.0.s8 %v8075
      %v8077 = vlaneseq
      %v8078 = vshrl.u32 %v8077, 7
      %v8079 = vsub.s32 %v8076, %v8078
      %v8080 = vrot.slane %v8072, %v8079
      %v8082 = vunpack.c.l.s4 1966171168
      %v8083 = vunpack.c.0.s8 %v8082
      %v8084 = vlaneseq
      %v8085 = vshrl.u32 %v8084, 7
      %v8086 = vsub.s32 %v8083, %v8085
      %v8087 = vrot.slane %v8073, %v8086
      %v8088 = vcombine.low %v8080, %v8087
      %8089 = vrot.lane.b32.xlu0 %v8001, 64
      %v8090 = vpop.permute.xlu0 %8089
      %8091 = vrot.lane.b32.xlu0 %v8071, 64
      %v8092 = vpop.permute.xlu0 %8091
      %8093 = vrot.lane.b32.xlu0 %v8050, 64
      %v8094 = vpop.permute.xlu0 %8093
      %8095 = vrot.lane.b32.xlu0 %v8088, 64
      %v8096 = vpop.permute.xlu0 %8095
      %v8097 = vsel %vm520, %v8090, %v8092
      %v8098 = vsel %vm520, %v8094, %v8096
      %8101 = vst [vmem:[#allocation4 + $0x1d0] sm:$0xff] %v8097
      %8102 = vst [vmem:[#allocation4 + $0x1f0] sm:$0xff] %v8098
      %8105 = vst [vmem:[#allocation4 + $0x210] sm:$0xff] %v8071
      %8106 = vst [vmem:[#allocation4 + $0x230] sm:$0xff] %v8088
      %s8107 = scalar_lea.vmem [#allocation3], 7
      %v8108 = vld [vmem:[%s8107] ss:$8 sm:$0x3]
      %s8109 = scalar_lea.vmem [#allocation3], 23
      %v8110 = vld [vmem:[%s8109] ss:$8 sm:$0x3]
      %s8111 = scalar_lea.vmem [#allocation3], 39
      %v8112 = vld [vmem:[%s8111] ss:$8 sm:$0x3]
      %s8113 = scalar_lea.vmem [#allocation3], 55
      %v8114 = vld [vmem:[%s8113] ss:$8 sm:$0x3]
      %s8115 = scalar_lea.vmem [#allocation3], 71
      %v8116 = vld [vmem:[%s8115] ss:$8 sm:$0x3]
      %s8117 = scalar_lea.vmem [#allocation3], 87
      %v8118 = vld [vmem:[%s8117] ss:$8 sm:$0x3]
      %s8119 = scalar_lea.vmem [#allocation3], 103
      %v8120 = vld [vmem:[%s8119] ss:$8 sm:$0x3]
      %s8121 = scalar_lea.vmem [#allocation3], 119
      %v8122 = vld [vmem:[%s8121] ss:$8 sm:$0x3]
      %s8123 = scalar_lea.vmem [#allocation3], 135
      %v8124 = vld [vmem:[%s8123] ss:$8 sm:$0x3]
      %s8125 = scalar_lea.vmem [#allocation3], 151
      %v8126 = vld [vmem:[%s8125] ss:$8 sm:$0x3]
      %s8127 = scalar_lea.vmem [#allocation3], 167
      %v8128 = vld [vmem:[%s8127] ss:$8 sm:$0x3]
      %s8129 = scalar_lea.vmem [#allocation3], 183
      %v8130 = vld [vmem:[%s8129] ss:$8 sm:$0x3]
      %s8131 = scalar_lea.vmem [#allocation3], 199
      %v8132 = vld [vmem:[%s8131] ss:$8 sm:$0x3]
      %s8133 = scalar_lea.vmem [#allocation3], 215
      %v8134 = vld [vmem:[%s8133] ss:$8 sm:$0x3]
      %s8135 = scalar_lea.vmem [#allocation3], 231
      %v8136 = vld [vmem:[%s8135] ss:$8 sm:$0x3]
      %s8137 = scalar_lea.vmem [#allocation3], 247
      %v8138 = vld [vmem:[%s8137] ss:$8 sm:$0x3]
      %v8155 = vcombine.low %v8108, %v8110
      %v8156 = vcombine.low %v8112, %v8114
      %v8157 = vcombine.low %v8116, %v8118
      %v8158 = vcombine.low %v8120, %v8122
      %v8160 = vunpack.c.l.s4 1966171168
      %v8161 = vunpack.c.0.s8 %v8160
      %v8162 = vlaneseq
      %v8163 = vshrl.u32 %v8162, 7
      %v8164 = vsub.s32 %v8161, %v8163
      %v8165 = vrot.slane %v8155, %v8164
      %v8167 = vunpack.c.l.s4 1966171168
      %v8168 = vunpack.c.0.s8 %v8167
      %v8169 = vlaneseq
      %v8170 = vshrl.u32 %v8169, 7
      %v8171 = vsub.s32 %v8168, %v8170
      %v8172 = vrot.slane %v8156, %v8171
      %v8174 = vunpack.c.l.s4 1966171168
      %v8175 = vunpack.c.0.s8 %v8174
      %v8176 = vlaneseq
      %v8177 = vshrl.u32 %v8176, 7
      %v8178 = vsub.s32 %v8175, %v8177
      %v8179 = vrot.slane %v8157, %v8178
      %v8181 = vunpack.c.l.s4 1966171168
      %v8182 = vunpack.c.0.s8 %v8181
      %v8183 = vlaneseq
      %v8184 = vshrl.u32 %v8183, 7
      %v8185 = vsub.s32 %v8182, %v8184
      %v8186 = vrot.slane %v8158, %v8185
      %v8187 = vcombine.low %v8165, %v8172
      %v8188 = vcombine.low %v8179, %v8186
      %v8190 = vunpack.c.l.s4 1966171168
      %v8191 = vunpack.c.0.s8 %v8190
      %v8192 = vlaneseq
      %v8193 = vshrl.u32 %v8192, 7
      %v8194 = vsub.s32 %v8191, %v8193
      %v8195 = vrot.slane %v8187, %v8194
      %v8197 = vunpack.c.l.s4 1966171168
      %v8198 = vunpack.c.0.s8 %v8197
      %v8199 = vlaneseq
      %v8200 = vshrl.u32 %v8199, 7
      %v8201 = vsub.s32 %v8198, %v8200
      %v8202 = vrot.slane %v8188, %v8201
      %v8203 = vcombine.low %v8195, %v8202
      %v8204 = vcombine.low %v8124, %v8126
      %v8205 = vcombine.low %v8128, %v8130
      %v8206 = vcombine.low %v8132, %v8134
      %v8207 = vcombine.low %v8136, %v8138
      %v8209 = vunpack.c.l.s4 1966171168
      %v8210 = vunpack.c.0.s8 %v8209
      %v8211 = vlaneseq
      %v8212 = vshrl.u32 %v8211, 7
      %v8213 = vsub.s32 %v8210, %v8212
      %v8214 = vrot.slane %v8204, %v8213
      %v8216 = vunpack.c.l.s4 1966171168
      %v8217 = vunpack.c.0.s8 %v8216
      %v8218 = vlaneseq
      %v8219 = vshrl.u32 %v8218, 7
      %v8220 = vsub.s32 %v8217, %v8219
      %v8221 = vrot.slane %v8205, %v8220
      %v8223 = vunpack.c.l.s4 1966171168
      %v8224 = vunpack.c.0.s8 %v8223
      %v8225 = vlaneseq
      %v8226 = vshrl.u32 %v8225, 7
      %v8227 = vsub.s32 %v8224, %v8226
      %v8228 = vrot.slane %v8206, %v8227
      %v8230 = vunpack.c.l.s4 1966171168
      %v8231 = vunpack.c.0.s8 %v8230
      %v8232 = vlaneseq
      %v8233 = vshrl.u32 %v8232, 7
      %v8234 = vsub.s32 %v8231, %v8233
      %v8235 = vrot.slane %v8207, %v8234
      %v8236 = vcombine.low %v8214, %v8221
      %v8237 = vcombine.low %v8228, %v8235
      %v8239 = vunpack.c.l.s4 1966171168
      %v8240 = vunpack.c.0.s8 %v8239
      %v8241 = vlaneseq
      %v8242 = vshrl.u32 %v8241, 7
      %v8243 = vsub.s32 %v8240, %v8242
      %v8244 = vrot.slane %v8236, %v8243
      %v8246 = vunpack.c.l.s4 1966171168
      %v8247 = vunpack.c.0.s8 %v8246
      %v8248 = vlaneseq
      %v8249 = vshrl.u32 %v8248, 7
      %v8250 = vsub.s32 %v8247, %v8249
      %v8251 = vrot.slane %v8237, %v8250
      %v8252 = vcombine.low %v8244, %v8251
      %8255 = vst [vmem:[#allocation4 + $0x198] sm:$0xff] %v8203
      %8256 = vst [vmem:[#allocation4 + $0x1b8] sm:$0xff] %v8252
      %v8257 = vcombine.high %v8165, %v8172
      %v8258 = vcombine.high %v8179, %v8186
      %v8260 = vunpack.c.l.s4 1966171168
      %v8261 = vunpack.c.0.s8 %v8260
      %v8262 = vlaneseq
      %v8263 = vshrl.u32 %v8262, 7
      %v8264 = vsub.s32 %v8261, %v8263
      %v8265 = vrot.slane %v8257, %v8264
      %v8267 = vunpack.c.l.s4 1966171168
      %v8268 = vunpack.c.0.s8 %v8267
      %v8269 = vlaneseq
      %v8270 = vshrl.u32 %v8269, 7
      %v8271 = vsub.s32 %v8268, %v8270
      %v8272 = vrot.slane %v8258, %v8271
      %v8273 = vcombine.low %v8265, %v8272
      %v8274 = vcombine.high %v8214, %v8221
      %v8275 = vcombine.high %v8228, %v8235
      %v8277 = vunpack.c.l.s4 1966171168
      %v8278 = vunpack.c.0.s8 %v8277
      %v8279 = vlaneseq
      %v8280 = vshrl.u32 %v8279, 7
      %v8281 = vsub.s32 %v8278, %v8280
      %v8282 = vrot.slane %v8274, %v8281
      %v8284 = vunpack.c.l.s4 1966171168
      %v8285 = vunpack.c.0.s8 %v8284
      %v8286 = vlaneseq
      %v8287 = vshrl.u32 %v8286, 7
      %v8288 = vsub.s32 %v8285, %v8287
      %v8289 = vrot.slane %v8275, %v8288
      %v8290 = vcombine.low %v8282, %v8289
      %8291 = vrot.lane.b32.xlu0 %v8203, 64
      %v8292 = vpop.permute.xlu0 %8291
      %8293 = vrot.lane.b32.xlu0 %v8273, 64
      %v8294 = vpop.permute.xlu0 %8293
      %8295 = vrot.lane.b32.xlu0 %v8252, 64
      %v8296 = vpop.permute.xlu0 %8295
      %8297 = vrot.lane.b32.xlu0 %v8290, 64
      %v8298 = vpop.permute.xlu0 %8297
      %v8299 = vsel %vm520, %v8292, %v8294
      %v8300 = vsel %vm520, %v8296, %v8298
      %8303 = vst [vmem:[#allocation4 + $0x1d8] sm:$0xff] %v8299
      %8304 = vst [vmem:[#allocation4 + $0x1f8] sm:$0xff] %v8300
      %8307 = vst [vmem:[#allocation4 + $0x218] sm:$0xff] %v8273
      %8308 = vst [vmem:[#allocation4 + $0x238] sm:$0xff] %v8290
      %v8309 = vld [vmem:[#allocation4] sm:$0xff]
      %v8310 = vld [vmem:[#allocation4 + $0x8] sm:$0xff]
      %v8311 = vld [vmem:[#allocation4 + $0x10] sm:$0xff]
      %v8312 = vld [vmem:[#allocation4 + $0x18] sm:$0xff]
      %v8313 = vld [vmem:[#allocation4 + $0x20] sm:$0xff]
      %v8314 = vld [vmem:[#allocation4 + $0x28] sm:$0xff]
      %v8315 = vld [vmem:[#allocation4 + $0x30] sm:$0xff]
      %v8316 = vld [vmem:[#allocation4 + $0x38] sm:$0xff]
      %v8317 = vld [vmem:[#allocation4 + $0x40] sm:$0xff]
      %v8318 = vld [vmem:[#allocation4 + $0x48] sm:$0xff]
      %v8319 = vld [vmem:[#allocation4 + $0x50] sm:$0xff]
      %v8320 = vld [vmem:[#allocation4 + $0x58] sm:$0xff]
      %v8321 = vld [vmem:[#allocation4 + $0x60] sm:$0xff]
      %v8322 = vld [vmem:[#allocation4 + $0x68] sm:$0xff]
      %v8323 = vld [vmem:[#allocation4 + $0x70] sm:$0xff]
      %v8324 = vld [vmem:[#allocation4 + $0x78] sm:$0xff]
      %v8325 = vld [vmem:[#allocation4 + $0x80] sm:$0xff]
      %v8326 = vld [vmem:[#allocation4 + $0x88] sm:$0xff]
      %v8327 = vld [vmem:[#allocation4 + $0x90] sm:$0xff]
      %v8328 = vld [vmem:[#allocation4 + $0x98] sm:$0xff]
      %v8329 = vld [vmem:[#allocation4 + $0xa0] sm:$0xff]
      %v8330 = vld [vmem:[#allocation4 + $0xa8] sm:$0xff]
      %v8331 = vld [vmem:[#allocation4 + $0xb0] sm:$0xff]
      %v8332 = vld [vmem:[#allocation4 + $0xb8] sm:$0xff]
      %v8333 = vld [vmem:[#allocation4 + $0xc0] sm:$0xff]
      %v8334 = vld [vmem:[#allocation4 + $0xc8] sm:$0xff]
      %v8335 = vld [vmem:[#allocation4 + $0xd0] sm:$0xff]
      %v8336 = vld [vmem:[#allocation4 + $0xd8] sm:$0xff]
      %v8337 = vld [vmem:[#allocation4 + $0xe0] sm:$0xff]
      %v8338 = vld [vmem:[#allocation4 + $0xe8] sm:$0xff]
      %v8339 = vld [vmem:[#allocation4 + $0xf0] sm:$0xff]
      %v8340 = vld [vmem:[#allocation4 + $0xf8] sm:$0xff]
      %v8341 = vld [vmem:[#allocation4 + $0x100] sm:$0xff]
      %v8342 = vld [vmem:[#allocation4 + $0x108] sm:$0xff]
      %v8343 = vld [vmem:[#allocation4 + $0x110] sm:$0xff]
      %v8344 = vld [vmem:[#allocation4 + $0x118] sm:$0xff]
      %v8345 = vld [vmem:[#allocation4 + $0x120] sm:$0xff]
      %v8346 = vld [vmem:[#allocation4 + $0x128] sm:$0xff]
      %v8347 = vld [vmem:[#allocation4 + $0x130] sm:$0xff]
      %v8348 = vld [vmem:[#allocation4 + $0x138] sm:$0xff]
      %v8349 = vld [vmem:[#allocation4 + $0x140] sm:$0xff]
      %v8350 = vld [vmem:[#allocation4 + $0x148] sm:$0xff]
      %v8351 = vld [vmem:[#allocation4 + $0x150] sm:$0xff]
      %v8352 = vld [vmem:[#allocation4 + $0x158] sm:$0xff]
      %v8353 = vld [vmem:[#allocation4 + $0x160] sm:$0xff]
      %v8354 = vld [vmem:[#allocation4 + $0x168] sm:$0xff]
      %v8355 = vld [vmem:[#allocation4 + $0x170] sm:$0xff]
      %v8356 = vld [vmem:[#allocation4 + $0x178] sm:$0xff]
      %v8357 = vld [vmem:[#allocation4 + $0x180] sm:$0xff]
      %v8358 = vld [vmem:[#allocation4 + $0x188] sm:$0xff]
      %v8359 = vld [vmem:[#allocation4 + $0x190] sm:$0xff]
      %v8360 = vld [vmem:[#allocation4 + $0x198] sm:$0xff]
      %v8361 = vld [vmem:[#allocation4 + $0x1a0] sm:$0xff]
      %v8362 = vld [vmem:[#allocation4 + $0x1a8] sm:$0xff]
      %v8363 = vld [vmem:[#allocation4 + $0x1b0] sm:$0xff]
      %v8364 = vld [vmem:[#allocation4 + $0x1b8] sm:$0xff]
      %v8365 = vld [vmem:[#allocation4 + $0x1c0] sm:$0xff]
      %v8366 = vld [vmem:[#allocation4 + $0x1c8] sm:$0xff]
      %v8367 = vld [vmem:[#allocation4 + $0x1d0] sm:$0xff]
      %v8368 = vld [vmem:[#allocation4 + $0x1d8] sm:$0xff]
      %v8369 = vld [vmem:[#allocation4 + $0x1e0] sm:$0xff]
      %v8370 = vld [vmem:[#allocation4 + $0x1e8] sm:$0xff]
      %v8371 = vld [vmem:[#allocation4 + $0x1f0] sm:$0xff]
      %v8372 = vld [vmem:[#allocation4 + $0x1f8] sm:$0xff]
      %v8373 = vld [vmem:[#allocation4 + $0x200] sm:$0xff]
      %v8374 = vld [vmem:[#allocation4 + $0x208] sm:$0xff]
      %v8375 = vld [vmem:[#allocation4 + $0x210] sm:$0xff]
      %v8376 = vld [vmem:[#allocation4 + $0x218] sm:$0xff]
      %v8377 = vld [vmem:[#allocation4 + $0x220] sm:$0xff]
      %v8378 = vld [vmem:[#allocation4 + $0x228] sm:$0xff]
      %v8379 = vld [vmem:[#allocation4 + $0x230] sm:$0xff]
      %v8380 = vld [vmem:[#allocation4 + $0x238] sm:$0xff]
      %v8381 = vld [vmem:[%s3] sm:$0xff]
      %v8382 = vld [vmem:[%s3 + $0x8] sm:$0xff]
      %v8383 = vld [vmem:[%s3 + $0x10] sm:$0xff]
      %v8384 = vld [vmem:[%s3 + $0x18] sm:$0xff]
      %v8385 = vld [vmem:[%s3 + $0x20] sm:$0xff]
      %v8386 = vld [vmem:[%s3 + $0x28] sm:$0xff]
      %v8387 = vld [vmem:[%s3 + $0x30] sm:$0xff]
      %v8388 = vld [vmem:[%s3 + $0x38] sm:$0xff]
      %v8389 = vld [vmem:[%s3 + $0x40] sm:$0xff]
      %v8390 = vld [vmem:[%s3 + $0x48] sm:$0xff]
      %v8391 = vld [vmem:[%s3 + $0x50] sm:$0xff]
      %v8392 = vld [vmem:[%s3 + $0x58] sm:$0xff]
      %v8393 = vld [vmem:[%s3 + $0x60] sm:$0xff]
      %v8394 = vld [vmem:[%s3 + $0x68] sm:$0xff]
      %v8395 = vld [vmem:[%s3 + $0x70] sm:$0xff]
      %v8396 = vld [vmem:[%s3 + $0x78] sm:$0xff]
      %v8397 = vld [vmem:[%s3 + $0x80] sm:$0xff]
      %v8398 = vld [vmem:[%s3 + $0x88] sm:$0xff]
      %v8399 = vld [vmem:[%s3 + $0x90] sm:$0xff]
      %v8400 = vld [vmem:[%s3 + $0x98] sm:$0xff]
      %v8401 = vld [vmem:[%s3 + $0xa0] sm:$0xff]
      %v8402 = vld [vmem:[%s3 + $0xa8] sm:$0xff]
      %v8403 = vld [vmem:[%s3 + $0xb0] sm:$0xff]
      %v8404 = vld [vmem:[%s3 + $0xb8] sm:$0xff]
      %v8405 = vld [vmem:[%s3 + $0xc0] sm:$0xff]
      %v8406 = vld [vmem:[%s3 + $0xc8] sm:$0xff]
      %v8407 = vld [vmem:[%s3 + $0xd0] sm:$0xff]
      %v8408 = vld [vmem:[%s3 + $0xd8] sm:$0xff]
      %v8409 = vld [vmem:[%s3 + $0xe0] sm:$0xff]
      %v8410 = vld [vmem:[%s3 + $0xe8] sm:$0xff]
      %v8411 = vld [vmem:[%s3 + $0xf0] sm:$0xff]
      %v8412 = vld [vmem:[%s3 + $0xf8] sm:$0xff]
      %v8413 = vld [vmem:[%s3 + $0x100] sm:$0xff]
      %v8414 = vld [vmem:[%s3 + $0x108] sm:$0xff]
      %v8415 = vld [vmem:[%s3 + $0x110] sm:$0xff]
      %v8416 = vld [vmem:[%s3 + $0x118] sm:$0xff]
      %v8417 = vld [vmem:[%s3 + $0x120] sm:$0xff]
      %v8418 = vld [vmem:[%s3 + $0x128] sm:$0xff]
      %v8419 = vld [vmem:[%s3 + $0x130] sm:$0xff]
      %v8420 = vld [vmem:[%s3 + $0x138] sm:$0xff]
      %v8421 = vld [vmem:[%s3 + $0x140] sm:$0xff]
      %v8422 = vld [vmem:[%s3 + $0x148] sm:$0xff]
      %v8423 = vld [vmem:[%s3 + $0x150] sm:$0xff]
      %v8424 = vld [vmem:[%s3 + $0x158] sm:$0xff]
      %v8425 = vld [vmem:[%s3 + $0x160] sm:$0xff]
      %v8426 = vld [vmem:[%s3 + $0x168] sm:$0xff]
      %v8427 = vld [vmem:[%s3 + $0x170] sm:$0xff]
      %v8428 = vld [vmem:[%s3 + $0x178] sm:$0xff]
      %v8429 = vld [vmem:[%s3 + $0x180] sm:$0xff]
      %v8430 = vld [vmem:[%s3 + $0x188] sm:$0xff]
      %v8431 = vld [vmem:[%s3 + $0x190] sm:$0xff]
      %v8432 = vld [vmem:[%s3 + $0x198] sm:$0xff]
      %v8433 = vld [vmem:[%s3 + $0x1a0] sm:$0xff]
      %v8434 = vld [vmem:[%s3 + $0x1a8] sm:$0xff]
      %v8435 = vld [vmem:[%s3 + $0x1b0] sm:$0xff]
      %v8436 = vld [vmem:[%s3 + $0x1b8] sm:$0xff]
      %v8437 = vld [vmem:[%s3 + $0x1c0] sm:$0xff]
      %v8438 = vld [vmem:[%s3 + $0x1c8] sm:$0xff]
      %v8439 = vld [vmem:[%s3 + $0x1d0] sm:$0xff]
      %v8440 = vld [vmem:[%s3 + $0x1d8] sm:$0xff]
      %v8441 = vld [vmem:[%s3 + $0x1e0] sm:$0xff]
      %v8442 = vld [vmem:[%s3 + $0x1e8] sm:$0xff]
      %v8443 = vld [vmem:[%s3 + $0x1f0] sm:$0xff]
      %v8444 = vld [vmem:[%s3 + $0x1f8] sm:$0xff]
      %v8445 = vld [vmem:[%s4] sm:$0x1]
      %v8447 = vlaneseq
      %v8448 = vshrl.u32 %v8447, 7
      %v8449 = vsub.s32 0, %v8448
      %v8450 = vrot.slane %v8445, %v8449
      %8452 = vmatprep.subr.mxu0 0.0
      %8453 = vmatpush1.msra.mxu0 %v8381
      %8454 = vmatprep.subr.mxu0 0.0
      %8455 = vmatpush1.msra.mxu0 %v8382
      %8456 = vmatprep.subr.mxu0 0.0
      %8457 = vmatpush1.msra.mxu0 %v8383
      %8458 = vmatprep.subr.mxu0 0.0
      %8459 = vmatpush1.msra.mxu0 %v8384
      %8460 = vmatprep.subr.mxu0 0.0
      %8461 = vmatpush1.msra.mxu0 %v8385
      %8462 = vmatprep.subr.mxu0 0.0
      %8463 = vmatpush1.msra.mxu0 %v8386
      %8464 = vmatprep.subr.mxu0 0.0
      %8465 = vmatpush1.msra.mxu0 %v8387
      %8466 = vmatprep.subr.mxu0 0.0
      %8467 = vmatpush1.msra.mxu0 %v8388
      %8468 = vmatprep.subr.mxu0 0.0
      %8469 = vmatpush1.msra.mxu0 %v8389
      %8470 = vmatprep.subr.mxu0 0.0
      %8471 = vmatpush1.msra.mxu0 %v8390
      %8472 = vmatprep.subr.mxu0 0.0
      %8473 = vmatpush1.msra.mxu0 %v8391
      %8474 = vmatprep.subr.mxu0 0.0
      %8475 = vmatpush1.msra.mxu0 %v8392
      %8476 = vmatprep.subr.mxu0 0.0
      %8477 = vmatpush1.msra.mxu0 %v8393
      %8478 = vmatprep.subr.mxu0 0.0
      %8479 = vmatpush1.msra.mxu0 %v8394
      %8480 = vmatprep.subr.mxu0 0.0
      %8481 = vmatpush1.msra.mxu0 %v8395
      %8482 = vmatprep.subr.mxu0 0.0
      %8483 = vmatpush1.msra.mxu0 %v8396
      %8484 = vmatprep.subr.mxu0 0.0
      %8485 = vmatpush1.msra.mxu0 %v8397
      %8486 = vmatprep.subr.mxu0 0.0
      %8487 = vmatpush1.msra.mxu0 %v8398
      %8488 = vmatprep.subr.mxu0 0.0
      %8489 = vmatpush1.msra.mxu0 %v8399
      %8490 = vmatprep.subr.mxu0 0.0
      %8491 = vmatpush1.msra.mxu0 %v8400
      %8492 = vmatprep.subr.mxu0 0.0
      %8493 = vmatpush1.msra.mxu0 %v8401
      %8494 = vmatprep.subr.mxu0 0.0
      %8495 = vmatpush1.msra.mxu0 %v8402
      %8496 = vmatprep.subr.mxu0 0.0
      %8497 = vmatpush1.msra.mxu0 %v8403
      %8498 = vmatprep.subr.mxu0 0.0
      %8499 = vmatpush1.msra.mxu0 %v8404
      %8500 = vmatprep.subr.mxu0 0.0
      %8501 = vmatpush1.msra.mxu0 %v8405
      %8502 = vmatprep.subr.mxu0 0.0
      %8503 = vmatpush1.msra.mxu0 %v8406
      %8504 = vmatprep.subr.mxu0 0.0
      %8505 = vmatpush1.msra.mxu0 %v8407
      %8506 = vmatprep.subr.mxu0 0.0
      %8507 = vmatpush1.msra.mxu0 %v8408
      %8508 = vmatprep.subr.mxu0 0.0
      %8509 = vmatpush1.msra.mxu0 %v8409
      %8510 = vmatprep.subr.mxu0 0.0
      %8511 = vmatpush1.msra.mxu0 %v8410
      %8512 = vmatprep.subr.mxu0 0.0
      %8513 = vmatpush1.msra.mxu0 %v8411
      %8514 = vmatprep.subr.mxu0 0.0
      %8515 = vmatpush1.msra.mxu0 %v8412
      %8516 = vmatprep.mubr.f32.mxu0 %v8310
      %8517 = vmatmul.mubr.f32.gmra.mrb[0].mxu0 %v8309
      %v8518 = vpop.f32.mrb[0].mxu0
      %v8519 = vadd.f32 %v8450, %v8518
      %v8520 = vpop.f32.mrb[0].mxu0
      %8521 = vmatprep.mubr.f32.mxu0 %v8314
      %8522 = vmatmul.mubr.f32.gmra.mrb[0].mxu0 %v8313
      %v8523 = vpop.f32.mrb[0].mxu0
      %v8524 = vadd.f32 %v8450, %v8523
      %v8525 = vpop.f32.mrb[0].mxu0
      %8526 = vmatprep.mubr.f32.mxu0 %v8318
      %8527 = vmatmul.mubr.f32.gmra.mrb[0].mxu0 %v8317
      %v8528 = vpop.f32.mrb[0].mxu0
      %v8529 = vadd.f32 %v8450, %v8528
      %v8530 = vpop.f32.mrb[0].mxu0
      %8531 = vmatprep.mubr.f32.mxu0 %v8322
      %8532 = vmatmul.mubr.f32.gmra.mrb[0].mxu0 %v8321
      %v8533 = vpop.f32.mrb[0].mxu0
      %v8534 = vadd.f32 %v8450, %v8533
      %v8535 = vpop.f32.mrb[0].mxu0
      %8536 = vmatprep.mubr.f32.mxu0 %v8326
      %8537 = vmatmul.mubr.f32.gmra.mrb[0].mxu0 %v8325
      %v8538 = vpop.f32.mrb[0].mxu0
      %v8539 = vadd.f32 %v8450, %v8538
      %v8540 = vpop.f32.mrb[0].mxu0
      %8541 = vmatprep.mubr.f32.mxu0 %v8330
      %8542 = vmatmul.mubr.f32.gmra.mrb[0].mxu0 %v8329
      %v8543 = vpop.f32.mrb[0].mxu0
      %v8544 = vadd.f32 %v8450, %v8543
      %v8545 = vpop.f32.mrb[0].mxu0
      %8546 = vmatprep.mubr.f32.mxu0 %v8334
      %8547 = vmatmul.mubr.f32.gmra.mrb[0].mxu0 %v8333
      %v8548 = vpop.f32.mrb[0].mxu0
      %v8549 = vadd.f32 %v8450, %v8548
      %v8550 = vpop.f32.mrb[0].mxu0
      %8551 = vmatprep.mubr.f32.mxu0 %v8338
      %8552 = vmatmul.mubr.f32.gmra.mrb[0].mxu0 %v8337
      %v8553 = vpop.f32.mrb[0].mxu0
      %v8554 = vadd.f32 %v8450, %v8553
      %v8555 = vpop.f32.mrb[0].mxu0
      %8556 = vmatprep.mubr.f32.mxu0 %v8342
      %8557 = vmatmul.mubr.f32.gmra.mrb[0].mxu0 %v8341
      %v8558 = vpop.f32.mrb[0].mxu0
      %v8559 = vadd.f32 %v8450, %v8558
      %v8560 = vpop.f32.mrb[0].mxu0
      %8561 = vmatprep.mubr.f32.mxu0 %v8346
      %8562 = vmatmul.mubr.f32.gmra.mrb[0].mxu0 %v8345
      %v8563 = vpop.f32.mrb[0].mxu0
      %v8564 = vadd.f32 %v8450, %v8563
      %v8565 = vpop.f32.mrb[0].mxu0
      %8566 = vmatprep.mubr.f32.mxu0 %v8350
      %8567 = vmatmul.mubr.f32.gmra.mrb[0].mxu0 %v8349
      %v8568 = vpop.f32.mrb[0].mxu0
      %v8569 = vadd.f32 %v8450, %v8568
      %v8570 = vpop.f32.mrb[0].mxu0
      %8571 = vmatprep.mubr.f32.mxu0 %v8354
      %8572 = vmatmul.mubr.f32.gmra.mrb[0].mxu0 %v8353
      %v8573 = vpop.f32.mrb[0].mxu0
      %v8574 = vadd.f32 %v8450, %v8573
      %v8575 = vpop.f32.mrb[0].mxu0
      %8576 = vmatprep.mubr.f32.mxu0 %v8358
      %8577 = vmatmul.mubr.f32.gmra.mrb[0].mxu0 %v8357
      %v8578 = vpop.f32.mrb[0].mxu0
      %v8579 = vadd.f32 %v8450, %v8578
      %v8580 = vpop.f32.mrb[0].mxu0
      %8581 = vmatprep.mubr.f32.mxu0 %v8362
      %8582 = vmatmul.mubr.f32.gmra.mrb[0].mxu0 %v8361
      %v8583 = vpop.f32.mrb[0].mxu0
      %v8584 = vadd.f32 %v8450, %v8583
      %v8585 = vpop.f32.mrb[0].mxu0
      %8586 = vmatprep.mubr.f32.mxu0 %v8366
      %8587 = vmatmul.mubr.f32.gmra.mrb[0].mxu0 %v8365
      %v8588 = vpop.f32.mrb[0].mxu0
      %v8589 = vadd.f32 %v8450, %v8588
      %v8590 = vpop.f32.mrb[0].mxu0
      %8591 = vmatprep.mubr.f32.mxu0 %v8370
      %8592 = vmatmul.mubr.f32.gmra.mrb[0].mxu0 %v8369
      %v8593 = vpop.f32.mrb[0].mxu0
      %v8594 = vadd.f32 %v8450, %v8593
      %v8595 = vpop.f32.mrb[0].mxu0
      %8596 = vmatprep.mubr.f32.mxu0 %v8374
      %8597 = vmatmul.mubr.f32.gmra.mrb[0].mxu0 %v8373
      %v8598 = vpop.f32.mrb[0].mxu0
      %v8599 = vadd.f32 %v8450, %v8598
      %v8600 = vpop.f32.mrb[0].mxu0
      %8601 = vmatprep.mubr.f32.mxu0 %v8378
      %8602 = vmatmul.mubr.f32.gmra.mrb[0].mxu0 %v8377
      %v8603 = vpop.f32.mrb[0].mxu0
      %v8604 = vadd.f32 %v8450, %v8603
      %v8605 = vpop.f32.mrb[0].mxu0
      %8606 = vdwg.mxu0
      %8607 = vmatprep.subr.mxu0 0.0
      %8608 = vmatpush1.msra.mxu0 %v8413
      %8609 = vmatprep.subr.mxu0 0.0
      %8610 = vmatpush1.msra.mxu0 %v8414
      %8611 = vmatprep.subr.mxu0 0.0
      %8612 = vmatpush1.msra.mxu0 %v8415
      %8613 = vmatprep.subr.mxu0 0.0
      %8614 = vmatpush1.msra.mxu0 %v8416
      %8615 = vmatprep.subr.mxu0 0.0
      %8616 = vmatpush1.msra.mxu0 %v8417
      %8617 = vmatprep.subr.mxu0 0.0
      %8618 = vmatpush1.msra.mxu0 %v8418
      %8619 = vmatprep.subr.mxu0 0.0
      %8620 = vmatpush1.msra.mxu0 %v8419
      %8621 = vmatprep.subr.mxu0 0.0
      %8622 = vmatpush1.msra.mxu0 %v8420
      %8623 = vmatprep.subr.mxu0 0.0
      %8624 = vmatpush1.msra.mxu0 %v8421
      %8625 = vmatprep.subr.mxu0 0.0
      %8626 = vmatpush1.msra.mxu0 %v8422
      %8627 = vmatprep.subr.mxu0 0.0
      %8628 = vmatpush1.msra.mxu0 %v8423
      %8629 = vmatprep.subr.mxu0 0.0
      %8630 = vmatpush1.msra.mxu0 %v8424
      %8631 = vmatprep.subr.mxu0 0.0
      %8632 = vmatpush1.msra.mxu0 %v8425
      %8633 = vmatprep.subr.mxu0 0.0
      %8634 = vmatpush1.msra.mxu0 %v8426
      %8635 = vmatprep.subr.mxu0 0.0
      %8636 = vmatpush1.msra.mxu0 %v8427
      %8637 = vmatprep.subr.mxu0 0.0
      %8638 = vmatpush1.msra.mxu0 %v8428
      %8639 = vmatprep.subr.mxu0 0.0
      %8640 = vmatpush1.msra.mxu0 %v8429
      %8641 = vmatprep.subr.mxu0 0.0
      %8642 = vmatpush1.msra.mxu0 %v8430
      %8643 = vmatprep.subr.mxu0 0.0
      %8644 = vmatpush1.msra.mxu0 %v8431
      %8645 = vmatprep.subr.mxu0 0.0
      %8646 = vmatpush1.msra.mxu0 %v8432
      %8647 = vmatprep.subr.mxu0 0.0
      %8648 = vmatpush1.msra.mxu0 %v8433
      %8649 = vmatprep.subr.mxu0 0.0
      %8650 = vmatpush1.msra.mxu0 %v8434
      %8651 = vmatprep.subr.mxu0 0.0
      %8652 = vmatpush1.msra.mxu0 %v8435
      %8653 = vmatprep.subr.mxu0 0.0
      %8654 = vmatpush1.msra.mxu0 %v8436
      %8655 = vmatprep.subr.mxu0 0.0
      %8656 = vmatpush1.msra.mxu0 %v8437
      %8657 = vmatprep.subr.mxu0 0.0
      %8658 = vmatpush1.msra.mxu0 %v8438
      %8659 = vmatprep.subr.mxu0 0.0
      %8660 = vmatpush1.msra.mxu0 %v8439
      %8661 = vmatprep.subr.mxu0 0.0
      %8662 = vmatpush1.msra.mxu0 %v8440
      %8663 = vmatprep.subr.mxu0 0.0
      %8664 = vmatpush1.msra.mxu0 %v8441
      %8665 = vmatprep.subr.mxu0 0.0
      %8666 = vmatpush1.msra.mxu0 %v8442
      %8667 = vmatprep.subr.mxu0 0.0
      %8668 = vmatpush1.msra.mxu0 %v8443
      %8669 = vmatprep.subr.mxu0 0.0
      %8670 = vmatpush1.msra.mxu0 %v8444
      %8671 = vmatprep.mubr.f32.mxu0 %v8312
      %8672 = vmatmul.mubr.f32.gmra.mrb[0].mxu0 %v8311
      %v8673 = vpop.f32.mrb[0].mxu0
      %v8674 = vadd.f32 %v8519, %v8673
      %v8675 = vpop.f32.mrb[0].mxu0
      %8676 = vmatprep.mubr.f32.mxu0 %v8316
      %8677 = vmatmul.mubr.f32.gmra.mrb[0].mxu0 %v8315
      %v8678 = vpop.f32.mrb[0].mxu0
      %v8679 = vadd.f32 %v8524, %v8678
      %v8680 = vpop.f32.mrb[0].mxu0
      %8681 = vmatprep.mubr.f32.mxu0 %v8320
      %8682 = vmatmul.mubr.f32.gmra.mrb[0].mxu0 %v8319
      %v8683 = vpop.f32.mrb[0].mxu0
      %v8684 = vadd.f32 %v8529, %v8683
      %v8685 = vpop.f32.mrb[0].mxu0
      %8686 = vmatprep.mubr.f32.mxu0 %v8324
      %8687 = vmatmul.mubr.f32.gmra.mrb[0].mxu0 %v8323
      %v8688 = vpop.f32.mrb[0].mxu0
      %v8689 = vadd.f32 %v8534, %v8688
      %v8690 = vpop.f32.mrb[0].mxu0
      %8691 = vmatprep.mubr.f32.mxu0 %v8328
      %8692 = vmatmul.mubr.f32.gmra.mrb[0].mxu0 %v8327
      %v8693 = vpop.f32.mrb[0].mxu0
      %v8694 = vadd.f32 %v8539, %v8693
      %v8695 = vpop.f32.mrb[0].mxu0
      %8696 = vmatprep.mubr.f32.mxu0 %v8332
      %8697 = vmatmul.mubr.f32.gmra.mrb[0].mxu0 %v8331
      %v8698 = vpop.f32.mrb[0].mxu0
      %v8699 = vadd.f32 %v8544, %v8698
      %v8700 = vpop.f32.mrb[0].mxu0
      %8701 = vmatprep.mubr.f32.mxu0 %v8336
      %8702 = vmatmul.mubr.f32.gmra.mrb[0].mxu0 %v8335
      %v8703 = vpop.f32.mrb[0].mxu0
      %v8704 = vadd.f32 %v8549, %v8703
      %v8705 = vpop.f32.mrb[0].mxu0
      %8706 = vmatprep.mubr.f32.mxu0 %v8340
      %8707 = vmatmul.mubr.f32.gmra.mrb[0].mxu0 %v8339
      %v8708 = vpop.f32.mrb[0].mxu0
      %v8709 = vadd.f32 %v8554, %v8708
      %v8710 = vpop.f32.mrb[0].mxu0
      %8711 = vmatprep.mubr.f32.mxu0 %v8344
      %8712 = vmatmul.mubr.f32.gmra.mrb[0].mxu0 %v8343
      %v8713 = vpop.f32.mrb[0].mxu0
      %v8714 = vadd.f32 %v8559, %v8713
      %v8715 = vpop.f32.mrb[0].mxu0
      %8716 = vmatprep.mubr.f32.mxu0 %v8348
      %8717 = vmatmul.mubr.f32.gmra.mrb[0].mxu0 %v8347
      %v8718 = vpop.f32.mrb[0].mxu0
      %v8719 = vadd.f32 %v8564, %v8718
      %v8720 = vpop.f32.mrb[0].mxu0
      %8721 = vmatprep.mubr.f32.mxu0 %v8352
      %8722 = vmatmul.mubr.f32.gmra.mrb[0].mxu0 %v8351
      %v8723 = vpop.f32.mrb[0].mxu0
      %v8724 = vadd.f32 %v8569, %v8723
      %v8725 = vpop.f32.mrb[0].mxu0
      %8726 = vmatprep.mubr.f32.mxu0 %v8356
      %8727 = vmatmul.mubr.f32.gmra.mrb[0].mxu0 %v8355
      %v8728 = vpop.f32.mrb[0].mxu0
      %v8729 = vadd.f32 %v8574, %v8728
      %v8730 = vpop.f32.mrb[0].mxu0
      %8731 = vmatprep.mubr.f32.mxu0 %v8360
      %8732 = vmatmul.mubr.f32.gmra.mrb[0].mxu0 %v8359
      %v8733 = vpop.f32.mrb[0].mxu0
      %v8734 = vadd.f32 %v8579, %v8733
      %v8735 = vpop.f32.mrb[0].mxu0
      %8736 = vmatprep.mubr.f32.mxu0 %v8364
      %8737 = vmatmul.mubr.f32.gmra.mrb[0].mxu0 %v8363
      %v8738 = vpop.f32.mrb[0].mxu0
      %v8739 = vadd.f32 %v8584, %v8738
      %v8740 = vpop.f32.mrb[0].mxu0
      %8741 = vmatprep.mubr.f32.mxu0 %v8368
      %8742 = vmatmul.mubr.f32.gmra.mrb[0].mxu0 %v8367
      %v8743 = vpop.f32.mrb[0].mxu0
      %v8744 = vadd.f32 %v8589, %v8743
      %v8745 = vpop.f32.mrb[0].mxu0
      %8746 = vmatprep.mubr.f32.mxu0 %v8372
      %8747 = vmatmul.mubr.f32.gmra.mrb[0].mxu0 %v8371
      %v8748 = vpop.f32.mrb[0].mxu0
      %v8749 = vadd.f32 %v8594, %v8748
      %v8750 = vpop.f32.mrb[0].mxu0
      %8751 = vmatprep.mubr.f32.mxu0 %v8376
      %8752 = vmatmul.mubr.f32.gmra.mrb[0].mxu0 %v8375
      %v8753 = vpop.f32.mrb[0].mxu0
      %v8754 = vadd.f32 %v8599, %v8753
      %v8755 = vpop.f32.mrb[0].mxu0
      %8756 = vmatprep.mubr.f32.mxu0 %v8380
      %8757 = vmatmul.mubr.f32.gmra.mrb[0].mxu0 %v8379
      %v8758 = vpop.f32.mrb[0].mxu0
      %v8759 = vadd.f32 %v8604, %v8758
      %v8760 = vpop.f32.mrb[0].mxu0
      %8761 = vdwg.mxu0
      %v8762 = vmax.f32 %v8674, 0.0
      %v8763 = vmax.f32 %v8679, 0.0
      %v8764 = vmax.f32 %v8684, 0.0
      %v8765 = vmax.f32 %v8689, 0.0
      %v8766 = vmax.f32 %v8694, 0.0
      %v8767 = vmax.f32 %v8699, 0.0
      %v8768 = vmax.f32 %v8704, 0.0
      %v8769 = vmax.f32 %v8709, 0.0
      %v8770 = vmax.f32 %v8714, 0.0
      %v8771 = vmax.f32 %v8719, 0.0
      %v8772 = vmax.f32 %v8724, 0.0
      %v8773 = vmax.f32 %v8729, 0.0
      %v8774 = vmax.f32 %v8734, 0.0
      %v8775 = vmax.f32 %v8739, 0.0
      %v8776 = vmax.f32 %v8744, 0.0
      %v8777 = vmax.f32 %v8749, 0.0
      %v8778 = vmax.f32 %v8754, 0.0
      %v8779 = vmax.f32 %v8759, 0.0
      %8780 = vst.msk [vmem:[#allocation5] sm:$0xff] %vm520, %v8762
      %8781 = vst.msk [vmem:[#allocation5 + $0x28] sm:$0xff] %vm520, %v8763
      %8784 = vrot.lane.b32.xlu0 %v8764, 64
      %v8785 = vpop.permute.xlu0 %8784
      %8786 = vrot.lane.b32.xlu0 %v8765, 64
      %v8787 = vpop.permute.xlu0 %8786
      %8790 = vst.msk [vmem:[#allocation5] sm:$0xff] %vm1289, %v8785
      %8791 = vst.msk [vmem:[#allocation5 + $0x28] sm:$0xff] %vm1289, %v8787
      %8792 = vst.msk [vmem:[#allocation5 + $0x8] sm:$0xff] %vm520, %v8766
      %8793 = vst.msk [vmem:[#allocation5 + $0x30] sm:$0xff] %vm520, %v8767
      %8796 = vrot.lane.b32.xlu0 %v8768, 64
      %v8797 = vpop.permute.xlu0 %8796
      %8798 = vrot.lane.b32.xlu0 %v8769, 64
      %v8799 = vpop.permute.xlu0 %8798
      %8802 = vst.msk [vmem:[#allocation5 + $0x8] sm:$0xff] %vm1289, %v8797
      %8803 = vst.msk [vmem:[#allocation5 + $0x30] sm:$0xff] %vm1289, %v8799
      %8804 = vst.msk [vmem:[#allocation5 + $0x10] sm:$0xff] %vm520, %v8770
      %8805 = vst.msk [vmem:[#allocation5 + $0x38] sm:$0xff] %vm520, %v8771
      %8808 = vrot.lane.b32.xlu0 %v8772, 64
      %v8809 = vpop.permute.xlu0 %8808
      %8810 = vrot.lane.b32.xlu0 %v8773, 64
      %v8811 = vpop.permute.xlu0 %8810
      %8814 = vst.msk [vmem:[#allocation5 + $0x10] sm:$0xff] %vm1289, %v8809
      %8815 = vst.msk [vmem:[#allocation5 + $0x38] sm:$0xff] %vm1289, %v8811
      %8816 = vst.msk [vmem:[#allocation5 + $0x18] sm:$0xff] %vm520, %v8774
      %8817 = vst.msk [vmem:[#allocation5 + $0x40] sm:$0xff] %vm520, %v8775
      %8820 = vrot.lane.b32.xlu0 %v8776, 64
      %v8821 = vpop.permute.xlu0 %8820
      %8822 = vrot.lane.b32.xlu0 %v8777, 64
      %v8823 = vpop.permute.xlu0 %8822
      %8826 = vst.msk [vmem:[#allocation5 + $0x18] sm:$0xff] %vm1289, %v8821
      %8827 = vst.msk [vmem:[#allocation5 + $0x40] sm:$0xff] %vm1289, %v8823
      %8828 = vst.msk [vmem:[#allocation5 + $0x20] sm:$0xff] %vm520, %v8778
      %8829 = vst.msk [vmem:[#allocation5 + $0x48] sm:$0xff] %vm520, %v8779
      %v8830 = vld [vmem:[#allocation5] sm:$0xff]
      %v8831 = vld [vmem:[#allocation5 + $0x8] sm:$0xff]
      %v8832 = vld [vmem:[#allocation5 + $0x10] sm:$0xff]
      %v8833 = vld [vmem:[#allocation5 + $0x18] sm:$0xff]
      %v8834 = vld [vmem:[#allocation5 + $0x20] sm:$0xff]
      %v8835 = vld [vmem:[#allocation5 + $0x28] sm:$0xff]
      %v8836 = vld [vmem:[#allocation5 + $0x30] sm:$0xff]
      %v8837 = vld [vmem:[#allocation5 + $0x38] sm:$0xff]
      %v8838 = vld [vmem:[#allocation5 + $0x40] sm:$0xff]
      %v8839 = vld [vmem:[#allocation5 + $0x48] sm:$0xff]
      %v8840 = vld [vmem:[%s5] sm:$0xff]
      %v8841 = vld [vmem:[%s5 + $0x8] sm:$0xff]
      %v8842 = vld [vmem:[%s5 + $0x10] sm:$0xff]
      %v8843 = vld [vmem:[%s5 + $0x18] sm:$0xff]
      %v8844 = vld [vmem:[%s5 + $0x20] sm:$0xff]
      %v8845 = vld [vmem:[%s5 + $0x28] sm:$0xff]
      %v8846 = vld [vmem:[%s5 + $0x30] sm:$0xff]
      %v8847 = vld [vmem:[%s5 + $0x38] sm:$0xff]
      %v8848 = vld [vmem:[%s5 + $0x40] sm:$0xff]
      %v8849 = vld [vmem:[%s5 + $0x48] sm:$0xff]
      %v8850 = vld [vmem:[%s5 + $0x50] sm:$0xff]
      %v8851 = vld [vmem:[%s5 + $0x58] sm:$0xff]
      %v8852 = vld [vmem:[%s5 + $0x60] sm:$0xff]
      %v8853 = vld [vmem:[%s5 + $0x68] sm:$0xff]
      %v8854 = vld [vmem:[%s5 + $0x70] sm:$0xff]
      %v8855 = vld [vmem:[%s5 + $0x78] sm:$0xff]
      %v8856 = vld [vmem:[%s5 + $0x80] sm:$0xff]
      %v8857 = vld [vmem:[%s5 + $0x88] sm:$0xff]
      %v8858 = vld [vmem:[%s5 + $0x90] sm:$0xff]
      %v8859 = vld [vmem:[%s5 + $0x98] sm:$0xff]
      %v8860 = vld [vmem:[%s5 + $0xa0] sm:$0xff]
      %v8861 = vld [vmem:[%s5 + $0xa8] sm:$0xff]
      %v8862 = vld [vmem:[%s5 + $0xb0] sm:$0xff]
      %v8863 = vld [vmem:[%s5 + $0xb8] sm:$0xff]
      %v8864 = vld [vmem:[%s5 + $0xc0] sm:$0xff]
      %v8865 = vld [vmem:[%s5 + $0xc8] sm:$0xff]
      %v8866 = vld [vmem:[%s5 + $0xd0] sm:$0xff]
      %v8867 = vld [vmem:[%s5 + $0xd8] sm:$0xff]
      %v8868 = vld [vmem:[%s5 + $0xe0] sm:$0xff]
      %v8869 = vld [vmem:[%s5 + $0xe8] sm:$0xff]
      %v8870 = vld [vmem:[%s5 + $0xf0] sm:$0xff]
      %v8871 = vld [vmem:[%s5 + $0xf8] sm:$0xff]
      %v8872 = vld [vmem:[%s5 + $0x100] sm:$0xff]
      %v8873 = vld [vmem:[%s5 + $0x108] sm:$0xff]
      %v8874 = vld [vmem:[%s5 + $0x110] sm:$0xff]
      %v8875 = vld [vmem:[%s5 + $0x118] sm:$0xff]
      %v8876 = vld [vmem:[%s5 + $0x120] sm:$0xff]
      %v8877 = vld [vmem:[%s5 + $0x128] sm:$0xff]
      %v8878 = vld [vmem:[%s5 + $0x130] sm:$0xff]
      %v8879 = vld [vmem:[%s5 + $0x138] sm:$0xff]
      %v8880 = vld [vmem:[%s5 + $0x140] sm:$0xff]
      %v8881 = vld [vmem:[%s5 + $0x148] sm:$0xff]
      %v8882 = vld [vmem:[%s5 + $0x150] sm:$0xff]
      %v8883 = vld [vmem:[%s5 + $0x158] sm:$0xff]
      %v8884 = vld [vmem:[%s5 + $0x160] sm:$0xff]
      %v8885 = vld [vmem:[%s5 + $0x168] sm:$0xff]
      %v8886 = vld [vmem:[%s5 + $0x170] sm:$0xff]
      %v8887 = vld [vmem:[%s5 + $0x178] sm:$0xff]
      %v8888 = vld [vmem:[%s5 + $0x180] sm:$0xff]
      %v8889 = vld [vmem:[%s5 + $0x188] sm:$0xff]
      %v8890 = vld [vmem:[%s5 + $0x190] sm:$0xff]
      %v8891 = vld [vmem:[%s5 + $0x198] sm:$0xff]
      %v8892 = vld [vmem:[%s5 + $0x1a0] sm:$0xff]
      %v8893 = vld [vmem:[%s5 + $0x1a8] sm:$0xff]
      %v8894 = vld [vmem:[%s5 + $0x1b0] sm:$0xff]
      %v8895 = vld [vmem:[%s5 + $0x1b8] sm:$0xff]
      %v8896 = vld [vmem:[%s5 + $0x1c0] sm:$0xff]
      %v8897 = vld [vmem:[%s5 + $0x1c8] sm:$0xff]
      %v8898 = vld [vmem:[%s5 + $0x1d0] sm:$0xff]
      %v8899 = vld [vmem:[%s5 + $0x1d8] sm:$0xff]
      %v8900 = vld [vmem:[%s5 + $0x1e0] sm:$0xff]
      %v8901 = vld [vmem:[%s5 + $0x1e8] sm:$0xff]
      %v8902 = vld [vmem:[%s5 + $0x1f0] sm:$0xff]
      %v8903 = vld [vmem:[%s5 + $0x1f8] sm:$0xff]
      %v8904 = vld [vmem:[%s5 + $0x200] sm:$0xff]
      %v8905 = vld [vmem:[%s5 + $0x208] sm:$0xff]
      %v8906 = vld [vmem:[%s5 + $0x210] sm:$0xff]
      %v8907 = vld [vmem:[%s5 + $0x218] sm:$0xff]
      %v8908 = vld [vmem:[%s5 + $0x220] sm:$0xff]
      %v8909 = vld [vmem:[%s5 + $0x228] sm:$0xff]
      %v8910 = vld [vmem:[%s5 + $0x230] sm:$0xff]
      %v8911 = vld [vmem:[%s5 + $0x238] sm:$0xff]
      %v8912 = vld [vmem:[%s6] sm:$0x1]
      %v8914 = vlaneseq
      %v8915 = vshrl.u32 %v8914, 7
      %v8916 = vsub.s32 0, %v8915
      %v8917 = vrot.slane %v8912, %v8916
      %v8920 = vsel %vm520, %v8834, 0
      %v8923 = vsel %vm520, %v8839, 0
      %8925 = vmatprep.subr.mxu0 0.0
      %8926 = vmatpush1.msra.mxu0 %v8840
      %8927 = vmatprep.subr.mxu0 0.0
      %8928 = vmatpush1.msra.mxu0 %v8841
      %8929 = vmatprep.subr.mxu0 0.0
      %8930 = vmatpush1.msra.mxu0 %v8842
      %8931 = vmatprep.subr.mxu0 0.0
      %8932 = vmatpush1.msra.mxu0 %v8843
      %8933 = vmatprep.subr.mxu0 0.0
      %8934 = vmatpush1.msra.mxu0 %v8844
      %8935 = vmatprep.subr.mxu0 0.0
      %8936 = vmatpush1.msra.mxu0 %v8845
      %8937 = vmatprep.subr.mxu0 0.0
      %8938 = vmatpush1.msra.mxu0 %v8846
      %8939 = vmatprep.subr.mxu0 0.0
      %8940 = vmatpush1.msra.mxu0 %v8847
      %8941 = vmatprep.subr.mxu0 0.0
      %8942 = vmatpush1.msra.mxu0 %v8848
      %8943 = vmatprep.subr.mxu0 0.0
      %8944 = vmatpush1.msra.mxu0 %v8849
      %8945 = vmatprep.subr.mxu0 0.0
      %8946 = vmatpush1.msra.mxu0 %v8850
      %8947 = vmatprep.subr.mxu0 0.0
      %8948 = vmatpush1.msra.mxu0 %v8851
      %8949 = vmatprep.subr.mxu0 0.0
      %8950 = vmatpush1.msra.mxu0 %v8852
      %8951 = vmatprep.subr.mxu0 0.0
      %8952 = vmatpush1.msra.mxu0 %v8853
      %8953 = vmatprep.subr.mxu0 0.0
      %8954 = vmatpush1.msra.mxu0 %v8854
      %8955 = vmatprep.subr.mxu0 0.0
      %8956 = vmatpush1.msra.mxu0 %v8855
      %8957 = vmatprep.subr.mxu0 0.0
      %8958 = vmatpush1.msra.mxu0 %v8856
      %8959 = vmatprep.subr.mxu0 0.0
      %8960 = vmatpush1.msra.mxu0 %v8857
      %8961 = vmatprep.subr.mxu0 0.0
      %8962 = vmatpush1.msra.mxu0 %v8858
      %8963 = vmatprep.subr.mxu0 0.0
      %8964 = vmatpush1.msra.mxu0 %v8859
      %8965 = vmatprep.subr.mxu0 0.0
      %8966 = vmatpush1.msra.mxu0 %v8860
      %8967 = vmatprep.subr.mxu0 0.0
      %8968 = vmatpush1.msra.mxu0 %v8861
      %8969 = vmatprep.subr.mxu0 0.0
      %8970 = vmatpush1.msra.mxu0 %v8862
      %8971 = vmatprep.subr.mxu0 0.0
      %8972 = vmatpush1.msra.mxu0 %v8863
      %8973 = vmatprep.subr.mxu0 0.0
      %8974 = vmatpush1.msra.mxu0 %v8864
      %8975 = vmatprep.subr.mxu0 0.0
      %8976 = vmatpush1.msra.mxu0 %v8865
      %8977 = vmatprep.subr.mxu0 0.0
      %8978 = vmatpush1.msra.mxu0 %v8866
      %8979 = vmatprep.subr.mxu0 0.0
      %8980 = vmatpush1.msra.mxu0 %v8867
      %8981 = vmatprep.subr.mxu0 0.0
      %8982 = vmatpush1.msra.mxu0 %v8868
      %8983 = vmatprep.subr.mxu0 0.0
      %8984 = vmatpush1.msra.mxu0 %v8869
      %8985 = vmatprep.subr.mxu0 0.0
      %8986 = vmatpush1.msra.mxu0 %v8870
      %8987 = vmatprep.subr.mxu0 0.0
      %8988 = vmatpush1.msra.mxu0 %v8871
      %8989 = vmatprep.mubr.f32.mxu0 %v8831
      %8990 = vmatmul.mubr.f32.gmra.mrb[0].mxu0 %v8830
      %v8991 = vpop.f32.mrb[0].mxu0
      %v8992 = vadd.f32 %v8917, %v8991
      %v8993 = vpop.f32.mrb[0].mxu0
      %8994 = vmatprep.mubr.f32.mxu0 %v8836
      %8995 = vmatmul.mubr.f32.gmra.mrb[0].mxu0 %v8835
      %v8996 = vpop.f32.mrb[0].mxu0
      %v8997 = vadd.f32 %v8917, %v8996
      %v8998 = vpop.f32.mrb[0].mxu0
      %8999 = vdwg.mxu0
      %9000 = vmatprep.subr.mxu0 0.0
      %9001 = vmatpush1.msra.mxu0 %v8872
      %9002 = vmatprep.subr.mxu0 0.0
      %9003 = vmatpush1.msra.mxu0 %v8873
      %9004 = vmatprep.subr.mxu0 0.0
      %9005 = vmatpush1.msra.mxu0 %v8874
      %9006 = vmatprep.subr.mxu0 0.0
      %9007 = vmatpush1.msra.mxu0 %v8875
      %9008 = vmatprep.subr.mxu0 0.0
      %9009 = vmatpush1.msra.mxu0 %v8876
      %9010 = vmatprep.subr.mxu0 0.0
      %9011 = vmatpush1.msra.mxu0 %v8877
      %9012 = vmatprep.subr.mxu0 0.0
      %9013 = vmatpush1.msra.mxu0 %v8878
      %9014 = vmatprep.subr.mxu0 0.0
      %9015 = vmatpush1.msra.mxu0 %v8879
      %9016 = vmatprep.subr.mxu0 0.0
      %9017 = vmatpush1.msra.mxu0 %v8880
      %9018 = vmatprep.subr.mxu0 0.0
      %9019 = vmatpush1.msra.mxu0 %v8881
      %9020 = vmatprep.subr.mxu0 0.0
      %9021 = vmatpush1.msra.mxu0 %v8882
      %9022 = vmatprep.subr.mxu0 0.0
      %9023 = vmatpush1.msra.mxu0 %v8883
      %9024 = vmatprep.subr.mxu0 0.0
      %9025 = vmatpush1.msra.mxu0 %v8884
      %9026 = vmatprep.subr.mxu0 0.0
      %9027 = vmatpush1.msra.mxu0 %v8885
      %9028 = vmatprep.subr.mxu0 0.0
      %9029 = vmatpush1.msra.mxu0 %v8886
      %9030 = vmatprep.subr.mxu0 0.0
      %9031 = vmatpush1.msra.mxu0 %v8887
      %9032 = vmatprep.subr.mxu0 0.0
      %9033 = vmatpush1.msra.mxu0 %v8888
      %9034 = vmatprep.subr.mxu0 0.0
      %9035 = vmatpush1.msra.mxu0 %v8889
      %9036 = vmatprep.subr.mxu0 0.0
      %9037 = vmatpush1.msra.mxu0 %v8890
      %9038 = vmatprep.subr.mxu0 0.0
      %9039 = vmatpush1.msra.mxu0 %v8891
      %9040 = vmatprep.subr.mxu0 0.0
      %9041 = vmatpush1.msra.mxu0 %v8892
      %9042 = vmatprep.subr.mxu0 0.0
      %9043 = vmatpush1.msra.mxu0 %v8893
      %9044 = vmatprep.subr.mxu0 0.0
      %9045 = vmatpush1.msra.mxu0 %v8894
      %9046 = vmatprep.subr.mxu0 0.0
      %9047 = vmatpush1.msra.mxu0 %v8895
      %9048 = vmatprep.subr.mxu0 0.0
      %9049 = vmatpush1.msra.mxu0 %v8896
      %9050 = vmatprep.subr.mxu0 0.0
      %9051 = vmatpush1.msra.mxu0 %v8897
      %9052 = vmatprep.subr.mxu0 0.0
      %9053 = vmatpush1.msra.mxu0 %v8898
      %9054 = vmatprep.subr.mxu0 0.0
      %9055 = vmatpush1.msra.mxu0 %v8899
      %9056 = vmatprep.subr.mxu0 0.0
      %9057 = vmatpush1.msra.mxu0 %v8900
      %9058 = vmatprep.subr.mxu0 0.0
      %9059 = vmatpush1.msra.mxu0 %v8901
      %9060 = vmatprep.subr.mxu0 0.0
      %9061 = vmatpush1.msra.mxu0 %v8902
      %9062 = vmatprep.subr.mxu0 0.0
      %9063 = vmatpush1.msra.mxu0 %v8903
      %9064 = vmatprep.mubr.f32.mxu0 %v8833
      %9065 = vmatmul.mubr.f32.gmra.mrb[0].mxu0 %v8832
      %v9066 = vpop.f32.mrb[0].mxu0
      %v9067 = vadd.f32 %v8992, %v9066
      %v9068 = vpop.f32.mrb[0].mxu0
      %9069 = vmatprep.mubr.f32.mxu0 %v8838
      %9070 = vmatmul.mubr.f32.gmra.mrb[0].mxu0 %v8837
      %v9071 = vpop.f32.mrb[0].mxu0
      %v9072 = vadd.f32 %v8997, %v9071
      %v9073 = vpop.f32.mrb[0].mxu0
      %9074 = vdwg.mxu0
      %9075 = vmatprep.subr.mxu0 0.0
      %9076 = vmatpush1.msra.mxu0 %v8904
      %9077 = vmatprep.subr.mxu0 0.0
      %9078 = vmatpush1.msra.mxu0 %v8905
      %9079 = vmatprep.subr.mxu0 0.0
      %9080 = vmatpush1.msra.mxu0 %v8906
      %9081 = vmatprep.subr.mxu0 0.0
      %9082 = vmatpush1.msra.mxu0 %v8907
      %9083 = vmatprep.subr.mxu0 0.0
      %9084 = vmatpush1.msra.mxu0 %v8908
      %9085 = vmatprep.subr.mxu0 0.0
      %9086 = vmatpush1.msra.mxu0 %v8909
      %9087 = vmatprep.subr.mxu0 0.0
      %9088 = vmatpush1.msra.mxu0 %v8910
      %9089 = vmatprep.subr.mxu0 0.0
      %9090 = vmatpush1.msra.mxu0 %v8911
      %9091 = vmatprep.subr.mxu0 0.0
      %9092 = vmatpush1.msra.mxu0 0.0
      %9093 = vmatprep.subr.mxu0 0.0
      %9094 = vmatpush1.msra.mxu0 0.0
      %9095 = vmatprep.subr.mxu0 0.0
      %9096 = vmatpush1.msra.mxu0 0.0
      %9097 = vmatprep.subr.mxu0 0.0
      %9098 = vmatpush1.msra.mxu0 0.0
      %9099 = vmatprep.subr.mxu0 0.0
      %9100 = vmatpush1.msra.mxu0 0.0
      %9101 = vmatprep.subr.mxu0 0.0
      %9102 = vmatpush1.msra.mxu0 0.0
      %9103 = vmatprep.subr.mxu0 0.0
      %9104 = vmatpush1.msra.mxu0 0.0
      %9105 = vmatprep.subr.mxu0 0.0
      %9106 = vmatpush1.msra.mxu0 0.0
      %9107 = vmatprep.subr.mxu0 0.0
      %9108 = vmatpush1.msra.mxu0 0.0
      %9109 = vmatprep.subr.mxu0 0.0
      %9110 = vmatpush1.msra.mxu0 0.0
      %9111 = vmatprep.subr.mxu0 0.0
      %9112 = vmatpush1.msra.mxu0 0.0
      %9113 = vmatprep.subr.mxu0 0.0
      %9114 = vmatpush1.msra.mxu0 0.0
      %9115 = vmatprep.subr.mxu0 0.0
      %9116 = vmatpush1.msra.mxu0 0.0
      %9117 = vmatprep.subr.mxu0 0.0
      %9118 = vmatpush1.msra.mxu0 0.0
      %9119 = vmatprep.subr.mxu0 0.0
      %9120 = vmatpush1.msra.mxu0 0.0
      %9121 = vmatprep.subr.mxu0 0.0
      %9122 = vmatpush1.msra.mxu0 0.0
      %9123 = vmatprep.subr.mxu0 0.0
      %9124 = vmatpush1.msra.mxu0 0.0
      %9125 = vmatprep.subr.mxu0 0.0
      %9126 = vmatpush1.msra.mxu0 0.0
      %9127 = vmatprep.subr.mxu0 0.0
      %9128 = vmatpush1.msra.mxu0 0.0
      %9129 = vmatprep.subr.mxu0 0.0
      %9130 = vmatpush1.msra.mxu0 0.0
      %9131 = vmatprep.subr.mxu0 0.0
      %9132 = vmatpush1.msra.mxu0 0.0
      %9133 = vmatprep.subr.mxu0 0.0
      %9134 = vmatpush1.msra.mxu0 0.0
      %9135 = vmatprep.subr.mxu0 0.0
      %9136 = vmatpush1.msra.mxu0 0.0
      %9137 = vmatprep.subr.mxu0 0.0
      %9138 = vmatpush1.msra.mxu0 0.0
      %9139 = vmatprep.mubr.f32.mxu0 0.0
      %9140 = vmatmul.mubr.f32.gmra.mrb[0].mxu0 %v8920
      %v9141 = vpop.f32.mrb[0].mxu0
      %v9142 = vadd.f32 %v9067, %v9141
      %v9143 = vpop.f32.mrb[0].mxu0
      %9144 = vmatprep.mubr.f32.mxu0 0.0
      %9145 = vmatmul.mubr.f32.gmra.mrb[0].mxu0 %v8923
      %v9146 = vpop.f32.mrb[0].mxu0
      %v9147 = vadd.f32 %v9072, %v9146
      %v9148 = vpop.f32.mrb[0].mxu0
      %9149 = vdwg.mxu0
      %v9150 = vmax.f32 %v9142, 0.0
      %v9151 = vmax.f32 %v9147, 0.0
      %v9152 = vld [vmem:[%s7] sm:$0xff]
      %v9153 = vld [vmem:[%s7 + $0x8] sm:$0xff]
      %v9154 = vld [vmem:[%s7 + $0x10] sm:$0xff]
      %v9155 = vld [vmem:[%s7 + $0x18] sm:$0xff]
      %v9156 = vld [vmem:[%s7 + $0x20] sm:$0xff]
      %v9157 = vld [vmem:[%s7 + $0x28] sm:$0xff]
      %v9158 = vld [vmem:[%s7 + $0x30] sm:$0xff]
      %v9159 = vld [vmem:[%s7 + $0x38] sm:$0xff]
      %v9160 = vld [vmem:[%s7 + $0x40] sm:$0xff]
      %v9161 = vld [vmem:[%s7 + $0x48] sm:$0xff]
      %v9162 = vld [vmem:[%s7 + $0x50] sm:$0xff]
      %v9163 = vld [vmem:[%s7 + $0x58] sm:$0xff]
      %v9164 = vld [vmem:[%s7 + $0x60] sm:$0xff]
      %v9165 = vld [vmem:[%s7 + $0x68] sm:$0xff]
      %v9166 = vld [vmem:[%s7 + $0x70] sm:$0xff]
      %v9167 = vld [vmem:[%s7 + $0x78] sm:$0xff]
      %v9168 = vld [vmem:[%s8] sm:$0x3]
      %v9170 = vlaneseq
      %v9171 = vshrl.u32 %v9170, 7
      %v9172 = vsub.s32 0, %v9171
      %v9173 = vrot.slane %v9168, %v9172
      %v9174 = vlaneseq
      %v9175 = vshrl.u32 %v9174, 7
      %v9176 = vsub.s32 1, %v9175
      %v9177 = vrot.slane %v9168, %v9176
      %v9181 = vsel %vm520, %v9150, 0
      %v9184 = vsel %vm520, %v9151, 0
      %9186 = vmatprep.subr.mxu0 %v9153
      %9187 = vmatpush1.msra.mxu0 %v9152
      %9188 = vmatprep.subr.mxu0 %v9155
      %9189 = vmatpush1.msra.mxu0 %v9154
      %9190 = vmatprep.subr.mxu0 %v9157
      %9191 = vmatpush1.msra.mxu0 %v9156
      %9192 = vmatprep.subr.mxu0 %v9159
      %9193 = vmatpush1.msra.mxu0 %v9158
      %9194 = vmatprep.subr.mxu0 %v9161
      %9195 = vmatpush1.msra.mxu0 %v9160
      %9196 = vmatprep.subr.mxu0 %v9163
      %9197 = vmatpush1.msra.mxu0 %v9162
      %9198 = vmatprep.subr.mxu0 %v9165
      %9199 = vmatpush1.msra.mxu0 %v9164
      %9200 = vmatprep.subr.mxu0 %v9167
      %9201 = vmatpush1.msra.mxu0 %v9166
      %9202 = vmatprep.subr.mxu0 0.0
      %9203 = vmatpush1.msra.mxu0 0.0
      %9204 = vmatprep.subr.mxu0 0.0
      %9205 = vmatpush1.msra.mxu0 0.0
      %9206 = vmatprep.subr.mxu0 0.0
      %9207 = vmatpush1.msra.mxu0 0.0
      %9208 = vmatprep.subr.mxu0 0.0
      %9209 = vmatpush1.msra.mxu0 0.0
      %9210 = vmatprep.subr.mxu0 0.0
      %9211 = vmatpush1.msra.mxu0 0.0
      %9212 = vmatprep.subr.mxu0 0.0
      %9213 = vmatpush1.msra.mxu0 0.0
      %9214 = vmatprep.subr.mxu0 0.0
      %9215 = vmatpush1.msra.mxu0 0.0
      %9216 = vmatprep.subr.mxu0 0.0
      %9217 = vmatpush1.msra.mxu0 0.0
      %9218 = vmatprep.subr.mxu0 0.0
      %9219 = vmatpush1.msra.mxu0 0.0
      %9220 = vmatprep.subr.mxu0 0.0
      %9221 = vmatpush1.msra.mxu0 0.0
      %9222 = vmatprep.subr.mxu0 0.0
      %9223 = vmatpush1.msra.mxu0 0.0
      %9224 = vmatprep.subr.mxu0 0.0
      %9225 = vmatpush1.msra.mxu0 0.0
      %9226 = vmatprep.subr.mxu0 0.0
      %9227 = vmatpush1.msra.mxu0 0.0
      %9228 = vmatprep.subr.mxu0 0.0
      %9229 = vmatpush1.msra.mxu0 0.0
      %9230 = vmatprep.subr.mxu0 0.0
      %9231 = vmatpush1.msra.mxu0 0.0
      %9232 = vmatprep.subr.mxu0 0.0
      %9233 = vmatpush1.msra.mxu0 0.0
      %9234 = vmatprep.subr.mxu0 0.0
      %9235 = vmatpush1.msra.mxu0 0.0
      %9236 = vmatprep.subr.mxu0 0.0
      %9237 = vmatpush1.msra.mxu0 0.0
      %9238 = vmatprep.subr.mxu0 0.0
      %9239 = vmatpush1.msra.mxu0 0.0
      %9240 = vmatprep.subr.mxu0 0.0
      %9241 = vmatpush1.msra.mxu0 0.0
      %9242 = vmatprep.subr.mxu0 0.0
      %9243 = vmatpush1.msra.mxu0 0.0
      %9244 = vmatprep.subr.mxu0 0.0
      %9245 = vmatpush1.msra.mxu0 0.0
      %9246 = vmatprep.subr.mxu0 0.0
      %9247 = vmatpush1.msra.mxu0 0.0
      %9248 = vmatprep.subr.mxu0 0.0
      %9249 = vmatpush1.msra.mxu0 0.0
      %9250 = vmatprep.mubr.f32.mxu0 0.0
      %9251 = vmatmul.mubr.f32.gmra.mrb[0].mxu0 %v9181
      %v9252 = vpop.f32.mrb[0].mxu0
      %v9253 = vadd.f32 %v9173, %v9252
      %v9254 = vpop.f32.mrb[0].mxu0
      %v9255 = vadd.f32 %v9177, %v9254
      %9256 = vmatprep.mubr.f32.mxu0 0.0
      %9257 = vmatmul.mubr.f32.gmra.mrb[0].mxu0 %v9184
      %v9258 = vpop.f32.mrb[0].mxu0
      %v9259 = vadd.f32 %v9173, %v9258
      %v9260 = vpop.f32.mrb[0].mxu0
      %v9261 = vadd.f32 %v9177, %v9260
      %9262 = vdwg.mxu0
      %v9263 = vmax.f32 %v9253, 0.0
      %v9264 = vmax.f32 %v9255, 0.0
      %v9265 = vmax.f32 %v9259, 0.0
      %v9266 = vmax.f32 %v9261, 0.0
      %v9267 = vld [vmem:[%s9] sm:$0xff]
      %v9268 = vld [vmem:[%s9 + $0x8] sm:$0xff]
      %v9269 = vld [vmem:[%s9 + $0x10] sm:$0xff]
      %v9270 = vld [vmem:[%s9 + $0x18] sm:$0xff]
      %v9271 = vld [vmem:[%s9 + $0x20] sm:$0xff]
      %v9272 = vld [vmem:[%s9 + $0x28] sm:$0xff]
      %v9273 = vld [vmem:[%s9 + $0x30] sm:$0xff]
      %v9274 = vld [vmem:[%s9 + $0x38] sm:$0xff]
      %v9275 = vld [vmem:[%s9 + $0x40] sm:$0xff]
      %v9276 = vld [vmem:[%s9 + $0x48] sm:$0xff]
      %v9277 = vld [vmem:[%s9 + $0x50] sm:$0xff]
      %v9278 = vld [vmem:[%s9 + $0x58] sm:$0xff]
      %v9279 = vld [vmem:[%s9 + $0x60] sm:$0xff]
      %v9280 = vld [vmem:[%s9 + $0x68] sm:$0xff]
      %v9281 = vld [vmem:[%s9 + $0x70] sm:$0xff]
      %v9282 = vld [vmem:[%s9 + $0x78] sm:$0xff]
      %v9283 = vld [vmem:[%s9 + $0x80] sm:$0xff]
      %v9284 = vld [vmem:[%s9 + $0x88] sm:$0xff]
      %v9285 = vld [vmem:[%s9 + $0x90] sm:$0xff]
      %v9286 = vld [vmem:[%s9 + $0x98] sm:$0xff]
      %v9287 = vld [vmem:[%s9 + $0xa0] sm:$0xff]
      %v9288 = vld [vmem:[%s9 + $0xa8] sm:$0xff]
      %v9289 = vld [vmem:[%s9 + $0xb0] sm:$0xff]
      %v9290 = vld [vmem:[%s9 + $0xb8] sm:$0xff]
      %v9291 = vld [vmem:[%s9 + $0xc0] sm:$0xff]
      %v9292 = vld [vmem:[%s9 + $0xc8] sm:$0xff]
      %v9293 = vld [vmem:[%s9 + $0xd0] sm:$0xff]
      %v9294 = vld [vmem:[%s9 + $0xd8] sm:$0xff]
      %v9295 = vld [vmem:[%s9 + $0xe0] sm:$0xff]
      %v9296 = vld [vmem:[%s9 + $0xe8] sm:$0xff]
      %v9297 = vld [vmem:[%s9 + $0xf0] sm:$0xff]
      %v9298 = vld [vmem:[%s9 + $0xf8] sm:$0xff]
      %v9299 = vld [vmem:[%s10] sm:$0x1]
      %v9301 = vlaneseq
      %v9302 = vshrl.u32 %v9301, 7
      %v9303 = vsub.s32 0, %v9302
      %v9304 = vrot.slane %v9299, %v9303
      %9306 = vmatprep.subr.mxu0 0.0
      %9307 = vmatpush1.msra.mxu0 %v9267
      %9308 = vmatprep.subr.mxu0 0.0
      %9309 = vmatpush1.msra.mxu0 %v9268
      %9310 = vmatprep.subr.mxu0 0.0
      %9311 = vmatpush1.msra.mxu0 %v9269
      %9312 = vmatprep.subr.mxu0 0.0
      %9313 = vmatpush1.msra.mxu0 %v9270
      %9314 = vmatprep.subr.mxu0 0.0
      %9315 = vmatpush1.msra.mxu0 %v9271
      %9316 = vmatprep.subr.mxu0 0.0
      %9317 = vmatpush1.msra.mxu0 %v9272
      %9318 = vmatprep.subr.mxu0 0.0
      %9319 = vmatpush1.msra.mxu0 %v9273
      %9320 = vmatprep.subr.mxu0 0.0
      %9321 = vmatpush1.msra.mxu0 %v9274
      %9322 = vmatprep.subr.mxu0 0.0
      %9323 = vmatpush1.msra.mxu0 %v9275
      %9324 = vmatprep.subr.mxu0 0.0
      %9325 = vmatpush1.msra.mxu0 %v9276
      %9326 = vmatprep.subr.mxu0 0.0
      %9327 = vmatpush1.msra.mxu0 %v9277
      %9328 = vmatprep.subr.mxu0 0.0
      %9329 = vmatpush1.msra.mxu0 %v9278
      %9330 = vmatprep.subr.mxu0 0.0
      %9331 = vmatpush1.msra.mxu0 %v9279
      %9332 = vmatprep.subr.mxu0 0.0
      %9333 = vmatpush1.msra.mxu0 %v9280
      %9334 = vmatprep.subr.mxu0 0.0
      %9335 = vmatpush1.msra.mxu0 %v9281
      %9336 = vmatprep.subr.mxu0 0.0
      %9337 = vmatpush1.msra.mxu0 %v9282
      %9338 = vmatprep.subr.mxu0 0.0
      %9339 = vmatpush1.msra.mxu0 %v9283
      %9340 = vmatprep.subr.mxu0 0.0
      %9341 = vmatpush1.msra.mxu0 %v9284
      %9342 = vmatprep.subr.mxu0 0.0
      %9343 = vmatpush1.msra.mxu0 %v9285
      %9344 = vmatprep.subr.mxu0 0.0
      %9345 = vmatpush1.msra.mxu0 %v9286
      %9346 = vmatprep.subr.mxu0 0.0
      %9347 = vmatpush1.msra.mxu0 %v9287
      %9348 = vmatprep.subr.mxu0 0.0
      %9349 = vmatpush1.msra.mxu0 %v9288
      %9350 = vmatprep.subr.mxu0 0.0
      %9351 = vmatpush1.msra.mxu0 %v9289
      %9352 = vmatprep.subr.mxu0 0.0
      %9353 = vmatpush1.msra.mxu0 %v9290
      %9354 = vmatprep.subr.mxu0 0.0
      %9355 = vmatpush1.msra.mxu0 %v9291
      %9356 = vmatprep.subr.mxu0 0.0
      %9357 = vmatpush1.msra.mxu0 %v9292
      %9358 = vmatprep.subr.mxu0 0.0
      %9359 = vmatpush1.msra.mxu0 %v9293
      %9360 = vmatprep.subr.mxu0 0.0
      %9361 = vmatpush1.msra.mxu0 %v9294
      %9362 = vmatprep.subr.mxu0 0.0
      %9363 = vmatpush1.msra.mxu0 %v9295
      %9364 = vmatprep.subr.mxu0 0.0
      %9365 = vmatpush1.msra.mxu0 %v9296
      %9366 = vmatprep.subr.mxu0 0.0
      %9367 = vmatpush1.msra.mxu0 %v9297
      %9368 = vmatprep.subr.mxu0 0.0
      %9369 = vmatpush1.msra.mxu0 %v9298
      %9370 = vmatprep.mubr.f32.mxu0 %v9264
      %9371 = vmatmul.mubr.f32.gmra.mrb[0].mxu0 %v9263
      %v9372 = vpop.f32.mrb[0].mxu0
      %v9373 = vadd.f32 %v9304, %v9372
      %v9374 = vpop.f32.mrb[0].mxu0
      %9375 = vmatprep.mubr.f32.mxu0 %v9266
      %9376 = vmatmul.mubr.f32.gmra.mrb[0].mxu0 %v9265
      %v9377 = vpop.f32.mrb[0].mxu0
      %v9378 = vadd.f32 %v9304, %v9377
      %v9379 = vpop.f32.mrb[0].mxu0
      %9380 = vdwg.mxu0
      %9381 = vst [vmem:[%s391] sm:$0xff] %v9373
      %9382 = vst [vmem:[%s391 + $0x8] sm:$0xff] %v9378
      %p9383 = scmp.lt.s32.totalorder %s22, 1
      %s9384 = scalar_select %p9383, %s22, 1
      %s9385 = smul.addr %s9384, 2
      %s9386 = smul.addr %s9385, 8
      %s9387 = scalar_lea.vmem %s11, %s9386
      // Predicated region
      $region65: #{atari_cnn_forward.1} parent=63 // pred_check
        %p9388 = pneg %p276
      $region66: #{atari_cnn_forward.1} parent=63 // pred_check_branch
        %9390 = sbr.rel (%p9388) target = $region68
      $region67: #{atari_cnn_forward.1} parent=63 // pred_region
        _
      $region68: #{atari_cnn_forward.1} parent=63 // pred_fallthru
        _
    $region64: #{atari_cnn_forward.1} parent=5 // pred_fallthru
      _
    %p9391 = scmp.le.s32.totalorder 2, %s17
    // Predicated region
    $region69: #{atari_cnn_forward.1} parent=5 // pred_check
      %p9392 = pneg %p9391
    $region70: #{atari_cnn_forward.1} parent=5 // pred_check_branch
      %9394 = sbr.rel (%p9392) target = $region72
    $region71: #{atari_cnn_forward.1} parent=5 // pred_region
      %s9395 = ssub.s32 %s17, 2
      // Predicated region
      $region73: #{atari_cnn_forward.1} parent=71 // pred_check
        %p9396 = pneg %p282
      $region74: #{atari_cnn_forward.1} parent=71 // pred_check_branch
        %9398 = sbr.rel (%p9396) target = $region76
      $region75: #{atari_cnn_forward.1} parent=71 // pred_region
        %p9399 = scmp.lt.s32.totalorder %s23, 1
        %s9400 = scalar_select %p9399, %s23, 1
        %s9401 = smul.addr %s9400, 2
        %s9402 = smul.addr %s9401, 8
        %s9403 = scalar_lea.vmem %s11, %s9402
      $region76: #{atari_cnn_forward.1} parent=71 // pred_fallthru
        _
    $region72: #{atari_cnn_forward.1} parent=5 // pred_fallthru
      _
  $region6: #{atari_cnn_forward.1} parent=0 // loop_footer
    %s21 = sadd.s32 1, %s17
  $region7: #{atari_cnn_forward.1} parent=0 // loop_footer_branch
    %16 = sbr.rel target = $region3
  $region8: #{atari_cnn_forward.1} parent=0 // loop_exit
    _

</llo_original>
